<compile_context>
chip_gen: v7x
topology: tpu7x:2x2x1
jax: 0.10.0
libtpu: 0.0.40
codegen_flags: <defaults>
</compile_context>

<pallas_src>
import functools

import jax
import jax.numpy as jnp
from jax.experimental import pallas as pl
from jax.experimental.pallas import tpu as pltpu


# ----------------------------------------------------------------------------
# helpers
# ----------------------------------------------------------------------------
def _layernorm(x, g, b, eps=1e-5):
    mu = jnp.mean(x, axis=-1, keepdims=True)
    var = jnp.mean((x - mu) ** 2, axis=-1, keepdims=True)
    return (x - mu) * jax.lax.rsqrt(var + eps) * g + b


# ----------------------------------------------------------------------------
# fused kernel: one grid step == one generator iteration
# ----------------------------------------------------------------------------
def rawgru_fused_kernel(
        nhead, enc_len,
        # SMEM per-step scalars
        sigma_ref, jump_ref,
        # dynamic inputs
        prefix_ref, x_init_ref, noise_ref,
        # weights (VMEM resident across the whole grid; constant index maps)
        enc_emb_w, enc_emb_b,
        wqkv, bqkv, wo, bo,
        ln1_w, ln1_b,
        f1w, f1b, f2w, f2b,
        ln2_w, ln2_b,
        head_sel, head_sel_t,
        e2d_w, e2d_b, emb_w, emb_b,
        wi0, wh0, bi0, bh0,
        wi1, wh1, bi1, bh1,
        rnn_out_w, rnn_out_b, out_w, out_b,
        # outputs (one [1, B, x_dim] row per generator step)
        y0_ref, y1_ref, x0_ref,
        # persistent VMEM state
        x_cur_scr, h0_scr, h1_scr, k_cache, v_cache):
    f32 = jnp.float32
    i = pl.program_id(0)

    B, L_max, E = k_cache.shape
    x_dim = x_init_ref.shape[1]
    hd = E // nhead
    scale = 1.0 / float(hd) ** 0.5

    def mm(a, w):
        return jnp.dot(a, w, preferred_element_type=f32)

    # ---- one-time init: state + K/V cache of the encoder prefix ------------
    @pl.when(i == 0)
    def _init():
        x_cur_scr[...] = x_init_ref[...]
        h0_scr[...] = jnp.zeros_like(h0_scr)
        h1_scr[...] = jnp.zeros_like(h1_scr)

        pre = prefix_ref[...].reshape(B * enc_len, x_dim)
        src_pre = mm(pre, enc_emb_w[...]) + enc_emb_b[...]            # [B*enc_len, E]
        k_pre = (mm(src_pre, wqkv[1]) + bqkv[1]).reshape(B, enc_len, E)
        v_pre = (mm(src_pre, wqkv[2]) + bqkv[2]).reshape(B, enc_len, E)
        pad = jnp.zeros((B, L_max - enc_len, E), f32)
        k_cache[...] = jnp.concatenate([k_pre, pad], axis=1)
        v_cache[...] = jnp.concatenate([v_pre, pad], axis=1)

    # ---- incremental (KV-cached) causal encoder for the new token ----------
    x_cur = x_cur_scr[...]                                            # [B, x_dim]
    pos_new = enc_len + i                                             # position of x_cur

    src_new = mm(x_cur, enc_emb_w[...]) + enc_emb_b[...]              # [B, E]
    q_new = mm(src_new, wqkv[0]) + bqkv[0]
    k_new = mm(src_new, wqkv[1]) + bqkv[1]
    v_new = mm(src_new, wqkv[2]) + bqkv[2]

    # write the new K/V row via a full-tile select (no dynamic sublane store)
    row = jax.lax.broadcasted_iota(jnp.int32, (B, L_max, E), 1)
    is_new = row == pos_new
    kc = jnp.where(is_new, k_new.reshape(B, 1, E), k_cache[...])
    vc = jnp.where(is_new, v_new.reshape(B, 1, E), v_cache[...])
    k_cache[...] = kc
    v_cache[...] = vc

    # per-head scores: s[b, l, h] = sum_{e in head h} q[b, e] * k[b, l, e]
    prod = q_new.reshape(B, 1, E) * kc                                # [B, L_max, E]
    s = mm(prod.reshape(B * L_max, E), head_sel[...]).reshape(B, L_max, nhead) * scale
    lpos = jax.lax.broadcasted_iota(jnp.int32, (B, L_max, nhead), 1)
    s = jnp.where(lpos <= pos_new, s, -1e9)                           # causal/length mask
    s = s - jnp.max(s, axis=1, keepdims=True)
    p = jnp.exp(s)
    p = p * pl.reciprocal(jnp.sum(p, axis=1, keepdims=True), approx=True)
    # broadcast head weights back onto E lanes and contract over positions
    p_full = mm(p.reshape(B * L_max, nhead), head_sel_t[...]).reshape(B, L_max, E)
    attn = jnp.sum(p_full * vc, axis=1)                               # [B, E]
    attn = mm(attn, wo[...]) + bo[...]

    # post-norm encoder layer (dropout = identity in eval), new token only
    h_res = _layernorm(src_new + attn, ln1_w[...], ln1_b[...])
    ff = jnp.maximum(mm(h_res, f1w[...]) + f1b[...], 0.0)             # ReLU
    ff = mm(ff, f2w[...]) + f2b[...]
    enc_last = _layernorm(h_res + ff, ln2_w[...], ln2_b[...])         # [B, E]

    # ---- enc_to_dec + emb + 2-layer GRUCell + output heads -----------------
    hx = mm(enc_last, e2d_w[...]) + e2d_b[...]
    # emb(x_0).squeeze() + hx  (squeeze is a no-op for B>1, x_dim>1)
    h0 = mm(x_cur, emb_w[...]) + emb_b[...] + hx                      # [B, h_dim]

    def gru_cell(x, h, wi, wh, bi, bh):
        # per-gate, lane-aligned weights: wi/wh [3, in, H], bi/bh [3, 1, H]
        r = jax.nn.sigmoid(mm(x, wi[0]) + bi[0] + mm(h, wh[0]) + bh[0])
        z = jax.nn.sigmoid(mm(x, wi[1]) + bi[1] + mm(h, wh[1]) + bh[1])
        n = jnp.tanh(mm(x, wi[2]) + bi[2] + r * (mm(h, wh[2]) + bh[2]))
        return (1.0 - z) * n + z * h

    h_prev0 = h0_scr[...]
    h_prev1 = h1_scr[...]
    h_l0 = gru_cell(h0, h_prev0, wi0, wh0, bi0, bh0)
    h_l1 = gru_cell(h_l0, h_prev1, wi1, wh1, bi1, bh1)
    h0_scr[...] = h_l0
    h1_scr[...] = h_l1

    pre_out = mm(h_l1, rnn_out_w[...]) + rnn_out_b[...] + h0
    y1 = mm(pre_out, out_w[...]) + out_b[...]                         # [B, x_dim]
    y0 = mm(h0, out_w[...]) + out_b[...]

    y0_ref[0] = y0
    y1_ref[0] = y1
    x0_ref[0] = x_cur

    # x_0 <- y + sigma[i]*noise (+ jumping[i]); carried to the next grid step
    x_cur_scr[...] = y1 + sigma_ref[i] * noise_ref[0] + jump_ref[i]


# ----------------------------------------------------------------------------
# wrapper: one pallas_call for the whole generator loop
# ----------------------------------------------------------------------------
_WEIGHT_ORDER = [
    'enc_emb_w', 'enc_emb_b',
    'wqkv', 'bqkv', 'out_proj_w', 'out_proj_b',
    'ln1_w', 'ln1_b',
    'ff1_w', 'ff1_b', 'ff2_w', 'ff2_b',
    'ln2_w', 'ln2_b',
    'head_sel', 'head_sel_t',
    'e2d_w', 'e2d_b', 'emb_w', 'emb_b',
    'wi0', 'wh0', 'bi0', 'bh0',
    'wi1', 'wh1', 'bi1', 'bh1',
    'rnn_out_w', 'rnn_out_b', 'out_w', 'out_b',
]


def rawgru_forward(x, sigma, params, *, enc_len, generator_num, layers,
                   hidden_dim, nhead, noise_key, jumping=None):
    """x: [T, B, x_dim] seq-first (PyTorch convention); returns (y0, y1, x0)."""
    if layers != 2:
        raise ValueError("fused kernel implements the default 2-layer GRUCell stack")
    T, B, x_dim = x.shape
    E = params['enc_emb_w'].shape[1]
    L_max = enc_len + generator_num

    prefix = jnp.transpose(x[:enc_len], (1, 0, 2)).astype(jnp.float32)   # [B, enc_len, x_dim]
    x_init = x[enc_len].astype(jnp.float32)                              # [B, x_dim]
    noise = jax.random.normal(noise_key, (generator_num, B, x_dim), jnp.float32)
    sigma = jnp.asarray(sigma, jnp.float32).reshape(generator_num)
    jump = (jnp.zeros((generator_num,), jnp.float32) if jumping is None
            else jnp.asarray(jumping, jnp.float32).reshape(generator_num))

    weights = [params[n] for n in _WEIGHT_ORDER]
    args = [sigma, jump, prefix, x_init, noise] + weights

    smem = pl.BlockSpec(memory_space=pltpu.MemorySpace.SMEM)

    def full_spec(a):
        nd = a.ndim
        return pl.BlockSpec(a.shape, lambda i, _nd=nd: (0,) * _nd)

    in_specs = ([smem, smem,
                 full_spec(prefix), full_spec(x_init),
                 pl.BlockSpec((1, B, x_dim), lambda i: (i, 0, 0))]
                + [full_spec(w) for w in weights])

    out_shape = jax.ShapeDtypeStruct((generator_num, B, x_dim), jnp.float32)
    out_spec = pl.BlockSpec((1, B, x_dim), lambda i: (i, 0, 0))

    kernel = functools.partial(rawgru_fused_kernel, nhead, enc_len)
    y0, y1, x0 = pl.pallas_call(
        kernel,
        grid=(generator_num,),
        out_shape=(out_shape, out_shape, out_shape),
        in_specs=in_specs,
        out_specs=(out_spec, out_spec, out_spec),
        scratch_shapes=[
            pltpu.VMEM((B, x_dim), jnp.float32),        # x_0 carried across steps
            pltpu.VMEM((B, hidden_dim), jnp.float32),   # GRU layer-0 hidden
            pltpu.VMEM((B, hidden_dim), jnp.float32),   # GRU layer-1 hidden
            pltpu.VMEM((B, L_max, E), jnp.float32),     # K cache
            pltpu.VMEM((B, L_max, E), jnp.float32),     # V cache
        ],
        compiler_params=pltpu.CompilerParams(
            dimension_semantics=("arbitrary",)),
    )(*args)
    return y0, y1, x0


# ----------------------------------------------------------------------------
# deterministic parameter init (PyTorch [out, in] layout, pre-transposed &
# per-gate / per-projection split for the kernel)
# ----------------------------------------------------------------------------
def init_params(key, x_dim, h_dim, hidden_dim, d_model, dim_ff, layers, nhead):
    ks = iter(jax.random.split(key, 32))

    def lin(k, out_f, in_f, scale=0.1):
        kw, kb = jax.random.split(k)
        w = scale * jax.random.normal(kw, (out_f, in_f), jnp.float32)
        b = scale * jax.random.normal(kb, (out_f,), jnp.float32)
        return w.T, b[None]                       # stored as [in, out], [1, out]

    def split3(w, b, d):
        # w: [in, 3d], b: [1, 3d]  ->  [3, in, d], [3, 1, d]
        return (jnp.stack([w[:, j * d:(j + 1) * d] for j in range(3)], axis=0),
                jnp.stack([b[:, j * d:(j + 1) * d] for j in range(3)], axis=0))

    p = {}
    p['enc_emb_w'], p['enc_emb_b'] = lin(next(ks), d_model, x_dim)       # h_enc_embedding
    in_w, in_b = lin(next(ks), 3 * d_model, d_model)                     # MHA in_proj (q|k|v)
    p['wqkv'], p['bqkv'] = split3(in_w, in_b, d_model)
    p['out_proj_w'], p['out_proj_b'] = lin(next(ks), d_model, d_model)   # MHA out_proj
    p['ln1_w'] = jnp.ones((1, d_model), jnp.float32)
    p['ln1_b'] = jnp.zeros((1, d_model), jnp.float32)
    p['ff1_w'], p['ff1_b'] = lin(next(ks), dim_ff, d_model)
    p['ff2_w'], p['ff2_b'] = lin(next(ks), d_model, dim_ff)
    p['ln2_w'] = jnp.ones((1, d_model), jnp.float32)
    p['ln2_b'] = jnp.zeros((1, d_model), jnp.float32)
    # head-selector matrices (constant): head_sel[e, h] = 1 iff lane e belongs to head h
    hd = d_model // nhead
    sel = (jnp.arange(d_model)[:, None] // hd ==
           jnp.arange(nhead)[None, :]).astype(jnp.float32)
    p['head_sel'] = sel
    p['head_sel_t'] = sel.T
    p['e2d_w'], p['e2d_b'] = lin(next(ks), h_dim, d_model)               # enc_to_dec
    p['emb_w'], p['emb_b'] = lin(next(ks), h_dim, x_dim)                 # emb
    for l in range(layers):                                              # GRU base weights
        in_sz = h_dim if l == 0 else hidden_dim
        wih, bih = lin(next(ks), 3 * hidden_dim, in_sz)
        whh, bhh = lin(next(ks), 3 * hidden_dim, hidden_dim)
        p[f'wi{l}'], p[f'bi{l}'] = split3(wih, bih, hidden_dim)          # [3, in, H], [3, 1, H]
        p[f'wh{l}'], p[f'bh{l}'] = split3(whh, bhh, hidden_dim)          # [3, H, H],  [3, 1, H]
    p['rnn_out_w'], p['rnn_out_b'] = lin(next(ks), h_dim, hidden_dim)    # rnn_output
    p['out_w'], p['out_b'] = lin(next(ks), x_dim, h_dim)                 # output
    return p


# ----------------------------------------------------------------------------
if __name__ == "__main__":
    x_dim, h_dim, hidden_dim = 4, 8, 32
    d_model, nhead, dim_ff = 32, 4, 64
    enc_len, generator_num, layers = 6, 5, 2
    B, T = 2, 8                                   # T >= enc_len + 1

    root = jax.random.PRNGKey(0)
    kp, kx, ksig, kn = jax.random.split(root, 4)

    params = init_params(kp, x_dim, h_dim, hidden_dim, d_model, dim_ff, layers, nhead)
    x = jax.random.normal(kx, (T, B, x_dim), jnp.float32)
    sigma = 0.05 * jnp.abs(jax.random.normal(ksig, (generator_num,), jnp.float32))

    y0, y1, x0 = rawgru_forward(
        x, sigma, params,
        enc_len=enc_len, generator_num=generator_num, layers=layers,
        hidden_dim=hidden_dim, nhead=nhead, noise_key=kn, jumping=None)

    jax.block_until_ready((y0, y1, x0))

    assert y0.shape == (generator_num, B, x_dim), y0.shape
    assert y1.shape == (generator_num, B, x_dim), y1.shape
    assert x0.shape == (generator_num, B, x_dim), x0.shape
    assert bool(jnp.all(jnp.isfinite(y0)) & jnp.all(jnp.isfinite(y1))
                & jnp.all(jnp.isfinite(x0)))
    # first stored x0 must equal the seed x[enc_len]
    assert bool(jnp.allclose(x0[0], x[enc_len], atol=1e-6))
    print("KERNEL_OK")
</pallas_src>

<mosaic_0001>
module attributes {stable_mosaic.version = 11 : i64} {
  func.func @rawgru_fused_kernel(%arg0: i32, %arg1: memref<5xf32, #tpu.memory_space<smem>>, %arg2: memref<5xf32, #tpu.memory_space<smem>>, %arg3: memref<2x6x4xf32, #tpu.memory_space<vmem>>, %arg4: memref<2x4xf32, #tpu.memory_space<vmem>>, %arg5: memref<1x2x4xf32, #tpu.memory_space<vmem>>, %arg6: memref<4x32xf32, #tpu.memory_space<vmem>>, %arg7: memref<1x32xf32, #tpu.memory_space<vmem>>, %arg8: memref<3x32x32xf32, #tpu.memory_space<vmem>>, %arg9: memref<3x1x32xf32, #tpu.memory_space<vmem>>, %arg10: memref<32x32xf32, #tpu.memory_space<vmem>>, %arg11: memref<1x32xf32, #tpu.memory_space<vmem>>, %arg12: memref<1x32xf32, #tpu.memory_space<vmem>>, %arg13: memref<1x32xf32, #tpu.memory_space<vmem>>, %arg14: memref<32x64xf32, #tpu.memory_space<vmem>>, %arg15: memref<1x64xf32, #tpu.memory_space<vmem>>, %arg16: memref<64x32xf32, #tpu.memory_space<vmem>>, %arg17: memref<1x32xf32, #tpu.memory_space<vmem>>, %arg18: memref<1x32xf32, #tpu.memory_space<vmem>>, %arg19: memref<1x32xf32, #tpu.memory_space<vmem>>, %arg20: memref<32x4xf32, #tpu.memory_space<vmem>>, %arg21: memref<4x32xf32, #tpu.memory_space<vmem>>, %arg22: memref<32x8xf32, #tpu.memory_space<vmem>>, %arg23: memref<1x8xf32, #tpu.memory_space<vmem>>, %arg24: memref<4x8xf32, #tpu.memory_space<vmem>>, %arg25: memref<1x8xf32, #tpu.memory_space<vmem>>, %arg26: memref<3x8x32xf32, #tpu.memory_space<vmem>>, %arg27: memref<3x32x32xf32, #tpu.memory_space<vmem>>, %arg28: memref<3x1x32xf32, #tpu.memory_space<vmem>>, %arg29: memref<3x1x32xf32, #tpu.memory_space<vmem>>, %arg30: memref<3x32x32xf32, #tpu.memory_space<vmem>>, %arg31: memref<3x32x32xf32, #tpu.memory_space<vmem>>, %arg32: memref<3x1x32xf32, #tpu.memory_space<vmem>>, %arg33: memref<3x1x32xf32, #tpu.memory_space<vmem>>, %arg34: memref<32x8xf32, #tpu.memory_space<vmem>>, %arg35: memref<1x8xf32, #tpu.memory_space<vmem>>, %arg36: memref<8x4xf32, #tpu.memory_space<vmem>>, %arg37: memref<1x4xf32, #tpu.memory_space<vmem>>, %arg38: memref<1x2x4xf32, #tpu.memory_space<vmem>>, %arg39: memref<1x2x4xf32, #tpu.memory_space<vmem>>, %arg40: memref<1x2x4xf32, #tpu.memory_space<vmem>>, %arg41: memref<2x4xf32, #tpu.memory_space<vmem>>, %arg42: memref<2x32xf32, #tpu.memory_space<vmem>>, %arg43: memref<2x32xf32, #tpu.memory_space<vmem>>, %arg44: memref<2x11x32xf32, #tpu.memory_space<vmem>>, %arg45: memref<2x11x32xf32, #tpu.memory_space<vmem>>) attributes {dimension_semantics = [#tpu.dimension_semantics<arbitrary>], iteration_bounds = array<i64: 5>, scalar_prefetch = 0 : i64, scratch_operands = 5 : i64, tpu.core_type = #tpu.core_type<tc>, window_params = [{transform_indices = @transform_0, window_bounds = array<i64: 5>}, {transform_indices = @transform_1, window_bounds = array<i64: 5>}, {pipeline_mode = #tpu.pipeline_mode<synchronous>, transform_indices = @transform_2, window_bounds = array<i64: 2, 6, 4>}, {pipeline_mode = #tpu.pipeline_mode<synchronous>, transform_indices = @transform_3, window_bounds = array<i64: 2, 4>}, {transform_indices = @transform_4, window_bounds = array<i64: 1, 2, 4>}, {pipeline_mode = #tpu.pipeline_mode<synchronous>, transform_indices = @transform_5, window_bounds = array<i64: 4, 32>}, {pipeline_mode = #tpu.pipeline_mode<synchronous>, transform_indices = @transform_6, window_bounds = array<i64: 1, 32>}, {pipeline_mode = #tpu.pipeline_mode<synchronous>, transform_indices = @transform_7, window_bounds = array<i64: 3, 32, 32>}, {pipeline_mode = #tpu.pipeline_mode<synchronous>, transform_indices = @transform_8, window_bounds = array<i64: 3, 1, 32>}, {pipeline_mode = #tpu.pipeline_mode<synchronous>, transform_indices = @transform_9, window_bounds = array<i64: 32, 32>}, {pipeline_mode = #tpu.pipeline_mode<synchronous>, transform_indices = @transform_10, window_bounds = array<i64: 1, 32>}, {pipeline_mode = #tpu.pipeline_mode<synchronous>, transform_indices = @transform_11, window_bounds = array<i64: 1, 32>}, {pipeline_mode = #tpu.pipeline_mode<synchronous>, transform_indices = @transform_12, window_bounds = array<i64: 1, 32>}, {pipeline_mode = #tpu.pipeline_mode<synchronous>, transform_indices = @transform_13, window_bounds = array<i64: 32, 64>}, {pipeline_mode = #tpu.pipeline_mode<synchronous>, transform_indices = @transform_14, window_bounds = array<i64: 1, 64>}, {pipeline_mode = #tpu.pipeline_mode<synchronous>, transform_indices = @transform_15, window_bounds = array<i64: 64, 32>}, {pipeline_mode = #tpu.pipeline_mode<synchronous>, transform_indices = @transform_16, window_bounds = array<i64: 1, 32>}, {pipeline_mode = #tpu.pipeline_mode<synchronous>, transform_indices = @transform_17, window_bounds = array<i64: 1, 32>}, {pipeline_mode = #tpu.pipeline_mode<synchronous>, transform_indices = @transform_18, window_bounds = array<i64: 1, 32>}, {pipeline_mode = #tpu.pipeline_mode<synchronous>, transform_indices = @transform_19, window_bounds = array<i64: 32, 4>}, {pipeline_mode = #tpu.pipeline_mode<synchronous>, transform_indices = @transform_20, window_bounds = array<i64: 4, 32>}, {pipeline_mode = #tpu.pipeline_mode<synchronous>, transform_indices = @transform_21, window_bounds = array<i64: 32, 8>}, {pipeline_mode = #tpu.pipeline_mode<synchronous>, transform_indices = @transform_22, window_bounds = array<i64: 1, 8>}, {pipeline_mode = #tpu.pipeline_mode<synchronous>, transform_indices = @transform_23, window_bounds = array<i64: 4, 8>}, {pipeline_mode = #tpu.pipeline_mode<synchronous>, transform_indices = @transform_24, window_bounds = array<i64: 1, 8>}, {pipeline_mode = #tpu.pipeline_mode<synchronous>, transform_indices = @transform_25, window_bounds = array<i64: 3, 8, 32>}, {pipeline_mode = #tpu.pipeline_mode<synchronous>, transform_indices = @transform_26, window_bounds = array<i64: 3, 32, 32>}, {pipeline_mode = #tpu.pipeline_mode<synchronous>, transform_indices = @transform_27, window_bounds = array<i64: 3, 1, 32>}, {pipeline_mode = #tpu.pipeline_mode<synchronous>, transform_indices = @transform_28, window_bounds = array<i64: 3, 1, 32>}, {pipeline_mode = #tpu.pipeline_mode<synchronous>, transform_indices = @transform_29, window_bounds = array<i64: 3, 32, 32>}, {pipeline_mode = #tpu.pipeline_mode<synchronous>, transform_indices = @transform_30, window_bounds = array<i64: 3, 32, 32>}, {pipeline_mode = #tpu.pipeline_mode<synchronous>, transform_indices = @transform_31, window_bounds = array<i64: 3, 1, 32>}, {pipeline_mode = #tpu.pipeline_mode<synchronous>, transform_indices = @transform_32, window_bounds = array<i64: 3, 1, 32>}, {pipeline_mode = #tpu.pipeline_mode<synchronous>, transform_indices = @transform_33, window_bounds = array<i64: 32, 8>}, {pipeline_mode = #tpu.pipeline_mode<synchronous>, transform_indices = @transform_34, window_bounds = array<i64: 1, 8>}, {pipeline_mode = #tpu.pipeline_mode<synchronous>, transform_indices = @transform_35, window_bounds = array<i64: 8, 4>}, {pipeline_mode = #tpu.pipeline_mode<synchronous>, transform_indices = @transform_36, window_bounds = array<i64: 1, 4>}, {transform_indices = @transform_37, window_bounds = array<i64: 1, 2, 4>}, {transform_indices = @transform_38, window_bounds = array<i64: 1, 2, 4>}, {transform_indices = @transform_39, window_bounds = array<i64: 1, 2, 4>}]} {
    %c0_i32 = arith.constant 0 : i32
    %0 = arith.cmpi eq, %arg0, %c0_i32 : i32
    %1 = arith.extui %0 : i1 to i32
    %c0_i32_0 = arith.constant 0 : i32
    %2 = arith.cmpi ne, %1, %c0_i32_0 : i32
    scf.if %2 {
      %c0_219 = arith.constant 0 : index
      %c0_220 = arith.constant 0 : index
      %319 = vector.load %arg4[%c0_219, %c0_220] : memref<2x4xf32, #tpu.memory_space<vmem>>, vector<2x4xf32>
      %c0_221 = arith.constant 0 : index
      %c0_222 = arith.constant 0 : index
      %320 = vector.load %arg41[%c0_221, %c0_222] : memref<2x4xf32, #tpu.memory_space<vmem>>, vector<2x4xf32>
      tpu.vector_store %arg41[%c0_221, %c0_222], %319 {strides = array<i32>} : memref<2x4xf32, #tpu.memory_space<vmem>>, vector<2x4xf32>,
      %cst_223 = arith.constant 0.000000e+00 : f32
      %321 = vector.broadcast %cst_223 : f32 to vector<2x32xf32>
      %c0_224 = arith.constant 0 : index
      %c0_225 = arith.constant 0 : index
      %322 = vector.load %arg42[%c0_224, %c0_225] : memref<2x32xf32, #tpu.memory_space<vmem>>, vector<2x32xf32>
      tpu.vector_store %arg42[%c0_224, %c0_225], %321 {strides = array<i32>} : memref<2x32xf32, #tpu.memory_space<vmem>>, vector<2x32xf32>,
      %cst_226 = arith.constant 0.000000e+00 : f32
      %323 = vector.broadcast %cst_226 : f32 to vector<2x32xf32>
      %c0_227 = arith.constant 0 : index
      %c0_228 = arith.constant 0 : index
      %324 = vector.load %arg43[%c0_227, %c0_228] : memref<2x32xf32, #tpu.memory_space<vmem>>, vector<2x32xf32>
      tpu.vector_store %arg43[%c0_227, %c0_228], %323 {strides = array<i32>} : memref<2x32xf32, #tpu.memory_space<vmem>>, vector<2x32xf32>,
      %c0_229 = arith.constant 0 : index
      %c0_230 = arith.constant 0 : index
      %c0_231 = arith.constant 0 : index
      %325 = vector.load %arg3[%c0_229, %c0_230, %c0_231] : memref<2x6x4xf32, #tpu.memory_space<vmem>>, vector<2x6x4xf32>
      %326 = vector.shape_cast %325 : vector<2x6x4xf32> to vector<12x4xf32>
      %c0_232 = arith.constant 0 : index
      %c0_233 = arith.constant 0 : index
      %327 = vector.load %arg6[%c0_232, %c0_233] : memref<4x32xf32, #tpu.memory_space<vmem>>, vector<4x32xf32>
      %cst_234 = arith.constant dense<0.000000e+00> : vector<12x32xf32>
      %328 = tpu.matmul %326, %327, %cst_234 {dimension_numbers = #tpu.dot_dimension_numbers<[1], [0], [0], [1], [0, 0, 1, 1], [], []>} : vector<12x4xf32>, vector<4x32xf32>, vector<12x32xf32> -> vector<12x32xf32>
      %c0_235 = arith.constant 0 : index
      %c0_236 = arith.constant 0 : index
      %329 = vector.load %arg7[%c0_235, %c0_236] : memref<1x32xf32, #tpu.memory_space<vmem>>, vector<1x32xf32>
      %330 = vector.broadcast %329 : vector<1x32xf32> to vector<12x32xf32>
      %331 = arith.addf %328, %330 : vector<12x32xf32>
      %c1_237 = arith.constant 1 : index
      %c0_238 = arith.constant 0 : index
      %c0_239 = arith.constant 0 : index
      %332 = vector.load %arg8[%c1_237, %c0_238, %c0_239] : memref<3x32x32xf32, #tpu.memory_space<vmem>>, vector<1x32x32xf32>
      %333 = vector.shape_cast %332 : vector<1x32x32xf32> to vector<32x32xf32>
      %cst_240 = arith.constant dense<0.000000e+00> : vector<12x32xf32>
      %334 = tpu.matmul %331, %333, %cst_240 {dimension_numbers = #tpu.dot_dimension_numbers<[1], [0], [0], [1], [0, 0, 1, 1], [], []>} : vector<12x32xf32>, vector<32x32xf32>, vector<12x32xf32> -> vector<12x32xf32>
      %c1_241 = arith.constant 1 : index
      %c0_242 = arith.constant 0 : index
      %c0_243 = arith.constant 0 : index
      %335 = vector.load %arg9[%c1_241, %c0_242, %c0_243] : memref<3x1x32xf32, #tpu.memory_space<vmem>>, vector<1x1x32xf32>
      %336 = vector.shape_cast %335 : vector<1x1x32xf32> to vector<1x32xf32>
      %337 = vector.broadcast %336 : vector<1x32xf32> to vector<12x32xf32>
      %338 = arith.addf %334, %337 : vector<12x32xf32>
      %339 = vector.shape_cast %338 : vector<12x32xf32> to vector<2x6x32xf32>
      %c2_244 = arith.constant 2 : index
      %c0_245 = arith.constant 0 : index
      %c0_246 = arith.constant 0 : index
      %340 = vector.load %arg8[%c2_244, %c0_245, %c0_246] : memref<3x32x32xf32, #tpu.memory_space<vmem>>, vector<1x32x32xf32>
      %341 = vector.shape_cast %340 : vector<1x32x32xf32> to vector<32x32xf32>
      %cst_247 = arith.constant dense<0.000000e+00> : vector<12x32xf32>
      %342 = tpu.matmul %331, %341, %cst_247 {dimension_numbers = #tpu.dot_dimension_numbers<[1], [0], [0], [1], [0, 0, 1, 1], [], []>} : vector<12x32xf32>, vector<32x32xf32>, vector<12x32xf32> -> vector<12x32xf32>
      %c2_248 = arith.constant 2 : index
      %c0_249 = arith.constant 0 : index
      %c0_250 = arith.constant 0 : index
      %343 = vector.load %arg9[%c2_248, %c0_249, %c0_250] : memref<3x1x32xf32, #tpu.memory_space<vmem>>, vector<1x1x32xf32>
      %344 = vector.shape_cast %343 : vector<1x1x32xf32> to vector<1x32xf32>
      %345 = vector.broadcast %344 : vector<1x32xf32> to vector<12x32xf32>
      %346 = arith.addf %342, %345 : vector<12x32xf32>
      %347 = vector.shape_cast %346 : vector<12x32xf32> to vector<2x6x32xf32>
      %cst_251 = arith.constant 0.000000e+00 : f32
      %348 = vector.broadcast %cst_251 : f32 to vector<2x5x32xf32>
      %349 = tpu.concatenate %339, %348 in 1 : vector<2x6x32xf32>, vector<2x5x32xf32> -> vector<2x11x32xf32>
      %c0_252 = arith.constant 0 : index
      %c0_253 = arith.constant 0 : index
      %c0_254 = arith.constant 0 : index
      %350 = vector.load %arg44[%c0_252, %c0_253, %c0_254] : memref<2x11x32xf32, #tpu.memory_space<vmem>>, vector<2x11x32xf32>
      tpu.vector_store %arg44[%c0_252, %c0_253, %c0_254], %349 {strides = array<i32>} : memref<2x11x32xf32, #tpu.memory_space<vmem>>, vector<2x11x32xf32>,
      %351 = tpu.concatenate %347, %348 in 1 : vector<2x6x32xf32>, vector<2x5x32xf32> -> vector<2x11x32xf32>
      %c0_255 = arith.constant 0 : index
      %c0_256 = arith.constant 0 : index
      %c0_257 = arith.constant 0 : index
      %352 = vector.load %arg45[%c0_255, %c0_256, %c0_257] : memref<2x11x32xf32, #tpu.memory_space<vmem>>, vector<2x11x32xf32>
      tpu.vector_store %arg45[%c0_255, %c0_256, %c0_257], %351 {strides = array<i32>} : memref<2x11x32xf32, #tpu.memory_space<vmem>>, vector<2x11x32xf32>,
    } else {
    }
    %c0 = arith.constant 0 : index
    %c0_1 = arith.constant 0 : index
    %3 = vector.load %arg41[%c0, %c0_1] : memref<2x4xf32, #tpu.memory_space<vmem>>, vector<2x4xf32>
    %c6_i32 = arith.constant 6 : i32
    %4 = arith.addi %c6_i32, %arg0 : i32
    %c0_2 = arith.constant 0 : index
    %c0_3 = arith.constant 0 : index
    %5 = vector.load %arg6[%c0_2, %c0_3] : memref<4x32xf32, #tpu.memory_space<vmem>>, vector<4x32xf32>
    %cst = arith.constant dense<0.000000e+00> : vector<2x32xf32>
    %6 = tpu.matmul %3, %5, %cst {dimension_numbers = #tpu.dot_dimension_numbers<[1], [0], [0], [1], [0, 0, 1, 1], [], []>} : vector<2x4xf32>, vector<4x32xf32>, vector<2x32xf32> -> vector<2x32xf32>
    %c0_4 = arith.constant 0 : index
    %c0_5 = arith.constant 0 : index
    %7 = vector.load %arg7[%c0_4, %c0_5] : memref<1x32xf32, #tpu.memory_space<vmem>>, vector<1x32xf32>
    %8 = vector.broadcast %7 : vector<1x32xf32> to vector<2x32xf32>
    %9 = arith.addf %6, %8 : vector<2x32xf32>
    %c0_6 = arith.constant 0 : index
    %c0_7 = arith.constant 0 : index
    %c0_8 = arith.constant 0 : index
    %10 = vector.load %arg8[%c0_6, %c0_7, %c0_8] : memref<3x32x32xf32, #tpu.memory_space<vmem>>, vector<1x32x32xf32>
    %11 = vector.shape_cast %10 : vector<1x32x32xf32> to vector<32x32xf32>
    %cst_9 = arith.constant dense<0.000000e+00> : vector<2x32xf32>
    %12 = tpu.matmul %9, %11, %cst_9 {dimension_numbers = #tpu.dot_dimension_numbers<[1], [0], [0], [1], [0, 0, 1, 1], [], []>} : vector<2x32xf32>, vector<32x32xf32>, vector<2x32xf32> -> vector<2x32xf32>
    %c0_10 = arith.constant 0 : index
    %c0_11 = arith.constant 0 : index
    %c0_12 = arith.constant 0 : index
    %13 = vector.load %arg9[%c0_10, %c0_11, %c0_12] : memref<3x1x32xf32, #tpu.memory_space<vmem>>, vector<1x1x32xf32>
    %14 = vector.shape_cast %13 : vector<1x1x32xf32> to vector<1x32xf32>
    %15 = vector.broadcast %14 : vector<1x32xf32> to vector<2x32xf32>
    %16 = arith.addf %12, %15 : vector<2x32xf32>
    %c1 = arith.constant 1 : index
    %c0_13 = arith.constant 0 : index
    %c0_14 = arith.constant 0 : index
    %17 = vector.load %arg8[%c1, %c0_13, %c0_14] : memref<3x32x32xf32, #tpu.memory_space<vmem>>, vector<1x32x32xf32>
    %18 = vector.shape_cast %17 : vector<1x32x32xf32> to vector<32x32xf32>
    %cst_15 = arith.constant dense<0.000000e+00> : vector<2x32xf32>
    %19 = tpu.matmul %9, %18, %cst_15 {dimension_numbers = #tpu.dot_dimension_numbers<[1], [0], [0], [1], [0, 0, 1, 1], [], []>} : vector<2x32xf32>, vector<32x32xf32>, vector<2x32xf32> -> vector<2x32xf32>
    %c1_16 = arith.constant 1 : index
    %c0_17 = arith.constant 0 : index
    %c0_18 = arith.constant 0 : index
    %20 = vector.load %arg9[%c1_16, %c0_17, %c0_18] : memref<3x1x32xf32, #tpu.memory_space<vmem>>, vector<1x1x32xf32>
    %21 = vector.shape_cast %20 : vector<1x1x32xf32> to vector<1x32xf32>
    %22 = vector.broadcast %21 : vector<1x32xf32> to vector<2x32xf32>
    %23 = arith.addf %19, %22 : vector<2x32xf32>
    %c2 = arith.constant 2 : index
    %c0_19 = arith.constant 0 : index
    %c0_20 = arith.constant 0 : index
    %24 = vector.load %arg8[%c2, %c0_19, %c0_20] : memref<3x32x32xf32, #tpu.memory_space<vmem>>, vector<1x32x32xf32>
    %25 = vector.shape_cast %24 : vector<1x32x32xf32> to vector<32x32xf32>
    %cst_21 = arith.constant dense<0.000000e+00> : vector<2x32xf32>
    %26 = tpu.matmul %9, %25, %cst_21 {dimension_numbers = #tpu.dot_dimension_numbers<[1], [0], [0], [1], [0, 0, 1, 1], [], []>} : vector<2x32xf32>, vector<32x32xf32>, vector<2x32xf32> -> vector<2x32xf32>
    %c2_22 = arith.constant 2 : index
    %c0_23 = arith.constant 0 : index
    %c0_24 = arith.constant 0 : index
    %27 = vector.load %arg9[%c2_22, %c0_23, %c0_24] : memref<3x1x32xf32, #tpu.memory_space<vmem>>, vector<1x1x32xf32>
    %28 = vector.shape_cast %27 : vector<1x1x32xf32> to vector<1x32xf32>
    %29 = vector.broadcast %28 : vector<1x32xf32> to vector<2x32xf32>
    %30 = arith.addf %26, %29 : vector<2x32xf32>
    %31 = tpu.iota {dimensions = array<i32: 1>} : vector<2x11x32xi32>
    %32 = vector.broadcast %4 : i32 to vector<2x11x32xi32>
    %33 = arith.cmpi eq, %31, %32 : vector<2x11x32xi32>
    %34 = vector.shape_cast %23 : vector<2x32xf32> to vector<2x1x32xf32>
    %c0_25 = arith.constant 0 : index
    %c0_26 = arith.constant 0 : index
    %c0_27 = arith.constant 0 : index
    %35 = vector.load %arg44[%c0_25, %c0_26, %c0_27] : memref<2x11x32xf32, #tpu.memory_space<vmem>>, vector<2x11x32xf32>
    %36 = vector.shape_cast %34 : vector<2x1x32xf32> to vector<2x1x32xf32>
    %37 = vector.broadcast %36 : vector<2x1x32xf32> to vector<2x11x32xf32>
    %38 = arith.select %33, %37, %35 : vector<2x11x32xi1>, vector<2x11x32xf32>
    %39 = vector.shape_cast %30 : vector<2x32xf32> to vector<2x1x32xf32>
    %c0_28 = arith.constant 0 : index
    %c0_29 = arith.constant 0 : index
    %c0_30 = arith.constant 0 : index
    %40 = vector.load %arg45[%c0_28, %c0_29, %c0_30] : memref<2x11x32xf32, #tpu.memory_space<vmem>>, vector<2x11x32xf32>
    %41 = vector.shape_cast %39 : vector<2x1x32xf32> to vector<2x1x32xf32>
    %42 = vector.broadcast %41 : vector<2x1x32xf32> to vector<2x11x32xf32>
    %43 = arith.select %33, %42, %40 : vector<2x11x32xi1>, vector<2x11x32xf32>
    %c0_31 = arith.constant 0 : index
    %c0_32 = arith.constant 0 : index
    %c0_33 = arith.constant 0 : index
    %44 = vector.load %arg44[%c0_31, %c0_32, %c0_33] : memref<2x11x32xf32, #tpu.memory_space<vmem>>, vector<2x11x32xf32>
    tpu.vector_store %arg44[%c0_31, %c0_32, %c0_33], %38 {strides = array<i32>} : memref<2x11x32xf32, #tpu.memory_space<vmem>>, vector<2x11x32xf32>,
    %c0_34 = arith.constant 0 : index
    %c0_35 = arith.constant 0 : index
    %c0_36 = arith.constant 0 : index
    %45 = vector.load %arg45[%c0_34, %c0_35, %c0_36] : memref<2x11x32xf32, #tpu.memory_space<vmem>>, vector<2x11x32xf32>
    tpu.vector_store %arg45[%c0_34, %c0_35, %c0_36], %43 {strides = array<i32>} : memref<2x11x32xf32, #tpu.memory_space<vmem>>, vector<2x11x32xf32>,
    %46 = vector.shape_cast %16 : vector<2x32xf32> to vector<2x1x32xf32>
    %47 = vector.broadcast %46 : vector<2x1x32xf32> to vector<2x11x32xf32>
    %48 = arith.mulf %47, %38 : vector<2x11x32xf32>
    %49 = vector.shape_cast %48 : vector<2x11x32xf32> to vector<22x32xf32>
    %c0_37 = arith.constant 0 : index
    %c0_38 = arith.constant 0 : index
    %50 = vector.load %arg20[%c0_37, %c0_38] : memref<32x4xf32, #tpu.memory_space<vmem>>, vector<32x4xf32>
    %cst_39 = arith.constant dense<0.000000e+00> : vector<22x4xf32>
    %51 = tpu.matmul %49, %50, %cst_39 {dimension_numbers = #tpu.dot_dimension_numbers<[1], [0], [0], [1], [0, 0, 1, 1], [], []>} : vector<22x32xf32>, vector<32x4xf32>, vector<22x4xf32> -> vector<22x4xf32>
    %52 = vector.shape_cast %51 : vector<22x4xf32> to vector<2x11x4xf32>
    %cst_40 = arith.constant 0.353553385 : f32
    %53 = vector.broadcast %cst_40 : f32 to vector<2x11x4xf32>
    %54 = arith.mulf %52, %53 : vector<2x11x4xf32>
    %55 = tpu.iota {dimensions = array<i32: 1>} : vector<2x11x4xi32>
    %56 = vector.broadcast %4 : i32 to vector<2x11x4xi32>
    %57 = arith.cmpi sle, %55, %56 : vector<2x11x4xi32>
    %cst_41 = arith.constant -1.000000e+09 : f32
    %58 = vector.broadcast %cst_41 : f32 to vector<2x11x4xf32>
    %59 = arith.select %57, %54, %58 : vector<2x11x4xi1>, vector<2x11x4xf32>
    %cst_42 = arith.constant dense<0xFF800000> : vector<2x4xf32>
    %60 = vector.multi_reduction <maximumf>, %59, %cst_42 [1] : vector<2x11x4xf32> to vector<2x4xf32>
    %61 = vector.shape_cast %60 : vector<2x4xf32> to vector<2x1x4xf32>
    %62 = vector.broadcast %61 : vector<2x1x4xf32> to vector<2x11x4xf32>
    %63 = arith.subf %59, %62 : vector<2x11x4xf32>
    %64 = math.exp %63 : vector<2x11x4xf32>
    %cst_43 = arith.constant dense<0.000000e+00> : vector<2x4xf32>
    %65 = vector.multi_reduction <add>, %64, %cst_43 [1] : vector<2x11x4xf32> to vector<2x4xf32>
    %66 = vector.shape_cast %65 : vector<2x4xf32> to vector<2x1x4xf32>
    %67 = tpu.reciprocal %66 {approx = true} : vector<2x1x4xf32> -> vector<2x1x4xf32>
    %68 = vector.broadcast %67 : vector<2x1x4xf32> to vector<2x11x4xf32>
    %69 = arith.mulf %64, %68 : vector<2x11x4xf32>
    %70 = vector.shape_cast %69 : vector<2x11x4xf32> to vector<22x4xf32>
    %c0_44 = arith.constant 0 : index
    %c0_45 = arith.constant 0 : index
    %71 = vector.load %arg21[%c0_44, %c0_45] : memref<4x32xf32, #tpu.memory_space<vmem>>, vector<4x32xf32>
    %cst_46 = arith.constant dense<0.000000e+00> : vector<22x32xf32>
    %72 = tpu.matmul %70, %71, %cst_46 {dimension_numbers = #tpu.dot_dimension_numbers<[1], [0], [0], [1], [0, 0, 1, 1], [], []>} : vector<22x4xf32>, vector<4x32xf32>, vector<22x32xf32> -> vector<22x32xf32>
    %73 = vector.shape_cast %72 : vector<22x32xf32> to vector<2x11x32xf32>
    %74 = arith.mulf %73, %43 : vector<2x11x32xf32>
    %cst_47 = arith.constant dense<0.000000e+00> : vector<2x32xf32>
    %75 = vector.multi_reduction <add>, %74, %cst_47 [1] : vector<2x11x32xf32> to vector<2x32xf32>
    %c0_48 = arith.constant 0 : index
    %c0_49 = arith.constant 0 : index
    %76 = vector.load %arg10[%c0_48, %c0_49] : memref<32x32xf32, #tpu.memory_space<vmem>>, vector<32x32xf32>
    %cst_50 = arith.constant dense<0.000000e+00> : vector<2x32xf32>
    %77 = tpu.matmul %75, %76, %cst_50 {dimension_numbers = #tpu.dot_dimension_numbers<[1], [0], [0], [1], [0, 0, 1, 1], [], []>} : vector<2x32xf32>, vector<32x32xf32>, vector<2x32xf32> -> vector<2x32xf32>
    %c0_51 = arith.constant 0 : index
    %c0_52 = arith.constant 0 : index
    %78 = vector.load %arg11[%c0_51, %c0_52] : memref<1x32xf32, #tpu.memory_space<vmem>>, vector<1x32xf32>
    %79 = vector.broadcast %78 : vector<1x32xf32> to vector<2x32xf32>
    %80 = arith.addf %77, %79 : vector<2x32xf32>
    %81 = arith.addf %9, %80 : vector<2x32xf32>
    %c0_53 = arith.constant 0 : index
    %c0_54 = arith.constant 0 : index
    %82 = vector.load %arg12[%c0_53, %c0_54] : memref<1x32xf32, #tpu.memory_space<vmem>>, vector<1x32xf32>
    %c0_55 = arith.constant 0 : index
    %c0_56 = arith.constant 0 : index
    %83 = vector.load %arg13[%c0_55, %c0_56] : memref<1x32xf32, #tpu.memory_space<vmem>>, vector<1x32xf32>
    %cst_57 = arith.constant dense<0.000000e+00> : vector<2xf32>
    %84 = vector.multi_reduction <add>, %81, %cst_57 [1] : vector<2x32xf32> to vector<2xf32>
    %85 = vector.shape_cast %84 : vector<2xf32> to vector<2x1xf32>
    %cst_58 = arith.constant 3.200000e+01 : f32
    %86 = vector.broadcast %cst_58 : f32 to vector<2x1xf32>
    %87 = arith.divf %85, %86 : vector<2x1xf32>
    %88 = vector.broadcast %87 : vector<2x1xf32> to vector<2x32xf32>
    %89 = arith.subf %81, %88 : vector<2x32xf32>
    %90 = arith.mulf %89, %89 : vector<2x32xf32>
    %cst_59 = arith.constant dense<0.000000e+00> : vector<2xf32>
    %91 = vector.multi_reduction <add>, %90, %cst_59 [1] : vector<2x32xf32> to vector<2xf32>
    %92 = vector.shape_cast %91 : vector<2xf32> to vector<2x1xf32>
    %cst_60 = arith.constant 3.200000e+01 : f32
    %93 = vector.broadcast %cst_60 : f32 to vector<2x1xf32>
    %94 = arith.divf %92, %93 : vector<2x1xf32>
    %95 = vector.broadcast %87 : vector<2x1xf32> to vector<2x32xf32>
    %96 = arith.subf %81, %95 : vector<2x32xf32>
    %cst_61 = arith.constant 9.99999974E-6 : f32
    %97 = vector.broadcast %cst_61 : f32 to vector<2x1xf32>
    %98 = arith.addf %94, %97 : vector<2x1xf32>
    %99 = math.rsqrt %98 : vector<2x1xf32>
    %100 = vector.broadcast %99 : vector<2x1xf32> to vector<2x32xf32>
    %101 = arith.mulf %96, %100 : vector<2x32xf32>
    %102 = vector.broadcast %82 : vector<1x32xf32> to vector<2x32xf32>
    %103 = arith.mulf %101, %102 : vector<2x32xf32>
    %104 = vector.broadcast %83 : vector<1x32xf32> to vector<2x32xf32>
    %105 = arith.addf %103, %104 : vector<2x32xf32>
    %c0_62 = arith.constant 0 : index
    %c0_63 = arith.constant 0 : index
    %106 = vector.load %arg14[%c0_62, %c0_63] : memref<32x64xf32, #tpu.memory_space<vmem>>, vector<32x64xf32>
    %cst_64 = arith.constant dense<0.000000e+00> : vector<2x64xf32>
    %107 = tpu.matmul %105, %106, %cst_64 {dimension_numbers = #tpu.dot_dimension_numbers<[1], [0], [0], [1], [0, 0, 1, 1], [], []>} : vector<2x32xf32>, vector<32x64xf32>, vector<2x64xf32> -> vector<2x64xf32>
    %c0_65 = arith.constant 0 : index
    %c0_66 = arith.constant 0 : index
    %108 = vector.load %arg15[%c0_65, %c0_66] : memref<1x64xf32, #tpu.memory_space<vmem>>, vector<1x64xf32>
    %109 = vector.broadcast %108 : vector<1x64xf32> to vector<2x64xf32>
    %110 = arith.addf %107, %109 : vector<2x64xf32>
    %cst_67 = arith.constant 0.000000e+00 : f32
    %111 = vector.broadcast %cst_67 : f32 to vector<2x64xf32>
    %112 = arith.maximumf %110, %111 : vector<2x64xf32>
    %c0_68 = arith.constant 0 : index
    %c0_69 = arith.constant 0 : index
    %113 = vector.load %arg16[%c0_68, %c0_69] : memref<64x32xf32, #tpu.memory_space<vmem>>, vector<64x32xf32>
    %cst_70 = arith.constant dense<0.000000e+00> : vector<2x32xf32>
    %114 = tpu.matmul %112, %113, %cst_70 {dimension_numbers = #tpu.dot_dimension_numbers<[1], [0], [0], [1], [0, 0, 1, 1], [], []>} : vector<2x64xf32>, vector<64x32xf32>, vector<2x32xf32> -> vector<2x32xf32>
    %c0_71 = arith.constant 0 : index
    %c0_72 = arith.constant 0 : index
    %115 = vector.load %arg17[%c0_71, %c0_72] : memref<1x32xf32, #tpu.memory_space<vmem>>, vector<1x32xf32>
    %116 = vector.broadcast %115 : vector<1x32xf32> to vector<2x32xf32>
    %117 = arith.addf %114, %116 : vector<2x32xf32>
    %118 = arith.addf %105, %117 : vector<2x32xf32>
    %c0_73 = arith.constant 0 : index
    %c0_74 = arith.constant 0 : index
    %119 = vector.load %arg18[%c0_73, %c0_74] : memref<1x32xf32, #tpu.memory_space<vmem>>, vector<1x32xf32>
    %c0_75 = arith.constant 0 : index
    %c0_76 = arith.constant 0 : index
    %120 = vector.load %arg19[%c0_75, %c0_76] : memref<1x32xf32, #tpu.memory_space<vmem>>, vector<1x32xf32>
    %cst_77 = arith.constant dense<0.000000e+00> : vector<2xf32>
    %121 = vector.multi_reduction <add>, %118, %cst_77 [1] : vector<2x32xf32> to vector<2xf32>
    %122 = vector.shape_cast %121 : vector<2xf32> to vector<2x1xf32>
    %cst_78 = arith.constant 3.200000e+01 : f32
    %123 = vector.broadcast %cst_78 : f32 to vector<2x1xf32>
    %124 = arith.divf %122, %123 : vector<2x1xf32>
    %125 = vector.broadcast %124 : vector<2x1xf32> to vector<2x32xf32>
    %126 = arith.subf %118, %125 : vector<2x32xf32>
    %127 = arith.mulf %126, %126 : vector<2x32xf32>
    %cst_79 = arith.constant dense<0.000000e+00> : vector<2xf32>
    %128 = vector.multi_reduction <add>, %127, %cst_79 [1] : vector<2x32xf32> to vector<2xf32>
    %129 = vector.shape_cast %128 : vector<2xf32> to vector<2x1xf32>
    %cst_80 = arith.constant 3.200000e+01 : f32
    %130 = vector.broadcast %cst_80 : f32 to vector<2x1xf32>
    %131 = arith.divf %129, %130 : vector<2x1xf32>
    %132 = vector.broadcast %124 : vector<2x1xf32> to vector<2x32xf32>
    %133 = arith.subf %118, %132 : vector<2x32xf32>
    %cst_81 = arith.constant 9.99999974E-6 : f32
    %134 = vector.broadcast %cst_81 : f32 to vector<2x1xf32>
    %135 = arith.addf %131, %134 : vector<2x1xf32>
    %136 = math.rsqrt %135 : vector<2x1xf32>
    %137 = vector.broadcast %136 : vector<2x1xf32> to vector<2x32xf32>
    %138 = arith.mulf %133, %137 : vector<2x32xf32>
    %139 = vector.broadcast %119 : vector<1x32xf32> to vector<2x32xf32>
    %140 = arith.mulf %138, %139 : vector<2x32xf32>
    %141 = vector.broadcast %120 : vector<1x32xf32> to vector<2x32xf32>
    %142 = arith.addf %140, %141 : vector<2x32xf32>
    %c0_82 = arith.constant 0 : index
    %c0_83 = arith.constant 0 : index
    %143 = vector.load %arg22[%c0_82, %c0_83] : memref<32x8xf32, #tpu.memory_space<vmem>>, vector<32x8xf32>
    %cst_84 = arith.constant dense<0.000000e+00> : vector<2x8xf32>
    %144 = tpu.matmul %142, %143, %cst_84 {dimension_numbers = #tpu.dot_dimension_numbers<[1], [0], [0], [1], [0, 0, 1, 1], [], []>} : vector<2x32xf32>, vector<32x8xf32>, vector<2x8xf32> -> vector<2x8xf32>
    %c0_85 = arith.constant 0 : index
    %c0_86 = arith.constant 0 : index
    %145 = vector.load %arg23[%c0_85, %c0_86] : memref<1x8xf32, #tpu.memory_space<vmem>>, vector<1x8xf32>
    %146 = vector.broadcast %145 : vector<1x8xf32> to vector<2x8xf32>
    %147 = arith.addf %144, %146 : vector<2x8xf32>
    %c0_87 = arith.constant 0 : index
    %c0_88 = arith.constant 0 : index
    %148 = vector.load %arg24[%c0_87, %c0_88] : memref<4x8xf32, #tpu.memory_space<vmem>>, vector<4x8xf32>
    %cst_89 = arith.constant dense<0.000000e+00> : vector<2x8xf32>
    %149 = tpu.matmul %3, %148, %cst_89 {dimension_numbers = #tpu.dot_dimension_numbers<[1], [0], [0], [1], [0, 0, 1, 1], [], []>} : vector<2x4xf32>, vector<4x8xf32>, vector<2x8xf32> -> vector<2x8xf32>
    %c0_90 = arith.constant 0 : index
    %c0_91 = arith.constant 0 : index
    %150 = vector.load %arg25[%c0_90, %c0_91] : memref<1x8xf32, #tpu.memory_space<vmem>>, vector<1x8xf32>
    %151 = vector.broadcast %150 : vector<1x8xf32> to vector<2x8xf32>
    %152 = arith.addf %149, %151 : vector<2x8xf32>
    %153 = arith.addf %152, %147 : vector<2x8xf32>
    %c0_92 = arith.constant 0 : index
    %c0_93 = arith.constant 0 : index
    %154 = vector.load %arg42[%c0_92, %c0_93] : memref<2x32xf32, #tpu.memory_space<vmem>>, vector<2x32xf32>
    %c0_94 = arith.constant 0 : index
    %c0_95 = arith.constant 0 : index
    %155 = vector.load %arg43[%c0_94, %c0_95] : memref<2x32xf32, #tpu.memory_space<vmem>>, vector<2x32xf32>
    %c0_96 = arith.constant 0 : index
    %c0_97 = arith.constant 0 : index
    %c0_98 = arith.constant 0 : index
    %156 = vector.load %arg26[%c0_96, %c0_97, %c0_98] : memref<3x8x32xf32, #tpu.memory_space<vmem>>, vector<1x8x32xf32>
    %157 = vector.shape_cast %156 : vector<1x8x32xf32> to vector<8x32xf32>
    %cst_99 = arith.constant dense<0.000000e+00> : vector<2x32xf32>
    %158 = tpu.matmul %153, %157, %cst_99 {dimension_numbers = #tpu.dot_dimension_numbers<[1], [0], [0], [1], [0, 0, 1, 1], [], []>} : vector<2x8xf32>, vector<8x32xf32>, vector<2x32xf32> -> vector<2x32xf32>
    %c0_100 = arith.constant 0 : index
    %c0_101 = arith.constant 0 : index
    %c0_102 = arith.constant 0 : index
    %159 = vector.load %arg28[%c0_100, %c0_101, %c0_102] : memref<3x1x32xf32, #tpu.memory_space<vmem>>, vector<1x1x32xf32>
    %160 = vector.shape_cast %159 : vector<1x1x32xf32> to vector<1x32xf32>
    %161 = vector.broadcast %160 : vector<1x32xf32> to vector<2x32xf32>
    %162 = arith.addf %158, %161 : vector<2x32xf32>
    %c0_103 = arith.constant 0 : index
    %c0_104 = arith.constant 0 : index
    %c0_105 = arith.constant 0 : index
    %163 = vector.load %arg27[%c0_103, %c0_104, %c0_105] : memref<3x32x32xf32, #tpu.memory_space<vmem>>, vector<1x32x32xf32>
    %164 = vector.shape_cast %163 : vector<1x32x32xf32> to vector<32x32xf32>
    %cst_106 = arith.constant dense<0.000000e+00> : vector<2x32xf32>
    %165 = tpu.matmul %154, %164, %cst_106 {dimension_numbers = #tpu.dot_dimension_numbers<[1], [0], [0], [1], [0, 0, 1, 1], [], []>} : vector<2x32xf32>, vector<32x32xf32>, vector<2x32xf32> -> vector<2x32xf32>
    %166 = arith.addf %162, %165 : vector<2x32xf32>
    %c0_107 = arith.constant 0 : index
    %c0_108 = arith.constant 0 : index
    %c0_109 = arith.constant 0 : index
    %167 = vector.load %arg29[%c0_107, %c0_108, %c0_109] : memref<3x1x32xf32, #tpu.memory_space<vmem>>, vector<1x1x32xf32>
    %168 = vector.shape_cast %167 : vector<1x1x32xf32> to vector<1x32xf32>
    %169 = vector.broadcast %168 : vector<1x32xf32> to vector<2x32xf32>
    %170 = arith.addf %166, %169 : vector<2x32xf32>
    %171 = arith.negf %170 : vector<2x32xf32>
    %172 = math.exp %171 : vector<2x32xf32>
    %cst_110 = arith.constant 1.000000e+00 : f32
    %173 = vector.broadcast %cst_110 : f32 to vector<2x32xf32>
    %174 = arith.addf %173, %172 : vector<2x32xf32>
    %175 = arith.divf %173, %174 : vector<2x32xf32>
    %c1_111 = arith.constant 1 : index
    %c0_112 = arith.constant 0 : index
    %c0_113 = arith.constant 0 : index
    %176 = vector.load %arg26[%c1_111, %c0_112, %c0_113] : memref<3x8x32xf32, #tpu.memory_space<vmem>>, vector<1x8x32xf32>
    %177 = vector.shape_cast %176 : vector<1x8x32xf32> to vector<8x32xf32>
    %cst_114 = arith.constant dense<0.000000e+00> : vector<2x32xf32>
    %178 = tpu.matmul %153, %177, %cst_114 {dimension_numbers = #tpu.dot_dimension_numbers<[1], [0], [0], [1], [0, 0, 1, 1], [], []>} : vector<2x8xf32>, vector<8x32xf32>, vector<2x32xf32> -> vector<2x32xf32>
    %c1_115 = arith.constant 1 : index
    %c0_116 = arith.constant 0 : index
    %c0_117 = arith.constant 0 : index
    %179 = vector.load %arg28[%c1_115, %c0_116, %c0_117] : memref<3x1x32xf32, #tpu.memory_space<vmem>>, vector<1x1x32xf32>
    %180 = vector.shape_cast %179 : vector<1x1x32xf32> to vector<1x32xf32>
    %181 = vector.broadcast %180 : vector<1x32xf32> to vector<2x32xf32>
    %182 = arith.addf %178, %181 : vector<2x32xf32>
    %c1_118 = arith.constant 1 : index
    %c0_119 = arith.constant 0 : index
    %c0_120 = arith.constant 0 : index
    %183 = vector.load %arg27[%c1_118, %c0_119, %c0_120] : memref<3x32x32xf32, #tpu.memory_space<vmem>>, vector<1x32x32xf32>
    %184 = vector.shape_cast %183 : vector<1x32x32xf32> to vector<32x32xf32>
    %cst_121 = arith.constant dense<0.000000e+00> : vector<2x32xf32>
    %185 = tpu.matmul %154, %184, %cst_121 {dimension_numbers = #tpu.dot_dimension_numbers<[1], [0], [0], [1], [0, 0, 1, 1], [], []>} : vector<2x32xf32>, vector<32x32xf32>, vector<2x32xf32> -> vector<2x32xf32>
    %186 = arith.addf %182, %185 : vector<2x32xf32>
    %c1_122 = arith.constant 1 : index
    %c0_123 = arith.constant 0 : index
    %c0_124 = arith.constant 0 : index
    %187 = vector.load %arg29[%c1_122, %c0_123, %c0_124] : memref<3x1x32xf32, #tpu.memory_space<vmem>>, vector<1x1x32xf32>
    %188 = vector.shape_cast %187 : vector<1x1x32xf32> to vector<1x32xf32>
    %189 = vector.broadcast %188 : vector<1x32xf32> to vector<2x32xf32>
    %190 = arith.addf %186, %189 : vector<2x32xf32>
    %191 = arith.negf %190 : vector<2x32xf32>
    %192 = math.exp %191 : vector<2x32xf32>
    %cst_125 = arith.constant 1.000000e+00 : f32
    %193 = vector.broadcast %cst_125 : f32 to vector<2x32xf32>
    %194 = arith.addf %193, %192 : vector<2x32xf32>
    %195 = arith.divf %193, %194 : vector<2x32xf32>
    %c2_126 = arith.constant 2 : index
    %c0_127 = arith.constant 0 : index
    %c0_128 = arith.constant 0 : index
    %196 = vector.load %arg26[%c2_126, %c0_127, %c0_128] : memref<3x8x32xf32, #tpu.memory_space<vmem>>, vector<1x8x32xf32>
    %197 = vector.shape_cast %196 : vector<1x8x32xf32> to vector<8x32xf32>
    %cst_129 = arith.constant dense<0.000000e+00> : vector<2x32xf32>
    %198 = tpu.matmul %153, %197, %cst_129 {dimension_numbers = #tpu.dot_dimension_numbers<[1], [0], [0], [1], [0, 0, 1, 1], [], []>} : vector<2x8xf32>, vector<8x32xf32>, vector<2x32xf32> -> vector<2x32xf32>
    %c2_130 = arith.constant 2 : index
    %c0_131 = arith.constant 0 : index
    %c0_132 = arith.constant 0 : index
    %199 = vector.load %arg28[%c2_130, %c0_131, %c0_132] : memref<3x1x32xf32, #tpu.memory_space<vmem>>, vector<1x1x32xf32>
    %200 = vector.shape_cast %199 : vector<1x1x32xf32> to vector<1x32xf32>
    %201 = vector.broadcast %200 : vector<1x32xf32> to vector<2x32xf32>
    %202 = arith.addf %198, %201 : vector<2x32xf32>
    %c2_133 = arith.constant 2 : index
    %c0_134 = arith.constant 0 : index
    %c0_135 = arith.constant 0 : index
    %203 = vector.load %arg27[%c2_133, %c0_134, %c0_135] : memref<3x32x32xf32, #tpu.memory_space<vmem>>, vector<1x32x32xf32>
    %204 = vector.shape_cast %203 : vector<1x32x32xf32> to vector<32x32xf32>
    %cst_136 = arith.constant dense<0.000000e+00> : vector<2x32xf32>
    %205 = tpu.matmul %154, %204, %cst_136 {dimension_numbers = #tpu.dot_dimension_numbers<[1], [0], [0], [1], [0, 0, 1, 1], [], []>} : vector<2x32xf32>, vector<32x32xf32>, vector<2x32xf32> -> vector<2x32xf32>
    %c2_137 = arith.constant 2 : index
    %c0_138 = arith.constant 0 : index
    %c0_139 = arith.constant 0 : index
    %206 = vector.load %arg29[%c2_137, %c0_138, %c0_139] : memref<3x1x32xf32, #tpu.memory_space<vmem>>, vector<1x1x32xf32>
    %207 = vector.shape_cast %206 : vector<1x1x32xf32> to vector<1x32xf32>
    %208 = vector.broadcast %207 : vector<1x32xf32> to vector<2x32xf32>
    %209 = arith.addf %205, %208 : vector<2x32xf32>
    %210 = arith.mulf %175, %209 : vector<2x32xf32>
    %211 = arith.addf %202, %210 : vector<2x32xf32>
    %212 = math.tanh %211 : vector<2x32xf32>
    %cst_140 = arith.constant 1.000000e+00 : f32
    %213 = vector.broadcast %cst_140 : f32 to vector<2x32xf32>
    %214 = arith.subf %213, %195 : vector<2x32xf32>
    %215 = arith.mulf %214, %212 : vector<2x32xf32>
    %216 = arith.mulf %195, %154 : vector<2x32xf32>
    %217 = arith.addf %215, %216 : vector<2x32xf32>
    %c0_141 = arith.constant 0 : index
    %c0_142 = arith.constant 0 : index
    %c0_143 = arith.constant 0 : index
    %218 = vector.load %arg30[%c0_141, %c0_142, %c0_143] : memref<3x32x32xf32, #tpu.memory_space<vmem>>, vector<1x32x32xf32>
    %219 = vector.shape_cast %218 : vector<1x32x32xf32> to vector<32x32xf32>
    %cst_144 = arith.constant dense<0.000000e+00> : vector<2x32xf32>
    %220 = tpu.matmul %217, %219, %cst_144 {dimension_numbers = #tpu.dot_dimension_numbers<[1], [0], [0], [1], [0, 0, 1, 1], [], []>} : vector<2x32xf32>, vector<32x32xf32>, vector<2x32xf32> -> vector<2x32xf32>
    %c0_145 = arith.constant 0 : index
    %c0_146 = arith.constant 0 : index
    %c0_147 = arith.constant 0 : index
    %221 = vector.load %arg32[%c0_145, %c0_146, %c0_147] : memref<3x1x32xf32, #tpu.memory_space<vmem>>, vector<1x1x32xf32>
    %222 = vector.shape_cast %221 : vector<1x1x32xf32> to vector<1x32xf32>
    %223 = vector.broadcast %222 : vector<1x32xf32> to vector<2x32xf32>
    %224 = arith.addf %220, %223 : vector<2x32xf32>
    %c0_148 = arith.constant 0 : index
    %c0_149 = arith.constant 0 : index
    %c0_150 = arith.constant 0 : index
    %225 = vector.load %arg31[%c0_148, %c0_149, %c0_150] : memref<3x32x32xf32, #tpu.memory_space<vmem>>, vector<1x32x32xf32>
    %226 = vector.shape_cast %225 : vector<1x32x32xf32> to vector<32x32xf32>
    %cst_151 = arith.constant dense<0.000000e+00> : vector<2x32xf32>
    %227 = tpu.matmul %155, %226, %cst_151 {dimension_numbers = #tpu.dot_dimension_numbers<[1], [0], [0], [1], [0, 0, 1, 1], [], []>} : vector<2x32xf32>, vector<32x32xf32>, vector<2x32xf32> -> vector<2x32xf32>
    %228 = arith.addf %224, %227 : vector<2x32xf32>
    %c0_152 = arith.constant 0 : index
    %c0_153 = arith.constant 0 : index
    %c0_154 = arith.constant 0 : index
    %229 = vector.load %arg33[%c0_152, %c0_153, %c0_154] : memref<3x1x32xf32, #tpu.memory_space<vmem>>, vector<1x1x32xf32>
    %230 = vector.shape_cast %229 : vector<1x1x32xf32> to vector<1x32xf32>
    %231 = vector.broadcast %230 : vector<1x32xf32> to vector<2x32xf32>
    %232 = arith.addf %228, %231 : vector<2x32xf32>
    %233 = arith.negf %232 : vector<2x32xf32>
    %234 = math.exp %233 : vector<2x32xf32>
    %cst_155 = arith.constant 1.000000e+00 : f32
    %235 = vector.broadcast %cst_155 : f32 to vector<2x32xf32>
    %236 = arith.addf %235, %234 : vector<2x32xf32>
    %237 = arith.divf %235, %236 : vector<2x32xf32>
    %c1_156 = arith.constant 1 : index
    %c0_157 = arith.constant 0 : index
    %c0_158 = arith.constant 0 : index
    %238 = vector.load %arg30[%c1_156, %c0_157, %c0_158] : memref<3x32x32xf32, #tpu.memory_space<vmem>>, vector<1x32x32xf32>
    %239 = vector.shape_cast %238 : vector<1x32x32xf32> to vector<32x32xf32>
    %cst_159 = arith.constant dense<0.000000e+00> : vector<2x32xf32>
    %240 = tpu.matmul %217, %239, %cst_159 {dimension_numbers = #tpu.dot_dimension_numbers<[1], [0], [0], [1], [0, 0, 1, 1], [], []>} : vector<2x32xf32>, vector<32x32xf32>, vector<2x32xf32> -> vector<2x32xf32>
    %c1_160 = arith.constant 1 : index
    %c0_161 = arith.constant 0 : index
    %c0_162 = arith.constant 0 : index
    %241 = vector.load %arg32[%c1_160, %c0_161, %c0_162] : memref<3x1x32xf32, #tpu.memory_space<vmem>>, vector<1x1x32xf32>
    %242 = vector.shape_cast %241 : vector<1x1x32xf32> to vector<1x32xf32>
    %243 = vector.broadcast %242 : vector<1x32xf32> to vector<2x32xf32>
    %244 = arith.addf %240, %243 : vector<2x32xf32>
    %c1_163 = arith.constant 1 : index
    %c0_164 = arith.constant 0 : index
    %c0_165 = arith.constant 0 : index
    %245 = vector.load %arg31[%c1_163, %c0_164, %c0_165] : memref<3x32x32xf32, #tpu.memory_space<vmem>>, vector<1x32x32xf32>
    %246 = vector.shape_cast %245 : vector<1x32x32xf32> to vector<32x32xf32>
    %cst_166 = arith.constant dense<0.000000e+00> : vector<2x32xf32>
    %247 = tpu.matmul %155, %246, %cst_166 {dimension_numbers = #tpu.dot_dimension_numbers<[1], [0], [0], [1], [0, 0, 1, 1], [], []>} : vector<2x32xf32>, vector<32x32xf32>, vector<2x32xf32> -> vector<2x32xf32>
    %248 = arith.addf %244, %247 : vector<2x32xf32>
    %c1_167 = arith.constant 1 : index
    %c0_168 = arith.constant 0 : index
    %c0_169 = arith.constant 0 : index
    %249 = vector.load %arg33[%c1_167, %c0_168, %c0_169] : memref<3x1x32xf32, #tpu.memory_space<vmem>>, vector<1x1x32xf32>
    %250 = vector.shape_cast %249 : vector<1x1x32xf32> to vector<1x32xf32>
    %251 = vector.broadcast %250 : vector<1x32xf32> to vector<2x32xf32>
    %252 = arith.addf %248, %251 : vector<2x32xf32>
    %253 = arith.negf %252 : vector<2x32xf32>
    %254 = math.exp %253 : vector<2x32xf32>
    %cst_170 = arith.constant 1.000000e+00 : f32
    %255 = vector.broadcast %cst_170 : f32 to vector<2x32xf32>
    %256 = arith.addf %255, %254 : vector<2x32xf32>
    %257 = arith.divf %255, %256 : vector<2x32xf32>
    %c2_171 = arith.constant 2 : index
    %c0_172 = arith.constant 0 : index
    %c0_173 = arith.constant 0 : index
    %258 = vector.load %arg30[%c2_171, %c0_172, %c0_173] : memref<3x32x32xf32, #tpu.memory_space<vmem>>, vector<1x32x32xf32>
    %259 = vector.shape_cast %258 : vector<1x32x32xf32> to vector<32x32xf32>
    %cst_174 = arith.constant dense<0.000000e+00> : vector<2x32xf32>
    %260 = tpu.matmul %217, %259, %cst_174 {dimension_numbers = #tpu.dot_dimension_numbers<[1], [0], [0], [1], [0, 0, 1, 1], [], []>} : vector<2x32xf32>, vector<32x32xf32>, vector<2x32xf32> -> vector<2x32xf32>
    %c2_175 = arith.constant 2 : index
    %c0_176 = arith.constant 0 : index
    %c0_177 = arith.constant 0 : index
    %261 = vector.load %arg32[%c2_175, %c0_176, %c0_177] : memref<3x1x32xf32, #tpu.memory_space<vmem>>, vector<1x1x32xf32>
    %262 = vector.shape_cast %261 : vector<1x1x32xf32> to vector<1x32xf32>
    %263 = vector.broadcast %262 : vector<1x32xf32> to vector<2x32xf32>
    %264 = arith.addf %260, %263 : vector<2x32xf32>
    %c2_178 = arith.constant 2 : index
    %c0_179 = arith.constant 0 : index
    %c0_180 = arith.constant 0 : index
    %265 = vector.load %arg31[%c2_178, %c0_179, %c0_180] : memref<3x32x32xf32, #tpu.memory_space<vmem>>, vector<1x32x32xf32>
    %266 = vector.shape_cast %265 : vector<1x32x32xf32> to vector<32x32xf32>
    %cst_181 = arith.constant dense<0.000000e+00> : vector<2x32xf32>
    %267 = tpu.matmul %155, %266, %cst_181 {dimension_numbers = #tpu.dot_dimension_numbers<[1], [0], [0], [1], [0, 0, 1, 1], [], []>} : vector<2x32xf32>, vector<32x32xf32>, vector<2x32xf32> -> vector<2x32xf32>
    %c2_182 = arith.constant 2 : index
    %c0_183 = arith.constant 0 : index
    %c0_184 = arith.constant 0 : index
    %268 = vector.load %arg33[%c2_182, %c0_183, %c0_184] : memref<3x1x32xf32, #tpu.memory_space<vmem>>, vector<1x1x32xf32>
    %269 = vector.shape_cast %268 : vector<1x1x32xf32> to vector<1x32xf32>
    %270 = vector.broadcast %269 : vector<1x32xf32> to vector<2x32xf32>
    %271 = arith.addf %267, %270 : vector<2x32xf32>
    %272 = arith.mulf %237, %271 : vector<2x32xf32>
    %273 = arith.addf %264, %272 : vector<2x32xf32>
    %274 = math.tanh %273 : vector<2x32xf32>
    %cst_185 = arith.constant 1.000000e+00 : f32
    %275 = vector.broadcast %cst_185 : f32 to vector<2x32xf32>
    %276 = arith.subf %275, %257 : vector<2x32xf32>
    %277 = arith.mulf %276, %274 : vector<2x32xf32>
    %278 = arith.mulf %257, %155 : vector<2x32xf32>
    %279 = arith.addf %277, %278 : vector<2x32xf32>
    %c0_186 = arith.constant 0 : index
    %c0_187 = arith.constant 0 : index
    %280 = vector.load %arg42[%c0_186, %c0_187] : memref<2x32xf32, #tpu.memory_space<vmem>>, vector<2x32xf32>
    tpu.vector_store %arg42[%c0_186, %c0_187], %217 {strides = array<i32>} : memref<2x32xf32, #tpu.memory_space<vmem>>, vector<2x32xf32>,
    %c0_188 = arith.constant 0 : index
    %c0_189 = arith.constant 0 : index
    %281 = vector.load %arg43[%c0_188, %c0_189] : memref<2x32xf32, #tpu.memory_space<vmem>>, vector<2x32xf32>
    tpu.vector_store %arg43[%c0_188, %c0_189], %279 {strides = array<i32>} : memref<2x32xf32, #tpu.memory_space<vmem>>, vector<2x32xf32>,
    %c0_190 = arith.constant 0 : index
    %c0_191 = arith.constant 0 : index
    %282 = vector.load %arg34[%c0_190, %c0_191] : memref<32x8xf32, #tpu.memory_space<vmem>>, vector<32x8xf32>
    %cst_192 = arith.constant dense<0.000000e+00> : vector<2x8xf32>
    %283 = tpu.matmul %279, %282, %cst_192 {dimension_numbers = #tpu.dot_dimension_numbers<[1], [0], [0], [1], [0, 0, 1, 1], [], []>} : vector<2x32xf32>, vector<32x8xf32>, vector<2x8xf32> -> vector<2x8xf32>
    %c0_193 = arith.constant 0 : index
    %c0_194 = arith.constant 0 : index
    %284 = vector.load %arg35[%c0_193, %c0_194] : memref<1x8xf32, #tpu.memory_space<vmem>>, vector<1x8xf32>
    %285 = vector.broadcast %284 : vector<1x8xf32> to vector<2x8xf32>
    %286 = arith.addf %283, %285 : vector<2x8xf32>
    %287 = arith.addf %286, %153 : vector<2x8xf32>
    %c0_195 = arith.constant 0 : index
    %c0_196 = arith.constant 0 : index
    %288 = vector.load %arg36[%c0_195, %c0_196] : memref<8x4xf32, #tpu.memory_space<vmem>>, vector<8x4xf32>
    %cst_197 = arith.constant dense<0.000000e+00> : vector<2x4xf32>
    %289 = tpu.matmul %287, %288, %cst_197 {dimension_numbers = #tpu.dot_dimension_numbers<[1], [0], [0], [1], [0, 0, 1, 1], [], []>} : vector<2x8xf32>, vector<8x4xf32>, vector<2x4xf32> -> vector<2x4xf32>
    %c0_198 = arith.constant 0 : index
    %c0_199 = arith.constant 0 : index
    %290 = vector.load %arg37[%c0_198, %c0_199] : memref<1x4xf32, #tpu.memory_space<vmem>>, vector<1x4xf32>
    %291 = vector.broadcast %290 : vector<1x4xf32> to vector<2x4xf32>
    %292 = arith.addf %289, %291 : vector<2x4xf32>
    %c0_200 = arith.constant 0 : index
    %c0_201 = arith.constant 0 : index
    %293 = vector.load %arg36[%c0_200, %c0_201] : memref<8x4xf32, #tpu.memory_space<vmem>>, vector<8x4xf32>
    %cst_202 = arith.constant dense<0.000000e+00> : vector<2x4xf32>
    %294 = tpu.matmul %153, %293, %cst_202 {dimension_numbers = #tpu.dot_dimension_numbers<[1], [0], [0], [1], [0, 0, 1, 1], [], []>} : vector<2x8xf32>, vector<8x4xf32>, vector<2x4xf32> -> vector<2x4xf32>
    %c0_203 = arith.constant 0 : index
    %c0_204 = arith.constant 0 : index
    %295 = vector.load %arg37[%c0_203, %c0_204] : memref<1x4xf32, #tpu.memory_space<vmem>>, vector<1x4xf32>
    %296 = vector.broadcast %295 : vector<1x4xf32> to vector<2x4xf32>
    %297 = arith.addf %294, %296 : vector<2x4xf32>
    %c0_205 = arith.constant 0 : index
    %c0_206 = arith.constant 0 : index
    %c0_207 = arith.constant 0 : index
    %298 = vector.load %arg38[%c0_205, %c0_206, %c0_207] : memref<1x2x4xf32, #tpu.memory_space<vmem>>, vector<1x2x4xf32>
    %299 = vector.shape_cast %298 : vector<1x2x4xf32> to vector<2x4xf32>
    %300 = vector.shape_cast %297 : vector<2x4xf32> to vector<1x2x4xf32>
    tpu.vector_store %arg38[%c0_205, %c0_206, %c0_207], %300 {strides = array<i32>} : memref<1x2x4xf32, #tpu.memory_space<vmem>>, vector<1x2x4xf32>,
    %c0_208 = arith.constant 0 : index
    %c0_209 = arith.constant 0 : index
    %c0_210 = arith.constant 0 : index
    %301 = vector.load %arg39[%c0_208, %c0_209, %c0_210] : memref<1x2x4xf32, #tpu.memory_space<vmem>>, vector<1x2x4xf32>
    %302 = vector.shape_cast %301 : vector<1x2x4xf32> to vector<2x4xf32>
    %303 = vector.shape_cast %292 : vector<2x4xf32> to vector<1x2x4xf32>
    tpu.vector_store %arg39[%c0_208, %c0_209, %c0_210], %303 {strides = array<i32>} : memref<1x2x4xf32, #tpu.memory_space<vmem>>, vector<1x2x4xf32>,
    %c0_211 = arith.constant 0 : index
    %c0_212 = arith.constant 0 : index
    %c0_213 = arith.constant 0 : index
    %304 = vector.load %arg40[%c0_211, %c0_212, %c0_213] : memref<1x2x4xf32, #tpu.memory_space<vmem>>, vector<1x2x4xf32>
    %305 = vector.shape_cast %304 : vector<1x2x4xf32> to vector<2x4xf32>
    %306 = vector.shape_cast %3 : vector<2x4xf32> to vector<1x2x4xf32>
    tpu.vector_store %arg40[%c0_211, %c0_212, %c0_213], %306 {strides = array<i32>} : memref<1x2x4xf32, #tpu.memory_space<vmem>>, vector<1x2x4xf32>,
    %307 = arith.index_cast %arg0 : i32 to index
    %308 = memref.load %arg1[%307] : memref<5xf32, #tpu.memory_space<smem>>
    %c0_214 = arith.constant 0 : index
    %c0_215 = arith.constant 0 : index
    %c0_216 = arith.constant 0 : index
    %309 = vector.load %arg5[%c0_214, %c0_215, %c0_216] : memref<1x2x4xf32, #tpu.memory_space<vmem>>, vector<1x2x4xf32>
    %310 = vector.shape_cast %309 : vector<1x2x4xf32> to vector<2x4xf32>
    %311 = vector.broadcast %308 : f32 to vector<2x4xf32>
    %312 = arith.mulf %311, %310 : vector<2x4xf32>
    %313 = arith.addf %292, %312 : vector<2x4xf32>
    %314 = arith.index_cast %arg0 : i32 to index
    %315 = memref.load %arg2[%314] : memref<5xf32, #tpu.memory_space<smem>>
    %316 = vector.broadcast %315 : f32 to vector<2x4xf32>
    %317 = arith.addf %313, %316 : vector<2x4xf32>
    %c0_217 = arith.constant 0 : index
    %c0_218 = arith.constant 0 : index
    %318 = vector.load %arg41[%c0_217, %c0_218] : memref<2x4xf32, #tpu.memory_space<vmem>>, vector<2x4xf32>
    tpu.vector_store %arg41[%c0_217, %c0_218], %317 {strides = array<i32>} : memref<2x4xf32, #tpu.memory_space<vmem>>, vector<2x4xf32>,
    return
  }
  func.func @transform_0(%arg0: i32) -> i32 {
    %c0_i32 = arith.constant 0 : i32
    %c0_i32_0 = arith.constant 0 : i32
    return %c0_i32 : i32
  }
  func.func @transform_1(%arg0: i32) -> i32 {
    %c0_i32 = arith.constant 0 : i32
    %c0_i32_0 = arith.constant 0 : i32
    return %c0_i32 : i32
  }
  func.func @transform_2(%arg0: i32) -> (i32, i32, i32) {
    %c0_i32 = arith.constant 0 : i32
    %c0_i32_0 = arith.constant 0 : i32
    %c0_i32_1 = arith.constant 0 : i32
    %c0_i32_2 = arith.constant 0 : i32
    return %c0_i32, %c0_i32_0, %c0_i32_1 : i32, i32, i32
  }
  func.func @transform_3(%arg0: i32) -> (i32, i32) {
    %c0_i32 = arith.constant 0 : i32
    %c0_i32_0 = arith.constant 0 : i32
    %c0_i32_1 = arith.constant 0 : i32
    return %c0_i32, %c0_i32_0 : i32, i32
  }
  func.func @transform_4(%arg0: i32) -> (i32, i32, i32) {
    %c0_i32 = arith.constant 0 : i32
    %c0_i32_0 = arith.constant 0 : i32
    %c0_i32_1 = arith.constant 0 : i32
    return %arg0, %c0_i32, %c0_i32_0 : i32, i32, i32
  }
  func.func @transform_5(%arg0: i32) -> (i32, i32) {
    %c0_i32 = arith.constant 0 : i32
    %c0_i32_0 = arith.constant 0 : i32
    %c0_i32_1 = arith.constant 0 : i32
    return %c0_i32, %c0_i32_0 : i32, i32
  }
  func.func @transform_6(%arg0: i32) -> (i32, i32) {
    %c0_i32 = arith.constant 0 : i32
    %c0_i32_0 = arith.constant 0 : i32
    %c0_i32_1 = arith.constant 0 : i32
    return %c0_i32, %c0_i32_0 : i32, i32
  }
  func.func @transform_7(%arg0: i32) -> (i32, i32, i32) {
    %c0_i32 = arith.constant 0 : i32
    %c0_i32_0 = arith.constant 0 : i32
    %c0_i32_1 = arith.constant 0 : i32
    %c0_i32_2 = arith.constant 0 : i32
    return %c0_i32, %c0_i32_0, %c0_i32_1 : i32, i32, i32
  }
  func.func @transform_8(%arg0: i32) -> (i32, i32, i32) {
    %c0_i32 = arith.constant 0 : i32
    %c0_i32_0 = arith.constant 0 : i32
    %c0_i32_1 = arith.constant 0 : i32
    %c0_i32_2 = arith.constant 0 : i32
    return %c0_i32, %c0_i32_0, %c0_i32_1 : i32, i32, i32
  }
  func.func @transform_9(%arg0: i32) -> (i32, i32) {
    %c0_i32 = arith.constant 0 : i32
    %c0_i32_0 = arith.constant 0 : i32
    %c0_i32_1 = arith.constant 0 : i32
    return %c0_i32, %c0_i32_0 : i32, i32
  }
  func.func @transform_10(%arg0: i32) -> (i32, i32) {
    %c0_i32 = arith.constant 0 : i32
    %c0_i32_0 = arith.constant 0 : i32
    %c0_i32_1 = arith.constant 0 : i32
    return %c0_i32, %c0_i32_0 : i32, i32
  }
  func.func @transform_11(%arg0: i32) -> (i32, i32) {
    %c0_i32 = arith.constant 0 : i32
    %c0_i32_0 = arith.constant 0 : i32
    %c0_i32_1 = arith.constant 0 : i32
    return %c0_i32, %c0_i32_0 : i32, i32
  }
  func.func @transform_12(%arg0: i32) -> (i32, i32) {
    %c0_i32 = arith.constant 0 : i32
    %c0_i32_0 = arith.constant 0 : i32
    %c0_i32_1 = arith.constant 0 : i32
    return %c0_i32, %c0_i32_0 : i32, i32
  }
  func.func @transform_13(%arg0: i32) -> (i32, i32) {
    %c0_i32 = arith.constant 0 : i32
    %c0_i32_0 = arith.constant 0 : i32
    %c0_i32_1 = arith.constant 0 : i32
    return %c0_i32, %c0_i32_0 : i32, i32
  }
  func.func @transform_14(%arg0: i32) -> (i32, i32) {
    %c0_i32 = arith.constant 0 : i32
    %c0_i32_0 = arith.constant 0 : i32
    %c0_i32_1 = arith.constant 0 : i32
    return %c0_i32, %c0_i32_0 : i32, i32
  }
  func.func @transform_15(%arg0: i32) -> (i32, i32) {
    %c0_i32 = arith.constant 0 : i32
    %c0_i32_0 = arith.constant 0 : i32
    %c0_i32_1 = arith.constant 0 : i32
    return %c0_i32, %c0_i32_0 : i32, i32
  }
  func.func @transform_16(%arg0: i32) -> (i32, i32) {
    %c0_i32 = arith.constant 0 : i32
    %c0_i32_0 = arith.constant 0 : i32
    %c0_i32_1 = arith.constant 0 : i32
    return %c0_i32, %c0_i32_0 : i32, i32
  }
  func.func @transform_17(%arg0: i32) -> (i32, i32) {
    %c0_i32 = arith.constant 0 : i32
    %c0_i32_0 = arith.constant 0 : i32
    %c0_i32_1 = arith.constant 0 : i32
    return %c0_i32, %c0_i32_0 : i32, i32
  }
  func.func @transform_18(%arg0: i32) -> (i32, i32) {
    %c0_i32 = arith.constant 0 : i32
    %c0_i32_0 = arith.constant 0 : i32
    %c0_i32_1 = arith.constant 0 : i32
    return %c0_i32, %c0_i32_0 : i32, i32
  }
  func.func @transform_19(%arg0: i32) -> (i32, i32) {
    %c0_i32 = arith.constant 0 : i32
    %c0_i32_0 = arith.constant 0 : i32
    %c0_i32_1 = arith.constant 0 : i32
    return %c0_i32, %c0_i32_0 : i32, i32
  }
  func.func @transform_20(%arg0: i32) -> (i32, i32) {
    %c0_i32 = arith.constant 0 : i32
    %c0_i32_0 = arith.constant 0 : i32
    %c0_i32_1 = arith.constant 0 : i32
    return %c0_i32, %c0_i32_0 : i32, i32
  }
  func.func @transform_21(%arg0: i32) -> (i32, i32) {
    %c0_i32 = arith.constant 0 : i32
    %c0_i32_0 = arith.constant 0 : i32
    %c0_i32_1 = arith.constant 0 : i32
    return %c0_i32, %c0_i32_0 : i32, i32
  }
  func.func @transform_22(%arg0: i32) -> (i32, i32) {
    %c0_i32 = arith.constant 0 : i32
    %c0_i32_0 = arith.constant 0 : i32
    %c0_i32_1 = arith.constant 0 : i32
    return %c0_i32, %c0_i32_0 : i32, i32
  }
  func.func @transform_23(%arg0: i32) -> (i32, i32) {
    %c0_i32 = arith.constant 0 : i32
    %c0_i32_0 = arith.constant 0 : i32
    %c0_i32_1 = arith.constant 0 : i32
    return %c0_i32, %c0_i32_0 : i32, i32
  }
  func.func @transform_24(%arg0: i32) -> (i32, i32) {
    %c0_i32 = arith.constant 0 : i32
    %c0_i32_0 = arith.constant 0 : i32
    %c0_i32_1 = arith.constant 0 : i32
    return %c0_i32, %c0_i32_0 : i32, i32
  }
  func.func @transform_25(%arg0: i32) -> (i32, i32, i32) {
    %c0_i32 = arith.constant 0 : i32
    %c0_i32_0 = arith.constant 0 : i32
    %c0_i32_1 = arith.constant 0 : i32
    %c0_i32_2 = arith.constant 0 : i32
    return %c0_i32, %c0_i32_0, %c0_i32_1 : i32, i32, i32
  }
  func.func @transform_26(%arg0: i32) -> (i32, i32, i32) {
    %c0_i32 = arith.constant 0 : i32
    %c0_i32_0 = arith.constant 0 : i32
    %c0_i32_1 = arith.constant 0 : i32
    %c0_i32_2 = arith.constant 0 : i32
    return %c0_i32, %c0_i32_0, %c0_i32_1 : i32, i32, i32
  }
  func.func @transform_27(%arg0: i32) -> (i32, i32, i32) {
    %c0_i32 = arith.constant 0 : i32
    %c0_i32_0 = arith.constant 0 : i32
    %c0_i32_1 = arith.constant 0 : i32
    %c0_i32_2 = arith.constant 0 : i32
    return %c0_i32, %c0_i32_0, %c0_i32_1 : i32, i32, i32
  }
  func.func @transform_28(%arg0: i32) -> (i32, i32, i32) {
    %c0_i32 = arith.constant 0 : i32
    %c0_i32_0 = arith.constant 0 : i32
    %c0_i32_1 = arith.constant 0 : i32
    %c0_i32_2 = arith.constant 0 : i32
    return %c0_i32, %c0_i32_0, %c0_i32_1 : i32, i32, i32
  }
  func.func @transform_29(%arg0: i32) -> (i32, i32, i32) {
    %c0_i32 = arith.constant 0 : i32
    %c0_i32_0 = arith.constant 0 : i32
    %c0_i32_1 = arith.constant 0 : i32
    %c0_i32_2 = arith.constant 0 : i32
    return %c0_i32, %c0_i32_0, %c0_i32_1 : i32, i32, i32
  }
  func.func @transform_30(%arg0: i32) -> (i32, i32, i32) {
    %c0_i32 = arith.constant 0 : i32
    %c0_i32_0 = arith.constant 0 : i32
    %c0_i32_1 = arith.constant 0 : i32
    %c0_i32_2 = arith.constant 0 : i32
    return %c0_i32, %c0_i32_0, %c0_i32_1 : i32, i32, i32
  }
  func.func @transform_31(%arg0: i32) -> (i32, i32, i32) {
    %c0_i32 = arith.constant 0 : i32
    %c0_i32_0 = arith.constant 0 : i32
    %c0_i32_1 = arith.constant 0 : i32
    %c0_i32_2 = arith.constant 0 : i32
    return %c0_i32, %c0_i32_0, %c0_i32_1 : i32, i32, i32
  }
  func.func @transform_32(%arg0: i32) -> (i32, i32, i32) {
    %c0_i32 = arith.constant 0 : i32
    %c0_i32_0 = arith.constant 0 : i32
    %c0_i32_1 = arith.constant 0 : i32
    %c0_i32_2 = arith.constant 0 : i32
    return %c0_i32, %c0_i32_0, %c0_i32_1 : i32, i32, i32
  }
  func.func @transform_33(%arg0: i32) -> (i32, i32) {
    %c0_i32 = arith.constant 0 : i32
    %c0_i32_0 = arith.constant 0 : i32
    %c0_i32_1 = arith.constant 0 : i32
    return %c0_i32, %c0_i32_0 : i32, i32
  }
  func.func @transform_34(%arg0: i32) -> (i32, i32) {
    %c0_i32 = arith.constant 0 : i32
    %c0_i32_0 = arith.constant 0 : i32
    %c0_i32_1 = arith.constant 0 : i32
    return %c0_i32, %c0_i32_0 : i32, i32
  }
  func.func @transform_35(%arg0: i32) -> (i32, i32) {
    %c0_i32 = arith.constant 0 : i32
    %c0_i32_0 = arith.constant 0 : i32
    %c0_i32_1 = arith.constant 0 : i32
    return %c0_i32, %c0_i32_0 : i32, i32
  }
  func.func @transform_36(%arg0: i32) -> (i32, i32) {
    %c0_i32 = arith.constant 0 : i32
    %c0_i32_0 = arith.constant 0 : i32
    %c0_i32_1 = arith.constant 0 : i32
    return %c0_i32, %c0_i32_0 : i32, i32
  }
  func.func @transform_37(%arg0: i32) -> (i32, i32, i32) {
    %c0_i32 = arith.constant 0 : i32
    %c0_i32_0 = arith.constant 0 : i32
    %c0_i32_1 = arith.constant 0 : i32
    return %arg0, %c0_i32, %c0_i32_0 : i32, i32, i32
  }
  func.func @transform_38(%arg0: i32) -> (i32, i32, i32) {
    %c0_i32 = arith.constant 0 : i32
    %c0_i32_0 = arith.constant 0 : i32
    %c0_i32_1 = arith.constant 0 : i32
    return %arg0, %c0_i32, %c0_i32_0 : i32, i32, i32
  }
  func.func @transform_39(%arg0: i32) -> (i32, i32, i32) {
    %c0_i32 = arith.constant 0 : i32
    %c0_i32_0 = arith.constant 0 : i32
    %c0_i32_1 = arith.constant 0 : i32
    return %arg0, %c0_i32, %c0_i32_0 : i32, i32, i32
  }
}

</mosaic_0001>

<llo_original>
// kernel: tpu_custom_call.1
$region0: #{tpu_custom_call.1}
  #allocation0 [shape = 'u32[]', space=smem, size = 0x4, offset = 0x4, fixed_abs, tag = 'smem constant byte address 0x4 - core index']
  #allocation1 [shape = 'u32[144,128]{1,0:T(1,128)}', space=vmem, size = 0x12000, scoped, tag = 'internal scratch']
  #allocation2 [shape = 'f32[2,4]{1,0:T(2,128)}', space=vmem, size = 0x400, scoped, tag = 'scratch operand']
  #allocation3 [shape = 'f32[2,32]{1,0:T(2,128)}', space=vmem, size = 0x400, scoped, tag = 'scratch operand']
  #allocation4 [shape = 'f32[2,32]{1,0:T(2,128)}', space=vmem, size = 0x400, scoped, tag = 'scratch operand']
  #allocation5 [shape = 'f32[2,11,32]{2,1,0:T(8,128)}', space=vmem, size = 0x4000, scoped, tag = 'scratch operand']
  #allocation6 [shape = 'f32[2,11,32]{2,1,0:T(8,128)}', space=vmem, size = 0x4000, scoped, tag = 'scratch operand']
  %s0 = inlined_call_operand.smem [shape: u32[40], index: -1, kind: input, shape index: {}]
  %s1 = sld [smem:[%s0]]
  %s2 = scalar_lea.smem %s0, 1
  %s3 = sld [smem:[%s2]]
  %s4 = scalar_lea.smem %s0, 2
  %s5 = sld [smem:[%s4]]
  %s6 = scalar_lea.smem %s0, 3
  %s7 = sld [smem:[%s6]]
  %s8 = scalar_lea.smem %s0, 4
  %s9 = sld [smem:[%s8]]
  %s10 = scalar_lea.smem %s0, 5
  %s11 = sld [smem:[%s10]]
  %s12 = scalar_lea.smem %s0, 6
  %s13 = sld [smem:[%s12]]
  %s14 = scalar_lea.smem %s0, 7
  %s15 = sld [smem:[%s14]]
  %s16 = scalar_lea.smem %s0, 8
  %s17 = sld [smem:[%s16]]
  %s18 = scalar_lea.smem %s0, 9
  %s19 = sld [smem:[%s18]]
  %s20 = scalar_lea.smem %s0, 10
  %s21 = sld [smem:[%s20]]
  %s22 = scalar_lea.smem %s0, 11
  %s23 = sld [smem:[%s22]]
  %s24 = scalar_lea.smem %s0, 12
  %s25 = sld [smem:[%s24]]
  %s26 = scalar_lea.smem %s0, 13
  %s27 = sld [smem:[%s26]]
  %s28 = scalar_lea.smem %s0, 14
  %s29 = sld [smem:[%s28]]
  %s30 = scalar_lea.smem %s0, 15
  %s31 = sld [smem:[%s30]]
  %s32 = scalar_lea.smem %s0, 16
  %s33 = sld [smem:[%s32]]
  %s34 = scalar_lea.smem %s0, 17
  %s35 = sld [smem:[%s34]]
  %s36 = scalar_lea.smem %s0, 18
  %s37 = sld [smem:[%s36]]
  %s38 = scalar_lea.smem %s0, 19
  %s39 = sld [smem:[%s38]]
  %s40 = scalar_lea.smem %s0, 20
  %s41 = sld [smem:[%s40]]
  %s42 = scalar_lea.smem %s0, 21
  %s43 = sld [smem:[%s42]]
  %s44 = scalar_lea.smem %s0, 22
  %s45 = sld [smem:[%s44]]
  %s46 = scalar_lea.smem %s0, 23
  %s47 = sld [smem:[%s46]]
  %s48 = scalar_lea.smem %s0, 24
  %s49 = sld [smem:[%s48]]
  %s50 = scalar_lea.smem %s0, 25
  %s51 = sld [smem:[%s50]]
  %s52 = scalar_lea.smem %s0, 26
  %s53 = sld [smem:[%s52]]
  %s54 = scalar_lea.smem %s0, 27
  %s55 = sld [smem:[%s54]]
  %s56 = scalar_lea.smem %s0, 28
  %s57 = sld [smem:[%s56]]
  %s58 = scalar_lea.smem %s0, 29
  %s59 = sld [smem:[%s58]]
  %s60 = scalar_lea.smem %s0, 30
  %s61 = sld [smem:[%s60]]
  %s62 = scalar_lea.smem %s0, 31
  %s63 = sld [smem:[%s62]]
  %s64 = scalar_lea.smem %s0, 32
  %s65 = sld [smem:[%s64]]
  %s66 = scalar_lea.smem %s0, 33
  %s67 = sld [smem:[%s66]]
  %s68 = scalar_lea.smem %s0, 34
  %s69 = sld [smem:[%s68]]
  %s70 = scalar_lea.smem %s0, 35
  %s71 = sld [smem:[%s70]]
  %s72 = scalar_lea.smem %s0, 36
  %s73 = sld [smem:[%s72]]
  %s74 = scalar_lea.smem %s0, 37
  %s75 = sld [smem:[%s74]]
  %s76 = scalar_lea.smem %s0, 38
  %s77 = sld [smem:[%s76]]
  %s78 = scalar_lea.smem %s0, 39
  %s79 = sld [smem:[%s78]]
  %80 = xla_tuple %s75, %s77, %s79
  %s81 = sld [smem:[#allocation0]]
  $region281: #{tpu_custom_call.1} parent=0
    _
  %s83 = ssub.s32 1, %s81
  %s84 = scalar_select 0, %s83, %s81
  $region1: #{tpu_custom_call.1} parent=0
    #allocation7 [shape = 'u8[512]{0}', space=smem, size = 0x200, scoped, tag = 'input window, operand 0, single buffered']
    #allocation8 [shape = 's32[2]{0}', space=sflag, size = 0x8, scoped, tag = 'scoped memory for tpu_custom_call.1']
    #allocation9 [shape = 's32[2]{0}', space=sflag, size = 0x8, scoped, tag = 'scoped memory for tpu_custom_call.1']
    #allocation10 [shape = 'u8[512]{0}', space=smem, size = 0x200, scoped, tag = 'input window, operand 1, single buffered']
    #allocation11 [shape = 's32[1]{0}', space=sflag, size = 0x4, scoped, tag = 'scoped memory for tpu_custom_call.1']
    #allocation12 [shape = 'u8[1024]{0}', space=vmem, size = 0x400, scoped, tag = 'input window, operand 3, single buffered']
    #allocation13 [shape = 'u8[2048]{0}', space=vmem, size = 0x800, scoped, tag = 'input window, operand 5, single buffered']
    #allocation14 [shape = 's32[1]{0}', space=sflag, size = 0x4, scoped, tag = 'scoped memory for tpu_custom_call.1']
    #allocation15 [shape = 'u8[512]{0}', space=vmem, size = 0x400, scoped, tag = 'input window, operand 6, single buffered']
    #allocation16 [shape = 'u8[1536]{0}', space=vmem, size = 0x800, scoped, tag = 'input window, operand 8, single buffered']
    #allocation17 [shape = 's32[1]{0}', space=sflag, size = 0x4, scoped, tag = 'scoped memory for tpu_custom_call.1']
    #allocation18 [shape = 'u8[16384]{0}', space=vmem, size = 0x4000, scoped, tag = 'input window, operand 9, single buffered']
    #allocation19 [shape = 'u8[512]{0}', space=vmem, size = 0x400, scoped, tag = 'input window, operand 10, single buffered']
    #allocation20 [shape = 's32[1]{0}', space=sflag, size = 0x4, scoped, tag = 'scoped memory for tpu_custom_call.1']
    #allocation21 [shape = 'u8[512]{0}', space=vmem, size = 0x400, scoped, tag = 'input window, operand 11, single buffered']
    #allocation22 [shape = 'u8[512]{0}', space=vmem, size = 0x400, scoped, tag = 'input window, operand 12, single buffered']
    #allocation23 [shape = 's32[1]{0}', space=sflag, size = 0x4, scoped, tag = 'scoped memory for tpu_custom_call.1']
    #allocation24 [shape = 'u8[16384]{0}', space=vmem, size = 0x4000, scoped, tag = 'input window, operand 13, single buffered']
    #allocation25 [shape = 'u8[512]{0}', space=vmem, size = 0x400, scoped, tag = 'input window, operand 14, single buffered']
    #allocation26 [shape = 's32[1]{0}', space=sflag, size = 0x4, scoped, tag = 'scoped memory for tpu_custom_call.1']
    #allocation27 [shape = 'u8[512]{0}', space=vmem, size = 0x400, scoped, tag = 'input window, operand 16, single buffered']
    #allocation28 [shape = 'u8[512]{0}', space=vmem, size = 0x400, scoped, tag = 'input window, operand 17, single buffered']
    #allocation29 [shape = 's32[1]{0}', space=sflag, size = 0x4, scoped, tag = 'scoped memory for tpu_custom_call.1']
    #allocation30 [shape = 'u8[512]{0}', space=vmem, size = 0x400, scoped, tag = 'input window, operand 18, single buffered']
    #allocation31 [shape = 'u8[2048]{0}', space=vmem, size = 0x800, scoped, tag = 'input window, operand 20, single buffered']
    #allocation32 [shape = 's32[1]{0}', space=sflag, size = 0x4, scoped, tag = 'scoped memory for tpu_custom_call.1']
    #allocation33 [shape = 'u8[512]{0}', space=vmem, size = 0x400, scoped, tag = 'input window, operand 22, single buffered']
    #allocation34 [shape = 'u8[2048]{0}', space=vmem, size = 0x800, scoped, tag = 'input window, operand 23, single buffered']
    #allocation35 [shape = 's32[1]{0}', space=sflag, size = 0x4, scoped, tag = 'scoped memory for tpu_custom_call.1']
    #allocation36 [shape = 'u8[512]{0}', space=vmem, size = 0x400, scoped, tag = 'input window, operand 24, single buffered']
    #allocation37 [shape = 'u8[49152]{0}', space=vmem, size = 0xc000, scoped, tag = 'input window, operand 30, single buffered']
    #allocation38 [shape = 's32[1]{0}', space=sflag, size = 0x4, scoped, tag = 'scoped memory for tpu_custom_call.1']
    %85 = vsyncpa [#allocation9], 0
    %86 = vsyncpa [#allocation11], 0
    %87 = vsyncpa [#allocation8], 0
    %88 = vsyncpa [#allocation14], 0
    %89 = vsyncpa [#allocation17], 0
    %90 = vsyncpa [#allocation20], 0
    %91 = vsyncpa [#allocation23], 0
    %92 = vsyncpa [#allocation26], 0
    %93 = vsyncpa [#allocation29], 0
    %94 = vsyncpa [#allocation32], 0
    %95 = vsyncpa [#allocation35], 0
    %96 = vsyncpa [#allocation38], 0
    loop: start=0, step=1, limit=7
    $region2: #{tpu_custom_call.1} parent=1 // loop_pre_header
      _
    $region3: #{tpu_custom_call.1} parent=1 // loop_header
      %s98 = sphi 0, %s102
      %p99 = scmp.ge.s32.totalorder %s98, 7
      %s106 = sphi 0, %s106
      %s108 = sphi 0, %s106
      %s109 = sphi 0, %s108
      %s123 = sphi 0, %s109
      %s127 = sphi 0, %s127
      %s129 = sphi 0, %s127
      %s130 = sphi 0, %s129
      %s144 = sphi 0, %s130
      %s148 = sphi 0, %s148
      %s150 = sphi 0, %s148
      %s151 = sphi 0, %s150
      %s165 = sphi 0, %s151
      %s169 = sphi 0, %s169
      %s171 = sphi 0, %s169
      %s172 = sphi 0, %s171
      %s186 = sphi 0, %s172
      %s192 = sphi 0, %s194
      %s195 = sphi 0, %s192
      %s196 = sphi 0, %s195
      %s212 = sphi 0, %s196
      %s216 = sphi 0, %s216
      %s218 = sphi 0, %s216
      %s219 = sphi 0, %s218
      %s233 = sphi 0, %s219
      %s237 = sphi 0, %s237
      %s239 = sphi 0, %s237
      %s240 = sphi 0, %s239
      %s254 = sphi 0, %s240
      %s258 = sphi 0, %s258
      %s260 = sphi 0, %s258
      %s261 = sphi 0, %s260
      %s275 = sphi 0, %s261
      %s279 = sphi 0, %s279
      %s281 = sphi 0, %s279
      %s282 = sphi 0, %s281
      %s296 = sphi 0, %s282
      %s300 = sphi 0, %s300
      %s302 = sphi 0, %s300
      %s303 = sphi 0, %s302
      %s317 = sphi 0, %s303
      %s321 = sphi 0, %s321
      %s323 = sphi 0, %s321
      %s324 = sphi 0, %s323
      %s338 = sphi 0, %s324
      %s342 = sphi 0, %s342
      %s344 = sphi 0, %s342
      %s345 = sphi 0, %s344
      %s359 = sphi 0, %s345
      %s363 = sphi 0, %s363
      %s365 = sphi 0, %s363
      %s366 = sphi 0, %s365
      %s380 = sphi 0, %s366
      %s384 = sphi 0, %s384
      %s386 = sphi 0, %s384
      %s387 = sphi 0, %s386
      %s401 = sphi 0, %s387
      %s405 = sphi 0, %s405
      %s407 = sphi 0, %s405
      %s408 = sphi 0, %s407
      %s422 = sphi 0, %s408
      %s426 = sphi 0, %s426
      %s428 = sphi 0, %s426
      %s429 = sphi 0, %s428
      %s443 = sphi 0, %s429
      %s447 = sphi 0, %s447
      %s449 = sphi 0, %s447
      %s450 = sphi 0, %s449
      %s464 = sphi 0, %s450
      %s468 = sphi 0, %s468
      %s470 = sphi 0, %s468
      %s471 = sphi 0, %s470
      %s485 = sphi 0, %s471
      %s489 = sphi 0, %s489
      %s491 = sphi 0, %s489
      %s492 = sphi 0, %s491
      %s506 = sphi 0, %s492
      %s510 = sphi 0, %s510
      %s512 = sphi 0, %s510
      %s513 = sphi 0, %s512
      %s527 = sphi 0, %s513
      %s531 = sphi 0, %s531
      %s533 = sphi 0, %s531
      %s534 = sphi 0, %s533
      %s548 = sphi 0, %s534
      %s552 = sphi 0, %s552
      %s554 = sphi 0, %s552
      %s555 = sphi 0, %s554
      %s569 = sphi 0, %s555
      %s573 = sphi 0, %s573
      %s575 = sphi 0, %s573
      %s576 = sphi 0, %s575
      %s590 = sphi 0, %s576
      %s594 = sphi 0, %s594
      %s596 = sphi 0, %s594
      %s597 = sphi 0, %s596
      %s611 = sphi 0, %s597
      %s615 = sphi 0, %s615
      %s617 = sphi 0, %s615
      %s618 = sphi 0, %s617
      %s632 = sphi 0, %s618
      %s636 = sphi 0, %s636
      %s638 = sphi 0, %s636
      %s639 = sphi 0, %s638
      %s653 = sphi 0, %s639
      %s657 = sphi 0, %s657
      %s659 = sphi 0, %s657
      %s660 = sphi 0, %s659
      %s674 = sphi 0, %s660
      %s678 = sphi 0, %s678
      %s680 = sphi 0, %s678
      %s681 = sphi 0, %s680
      %s695 = sphi 0, %s681
      %s699 = sphi 0, %s699
      %s701 = sphi 0, %s699
      %s702 = sphi 0, %s701
      %s716 = sphi 0, %s702
      %s720 = sphi 0, %s720
      %s722 = sphi 0, %s720
      %s723 = sphi 0, %s722
      %s737 = sphi 0, %s723
      %s741 = sphi 0, %s741
      %s743 = sphi 0, %s741
      %s744 = sphi 0, %s743
      %s758 = sphi 0, %s744
      %s762 = sphi 0, %s762
      %s764 = sphi 0, %s762
      %s765 = sphi 0, %s764
      %s779 = sphi 0, %s765
      %s783 = sphi 0, %s783
      %s785 = sphi 0, %s783
      %s786 = sphi 0, %s785
      %s800 = sphi 0, %s786
      %s804 = sphi 0, %s804
      %s806 = sphi 0, %s804
      %s807 = sphi 0, %s806
      %s821 = sphi 0, %s807
      %s825 = sphi 0, %s825
      %s827 = sphi 0, %s825
      %s828 = sphi 0, %s827
      %s842 = sphi 0, %s828
      %s846 = sphi 0, %s846
      %s848 = sphi 0, %s846
      %s849 = sphi 0, %s848
      %s863 = sphi 0, %s849
      %s867 = sphi 0, %s867
      %s869 = sphi 0, %s867
      %s870 = sphi 0, %s869
      %s884 = sphi 0, %s870
      %s890 = sphi 0, %s892
      %s893 = sphi 0, %s890
      %s894 = sphi 0, %s893
      %s910 = sphi 0, %s894
      %s916 = sphi 0, %s918
      %s919 = sphi 0, %s916
      %s920 = sphi 0, %s919
      %s936 = sphi 0, %s920
      %s942 = sphi 0, %s944
      %s945 = sphi 0, %s942
      %s946 = sphi 0, %s945
      %s962 = sphi 0, %s946
    $region4: #{tpu_custom_call.1} parent=1 // loop_header_branch
      %101 = sbr.rel (%p99) target = $region8
    $region5: #{tpu_custom_call.1} parent=1 // loop_body
      %s103 = ssub.s32 %s98, 1
      %s104 = ssub.s32 %s98, 2
      %s105 = sadd.s32 %s98, 1
      %s107 = sadd.s32 %s106, 1
      %p110 = scmp.eq.s32.totalorder %s98, 4
      %p111 = scmp.ne.s32.totalorder %s106, %s108
      %p112 = scmp.eq.s32.totalorder %s98, 0
      %p113 = por %p111, %p112
      %p114 = scmp.ne.s32.totalorder %s106, %s108
      %p115 = scmp.eq.s32.totalorder %s103, 4
      %p116 = por %p114, %p115
      %p117 = scmp.ne.s32.totalorder %s108, %s109
      %p118 = scmp.eq.s32.totalorder %s103, 0
      %p119 = por %p117, %p118
      %p120 = scmp.ne.s32.totalorder %s108, %s109
      %p121 = scmp.eq.s32.totalorder %s104, 4
      %p122 = por %p120, %p121
      %p124 = scmp.ne.s32.totalorder %s109, %s123
      %p125 = scmp.eq.s32.totalorder %s104, 0
      %p126 = por %p124, %p125
      %s128 = sadd.s32 %s127, 1
      %p131 = scmp.eq.s32.totalorder %s98, 4
      %p132 = scmp.ne.s32.totalorder %s127, %s129
      %p133 = scmp.eq.s32.totalorder %s98, 0
      %p134 = por %p132, %p133
      %p135 = scmp.ne.s32.totalorder %s127, %s129
      %p136 = scmp.eq.s32.totalorder %s103, 4
      %p137 = por %p135, %p136
      %p138 = scmp.ne.s32.totalorder %s129, %s130
      %p139 = scmp.eq.s32.totalorder %s103, 0
      %p140 = por %p138, %p139
      %p141 = scmp.ne.s32.totalorder %s129, %s130
      %p142 = scmp.eq.s32.totalorder %s104, 4
      %p143 = por %p141, %p142
      %p145 = scmp.ne.s32.totalorder %s130, %s144
      %p146 = scmp.eq.s32.totalorder %s104, 0
      %p147 = por %p145, %p146
      %s149 = sadd.s32 %s148, 1
      %p152 = scmp.eq.s32.totalorder %s98, 4
      %p153 = scmp.ne.s32.totalorder %s148, %s150
      %p154 = scmp.eq.s32.totalorder %s98, 0
      %p155 = por %p153, %p154
      %p156 = scmp.ne.s32.totalorder %s148, %s150
      %p157 = scmp.eq.s32.totalorder %s103, 4
      %p158 = por %p156, %p157
      %p159 = scmp.ne.s32.totalorder %s150, %s151
      %p160 = scmp.eq.s32.totalorder %s103, 0
      %p161 = por %p159, %p160
      %p162 = scmp.ne.s32.totalorder %s150, %s151
      %p163 = scmp.eq.s32.totalorder %s104, 4
      %p164 = por %p162, %p163
      %p166 = scmp.ne.s32.totalorder %s151, %s165
      %p167 = scmp.eq.s32.totalorder %s104, 0
      %p168 = por %p166, %p167
      %s170 = sadd.s32 %s169, 1
      %p173 = scmp.eq.s32.totalorder %s98, 4
      %p174 = scmp.ne.s32.totalorder %s169, %s171
      %p175 = scmp.eq.s32.totalorder %s98, 0
      %p176 = por %p174, %p175
      %p177 = scmp.ne.s32.totalorder %s169, %s171
      %p178 = scmp.eq.s32.totalorder %s103, 4
      %p179 = por %p177, %p178
      %p180 = scmp.ne.s32.totalorder %s171, %s172
      %p181 = scmp.eq.s32.totalorder %s103, 0
      %p182 = por %p180, %p181
      %p183 = scmp.ne.s32.totalorder %s171, %s172
      %p184 = scmp.eq.s32.totalorder %s104, 4
      %p185 = por %p183, %p184
      %p187 = scmp.ne.s32.totalorder %s172, %s186
      %p188 = scmp.eq.s32.totalorder %s104, 0
      %p189 = por %p187, %p188
      %s190 = ssub.s32 %s98, %s105
      %p191 = scmp.eq.s32.totalorder %s190, 0
      %s193 = sadd.s32 %s192, 1
      %s194 = scalar_select %p191, %s192, %s193
      %p197 = pneg %p191
      %p198 = scmp.eq.s32.totalorder %s98, 4
      %p199 = por %p197, %p198
      %p200 = scmp.ne.s32.totalorder %s192, %s195
      %p201 = scmp.eq.s32.totalorder %s98, 0
      %p202 = por %p200, %p201
      %p203 = scmp.ne.s32.totalorder %s192, %s195
      %p204 = scmp.eq.s32.totalorder %s103, 4
      %p205 = por %p203, %p204
      %p206 = scmp.ne.s32.totalorder %s195, %s196
      %p207 = scmp.eq.s32.totalorder %s103, 0
      %p208 = por %p206, %p207
      %p209 = scmp.ne.s32.totalorder %s195, %s196
      %p210 = scmp.eq.s32.totalorder %s104, 4
      %p211 = por %p209, %p210
      %p213 = scmp.ne.s32.totalorder %s196, %s212
      %p214 = scmp.eq.s32.totalorder %s104, 0
      %p215 = por %p213, %p214
      %s217 = sadd.s32 %s216, 1
      %p220 = scmp.eq.s32.totalorder %s98, 4
      %p221 = scmp.ne.s32.totalorder %s216, %s218
      %p222 = scmp.eq.s32.totalorder %s98, 0
      %p223 = por %p221, %p222
      %p224 = scmp.ne.s32.totalorder %s216, %s218
      %p225 = scmp.eq.s32.totalorder %s103, 4
      %p226 = por %p224, %p225
      %p227 = scmp.ne.s32.totalorder %s218, %s219
      %p228 = scmp.eq.s32.totalorder %s103, 0
      %p229 = por %p227, %p228
      %p230 = scmp.ne.s32.totalorder %s218, %s219
      %p231 = scmp.eq.s32.totalorder %s104, 4
      %p232 = por %p230, %p231
      %p234 = scmp.ne.s32.totalorder %s219, %s233
      %p235 = scmp.eq.s32.totalorder %s104, 0
      %p236 = por %p234, %p235
      %s238 = sadd.s32 %s237, 1
      %p241 = scmp.eq.s32.totalorder %s98, 4
      %p242 = scmp.ne.s32.totalorder %s237, %s239
      %p243 = scmp.eq.s32.totalorder %s98, 0
      %p244 = por %p242, %p243
      %p245 = scmp.ne.s32.totalorder %s237, %s239
      %p246 = scmp.eq.s32.totalorder %s103, 4
      %p247 = por %p245, %p246
      %p248 = scmp.ne.s32.totalorder %s239, %s240
      %p249 = scmp.eq.s32.totalorder %s103, 0
      %p250 = por %p248, %p249
      %p251 = scmp.ne.s32.totalorder %s239, %s240
      %p252 = scmp.eq.s32.totalorder %s104, 4
      %p253 = por %p251, %p252
      %p255 = scmp.ne.s32.totalorder %s240, %s254
      %p256 = scmp.eq.s32.totalorder %s104, 0
      %p257 = por %p255, %p256
      %s259 = sadd.s32 %s258, 1
      %p262 = scmp.eq.s32.totalorder %s98, 4
      %p263 = scmp.ne.s32.totalorder %s258, %s260
      %p264 = scmp.eq.s32.totalorder %s98, 0
      %p265 = por %p263, %p264
      %p266 = scmp.ne.s32.totalorder %s258, %s260
      %p267 = scmp.eq.s32.totalorder %s103, 4
      %p268 = por %p266, %p267
      %p269 = scmp.ne.s32.totalorder %s260, %s261
      %p270 = scmp.eq.s32.totalorder %s103, 0
      %p271 = por %p269, %p270
      %p272 = scmp.ne.s32.totalorder %s260, %s261
      %p273 = scmp.eq.s32.totalorder %s104, 4
      %p274 = por %p272, %p273
      %p276 = scmp.ne.s32.totalorder %s261, %s275
      %p277 = scmp.eq.s32.totalorder %s104, 0
      %p278 = por %p276, %p277
      %s280 = sadd.s32 %s279, 1
      %p283 = scmp.eq.s32.totalorder %s98, 4
      %p284 = scmp.ne.s32.totalorder %s279, %s281
      %p285 = scmp.eq.s32.totalorder %s98, 0
      %p286 = por %p284, %p285
      %p287 = scmp.ne.s32.totalorder %s279, %s281
      %p288 = scmp.eq.s32.totalorder %s103, 4
      %p289 = por %p287, %p288
      %p290 = scmp.ne.s32.totalorder %s281, %s282
      %p291 = scmp.eq.s32.totalorder %s103, 0
      %p292 = por %p290, %p291
      %p293 = scmp.ne.s32.totalorder %s281, %s282
      %p294 = scmp.eq.s32.totalorder %s104, 4
      %p295 = por %p293, %p294
      %p297 = scmp.ne.s32.totalorder %s282, %s296
      %p298 = scmp.eq.s32.totalorder %s104, 0
      %p299 = por %p297, %p298
      %s301 = sadd.s32 %s300, 1
      %p304 = scmp.eq.s32.totalorder %s98, 4
      %p305 = scmp.ne.s32.totalorder %s300, %s302
      %p306 = scmp.eq.s32.totalorder %s98, 0
      %p307 = por %p305, %p306
      %p308 = scmp.ne.s32.totalorder %s300, %s302
      %p309 = scmp.eq.s32.totalorder %s103, 4
      %p310 = por %p308, %p309
      %p311 = scmp.ne.s32.totalorder %s302, %s303
      %p312 = scmp.eq.s32.totalorder %s103, 0
      %p313 = por %p311, %p312
      %p314 = scmp.ne.s32.totalorder %s302, %s303
      %p315 = scmp.eq.s32.totalorder %s104, 4
      %p316 = por %p314, %p315
      %p318 = scmp.ne.s32.totalorder %s303, %s317
      %p319 = scmp.eq.s32.totalorder %s104, 0
      %p320 = por %p318, %p319
      %s322 = sadd.s32 %s321, 1
      %p325 = scmp.eq.s32.totalorder %s98, 4
      %p326 = scmp.ne.s32.totalorder %s321, %s323
      %p327 = scmp.eq.s32.totalorder %s98, 0
      %p328 = por %p326, %p327
      %p329 = scmp.ne.s32.totalorder %s321, %s323
      %p330 = scmp.eq.s32.totalorder %s103, 4
      %p331 = por %p329, %p330
      %p332 = scmp.ne.s32.totalorder %s323, %s324
      %p333 = scmp.eq.s32.totalorder %s103, 0
      %p334 = por %p332, %p333
      %p335 = scmp.ne.s32.totalorder %s323, %s324
      %p336 = scmp.eq.s32.totalorder %s104, 4
      %p337 = por %p335, %p336
      %p339 = scmp.ne.s32.totalorder %s324, %s338
      %p340 = scmp.eq.s32.totalorder %s104, 0
      %p341 = por %p339, %p340
      %s343 = sadd.s32 %s342, 1
      %p346 = scmp.eq.s32.totalorder %s98, 4
      %p347 = scmp.ne.s32.totalorder %s342, %s344
      %p348 = scmp.eq.s32.totalorder %s98, 0
      %p349 = por %p347, %p348
      %p350 = scmp.ne.s32.totalorder %s342, %s344
      %p351 = scmp.eq.s32.totalorder %s103, 4
      %p352 = por %p350, %p351
      %p353 = scmp.ne.s32.totalorder %s344, %s345
      %p354 = scmp.eq.s32.totalorder %s103, 0
      %p355 = por %p353, %p354
      %p356 = scmp.ne.s32.totalorder %s344, %s345
      %p357 = scmp.eq.s32.totalorder %s104, 4
      %p358 = por %p356, %p357
      %p360 = scmp.ne.s32.totalorder %s345, %s359
      %p361 = scmp.eq.s32.totalorder %s104, 0
      %p362 = por %p360, %p361
      %s364 = sadd.s32 %s363, 1
      %p367 = scmp.eq.s32.totalorder %s98, 4
      %p368 = scmp.ne.s32.totalorder %s363, %s365
      %p369 = scmp.eq.s32.totalorder %s98, 0
      %p370 = por %p368, %p369
      %p371 = scmp.ne.s32.totalorder %s363, %s365
      %p372 = scmp.eq.s32.totalorder %s103, 4
      %p373 = por %p371, %p372
      %p374 = scmp.ne.s32.totalorder %s365, %s366
      %p375 = scmp.eq.s32.totalorder %s103, 0
      %p376 = por %p374, %p375
      %p377 = scmp.ne.s32.totalorder %s365, %s366
      %p378 = scmp.eq.s32.totalorder %s104, 4
      %p379 = por %p377, %p378
      %p381 = scmp.ne.s32.totalorder %s366, %s380
      %p382 = scmp.eq.s32.totalorder %s104, 0
      %p383 = por %p381, %p382
      %s385 = sadd.s32 %s384, 1
      %p388 = scmp.eq.s32.totalorder %s98, 4
      %p389 = scmp.ne.s32.totalorder %s384, %s386
      %p390 = scmp.eq.s32.totalorder %s98, 0
      %p391 = por %p389, %p390
      %p392 = scmp.ne.s32.totalorder %s384, %s386
      %p393 = scmp.eq.s32.totalorder %s103, 4
      %p394 = por %p392, %p393
      %p395 = scmp.ne.s32.totalorder %s386, %s387
      %p396 = scmp.eq.s32.totalorder %s103, 0
      %p397 = por %p395, %p396
      %p398 = scmp.ne.s32.totalorder %s386, %s387
      %p399 = scmp.eq.s32.totalorder %s104, 4
      %p400 = por %p398, %p399
      %p402 = scmp.ne.s32.totalorder %s387, %s401
      %p403 = scmp.eq.s32.totalorder %s104, 0
      %p404 = por %p402, %p403
      %s406 = sadd.s32 %s405, 1
      %p409 = scmp.eq.s32.totalorder %s98, 4
      %p410 = scmp.ne.s32.totalorder %s405, %s407
      %p411 = scmp.eq.s32.totalorder %s98, 0
      %p412 = por %p410, %p411
      %p413 = scmp.ne.s32.totalorder %s405, %s407
      %p414 = scmp.eq.s32.totalorder %s103, 4
      %p415 = por %p413, %p414
      %p416 = scmp.ne.s32.totalorder %s407, %s408
      %p417 = scmp.eq.s32.totalorder %s103, 0
      %p418 = por %p416, %p417
      %p419 = scmp.ne.s32.totalorder %s407, %s408
      %p420 = scmp.eq.s32.totalorder %s104, 4
      %p421 = por %p419, %p420
      %p423 = scmp.ne.s32.totalorder %s408, %s422
      %p424 = scmp.eq.s32.totalorder %s104, 0
      %p425 = por %p423, %p424
      %s427 = sadd.s32 %s426, 1
      %p430 = scmp.eq.s32.totalorder %s98, 4
      %p431 = scmp.ne.s32.totalorder %s426, %s428
      %p432 = scmp.eq.s32.totalorder %s98, 0
      %p433 = por %p431, %p432
      %p434 = scmp.ne.s32.totalorder %s426, %s428
      %p435 = scmp.eq.s32.totalorder %s103, 4
      %p436 = por %p434, %p435
      %p437 = scmp.ne.s32.totalorder %s428, %s429
      %p438 = scmp.eq.s32.totalorder %s103, 0
      %p439 = por %p437, %p438
      %p440 = scmp.ne.s32.totalorder %s428, %s429
      %p441 = scmp.eq.s32.totalorder %s104, 4
      %p442 = por %p440, %p441
      %p444 = scmp.ne.s32.totalorder %s429, %s443
      %p445 = scmp.eq.s32.totalorder %s104, 0
      %p446 = por %p444, %p445
      %s448 = sadd.s32 %s447, 1
      %p451 = scmp.eq.s32.totalorder %s98, 4
      %p452 = scmp.ne.s32.totalorder %s447, %s449
      %p453 = scmp.eq.s32.totalorder %s98, 0
      %p454 = por %p452, %p453
      %p455 = scmp.ne.s32.totalorder %s447, %s449
      %p456 = scmp.eq.s32.totalorder %s103, 4
      %p457 = por %p455, %p456
      %p458 = scmp.ne.s32.totalorder %s449, %s450
      %p459 = scmp.eq.s32.totalorder %s103, 0
      %p460 = por %p458, %p459
      %p461 = scmp.ne.s32.totalorder %s449, %s450
      %p462 = scmp.eq.s32.totalorder %s104, 4
      %p463 = por %p461, %p462
      %p465 = scmp.ne.s32.totalorder %s450, %s464
      %p466 = scmp.eq.s32.totalorder %s104, 0
      %p467 = por %p465, %p466
      %s469 = sadd.s32 %s468, 1
      %p472 = scmp.eq.s32.totalorder %s98, 4
      %p473 = scmp.ne.s32.totalorder %s468, %s470
      %p474 = scmp.eq.s32.totalorder %s98, 0
      %p475 = por %p473, %p474
      %p476 = scmp.ne.s32.totalorder %s468, %s470
      %p477 = scmp.eq.s32.totalorder %s103, 4
      %p478 = por %p476, %p477
      %p479 = scmp.ne.s32.totalorder %s470, %s471
      %p480 = scmp.eq.s32.totalorder %s103, 0
      %p481 = por %p479, %p480
      %p482 = scmp.ne.s32.totalorder %s470, %s471
      %p483 = scmp.eq.s32.totalorder %s104, 4
      %p484 = por %p482, %p483
      %p486 = scmp.ne.s32.totalorder %s471, %s485
      %p487 = scmp.eq.s32.totalorder %s104, 0
      %p488 = por %p486, %p487
      %s490 = sadd.s32 %s489, 1
      %p493 = scmp.eq.s32.totalorder %s98, 4
      %p494 = scmp.ne.s32.totalorder %s489, %s491
      %p495 = scmp.eq.s32.totalorder %s98, 0
      %p496 = por %p494, %p495
      %p497 = scmp.ne.s32.totalorder %s489, %s491
      %p498 = scmp.eq.s32.totalorder %s103, 4
      %p499 = por %p497, %p498
      %p500 = scmp.ne.s32.totalorder %s491, %s492
      %p501 = scmp.eq.s32.totalorder %s103, 0
      %p502 = por %p500, %p501
      %p503 = scmp.ne.s32.totalorder %s491, %s492
      %p504 = scmp.eq.s32.totalorder %s104, 4
      %p505 = por %p503, %p504
      %p507 = scmp.ne.s32.totalorder %s492, %s506
      %p508 = scmp.eq.s32.totalorder %s104, 0
      %p509 = por %p507, %p508
      %s511 = sadd.s32 %s510, 1
      %p514 = scmp.eq.s32.totalorder %s98, 4
      %p515 = scmp.ne.s32.totalorder %s510, %s512
      %p516 = scmp.eq.s32.totalorder %s98, 0
      %p517 = por %p515, %p516
      %p518 = scmp.ne.s32.totalorder %s510, %s512
      %p519 = scmp.eq.s32.totalorder %s103, 4
      %p520 = por %p518, %p519
      %p521 = scmp.ne.s32.totalorder %s512, %s513
      %p522 = scmp.eq.s32.totalorder %s103, 0
      %p523 = por %p521, %p522
      %p524 = scmp.ne.s32.totalorder %s512, %s513
      %p525 = scmp.eq.s32.totalorder %s104, 4
      %p526 = por %p524, %p525
      %p528 = scmp.ne.s32.totalorder %s513, %s527
      %p529 = scmp.eq.s32.totalorder %s104, 0
      %p530 = por %p528, %p529
      %s532 = sadd.s32 %s531, 1
      %p535 = scmp.eq.s32.totalorder %s98, 4
      %p536 = scmp.ne.s32.totalorder %s531, %s533
      %p537 = scmp.eq.s32.totalorder %s98, 0
      %p538 = por %p536, %p537
      %p539 = scmp.ne.s32.totalorder %s531, %s533
      %p540 = scmp.eq.s32.totalorder %s103, 4
      %p541 = por %p539, %p540
      %p542 = scmp.ne.s32.totalorder %s533, %s534
      %p543 = scmp.eq.s32.totalorder %s103, 0
      %p544 = por %p542, %p543
      %p545 = scmp.ne.s32.totalorder %s533, %s534
      %p546 = scmp.eq.s32.totalorder %s104, 4
      %p547 = por %p545, %p546
      %p549 = scmp.ne.s32.totalorder %s534, %s548
      %p550 = scmp.eq.s32.totalorder %s104, 0
      %p551 = por %p549, %p550
      %s553 = sadd.s32 %s552, 1
      %p556 = scmp.eq.s32.totalorder %s98, 4
      %p557 = scmp.ne.s32.totalorder %s552, %s554
      %p558 = scmp.eq.s32.totalorder %s98, 0
      %p559 = por %p557, %p558
      %p560 = scmp.ne.s32.totalorder %s552, %s554
      %p561 = scmp.eq.s32.totalorder %s103, 4
      %p562 = por %p560, %p561
      %p563 = scmp.ne.s32.totalorder %s554, %s555
      %p564 = scmp.eq.s32.totalorder %s103, 0
      %p565 = por %p563, %p564
      %p566 = scmp.ne.s32.totalorder %s554, %s555
      %p567 = scmp.eq.s32.totalorder %s104, 4
      %p568 = por %p566, %p567
      %p570 = scmp.ne.s32.totalorder %s555, %s569
      %p571 = scmp.eq.s32.totalorder %s104, 0
      %p572 = por %p570, %p571
      %s574 = sadd.s32 %s573, 1
      %p577 = scmp.eq.s32.totalorder %s98, 4
      %p578 = scmp.ne.s32.totalorder %s573, %s575
      %p579 = scmp.eq.s32.totalorder %s98, 0
      %p580 = por %p578, %p579
      %p581 = scmp.ne.s32.totalorder %s573, %s575
      %p582 = scmp.eq.s32.totalorder %s103, 4
      %p583 = por %p581, %p582
      %p584 = scmp.ne.s32.totalorder %s575, %s576
      %p585 = scmp.eq.s32.totalorder %s103, 0
      %p586 = por %p584, %p585
      %p587 = scmp.ne.s32.totalorder %s575, %s576
      %p588 = scmp.eq.s32.totalorder %s104, 4
      %p589 = por %p587, %p588
      %p591 = scmp.ne.s32.totalorder %s576, %s590
      %p592 = scmp.eq.s32.totalorder %s104, 0
      %p593 = por %p591, %p592
      %s595 = sadd.s32 %s594, 1
      %p598 = scmp.eq.s32.totalorder %s98, 4
      %p599 = scmp.ne.s32.totalorder %s594, %s596
      %p600 = scmp.eq.s32.totalorder %s98, 0
      %p601 = por %p599, %p600
      %p602 = scmp.ne.s32.totalorder %s594, %s596
      %p603 = scmp.eq.s32.totalorder %s103, 4
      %p604 = por %p602, %p603
      %p605 = scmp.ne.s32.totalorder %s596, %s597
      %p606 = scmp.eq.s32.totalorder %s103, 0
      %p607 = por %p605, %p606
      %p608 = scmp.ne.s32.totalorder %s596, %s597
      %p609 = scmp.eq.s32.totalorder %s104, 4
      %p610 = por %p608, %p609
      %p612 = scmp.ne.s32.totalorder %s597, %s611
      %p613 = scmp.eq.s32.totalorder %s104, 0
      %p614 = por %p612, %p613
      %s616 = sadd.s32 %s615, 1
      %p619 = scmp.eq.s32.totalorder %s98, 4
      %p620 = scmp.ne.s32.totalorder %s615, %s617
      %p621 = scmp.eq.s32.totalorder %s98, 0
      %p622 = por %p620, %p621
      %p623 = scmp.ne.s32.totalorder %s615, %s617
      %p624 = scmp.eq.s32.totalorder %s103, 4
      %p625 = por %p623, %p624
      %p626 = scmp.ne.s32.totalorder %s617, %s618
      %p627 = scmp.eq.s32.totalorder %s103, 0
      %p628 = por %p626, %p627
      %p629 = scmp.ne.s32.totalorder %s617, %s618
      %p630 = scmp.eq.s32.totalorder %s104, 4
      %p631 = por %p629, %p630
      %p633 = scmp.ne.s32.totalorder %s618, %s632
      %p634 = scmp.eq.s32.totalorder %s104, 0
      %p635 = por %p633, %p634
      %s637 = sadd.s32 %s636, 1
      %p640 = scmp.eq.s32.totalorder %s98, 4
      %p641 = scmp.ne.s32.totalorder %s636, %s638
      %p642 = scmp.eq.s32.totalorder %s98, 0
      %p643 = por %p641, %p642
      %p644 = scmp.ne.s32.totalorder %s636, %s638
      %p645 = scmp.eq.s32.totalorder %s103, 4
      %p646 = por %p644, %p645
      %p647 = scmp.ne.s32.totalorder %s638, %s639
      %p648 = scmp.eq.s32.totalorder %s103, 0
      %p649 = por %p647, %p648
      %p650 = scmp.ne.s32.totalorder %s638, %s639
      %p651 = scmp.eq.s32.totalorder %s104, 4
      %p652 = por %p650, %p651
      %p654 = scmp.ne.s32.totalorder %s639, %s653
      %p655 = scmp.eq.s32.totalorder %s104, 0
      %p656 = por %p654, %p655
      %s658 = sadd.s32 %s657, 1
      %p661 = scmp.eq.s32.totalorder %s98, 4
      %p662 = scmp.ne.s32.totalorder %s657, %s659
      %p663 = scmp.eq.s32.totalorder %s98, 0
      %p664 = por %p662, %p663
      %p665 = scmp.ne.s32.totalorder %s657, %s659
      %p666 = scmp.eq.s32.totalorder %s103, 4
      %p667 = por %p665, %p666
      %p668 = scmp.ne.s32.totalorder %s659, %s660
      %p669 = scmp.eq.s32.totalorder %s103, 0
      %p670 = por %p668, %p669
      %p671 = scmp.ne.s32.totalorder %s659, %s660
      %p672 = scmp.eq.s32.totalorder %s104, 4
      %p673 = por %p671, %p672
      %p675 = scmp.ne.s32.totalorder %s660, %s674
      %p676 = scmp.eq.s32.totalorder %s104, 0
      %p677 = por %p675, %p676
      %s679 = sadd.s32 %s678, 1
      %p682 = scmp.eq.s32.totalorder %s98, 4
      %p683 = scmp.ne.s32.totalorder %s678, %s680
      %p684 = scmp.eq.s32.totalorder %s98, 0
      %p685 = por %p683, %p684
      %p686 = scmp.ne.s32.totalorder %s678, %s680
      %p687 = scmp.eq.s32.totalorder %s103, 4
      %p688 = por %p686, %p687
      %p689 = scmp.ne.s32.totalorder %s680, %s681
      %p690 = scmp.eq.s32.totalorder %s103, 0
      %p691 = por %p689, %p690
      %p692 = scmp.ne.s32.totalorder %s680, %s681
      %p693 = scmp.eq.s32.totalorder %s104, 4
      %p694 = por %p692, %p693
      %p696 = scmp.ne.s32.totalorder %s681, %s695
      %p697 = scmp.eq.s32.totalorder %s104, 0
      %p698 = por %p696, %p697
      %s700 = sadd.s32 %s699, 1
      %p703 = scmp.eq.s32.totalorder %s98, 4
      %p704 = scmp.ne.s32.totalorder %s699, %s701
      %p705 = scmp.eq.s32.totalorder %s98, 0
      %p706 = por %p704, %p705
      %p707 = scmp.ne.s32.totalorder %s699, %s701
      %p708 = scmp.eq.s32.totalorder %s103, 4
      %p709 = por %p707, %p708
      %p710 = scmp.ne.s32.totalorder %s701, %s702
      %p711 = scmp.eq.s32.totalorder %s103, 0
      %p712 = por %p710, %p711
      %p713 = scmp.ne.s32.totalorder %s701, %s702
      %p714 = scmp.eq.s32.totalorder %s104, 4
      %p715 = por %p713, %p714
      %p717 = scmp.ne.s32.totalorder %s702, %s716
      %p718 = scmp.eq.s32.totalorder %s104, 0
      %p719 = por %p717, %p718
      %s721 = sadd.s32 %s720, 1
      %p724 = scmp.eq.s32.totalorder %s98, 4
      %p725 = scmp.ne.s32.totalorder %s720, %s722
      %p726 = scmp.eq.s32.totalorder %s98, 0
      %p727 = por %p725, %p726
      %p728 = scmp.ne.s32.totalorder %s720, %s722
      %p729 = scmp.eq.s32.totalorder %s103, 4
      %p730 = por %p728, %p729
      %p731 = scmp.ne.s32.totalorder %s722, %s723
      %p732 = scmp.eq.s32.totalorder %s103, 0
      %p733 = por %p731, %p732
      %p734 = scmp.ne.s32.totalorder %s722, %s723
      %p735 = scmp.eq.s32.totalorder %s104, 4
      %p736 = por %p734, %p735
      %p738 = scmp.ne.s32.totalorder %s723, %s737
      %p739 = scmp.eq.s32.totalorder %s104, 0
      %p740 = por %p738, %p739
      %s742 = sadd.s32 %s741, 1
      %p745 = scmp.eq.s32.totalorder %s98, 4
      %p746 = scmp.ne.s32.totalorder %s741, %s743
      %p747 = scmp.eq.s32.totalorder %s98, 0
      %p748 = por %p746, %p747
      %p749 = scmp.ne.s32.totalorder %s741, %s743
      %p750 = scmp.eq.s32.totalorder %s103, 4
      %p751 = por %p749, %p750
      %p752 = scmp.ne.s32.totalorder %s743, %s744
      %p753 = scmp.eq.s32.totalorder %s103, 0
      %p754 = por %p752, %p753
      %p755 = scmp.ne.s32.totalorder %s743, %s744
      %p756 = scmp.eq.s32.totalorder %s104, 4
      %p757 = por %p755, %p756
      %p759 = scmp.ne.s32.totalorder %s744, %s758
      %p760 = scmp.eq.s32.totalorder %s104, 0
      %p761 = por %p759, %p760
      %s763 = sadd.s32 %s762, 1
      %p766 = scmp.eq.s32.totalorder %s98, 4
      %p767 = scmp.ne.s32.totalorder %s762, %s764
      %p768 = scmp.eq.s32.totalorder %s98, 0
      %p769 = por %p767, %p768
      %p770 = scmp.ne.s32.totalorder %s762, %s764
      %p771 = scmp.eq.s32.totalorder %s103, 4
      %p772 = por %p770, %p771
      %p773 = scmp.ne.s32.totalorder %s764, %s765
      %p774 = scmp.eq.s32.totalorder %s103, 0
      %p775 = por %p773, %p774
      %p776 = scmp.ne.s32.totalorder %s764, %s765
      %p777 = scmp.eq.s32.totalorder %s104, 4
      %p778 = por %p776, %p777
      %p780 = scmp.ne.s32.totalorder %s765, %s779
      %p781 = scmp.eq.s32.totalorder %s104, 0
      %p782 = por %p780, %p781
      %s784 = sadd.s32 %s783, 1
      %p787 = scmp.eq.s32.totalorder %s98, 4
      %p788 = scmp.ne.s32.totalorder %s783, %s785
      %p789 = scmp.eq.s32.totalorder %s98, 0
      %p790 = por %p788, %p789
      %p791 = scmp.ne.s32.totalorder %s783, %s785
      %p792 = scmp.eq.s32.totalorder %s103, 4
      %p793 = por %p791, %p792
      %p794 = scmp.ne.s32.totalorder %s785, %s786
      %p795 = scmp.eq.s32.totalorder %s103, 0
      %p796 = por %p794, %p795
      %p797 = scmp.ne.s32.totalorder %s785, %s786
      %p798 = scmp.eq.s32.totalorder %s104, 4
      %p799 = por %p797, %p798
      %p801 = scmp.ne.s32.totalorder %s786, %s800
      %p802 = scmp.eq.s32.totalorder %s104, 0
      %p803 = por %p801, %p802
      %s805 = sadd.s32 %s804, 1
      %p808 = scmp.eq.s32.totalorder %s98, 4
      %p809 = scmp.ne.s32.totalorder %s804, %s806
      %p810 = scmp.eq.s32.totalorder %s98, 0
      %p811 = por %p809, %p810
      %p812 = scmp.ne.s32.totalorder %s804, %s806
      %p813 = scmp.eq.s32.totalorder %s103, 4
      %p814 = por %p812, %p813
      %p815 = scmp.ne.s32.totalorder %s806, %s807
      %p816 = scmp.eq.s32.totalorder %s103, 0
      %p817 = por %p815, %p816
      %p818 = scmp.ne.s32.totalorder %s806, %s807
      %p819 = scmp.eq.s32.totalorder %s104, 4
      %p820 = por %p818, %p819
      %p822 = scmp.ne.s32.totalorder %s807, %s821
      %p823 = scmp.eq.s32.totalorder %s104, 0
      %p824 = por %p822, %p823
      %s826 = sadd.s32 %s825, 1
      %p829 = scmp.eq.s32.totalorder %s98, 4
      %p830 = scmp.ne.s32.totalorder %s825, %s827
      %p831 = scmp.eq.s32.totalorder %s98, 0
      %p832 = por %p830, %p831
      %p833 = scmp.ne.s32.totalorder %s825, %s827
      %p834 = scmp.eq.s32.totalorder %s103, 4
      %p835 = por %p833, %p834
      %p836 = scmp.ne.s32.totalorder %s827, %s828
      %p837 = scmp.eq.s32.totalorder %s103, 0
      %p838 = por %p836, %p837
      %p839 = scmp.ne.s32.totalorder %s827, %s828
      %p840 = scmp.eq.s32.totalorder %s104, 4
      %p841 = por %p839, %p840
      %p843 = scmp.ne.s32.totalorder %s828, %s842
      %p844 = scmp.eq.s32.totalorder %s104, 0
      %p845 = por %p843, %p844
      %s847 = sadd.s32 %s846, 1
      %p850 = scmp.eq.s32.totalorder %s98, 4
      %p851 = scmp.ne.s32.totalorder %s846, %s848
      %p852 = scmp.eq.s32.totalorder %s98, 0
      %p853 = por %p851, %p852
      %p854 = scmp.ne.s32.totalorder %s846, %s848
      %p855 = scmp.eq.s32.totalorder %s103, 4
      %p856 = por %p854, %p855
      %p857 = scmp.ne.s32.totalorder %s848, %s849
      %p858 = scmp.eq.s32.totalorder %s103, 0
      %p859 = por %p857, %p858
      %p860 = scmp.ne.s32.totalorder %s848, %s849
      %p861 = scmp.eq.s32.totalorder %s104, 4
      %p862 = por %p860, %p861
      %p864 = scmp.ne.s32.totalorder %s849, %s863
      %p865 = scmp.eq.s32.totalorder %s104, 0
      %p866 = por %p864, %p865
      %s868 = sadd.s32 %s867, 1
      %p871 = scmp.eq.s32.totalorder %s98, 4
      %p872 = scmp.ne.s32.totalorder %s867, %s869
      %p873 = scmp.eq.s32.totalorder %s98, 0
      %p874 = por %p872, %p873
      %p875 = scmp.ne.s32.totalorder %s867, %s869
      %p876 = scmp.eq.s32.totalorder %s103, 4
      %p877 = por %p875, %p876
      %p878 = scmp.ne.s32.totalorder %s869, %s870
      %p879 = scmp.eq.s32.totalorder %s103, 0
      %p880 = por %p878, %p879
      %p881 = scmp.ne.s32.totalorder %s869, %s870
      %p882 = scmp.eq.s32.totalorder %s104, 4
      %p883 = por %p881, %p882
      %p885 = scmp.ne.s32.totalorder %s870, %s884
      %p886 = scmp.eq.s32.totalorder %s104, 0
      %p887 = por %p885, %p886
      %s888 = ssub.s32 %s98, %s105
      %p889 = scmp.eq.s32.totalorder %s888, 0
      %s891 = sadd.s32 %s890, 1
      %s892 = scalar_select %p889, %s890, %s891
      %p895 = pneg %p889
      %p896 = scmp.eq.s32.totalorder %s98, 4
      %p897 = por %p895, %p896
      %p898 = scmp.ne.s32.totalorder %s890, %s893
      %p899 = scmp.eq.s32.totalorder %s98, 0
      %p900 = por %p898, %p899
      %p901 = scmp.ne.s32.totalorder %s890, %s893
      %p902 = scmp.eq.s32.totalorder %s103, 4
      %p903 = por %p901, %p902
      %p904 = scmp.ne.s32.totalorder %s893, %s894
      %p905 = scmp.eq.s32.totalorder %s103, 0
      %p906 = por %p904, %p905
      %p907 = scmp.ne.s32.totalorder %s893, %s894
      %p908 = scmp.eq.s32.totalorder %s104, 4
      %p909 = por %p907, %p908
      %p911 = scmp.ne.s32.totalorder %s894, %s910
      %p912 = scmp.eq.s32.totalorder %s104, 0
      %p913 = por %p911, %p912
      %s914 = ssub.s32 %s98, %s105
      %p915 = scmp.eq.s32.totalorder %s914, 0
      %s917 = sadd.s32 %s916, 1
      %s918 = scalar_select %p915, %s916, %s917
      %p921 = pneg %p915
      %p922 = scmp.eq.s32.totalorder %s98, 4
      %p923 = por %p921, %p922
      %p924 = scmp.ne.s32.totalorder %s916, %s919
      %p925 = scmp.eq.s32.totalorder %s98, 0
      %p926 = por %p924, %p925
      %p927 = scmp.ne.s32.totalorder %s916, %s919
      %p928 = scmp.eq.s32.totalorder %s103, 4
      %p929 = por %p927, %p928
      %p930 = scmp.ne.s32.totalorder %s919, %s920
      %p931 = scmp.eq.s32.totalorder %s103, 0
      %p932 = por %p930, %p931
      %p933 = scmp.ne.s32.totalorder %s919, %s920
      %p934 = scmp.eq.s32.totalorder %s104, 4
      %p935 = por %p933, %p934
      %p937 = scmp.ne.s32.totalorder %s920, %s936
      %p938 = scmp.eq.s32.totalorder %s104, 0
      %p939 = por %p937, %p938
      %s940 = ssub.s32 %s98, %s105
      %p941 = scmp.eq.s32.totalorder %s940, 0
      %s943 = sadd.s32 %s942, 1
      %s944 = scalar_select %p941, %s942, %s943
      %p947 = pneg %p941
      %p948 = scmp.eq.s32.totalorder %s98, 4
      %p949 = por %p947, %p948
      %p950 = scmp.ne.s32.totalorder %s942, %s945
      %p951 = scmp.eq.s32.totalorder %s98, 0
      %p952 = por %p950, %p951
      %p953 = scmp.ne.s32.totalorder %s942, %s945
      %p954 = scmp.eq.s32.totalorder %s103, 4
      %p955 = por %p953, %p954
      %p956 = scmp.ne.s32.totalorder %s945, %s946
      %p957 = scmp.eq.s32.totalorder %s103, 0
      %p958 = por %p956, %p957
      %p959 = scmp.ne.s32.totalorder %s945, %s946
      %p960 = scmp.eq.s32.totalorder %s104, 4
      %p961 = por %p959, %p960
      %p963 = scmp.ne.s32.totalorder %s946, %s962
      %p964 = scmp.eq.s32.totalorder %s104, 0
      %p965 = por %p963, %p964
      %p966 = scmp.le.s32.totalorder 1, %s98
      %p967 = scmp.lt.s32.totalorder %s98, 6
      %p968 = pnand %p966, %p967
      %p969 = pneg %p968
      // Predicated region
      $region9: #{tpu_custom_call.1} parent=5 // pred_check
        _
      $region10: #{tpu_custom_call.1} parent=5 // pred_check_branch
        %971 = sbr.rel (%p968) target = $region12
      $region11: #{tpu_custom_call.1} parent=5 // pred_region
        %s972 = ssub.s32 %s98, 1
        // Predicated region
        $region13: #{tpu_custom_call.1} parent=11 // pred_check
          %p973 = pneg %p119
        $region14: #{tpu_custom_call.1} parent=11 // pred_check_branch
          %975 = sbr.rel (%p973) target = $region16
        $region15: #{tpu_custom_call.1} parent=11 // pred_region
          %s977 = ssub.s32 16, 16
          %978 = vsyncadd [#allocation9], %s977
          %981 = dma.hbm_to_smem %s1, 16, [#allocation7], [#allocation9]
        $region16: #{tpu_custom_call.1} parent=11 // pred_fallthru
          _
        // Predicated region
        $region17: #{tpu_custom_call.1} parent=11 // pred_check
          %p982 = pneg %p140
        $region18: #{tpu_custom_call.1} parent=11 // pred_check_branch
          %984 = sbr.rel (%p982) target = $region20
        $region19: #{tpu_custom_call.1} parent=11 // pred_region
          %s986 = ssub.s32 16, 16
          %987 = vsyncadd [#allocation11], %s986
          %990 = dma.hbm_to_smem %s3, 16, [#allocation10], [#allocation11]
        $region20: #{tpu_custom_call.1} parent=11 // pred_fallthru
          _
        // Predicated region
        $region21: #{tpu_custom_call.1} parent=11 // pred_check
          %p991 = pneg %p161
        $region22: #{tpu_custom_call.1} parent=11 // pred_check_branch
          %993 = sbr.rel (%p991) target = $region24
        $region23: #{tpu_custom_call.1} parent=11 // pred_region
          _
        $region24: #{tpu_custom_call.1} parent=11 // pred_fallthru
          _
        // Predicated region
        $region25: #{tpu_custom_call.1} parent=11 // pred_check
          %p994 = pneg %p182
        $region26: #{tpu_custom_call.1} parent=11 // pred_check_branch
          %996 = sbr.rel (%p994) target = $region28
        $region27: #{tpu_custom_call.1} parent=11 // pred_region
          %s998 = ssub.s32 32, 32
          %999 = vsyncadd [#allocation8], %s998
          %s1001 = sshll.u32 [#allocation12], 4
          %s1002 = int_to_ptr.vmem [resolvable:$true] %s1001
          %1004 = dma.hbm_to_vmem [thread:$0]  %s7, 32, %s1002, [#allocation8]
        $region28: #{tpu_custom_call.1} parent=11 // pred_fallthru
          _
        // Predicated region
        $region29: #{tpu_custom_call.1} parent=11 // pred_check
          %p1005 = pneg %p229
        $region30: #{tpu_custom_call.1} parent=11 // pred_check_branch
          %1007 = sbr.rel (%p1005) target = $region32
        $region31: #{tpu_custom_call.1} parent=11 // pred_region
          %s1009 = ssub.s32 64, 64
          %1010 = vsyncadd [#allocation14], %s1009
          %s1012 = sshll.u32 [#allocation13], 4
          %s1013 = int_to_ptr.vmem [resolvable:$true] %s1012
          %1015 = dma.hbm_to_vmem [thread:$0]  %s11, 64, %s1013, [#allocation14]
        $region32: #{tpu_custom_call.1} parent=11 // pred_fallthru
          _
        // Predicated region
        $region33: #{tpu_custom_call.1} parent=11 // pred_check
          %p1016 = pneg %p250
        $region34: #{tpu_custom_call.1} parent=11 // pred_check_branch
          %1018 = sbr.rel (%p1016) target = $region36
        $region35: #{tpu_custom_call.1} parent=11 // pred_region
          %s1020 = ssub.s32 16, 16
          %1021 = vsyncadd [#allocation14], %s1020
          %s1023 = sshll.u32 [#allocation15], 4
          %s1024 = int_to_ptr.vmem [resolvable:$true] %s1023
          %1026 = dma.hbm_to_vmem [thread:$0]  %s13, 16, %s1024, [#allocation14]
        $region36: #{tpu_custom_call.1} parent=11 // pred_fallthru
          _
        // Predicated region
        $region37: #{tpu_custom_call.1} parent=11 // pred_check
          %p1027 = pneg %p271
        $region38: #{tpu_custom_call.1} parent=11 // pred_check_branch
          %1029 = sbr.rel (%p1027) target = $region40
        $region39: #{tpu_custom_call.1} parent=11 // pred_region
          _
        $region40: #{tpu_custom_call.1} parent=11 // pred_fallthru
          _
        // Predicated region
        $region41: #{tpu_custom_call.1} parent=11 // pred_check
          %p1030 = pneg %p292
        $region42: #{tpu_custom_call.1} parent=11 // pred_check_branch
          %1032 = sbr.rel (%p1030) target = $region44
        $region43: #{tpu_custom_call.1} parent=11 // pred_region
          %s1034 = ssub.s32 48, 48
          %1035 = vsyncadd [#allocation17], %s1034
          %s1036 = sshll.u32 [#allocation16], 4
          %s1037 = int_to_ptr.vmem [resolvable:$true] %s1036
          %1042 = dma.hbm_to_vmem [thread:$0]  %s17, 48, %s1037, [#allocation17], 16, 16, 1
        $region44: #{tpu_custom_call.1} parent=11 // pred_fallthru
          _
        // Predicated region
        $region45: #{tpu_custom_call.1} parent=11 // pred_check
          %p1043 = pneg %p313
        $region46: #{tpu_custom_call.1} parent=11 // pred_check_branch
          %1045 = sbr.rel (%p1043) target = $region48
        $region47: #{tpu_custom_call.1} parent=11 // pred_region
          %s1047 = ssub.s32 512, 512
          %1048 = vsyncadd [#allocation17], %s1047
          %s1049 = sshll.u32 [#allocation18], 4
          %s1050 = int_to_ptr.vmem [resolvable:$true] %s1049
          %1055 = dma.hbm_to_vmem [thread:$0]  %s19, 512, %s1050, [#allocation17], 128, 128, 8
        $region48: #{tpu_custom_call.1} parent=11 // pred_fallthru
          _
        // Predicated region
        $region49: #{tpu_custom_call.1} parent=11 // pred_check
          %p1056 = pneg %p334
        $region50: #{tpu_custom_call.1} parent=11 // pred_check_branch
          %1058 = sbr.rel (%p1056) target = $region52
        $region51: #{tpu_custom_call.1} parent=11 // pred_region
          %s1060 = ssub.s32 16, 16
          %1061 = vsyncadd [#allocation20], %s1060
          %s1063 = sshll.u32 [#allocation19], 4
          %s1064 = int_to_ptr.vmem [resolvable:$true] %s1063
          %1066 = dma.hbm_to_vmem [thread:$0]  %s21, 16, %s1064, [#allocation20]
        $region52: #{tpu_custom_call.1} parent=11 // pred_fallthru
          _
        // Predicated region
        $region53: #{tpu_custom_call.1} parent=11 // pred_check
          %p1067 = pneg %p355
        $region54: #{tpu_custom_call.1} parent=11 // pred_check_branch
          %1069 = sbr.rel (%p1067) target = $region56
        $region55: #{tpu_custom_call.1} parent=11 // pred_region
          %s1071 = ssub.s32 16, 16
          %1072 = vsyncadd [#allocation20], %s1071
          %s1074 = sshll.u32 [#allocation21], 4
          %s1075 = int_to_ptr.vmem [resolvable:$true] %s1074
          %1077 = dma.hbm_to_vmem [thread:$0]  %s23, 16, %s1075, [#allocation20]
        $region56: #{tpu_custom_call.1} parent=11 // pred_fallthru
          _
        // Predicated region
        $region57: #{tpu_custom_call.1} parent=11 // pred_check
          %p1078 = pneg %p376
        $region58: #{tpu_custom_call.1} parent=11 // pred_check_branch
          %1080 = sbr.rel (%p1078) target = $region60
        $region59: #{tpu_custom_call.1} parent=11 // pred_region
          %s1082 = ssub.s32 16, 16
          %1083 = vsyncadd [#allocation23], %s1082
          %s1085 = sshll.u32 [#allocation22], 4
          %s1086 = int_to_ptr.vmem [resolvable:$true] %s1085
          %1088 = dma.hbm_to_vmem [thread:$0]  %s25, 16, %s1086, [#allocation23]
        $region60: #{tpu_custom_call.1} parent=11 // pred_fallthru
          _
        // Predicated region
        $region61: #{tpu_custom_call.1} parent=11 // pred_check
          %p1089 = pneg %p397
        $region62: #{tpu_custom_call.1} parent=11 // pred_check_branch
          %1091 = sbr.rel (%p1089) target = $region64
        $region63: #{tpu_custom_call.1} parent=11 // pred_region
          %s1093 = ssub.s32 512, 512
          %1094 = vsyncadd [#allocation23], %s1093
          %s1095 = sshll.u32 [#allocation24], 4
          %s1096 = int_to_ptr.vmem [resolvable:$true] %s1095
          %1101 = dma.hbm_to_vmem [thread:$0]  %s27, 512, %s1096, [#allocation23], 128, 128, 8
        $region64: #{tpu_custom_call.1} parent=11 // pred_fallthru
          _
        // Predicated region
        $region65: #{tpu_custom_call.1} parent=11 // pred_check
          %p1102 = pneg %p418
        $region66: #{tpu_custom_call.1} parent=11 // pred_check_branch
          %1104 = sbr.rel (%p1102) target = $region68
        $region67: #{tpu_custom_call.1} parent=11 // pred_region
          %s1106 = ssub.s32 16, 16
          %1107 = vsyncadd [#allocation26], %s1106
          %s1109 = sshll.u32 [#allocation25], 4
          %s1110 = int_to_ptr.vmem [resolvable:$true] %s1109
          %1112 = dma.hbm_to_vmem [thread:$0]  %s29, 16, %s1110, [#allocation26]
        $region68: #{tpu_custom_call.1} parent=11 // pred_fallthru
          _
        // Predicated region
        $region69: #{tpu_custom_call.1} parent=11 // pred_check
          %p1113 = pneg %p439
        $region70: #{tpu_custom_call.1} parent=11 // pred_check_branch
          %1115 = sbr.rel (%p1113) target = $region72
        $region71: #{tpu_custom_call.1} parent=11 // pred_region
          _
        $region72: #{tpu_custom_call.1} parent=11 // pred_fallthru
          _
        // Predicated region
        $region73: #{tpu_custom_call.1} parent=11 // pred_check
          %p1116 = pneg %p460
        $region74: #{tpu_custom_call.1} parent=11 // pred_check_branch
          %1118 = sbr.rel (%p1116) target = $region76
        $region75: #{tpu_custom_call.1} parent=11 // pred_region
          %s1120 = ssub.s32 16, 16
          %1121 = vsyncadd [#allocation26], %s1120
          %s1123 = sshll.u32 [#allocation27], 4
          %s1124 = int_to_ptr.vmem [resolvable:$true] %s1123
          %1126 = dma.hbm_to_vmem [thread:$0]  %s33, 16, %s1124, [#allocation26]
        $region76: #{tpu_custom_call.1} parent=11 // pred_fallthru
          _
        // Predicated region
        $region77: #{tpu_custom_call.1} parent=11 // pred_check
          %p1127 = pneg %p481
        $region78: #{tpu_custom_call.1} parent=11 // pred_check_branch
          %1129 = sbr.rel (%p1127) target = $region80
        $region79: #{tpu_custom_call.1} parent=11 // pred_region
          %s1131 = ssub.s32 16, 16
          %1132 = vsyncadd [#allocation29], %s1131
          %s1134 = sshll.u32 [#allocation28], 4
          %s1135 = int_to_ptr.vmem [resolvable:$true] %s1134
          %1137 = dma.hbm_to_vmem [thread:$0]  %s35, 16, %s1135, [#allocation29]
        $region80: #{tpu_custom_call.1} parent=11 // pred_fallthru
          _
        // Predicated region
        $region81: #{tpu_custom_call.1} parent=11 // pred_check
          %p1138 = pneg %p502
        $region82: #{tpu_custom_call.1} parent=11 // pred_check_branch
          %1140 = sbr.rel (%p1138) target = $region84
        $region83: #{tpu_custom_call.1} parent=11 // pred_region
          %s1142 = ssub.s32 16, 16
          %1143 = vsyncadd [#allocation29], %s1142
          %s1145 = sshll.u32 [#allocation30], 4
          %s1146 = int_to_ptr.vmem [resolvable:$true] %s1145
          %1148 = dma.hbm_to_vmem [thread:$0]  %s37, 16, %s1146, [#allocation29]
        $region84: #{tpu_custom_call.1} parent=11 // pred_fallthru
          _
        // Predicated region
        $region85: #{tpu_custom_call.1} parent=11 // pred_check
          %p1149 = pneg %p523
        $region86: #{tpu_custom_call.1} parent=11 // pred_check_branch
          %1151 = sbr.rel (%p1149) target = $region88
        $region87: #{tpu_custom_call.1} parent=11 // pred_region
          _
        $region88: #{tpu_custom_call.1} parent=11 // pred_fallthru
          _
        // Predicated region
        $region89: #{tpu_custom_call.1} parent=11 // pred_check
          %p1152 = pneg %p544
        $region90: #{tpu_custom_call.1} parent=11 // pred_check_branch
          %1154 = sbr.rel (%p1152) target = $region92
        $region91: #{tpu_custom_call.1} parent=11 // pred_region
          %s1156 = ssub.s32 64, 64
          %1157 = vsyncadd [#allocation32], %s1156
          %s1159 = sshll.u32 [#allocation31], 4
          %s1160 = int_to_ptr.vmem [resolvable:$true] %s1159
          %1162 = dma.hbm_to_vmem [thread:$0]  %s41, 64, %s1160, [#allocation32]
        $region92: #{tpu_custom_call.1} parent=11 // pred_fallthru
          _
        // Predicated region
        $region93: #{tpu_custom_call.1} parent=11 // pred_check
          %p1163 = pneg %p565
        $region94: #{tpu_custom_call.1} parent=11 // pred_check_branch
          %1165 = sbr.rel (%p1163) target = $region96
        $region95: #{tpu_custom_call.1} parent=11 // pred_region
          _
        $region96: #{tpu_custom_call.1} parent=11 // pred_fallthru
          _
        // Predicated region
        $region97: #{tpu_custom_call.1} parent=11 // pred_check
          %p1166 = pneg %p586
        $region98: #{tpu_custom_call.1} parent=11 // pred_check_branch
          %1168 = sbr.rel (%p1166) target = $region100
        $region99: #{tpu_custom_call.1} parent=11 // pred_region
          %s1170 = ssub.s32 16, 16
          %1171 = vsyncadd [#allocation32], %s1170
          %s1173 = sshll.u32 [#allocation33], 4
          %s1174 = int_to_ptr.vmem [resolvable:$true] %s1173
          %1176 = dma.hbm_to_vmem [thread:$0]  %s45, 16, %s1174, [#allocation32]
        $region100: #{tpu_custom_call.1} parent=11 // pred_fallthru
          _
        // Predicated region
        $region101: #{tpu_custom_call.1} parent=11 // pred_check
          %p1177 = pneg %p607
        $region102: #{tpu_custom_call.1} parent=11 // pred_check_branch
          %1179 = sbr.rel (%p1177) target = $region104
        $region103: #{tpu_custom_call.1} parent=11 // pred_region
          %s1181 = ssub.s32 64, 64
          %1182 = vsyncadd [#allocation35], %s1181
          %s1184 = sshll.u32 [#allocation34], 4
          %s1185 = int_to_ptr.vmem [resolvable:$true] %s1184
          %1187 = dma.hbm_to_vmem [thread:$0]  %s47, 64, %s1185, [#allocation35]
        $region104: #{tpu_custom_call.1} parent=11 // pred_fallthru
          _
        // Predicated region
        $region105: #{tpu_custom_call.1} parent=11 // pred_check
          %p1188 = pneg %p628
        $region106: #{tpu_custom_call.1} parent=11 // pred_check_branch
          %1190 = sbr.rel (%p1188) target = $region108
        $region107: #{tpu_custom_call.1} parent=11 // pred_region
          %s1192 = ssub.s32 16, 16
          %1193 = vsyncadd [#allocation35], %s1192
          %s1195 = sshll.u32 [#allocation36], 4
          %s1196 = int_to_ptr.vmem [resolvable:$true] %s1195
          %1198 = dma.hbm_to_vmem [thread:$0]  %s49, 16, %s1196, [#allocation35]
        $region108: #{tpu_custom_call.1} parent=11 // pred_fallthru
          _
        // Predicated region
        $region109: #{tpu_custom_call.1} parent=11 // pred_check
          %p1199 = pneg %p649
        $region110: #{tpu_custom_call.1} parent=11 // pred_check_branch
          %1201 = sbr.rel (%p1199) target = $region112
        $region111: #{tpu_custom_call.1} parent=11 // pred_region
          _
        $region112: #{tpu_custom_call.1} parent=11 // pred_fallthru
          _
        // Predicated region
        $region113: #{tpu_custom_call.1} parent=11 // pred_check
          %p1202 = pneg %p670
        $region114: #{tpu_custom_call.1} parent=11 // pred_check_branch
          %1204 = sbr.rel (%p1202) target = $region116
        $region115: #{tpu_custom_call.1} parent=11 // pred_region
          _
        $region116: #{tpu_custom_call.1} parent=11 // pred_fallthru
          _
        // Predicated region
        $region117: #{tpu_custom_call.1} parent=11 // pred_check
          %p1205 = pneg %p691
        $region118: #{tpu_custom_call.1} parent=11 // pred_check_branch
          %1207 = sbr.rel (%p1205) target = $region120
        $region119: #{tpu_custom_call.1} parent=11 // pred_region
          _
        $region120: #{tpu_custom_call.1} parent=11 // pred_fallthru
          _
        // Predicated region
        $region121: #{tpu_custom_call.1} parent=11 // pred_check
          %p1208 = pneg %p712
        $region122: #{tpu_custom_call.1} parent=11 // pred_check_branch
          %1210 = sbr.rel (%p1208) target = $region124
        $region123: #{tpu_custom_call.1} parent=11 // pred_region
          _
        $region124: #{tpu_custom_call.1} parent=11 // pred_fallthru
          _
        // Predicated region
        $region125: #{tpu_custom_call.1} parent=11 // pred_check
          %p1211 = pneg %p733
        $region126: #{tpu_custom_call.1} parent=11 // pred_check_branch
          %1213 = sbr.rel (%p1211) target = $region128
        $region127: #{tpu_custom_call.1} parent=11 // pred_region
          _
        $region128: #{tpu_custom_call.1} parent=11 // pred_fallthru
          _
        // Predicated region
        $region129: #{tpu_custom_call.1} parent=11 // pred_check
          %p1214 = pneg %p754
        $region130: #{tpu_custom_call.1} parent=11 // pred_check_branch
          %1216 = sbr.rel (%p1214) target = $region132
        $region131: #{tpu_custom_call.1} parent=11 // pred_region
          %s1218 = ssub.s32 1536, 1536
          %1219 = vsyncadd [#allocation38], %s1218
          %s1220 = sshll.u32 [#allocation37], 4
          %s1221 = int_to_ptr.vmem [resolvable:$true] %s1220
          %1226 = dma.hbm_to_vmem [thread:$0]  %s61, 1536, %s1221, [#allocation38], 128, 128, 8
        $region132: #{tpu_custom_call.1} parent=11 // pred_fallthru
          _
        // Predicated region
        $region133: #{tpu_custom_call.1} parent=11 // pred_check
          %p1227 = pneg %p775
        $region134: #{tpu_custom_call.1} parent=11 // pred_check_branch
          %1229 = sbr.rel (%p1227) target = $region136
        $region135: #{tpu_custom_call.1} parent=11 // pred_region
          _
        $region136: #{tpu_custom_call.1} parent=11 // pred_fallthru
          _
        // Predicated region
        $region137: #{tpu_custom_call.1} parent=11 // pred_check
          %p1230 = pneg %p796
        $region138: #{tpu_custom_call.1} parent=11 // pred_check_branch
          %1232 = sbr.rel (%p1230) target = $region140
        $region139: #{tpu_custom_call.1} parent=11 // pred_region
          _
        $region140: #{tpu_custom_call.1} parent=11 // pred_fallthru
          _
        // Predicated region
        $region141: #{tpu_custom_call.1} parent=11 // pred_check
          %p1233 = pneg %p817
        $region142: #{tpu_custom_call.1} parent=11 // pred_check_branch
          %1235 = sbr.rel (%p1233) target = $region144
        $region143: #{tpu_custom_call.1} parent=11 // pred_region
          _
        $region144: #{tpu_custom_call.1} parent=11 // pred_fallthru
          _
        // Predicated region
        $region145: #{tpu_custom_call.1} parent=11 // pred_check
          %p1236 = pneg %p838
        $region146: #{tpu_custom_call.1} parent=11 // pred_check_branch
          %1238 = sbr.rel (%p1236) target = $region148
        $region147: #{tpu_custom_call.1} parent=11 // pred_region
          _
        $region148: #{tpu_custom_call.1} parent=11 // pred_fallthru
          _
        // Predicated region
        $region149: #{tpu_custom_call.1} parent=11 // pred_check
          %p1239 = pneg %p859
        $region150: #{tpu_custom_call.1} parent=11 // pred_check_branch
          %1241 = sbr.rel (%p1239) target = $region152
        $region151: #{tpu_custom_call.1} parent=11 // pred_region
          _
        $region152: #{tpu_custom_call.1} parent=11 // pred_fallthru
          _
        // Predicated region
        $region153: #{tpu_custom_call.1} parent=11 // pred_check
          %p1242 = pneg %p880
        $region154: #{tpu_custom_call.1} parent=11 // pred_check_branch
          %1244 = sbr.rel (%p1242) target = $region156
        $region155: #{tpu_custom_call.1} parent=11 // pred_region
          _
        $region156: #{tpu_custom_call.1} parent=11 // pred_fallthru
          _
      $region12: #{tpu_custom_call.1} parent=5 // pred_fallthru
        _
      %p1245 = scmp.lt.s32.totalorder %s98, 5
      // Predicated region
      $region157: #{tpu_custom_call.1} parent=5 // pred_check
        %p1246 = pneg %p1245
      $region158: #{tpu_custom_call.1} parent=5 // pred_check_branch
        %1248 = sbr.rel (%p1246) target = $region160
      $region159: #{tpu_custom_call.1} parent=5 // pred_region
        // Predicated region
        $region161: #{tpu_custom_call.1} parent=159 // pred_check
          %p1249 = pneg %p202
        $region162: #{tpu_custom_call.1} parent=159 // pred_check_branch
          %1251 = sbr.rel (%p1249) target = $region164
        $region163: #{tpu_custom_call.1} parent=159 // pred_region
          %p1252 = scmp.lt.s32.totalorder %s98, 4
          %s1253 = scalar_select %p1252, %s98, 4
          %s1254 = smul.addr %s1253, 2
          %s1255 = scalar_lea.vmem %s9, %s1254
        $region164: #{tpu_custom_call.1} parent=159 // pred_fallthru
          _
      $region160: #{tpu_custom_call.1} parent=5 // pred_fallthru
        _
      %p1256 = scmp.le.s32.totalorder 1, %s98
      %p1257 = scmp.lt.s32.totalorder %s98, 6
      %p1258 = pnand %p1256, %p1257
      %p1259 = pneg %p1258
      // Predicated region
      $region165: #{tpu_custom_call.1} parent=5 // pred_check
        _
      $region166: #{tpu_custom_call.1} parent=5 // pred_check_branch
        %1261 = sbr.rel (%p1258) target = $region168
      $region167: #{tpu_custom_call.1} parent=5 // pred_region
        %s1262 = ssub.s32 %s98, 1
        // Predicated region
        $region169: #{tpu_custom_call.1} parent=167 // pred_check
          %p1263 = pneg %p119
        $region170: #{tpu_custom_call.1} parent=167 // pred_check_branch
          %1265 = sbr.rel (%p1263) target = $region172
        $region171: #{tpu_custom_call.1} parent=167 // pred_region
          %1266 = dma.done [#allocation9], 16
        $region172: #{tpu_custom_call.1} parent=167 // pred_fallthru
          _
        // Predicated region
        $region173: #{tpu_custom_call.1} parent=167 // pred_check
          %p1267 = pneg %p140
        $region174: #{tpu_custom_call.1} parent=167 // pred_check_branch
          %1269 = sbr.rel (%p1267) target = $region176
        $region175: #{tpu_custom_call.1} parent=167 // pred_region
          %1270 = dma.done [#allocation11], 16
        $region176: #{tpu_custom_call.1} parent=167 // pred_fallthru
          _
        // Predicated region
        $region177: #{tpu_custom_call.1} parent=167 // pred_check
          %p1271 = pneg %p182
        $region178: #{tpu_custom_call.1} parent=167 // pred_check_branch
          %1273 = sbr.rel (%p1271) target = $region180
        $region179: #{tpu_custom_call.1} parent=167 // pred_region
          %1274 = dma.done [#allocation8], 32
        $region180: #{tpu_custom_call.1} parent=167 // pred_fallthru
          _
        // Predicated region
        $region181: #{tpu_custom_call.1} parent=167 // pred_check
          %p1275 = pneg %p229
        $region182: #{tpu_custom_call.1} parent=167 // pred_check_branch
          %1277 = sbr.rel (%p1275) target = $region184
        $region183: #{tpu_custom_call.1} parent=167 // pred_region
          %1278 = dma.done [#allocation14], 64
        $region184: #{tpu_custom_call.1} parent=167 // pred_fallthru
          _
        // Predicated region
        $region185: #{tpu_custom_call.1} parent=167 // pred_check
          %p1279 = pneg %p250
        $region186: #{tpu_custom_call.1} parent=167 // pred_check_branch
          %1281 = sbr.rel (%p1279) target = $region188
        $region187: #{tpu_custom_call.1} parent=167 // pred_region
          %1282 = dma.done [#allocation14], 16
        $region188: #{tpu_custom_call.1} parent=167 // pred_fallthru
          _
        // Predicated region
        $region189: #{tpu_custom_call.1} parent=167 // pred_check
          %p1283 = pneg %p292
        $region190: #{tpu_custom_call.1} parent=167 // pred_check_branch
          %1285 = sbr.rel (%p1283) target = $region192
        $region191: #{tpu_custom_call.1} parent=167 // pred_region
          %1286 = dma.done [#allocation17], 48
        $region192: #{tpu_custom_call.1} parent=167 // pred_fallthru
          _
        // Predicated region
        $region193: #{tpu_custom_call.1} parent=167 // pred_check
          %p1287 = pneg %p313
        $region194: #{tpu_custom_call.1} parent=167 // pred_check_branch
          %1289 = sbr.rel (%p1287) target = $region196
        $region195: #{tpu_custom_call.1} parent=167 // pred_region
          %1290 = dma.done [#allocation17], 512
        $region196: #{tpu_custom_call.1} parent=167 // pred_fallthru
          _
        // Predicated region
        $region197: #{tpu_custom_call.1} parent=167 // pred_check
          %p1291 = pneg %p334
        $region198: #{tpu_custom_call.1} parent=167 // pred_check_branch
          %1293 = sbr.rel (%p1291) target = $region200
        $region199: #{tpu_custom_call.1} parent=167 // pred_region
          %1294 = dma.done [#allocation20], 16
        $region200: #{tpu_custom_call.1} parent=167 // pred_fallthru
          _
        // Predicated region
        $region201: #{tpu_custom_call.1} parent=167 // pred_check
          %p1295 = pneg %p355
        $region202: #{tpu_custom_call.1} parent=167 // pred_check_branch
          %1297 = sbr.rel (%p1295) target = $region204
        $region203: #{tpu_custom_call.1} parent=167 // pred_region
          %1298 = dma.done [#allocation20], 16
        $region204: #{tpu_custom_call.1} parent=167 // pred_fallthru
          _
        // Predicated region
        $region205: #{tpu_custom_call.1} parent=167 // pred_check
          %p1299 = pneg %p376
        $region206: #{tpu_custom_call.1} parent=167 // pred_check_branch
          %1301 = sbr.rel (%p1299) target = $region208
        $region207: #{tpu_custom_call.1} parent=167 // pred_region
          %1302 = dma.done [#allocation23], 16
        $region208: #{tpu_custom_call.1} parent=167 // pred_fallthru
          _
        // Predicated region
        $region209: #{tpu_custom_call.1} parent=167 // pred_check
          %p1303 = pneg %p397
        $region210: #{tpu_custom_call.1} parent=167 // pred_check_branch
          %1305 = sbr.rel (%p1303) target = $region212
        $region211: #{tpu_custom_call.1} parent=167 // pred_region
          %1306 = dma.done [#allocation23], 512
        $region212: #{tpu_custom_call.1} parent=167 // pred_fallthru
          _
        // Predicated region
        $region213: #{tpu_custom_call.1} parent=167 // pred_check
          %p1307 = pneg %p418
        $region214: #{tpu_custom_call.1} parent=167 // pred_check_branch
          %1309 = sbr.rel (%p1307) target = $region216
        $region215: #{tpu_custom_call.1} parent=167 // pred_region
          %1310 = dma.done [#allocation26], 16
        $region216: #{tpu_custom_call.1} parent=167 // pred_fallthru
          _
        // Predicated region
        $region217: #{tpu_custom_call.1} parent=167 // pred_check
          %p1311 = pneg %p460
        $region218: #{tpu_custom_call.1} parent=167 // pred_check_branch
          %1313 = sbr.rel (%p1311) target = $region220
        $region219: #{tpu_custom_call.1} parent=167 // pred_region
          %1314 = dma.done [#allocation26], 16
        $region220: #{tpu_custom_call.1} parent=167 // pred_fallthru
          _
        // Predicated region
        $region221: #{tpu_custom_call.1} parent=167 // pred_check
          %p1315 = pneg %p481
        $region222: #{tpu_custom_call.1} parent=167 // pred_check_branch
          %1317 = sbr.rel (%p1315) target = $region224
        $region223: #{tpu_custom_call.1} parent=167 // pred_region
          %1318 = dma.done [#allocation29], 16
        $region224: #{tpu_custom_call.1} parent=167 // pred_fallthru
          _
        // Predicated region
        $region225: #{tpu_custom_call.1} parent=167 // pred_check
          %p1319 = pneg %p502
        $region226: #{tpu_custom_call.1} parent=167 // pred_check_branch
          %1321 = sbr.rel (%p1319) target = $region228
        $region227: #{tpu_custom_call.1} parent=167 // pred_region
          %1322 = dma.done [#allocation29], 16
        $region228: #{tpu_custom_call.1} parent=167 // pred_fallthru
          _
        // Predicated region
        $region229: #{tpu_custom_call.1} parent=167 // pred_check
          %p1323 = pneg %p544
        $region230: #{tpu_custom_call.1} parent=167 // pred_check_branch
          %1325 = sbr.rel (%p1323) target = $region232
        $region231: #{tpu_custom_call.1} parent=167 // pred_region
          %1326 = dma.done [#allocation32], 64
        $region232: #{tpu_custom_call.1} parent=167 // pred_fallthru
          _
        // Predicated region
        $region233: #{tpu_custom_call.1} parent=167 // pred_check
          %p1327 = pneg %p586
        $region234: #{tpu_custom_call.1} parent=167 // pred_check_branch
          %1329 = sbr.rel (%p1327) target = $region236
        $region235: #{tpu_custom_call.1} parent=167 // pred_region
          %1330 = dma.done [#allocation32], 16
        $region236: #{tpu_custom_call.1} parent=167 // pred_fallthru
          _
        // Predicated region
        $region237: #{tpu_custom_call.1} parent=167 // pred_check
          %p1331 = pneg %p607
        $region238: #{tpu_custom_call.1} parent=167 // pred_check_branch
          %1333 = sbr.rel (%p1331) target = $region240
        $region239: #{tpu_custom_call.1} parent=167 // pred_region
          %1334 = dma.done [#allocation35], 64
        $region240: #{tpu_custom_call.1} parent=167 // pred_fallthru
          _
        // Predicated region
        $region241: #{tpu_custom_call.1} parent=167 // pred_check
          %p1335 = pneg %p628
        $region242: #{tpu_custom_call.1} parent=167 // pred_check_branch
          %1337 = sbr.rel (%p1335) target = $region244
        $region243: #{tpu_custom_call.1} parent=167 // pred_region
          %1338 = dma.done [#allocation35], 16
        $region244: #{tpu_custom_call.1} parent=167 // pred_fallthru
          _
        // Predicated region
        $region245: #{tpu_custom_call.1} parent=167 // pred_check
          %p1339 = pneg %p754
        $region246: #{tpu_custom_call.1} parent=167 // pred_check_branch
          %1341 = sbr.rel (%p1339) target = $region248
        $region247: #{tpu_custom_call.1} parent=167 // pred_region
          %1342 = dma.done [#allocation38], 1536
        $region248: #{tpu_custom_call.1} parent=167 // pred_fallthru
          _
        %1343 = sfence
        %p1344 = pneg %p119
        %p1345 = pneg %p116
        %p1346 = pneg %p140
        %p1347 = pneg %p137
        %p1348 = pneg %p161
        %p1349 = pneg %p158
        %p1350 = pneg %p182
        %p1351 = pneg %p179
        %p1352 = scmp.lt.s32.totalorder %s103, 4
        %s1353 = scalar_select %p1352, %s103, 4
        %s1354 = smul.addr %s1353, 2
        %s1355 = scalar_lea.vmem %s9, %s1354
        %p1356 = pneg %p208
        %p1357 = pneg %p205
        %p1358 = pneg %p229
        %p1359 = pneg %p226
        %p1360 = pneg %p250
        %p1361 = pneg %p247
        %p1362 = pneg %p271
        %p1363 = pneg %p268
        %p1364 = pneg %p292
        %p1365 = pneg %p289
        %p1366 = pneg %p313
        %p1367 = pneg %p310
        %p1368 = pneg %p334
        %p1369 = pneg %p331
        %p1370 = pneg %p355
        %p1371 = pneg %p352
        %p1372 = pneg %p376
        %p1373 = pneg %p373
        %p1374 = pneg %p397
        %p1375 = pneg %p394
        %p1376 = pneg %p418
        %p1377 = pneg %p415
        %p1378 = pneg %p439
        %p1379 = pneg %p436
        %p1380 = pneg %p460
        %p1381 = pneg %p457
        %p1382 = pneg %p481
        %p1383 = pneg %p478
        %p1384 = pneg %p502
        %p1385 = pneg %p499
        %p1386 = pneg %p523
        %p1387 = pneg %p520
        %p1388 = pneg %p544
        %p1389 = pneg %p541
        %p1390 = pneg %p565
        %p1391 = pneg %p562
        %p1392 = pneg %p586
        %p1393 = pneg %p583
        %p1394 = pneg %p607
        %p1395 = pneg %p604
        %p1396 = pneg %p628
        %p1397 = pneg %p625
        %p1398 = pneg %p649
        %p1399 = pneg %p646
        %p1400 = pneg %p670
        %p1401 = pneg %p667
        %p1402 = pneg %p691
        %p1403 = pneg %p688
        %p1404 = pneg %p712
        %p1405 = pneg %p709
        %p1406 = pneg %p733
        %p1407 = pneg %p730
        %p1408 = pneg %p754
        %p1409 = pneg %p751
        %p1410 = pneg %p775
        %p1411 = pneg %p772
        %p1412 = pneg %p796
        %p1413 = pneg %p793
        %p1414 = pneg %p817
        %p1415 = pneg %p814
        %p1416 = pneg %p838
        %p1417 = pneg %p835
        %p1418 = pneg %p859
        %p1419 = pneg %p856
        %p1420 = pneg %p880
        %p1421 = pneg %p877
        %p1422 = pneg %p906
        %p1423 = pneg %p903
        %p1424 = scmp.lt.s32.totalorder %s103, 4
        %s1425 = scalar_select %p1424, %s103, 4
        %s1426 = smul.addr %s1425, 2
        %s1427 = scalar_lea.vmem %s75, %s1426
        %p1428 = pneg %p932
        %p1429 = pneg %p929
        %p1430 = scmp.lt.s32.totalorder %s103, 4
        %s1431 = scalar_select %p1430, %s103, 4
        %s1432 = smul.addr %s1431, 2
        %s1433 = scalar_lea.vmem %s77, %s1432
        %p1434 = pneg %p958
        %p1435 = pneg %p955
        %p1436 = scmp.lt.s32.totalorder %s103, 4
        %s1437 = scalar_select %p1436, %s103, 4
        %s1438 = smul.addr %s1437, 2
        %s1439 = scalar_lea.vmem %s79, %s1438
        %p1440 = scmp.lt.s32.totalorder %s103, 4
        %s1441 = scalar_select %p1440, %s103, 4
        %s1442 = smul.addr %s1441, 2
        %s1443 = scalar_lea.vmem %s9, %s1442
        %p1444 = scmp.lt.s32.totalorder %s103, 4
        %s1445 = scalar_select %p1444, %s103, 4
        %s1446 = smul.addr %s1445, 2
        %s1447 = scalar_lea.vmem %s75, %s1446
        %p1448 = scmp.lt.s32.totalorder %s103, 4
        %s1449 = scalar_select %p1448, %s103, 4
        %s1450 = smul.addr %s1449, 2
        %s1451 = scalar_lea.vmem %s77, %s1450
        %p1452 = scmp.lt.s32.totalorder %s103, 4
        %s1453 = scalar_select %p1452, %s103, 4
        %s1454 = smul.addr %s1453, 2
        %s1455 = scalar_lea.vmem %s79, %s1454
        %p1456 = scmp.eq.s32.totalorder %s103, 0
        // Predicated region
        $region249: #{tpu_custom_call.1} parent=167 // pred_check
          %p1457 = pneg %p1456
        $region250: #{tpu_custom_call.1} parent=167 // pred_check_branch
          %1459 = sbr.rel (%p1457) target = $region252
        $region251: #{tpu_custom_call.1} parent=167 // pred_region
          %v1460 = vld [vmem:[#allocation12] sm:$0x3]
          %vm1461 = vcmask 25600
          %1462 = vst.msk [vmem:[#allocation2] sm:$0x3] %vm1461, %v1460
          %vm1463 = vcmask 254976
          %1464 = vst.msk [vmem:[#allocation3] sm:$0x3] %vm1463, 0.0
          %1465 = vst.msk [vmem:[#allocation4] sm:$0x3] %vm1463, 0.0
          %v1466 = vld [vmem:[%s5] sm:$0x3f]
          %v1467 = vld [vmem:[%s5 + $0x8] sm:$0x3f]
          %v1470 = vcombine.high %v1466, %v1466
          %v1472 = vunpack.c.l.s4 1983009808
          %v1473 = vunpack.c.0.s8 %v1472
          %v1474 = vlaneseq
          %v1475 = vshrl.u32 %v1474, 7
          %v1476 = vsub.s32 %v1473, %v1475
          %v1477 = vrot.slane %v1466, %v1476
          %v1479 = vunpack.c.l.s4 1983009808
          %v1480 = vunpack.c.0.s8 %v1479
          %v1481 = vlaneseq
          %v1482 = vshrl.u32 %v1481, 7
          %v1483 = vsub.s32 %v1480, %v1482
          %v1484 = vrot.slane %v1470, %v1483
          %v1485 = vcombine.high %v1477, %v1477
          %v1486 = vcombine.high %v1467, %v1467
          %v1488 = vunpack.c.l.s4 1983009808
          %v1489 = vunpack.c.0.s8 %v1488
          %v1490 = vlaneseq
          %v1491 = vshrl.u32 %v1490, 7
          %v1492 = vsub.s32 %v1489, %v1491
          %v1493 = vrot.slane %v1467, %v1492
          %v1495 = vunpack.c.l.s4 1983009808
          %v1496 = vunpack.c.0.s8 %v1495
          %v1497 = vlaneseq
          %v1498 = vshrl.u32 %v1497, 7
          %v1499 = vsub.s32 %v1496, %v1498
          %v1500 = vrot.slane %v1486, %v1499
          %v1501 = vcombine.high %v1493, %v1493
          %v1502 = vld [vmem:[#allocation13] sm:$0xf]
          %v1503 = vld [vmem:[#allocation15] sm:$0x1]
          %v1505 = vlaneseq
          %v1506 = vshrl.u32 %v1505, 7
          %v1507 = vsub.s32 0, %v1506
          %v1508 = vrot.slane %v1503, %v1507
          %v1510 = vcombine.low %v1477, %v1485
          %v1511 = vcombine.low %v1484, %v1493
          %v1513 = vunpack.c.l.s4 1983009808
          %v1514 = vunpack.c.0.s8 %v1513
          %v1515 = vlaneseq
          %v1516 = vshrl.u32 %v1515, 7
          %v1517 = vsub.s32 %v1514, %v1516
          %v1518 = vrot.slane %v1510, %v1517
          %v1520 = vunpack.c.l.s4 1983009808
          %v1521 = vunpack.c.0.s8 %v1520
          %v1522 = vlaneseq
          %v1523 = vshrl.u32 %v1522, 7
          %v1524 = vsub.s32 %v1521, %v1523
          %v1525 = vrot.slane %v1511, %v1524
          %v1526 = vcombine.low %v1518, %v1525
          %v1527 = vcombine.low %v1501, %v1500
          %v1529 = vunpack.c.l.s4 1983009808
          %v1530 = vunpack.c.0.s8 %v1529
          %v1531 = vlaneseq
          %v1532 = vshrl.u32 %v1531, 7
          %v1533 = vsub.s32 %v1530, %v1532
          %v1534 = vrot.slane %v1527, %v1533
          %vm1535 = vcmask 31744
          %v1536 = vsel %vm1535, %v1526, 0
          %v1538 = vsel %vm1535, %v1534, 0
          %vm1540 = vcmask 1043456
          %v1542 = vsel %vm1540, %v1502, 0
          %1544 = vmatprep.subr.mxu0 0.0
          %1545 = vmatpush1.msra.mxu0 %v1542
          %1546 = vmatprep.subr.mxu0 0.0
          %1547 = vmatpush1.msra.mxu0 0.0
          %1548 = vmatprep.subr.mxu0 0.0
          %1549 = vmatpush1.msra.mxu0 0.0
          %1550 = vmatprep.subr.mxu0 0.0
          %1551 = vmatpush1.msra.mxu0 0.0
          %1552 = vmatprep.subr.mxu0 0.0
          %1553 = vmatpush1.msra.mxu0 0.0
          %1554 = vmatprep.subr.mxu0 0.0
          %1555 = vmatpush1.msra.mxu0 0.0
          %1556 = vmatprep.subr.mxu0 0.0
          %1557 = vmatpush1.msra.mxu0 0.0
          %1558 = vmatprep.subr.mxu0 0.0
          %1559 = vmatpush1.msra.mxu0 0.0
          %1560 = vmatprep.subr.mxu0 0.0
          %1561 = vmatpush1.msra.mxu0 0.0
          %1562 = vmatprep.subr.mxu0 0.0
          %1563 = vmatpush1.msra.mxu0 0.0
          %1564 = vmatprep.subr.mxu0 0.0
          %1565 = vmatpush1.msra.mxu0 0.0
          %1566 = vmatprep.subr.mxu0 0.0
          %1567 = vmatpush1.msra.mxu0 0.0
          %1568 = vmatprep.subr.mxu0 0.0
          %1569 = vmatpush1.msra.mxu0 0.0
          %1570 = vmatprep.subr.mxu0 0.0
          %1571 = vmatpush1.msra.mxu0 0.0
          %1572 = vmatprep.subr.mxu0 0.0
          %1573 = vmatpush1.msra.mxu0 0.0
          %1574 = vmatprep.subr.mxu0 0.0
          %1575 = vmatpush1.msra.mxu0 0.0
          %1576 = vmatprep.subr.mxu0 0.0
          %1577 = vmatpush1.msra.mxu0 0.0
          %1578 = vmatprep.subr.mxu0 0.0
          %1579 = vmatpush1.msra.mxu0 0.0
          %1580 = vmatprep.subr.mxu0 0.0
          %1581 = vmatpush1.msra.mxu0 0.0
          %1582 = vmatprep.subr.mxu0 0.0
          %1583 = vmatpush1.msra.mxu0 0.0
          %1584 = vmatprep.subr.mxu0 0.0
          %1585 = vmatpush1.msra.mxu0 0.0
          %1586 = vmatprep.subr.mxu0 0.0
          %1587 = vmatpush1.msra.mxu0 0.0
          %1588 = vmatprep.subr.mxu0 0.0
          %1589 = vmatpush1.msra.mxu0 0.0
          %1590 = vmatprep.subr.mxu0 0.0
          %1591 = vmatpush1.msra.mxu0 0.0
          %1592 = vmatprep.subr.mxu0 0.0
          %1593 = vmatpush1.msra.mxu0 0.0
          %1594 = vmatprep.subr.mxu0 0.0
          %1595 = vmatpush1.msra.mxu0 0.0
          %1596 = vmatprep.subr.mxu0 0.0
          %1597 = vmatpush1.msra.mxu0 0.0
          %1598 = vmatprep.subr.mxu0 0.0
          %1599 = vmatpush1.msra.mxu0 0.0
          %1600 = vmatprep.subr.mxu0 0.0
          %1601 = vmatpush1.msra.mxu0 0.0
          %1602 = vmatprep.subr.mxu0 0.0
          %1603 = vmatpush1.msra.mxu0 0.0
          %1604 = vmatprep.subr.mxu0 0.0
          %1605 = vmatpush1.msra.mxu0 0.0
          %1606 = vmatprep.subr.mxu0 0.0
          %1607 = vmatpush1.msra.mxu0 0.0
          %1608 = vmatprep.mubr.f32.mxu0 0.0
          %1609 = vmatmul.mubr.f32.gmra.mrb[0].mxu0 %v1536
          %v1610 = vpop.f32.mrb[0].mxu0
          %v1611 = vadd.f32 %v1508, %v1610
          %v1612 = vpop.f32.mrb[0].mxu0
          %1613 = vmatprep.mubr.f32.mxu0 0.0
          %1614 = vmatmul.mubr.f32.gmra.mrb[0].mxu0 %v1538
          %v1615 = vpop.f32.mrb[0].mxu0
          %v1616 = vadd.f32 %v1508, %v1615
          %v1617 = vpop.f32.mrb[0].mxu0
          %1618 = vdwg.mxu0
          %s1619 = scalar_lea.vmem %s15, 32
          %v1620 = vld [vmem:[%s1619] sm:$0xff]
          %v1621 = vld [vmem:[%s1619 + $0x8] sm:$0xff]
          %v1622 = vld [vmem:[%s1619 + $0x10] sm:$0xff]
          %v1623 = vld [vmem:[%s1619 + $0x18] sm:$0xff]
          %s1624 = scalar_lea.vmem [#allocation16], 1
          %v1625 = vld [vmem:[%s1624] sm:$0x1]
          %v1627 = vlaneseq
          %v1628 = vshrl.u32 %v1627, 7
          %v1629 = vsub.s32 0, %v1628
          %v1630 = vrot.slane %v1625, %v1629
          %vm1632 = vcmask 261120
          %v1634 = vsel %vm1632, %v1611, 0
          %v1637 = vsel %vm1632, %v1616, 0
          %1639 = vmatprep.subr.mxu0 0.0
          %1640 = vmatpush1.msra.mxu0 %v1620
          %1641 = vmatprep.subr.mxu0 0.0
          %1642 = vmatpush1.msra.mxu0 %v1621
          %1643 = vmatprep.subr.mxu0 0.0
          %1644 = vmatpush1.msra.mxu0 %v1622
          %1645 = vmatprep.subr.mxu0 0.0
          %1646 = vmatpush1.msra.mxu0 %v1623
          %1647 = vmatprep.subr.mxu0 0.0
          %1648 = vmatpush1.msra.mxu0 0.0
          %1649 = vmatprep.subr.mxu0 0.0
          %1650 = vmatpush1.msra.mxu0 0.0
          %1651 = vmatprep.subr.mxu0 0.0
          %1652 = vmatpush1.msra.mxu0 0.0
          %1653 = vmatprep.subr.mxu0 0.0
          %1654 = vmatpush1.msra.mxu0 0.0
          %1655 = vmatprep.subr.mxu0 0.0
          %1656 = vmatpush1.msra.mxu0 0.0
          %1657 = vmatprep.subr.mxu0 0.0
          %1658 = vmatpush1.msra.mxu0 0.0
          %1659 = vmatprep.subr.mxu0 0.0
          %1660 = vmatpush1.msra.mxu0 0.0
          %1661 = vmatprep.subr.mxu0 0.0
          %1662 = vmatpush1.msra.mxu0 0.0
          %1663 = vmatprep.subr.mxu0 0.0
          %1664 = vmatpush1.msra.mxu0 0.0
          %1665 = vmatprep.subr.mxu0 0.0
          %1666 = vmatpush1.msra.mxu0 0.0
          %1667 = vmatprep.subr.mxu0 0.0
          %1668 = vmatpush1.msra.mxu0 0.0
          %1669 = vmatprep.subr.mxu0 0.0
          %1670 = vmatpush1.msra.mxu0 0.0
          %1671 = vmatprep.subr.mxu0 0.0
          %1672 = vmatpush1.msra.mxu0 0.0
          %1673 = vmatprep.subr.mxu0 0.0
          %1674 = vmatpush1.msra.mxu0 0.0
          %1675 = vmatprep.subr.mxu0 0.0
          %1676 = vmatpush1.msra.mxu0 0.0
          %1677 = vmatprep.subr.mxu0 0.0
          %1678 = vmatpush1.msra.mxu0 0.0
          %1679 = vmatprep.subr.mxu0 0.0
          %1680 = vmatpush1.msra.mxu0 0.0
          %1681 = vmatprep.subr.mxu0 0.0
          %1682 = vmatpush1.msra.mxu0 0.0
          %1683 = vmatprep.subr.mxu0 0.0
          %1684 = vmatpush1.msra.mxu0 0.0
          %1685 = vmatprep.subr.mxu0 0.0
          %1686 = vmatpush1.msra.mxu0 0.0
          %1687 = vmatprep.subr.mxu0 0.0
          %1688 = vmatpush1.msra.mxu0 0.0
          %1689 = vmatprep.subr.mxu0 0.0
          %1690 = vmatpush1.msra.mxu0 0.0
          %1691 = vmatprep.subr.mxu0 0.0
          %1692 = vmatpush1.msra.mxu0 0.0
          %1693 = vmatprep.subr.mxu0 0.0
          %1694 = vmatpush1.msra.mxu0 0.0
          %1695 = vmatprep.subr.mxu0 0.0
          %1696 = vmatpush1.msra.mxu0 0.0
          %1697 = vmatprep.subr.mxu0 0.0
          %1698 = vmatpush1.msra.mxu0 0.0
          %1699 = vmatprep.subr.mxu0 0.0
          %1700 = vmatpush1.msra.mxu0 0.0
          %1701 = vmatprep.subr.mxu0 0.0
          %1702 = vmatpush1.msra.mxu0 0.0
          %1703 = vmatprep.mubr.f32.mxu0 0.0
          %1704 = vmatmul.mubr.f32.gmra.mrb[0].mxu0 %v1634
          %v1705 = vpop.f32.mrb[0].mxu0
          %v1706 = vadd.f32 %v1630, %v1705
          %v1707 = vpop.f32.mrb[0].mxu0
          %1708 = vmatprep.mubr.f32.mxu0 0.0
          %1709 = vmatmul.mubr.f32.gmra.mrb[0].mxu0 %v1637
          %v1710 = vpop.f32.mrb[0].mxu0
          %v1711 = vadd.f32 %v1630, %v1710
          %v1712 = vpop.f32.mrb[0].mxu0
          %1713 = vdwg.mxu0
          %v1716 = vcombine.high %v1706, %v1706
          %v1718 = vunpack.c.l.s4 1983009808
          %v1719 = vunpack.c.0.s8 %v1718
          %v1720 = vlaneseq
          %v1721 = vshrl.u32 %v1720, 7
          %v1722 = vsub.s32 %v1719, %v1721
          %v1723 = vrot.slane %v1706, %v1722
          %v1725 = vunpack.c.l.s4 1983009808
          %v1726 = vunpack.c.0.s8 %v1725
          %v1727 = vlaneseq
          %v1728 = vshrl.u32 %v1727, 7
          %v1729 = vsub.s32 %v1726, %v1728
          %v1730 = vrot.slane %v1716, %v1729
          %v1731 = vcombine.high %v1723, %v1723
          %v1732 = vcombine.high %v1730, %v1730
          %v1734 = vunpack.c.l.s4 1983009808
          %v1735 = vunpack.c.0.s8 %v1734
          %v1736 = vlaneseq
          %v1737 = vshrl.u32 %v1736, 7
          %v1738 = vsub.s32 %v1735, %v1737
          %v1739 = vrot.slane %v1711, %v1738
          %v1740 = vcombine.high %v1739, %v1739
          %s1741 = scalar_lea.vmem %s15, 64
          %v1742 = vld [vmem:[%s1741] sm:$0xff]
          %v1743 = vld [vmem:[%s1741 + $0x8] sm:$0xff]
          %v1744 = vld [vmem:[%s1741 + $0x10] sm:$0xff]
          %v1745 = vld [vmem:[%s1741 + $0x18] sm:$0xff]
          %s1746 = scalar_lea.vmem [#allocation16], 2
          %v1747 = vld [vmem:[%s1746] sm:$0x1]
          %v1749 = vlaneseq
          %v1750 = vshrl.u32 %v1749, 7
          %v1751 = vsub.s32 0, %v1750
          %v1752 = vrot.slane %v1747, %v1751
          %1754 = vmatprep.subr.mxu0 0.0
          %1755 = vmatpush1.msra.mxu0 %v1742
          %1756 = vmatprep.subr.mxu0 0.0
          %1757 = vmatpush1.msra.mxu0 %v1743
          %1758 = vmatprep.subr.mxu0 0.0
          %1759 = vmatpush1.msra.mxu0 %v1744
          %1760 = vmatprep.subr.mxu0 0.0
          %1761 = vmatpush1.msra.mxu0 %v1745
          %1762 = vmatprep.subr.mxu0 0.0
          %1763 = vmatpush1.msra.mxu0 0.0
          %1764 = vmatprep.subr.mxu0 0.0
          %1765 = vmatpush1.msra.mxu0 0.0
          %1766 = vmatprep.subr.mxu0 0.0
          %1767 = vmatpush1.msra.mxu0 0.0
          %1768 = vmatprep.subr.mxu0 0.0
          %1769 = vmatpush1.msra.mxu0 0.0
          %1770 = vmatprep.subr.mxu0 0.0
          %1771 = vmatpush1.msra.mxu0 0.0
          %1772 = vmatprep.subr.mxu0 0.0
          %1773 = vmatpush1.msra.mxu0 0.0
          %1774 = vmatprep.subr.mxu0 0.0
          %1775 = vmatpush1.msra.mxu0 0.0
          %1776 = vmatprep.subr.mxu0 0.0
          %1777 = vmatpush1.msra.mxu0 0.0
          %1778 = vmatprep.subr.mxu0 0.0
          %1779 = vmatpush1.msra.mxu0 0.0
          %1780 = vmatprep.subr.mxu0 0.0
          %1781 = vmatpush1.msra.mxu0 0.0
          %1782 = vmatprep.subr.mxu0 0.0
          %1783 = vmatpush1.msra.mxu0 0.0
          %1784 = vmatprep.subr.mxu0 0.0
          %1785 = vmatpush1.msra.mxu0 0.0
          %1786 = vmatprep.subr.mxu0 0.0
          %1787 = vmatpush1.msra.mxu0 0.0
          %1788 = vmatprep.subr.mxu0 0.0
          %1789 = vmatpush1.msra.mxu0 0.0
          %1790 = vmatprep.subr.mxu0 0.0
          %1791 = vmatpush1.msra.mxu0 0.0
          %1792 = vmatprep.subr.mxu0 0.0
          %1793 = vmatpush1.msra.mxu0 0.0
          %1794 = vmatprep.subr.mxu0 0.0
          %1795 = vmatpush1.msra.mxu0 0.0
          %1796 = vmatprep.subr.mxu0 0.0
          %1797 = vmatpush1.msra.mxu0 0.0
          %1798 = vmatprep.subr.mxu0 0.0
          %1799 = vmatpush1.msra.mxu0 0.0
          %1800 = vmatprep.subr.mxu0 0.0
          %1801 = vmatpush1.msra.mxu0 0.0
          %1802 = vmatprep.subr.mxu0 0.0
          %1803 = vmatpush1.msra.mxu0 0.0
          %1804 = vmatprep.subr.mxu0 0.0
          %1805 = vmatpush1.msra.mxu0 0.0
          %1806 = vmatprep.subr.mxu0 0.0
          %1807 = vmatpush1.msra.mxu0 0.0
          %1808 = vmatprep.subr.mxu0 0.0
          %1809 = vmatpush1.msra.mxu0 0.0
          %1810 = vmatprep.subr.mxu0 0.0
          %1811 = vmatpush1.msra.mxu0 0.0
          %1812 = vmatprep.subr.mxu0 0.0
          %1813 = vmatpush1.msra.mxu0 0.0
          %1814 = vmatprep.subr.mxu0 0.0
          %1815 = vmatpush1.msra.mxu0 0.0
          %1816 = vmatprep.subr.mxu0 0.0
          %1817 = vmatpush1.msra.mxu0 0.0
          %1818 = vmatprep.mubr.f32.mxu0 0.0
          %1819 = vmatmul.mubr.f32.gmra.mrb[0].mxu0 %v1634
          %v1820 = vpop.f32.mrb[0].mxu0
          %v1821 = vadd.f32 %v1752, %v1820
          %v1822 = vpop.f32.mrb[0].mxu0
          %1823 = vmatprep.mubr.f32.mxu0 0.0
          %1824 = vmatmul.mubr.f32.gmra.mrb[0].mxu0 %v1637
          %v1825 = vpop.f32.mrb[0].mxu0
          %v1826 = vadd.f32 %v1752, %v1825
          %v1827 = vpop.f32.mrb[0].mxu0
          %1828 = vdwg.mxu0
          %v1831 = vcombine.high %v1821, %v1821
          %v1833 = vunpack.c.l.s4 1983009808
          %v1834 = vunpack.c.0.s8 %v1833
          %v1835 = vlaneseq
          %v1836 = vshrl.u32 %v1835, 7
          %v1837 = vsub.s32 %v1834, %v1836
          %v1838 = vrot.slane %v1821, %v1837
          %v1840 = vunpack.c.l.s4 1983009808
          %v1841 = vunpack.c.0.s8 %v1840
          %v1842 = vlaneseq
          %v1843 = vshrl.u32 %v1842, 7
          %v1844 = vsub.s32 %v1841, %v1843
          %v1845 = vrot.slane %v1831, %v1844
          %v1846 = vcombine.high %v1838, %v1838
          %v1847 = vcombine.high %v1845, %v1845
          %v1849 = vunpack.c.l.s4 1983009808
          %v1850 = vunpack.c.0.s8 %v1849
          %v1851 = vlaneseq
          %v1852 = vshrl.u32 %v1851, 7
          %v1853 = vsub.s32 %v1850, %v1852
          %v1854 = vrot.slane %v1826, %v1853
          %v1855 = vcombine.high %v1854, %v1854
          %v1856 = vcombine.low %v1723, %v1731
          %v1858 = vunpack.c.l.s4 1983009808
          %v1859 = vunpack.c.0.s8 %v1858
          %v1860 = vlaneseq
          %v1861 = vshrl.u32 %v1860, 7
          %v1862 = vsub.s32 %v1859, %v1861
          %v1863 = vrot.slane %v1856, %v1862
          %v1865 = vunpack.c.l.s4 1983009808
          %v1866 = vunpack.c.0.s8 %v1865
          %v1867 = vlaneseq
          %v1868 = vshrl.u32 %v1867, 7
          %v1869 = vsub.s32 %v1866, %v1868
          %v1870 = vrot.slane %v1730, %v1869
          %v1871 = vcombine.low %v1863, %v1870
          %v1872 = vcombine.low %v1732, %v1739
          %v1874 = vunpack.c.l.s4 1983009808
          %v1875 = vunpack.c.0.s8 %v1874
          %v1876 = vlaneseq
          %v1877 = vshrl.u32 %v1876, 7
          %v1878 = vsub.s32 %v1875, %v1877
          %v1879 = vrot.slane %v1872, %v1878
          %v1881 = vunpack.c.l.s4 1983009808
          %v1882 = vunpack.c.0.s8 %v1881
          %v1883 = vlaneseq
          %v1884 = vshrl.u32 %v1883, 7
          %v1885 = vsub.s32 %v1882, %v1884
          %v1886 = vrot.slane %v1740, %v1885
          %v1887 = vcombine.low %v1879, %v1886
          %vm1890 = vcmask 1045504
          %v1891 = vsel %vm1890, %v1871, 0.0
          %v1892 = vsel %vm1890, %v1887, 0.0
          %1893 = vst.msk [vmem:[#allocation5] sm:$0xff] %vm1632, %v1891
          %vm1894 = vcmask 256000
          %1895 = vst.msk [vmem:[#allocation5 + $0x8] sm:$0x7] %vm1894, 0.0
          %1896 = vst.msk [vmem:[#allocation5 + $0x10] sm:$0xff] %vm1632, %v1892
          %1897 = vst.msk [vmem:[#allocation5 + $0x18] sm:$0x7] %vm1894, 0.0
          %v1898 = vcombine.low %v1838, %v1846
          %v1900 = vunpack.c.l.s4 1983009808
          %v1901 = vunpack.c.0.s8 %v1900
          %v1902 = vlaneseq
          %v1903 = vshrl.u32 %v1902, 7
          %v1904 = vsub.s32 %v1901, %v1903
          %v1905 = vrot.slane %v1898, %v1904
          %v1907 = vunpack.c.l.s4 1983009808
          %v1908 = vunpack.c.0.s8 %v1907
          %v1909 = vlaneseq
          %v1910 = vshrl.u32 %v1909, 7
          %v1911 = vsub.s32 %v1908, %v1910
          %v1912 = vrot.slane %v1845, %v1911
          %v1913 = vcombine.low %v1905, %v1912
          %v1914 = vcombine.low %v1847, %v1854
          %v1916 = vunpack.c.l.s4 1983009808
          %v1917 = vunpack.c.0.s8 %v1916
          %v1918 = vlaneseq
          %v1919 = vshrl.u32 %v1918, 7
          %v1920 = vsub.s32 %v1917, %v1919
          %v1921 = vrot.slane %v1914, %v1920
          %v1923 = vunpack.c.l.s4 1983009808
          %v1924 = vunpack.c.0.s8 %v1923
          %v1925 = vlaneseq
          %v1926 = vshrl.u32 %v1925, 7
          %v1927 = vsub.s32 %v1924, %v1926
          %v1928 = vrot.slane %v1855, %v1927
          %v1929 = vcombine.low %v1921, %v1928
          %v1932 = vsel %vm1890, %v1913, 0.0
          %v1933 = vsel %vm1890, %v1929, 0.0
          %1934 = vst.msk [vmem:[#allocation6] sm:$0xff] %vm1632, %v1932
          %1935 = vst.msk [vmem:[#allocation6 + $0x8] sm:$0x7] %vm1894, 0.0
          %1936 = vst.msk [vmem:[#allocation6 + $0x10] sm:$0xff] %vm1632, %v1933
          %1937 = vst.msk [vmem:[#allocation6 + $0x18] sm:$0x7] %vm1894, 0.0
        $region252: #{tpu_custom_call.1} parent=167 // pred_fallthru
          _
        %v1938 = vld [vmem:[#allocation2] sm:$0x3]
        %s1939 = sadd.s32 %s103, 6
        %v1940 = vld [vmem:[#allocation13] sm:$0xf]
        %v1941 = vld [vmem:[#allocation15] sm:$0x1]
        %v1943 = vlaneseq
        %v1944 = vshrl.u32 %v1943, 7
        %v1945 = vsub.s32 0, %v1944
        %v1946 = vrot.slane %v1941, %v1945
        %vm1948 = vcmask 31744
        %v1950 = vsel %vm1948, %v1938, 0
        %vm1952 = vcmask 1043456
        %v1954 = vsel %vm1952, %v1940, 0
        %1956 = vmatprep.subr.mxu0 0.0
        %1957 = vmatpush1.msra.mxu0 %v1954
        %1958 = vmatprep.subr.mxu0 0.0
        %1959 = vmatpush1.msra.mxu0 0.0
        %1960 = vmatprep.subr.mxu0 0.0
        %1961 = vmatpush1.msra.mxu0 0.0
        %1962 = vmatprep.subr.mxu0 0.0
        %1963 = vmatpush1.msra.mxu0 0.0
        %1964 = vmatprep.subr.mxu0 0.0
        %1965 = vmatpush1.msra.mxu0 0.0
        %1966 = vmatprep.subr.mxu0 0.0
        %1967 = vmatpush1.msra.mxu0 0.0
        %1968 = vmatprep.subr.mxu0 0.0
        %1969 = vmatpush1.msra.mxu0 0.0
        %1970 = vmatprep.subr.mxu0 0.0
        %1971 = vmatpush1.msra.mxu0 0.0
        %1972 = vmatprep.subr.mxu0 0.0
        %1973 = vmatpush1.msra.mxu0 0.0
        %1974 = vmatprep.subr.mxu0 0.0
        %1975 = vmatpush1.msra.mxu0 0.0
        %1976 = vmatprep.subr.mxu0 0.0
        %1977 = vmatpush1.msra.mxu0 0.0
        %1978 = vmatprep.subr.mxu0 0.0
        %1979 = vmatpush1.msra.mxu0 0.0
        %1980 = vmatprep.subr.mxu0 0.0
        %1981 = vmatpush1.msra.mxu0 0.0
        %1982 = vmatprep.subr.mxu0 0.0
        %1983 = vmatpush1.msra.mxu0 0.0
        %1984 = vmatprep.subr.mxu0 0.0
        %1985 = vmatpush1.msra.mxu0 0.0
        %1986 = vmatprep.subr.mxu0 0.0
        %1987 = vmatpush1.msra.mxu0 0.0
        %1988 = vmatprep.subr.mxu0 0.0
        %1989 = vmatpush1.msra.mxu0 0.0
        %1990 = vmatprep.subr.mxu0 0.0
        %1991 = vmatpush1.msra.mxu0 0.0
        %1992 = vmatprep.subr.mxu0 0.0
        %1993 = vmatpush1.msra.mxu0 0.0
        %1994 = vmatprep.subr.mxu0 0.0
        %1995 = vmatpush1.msra.mxu0 0.0
        %1996 = vmatprep.subr.mxu0 0.0
        %1997 = vmatpush1.msra.mxu0 0.0
        %1998 = vmatprep.subr.mxu0 0.0
        %1999 = vmatpush1.msra.mxu0 0.0
        %2000 = vmatprep.subr.mxu0 0.0
        %2001 = vmatpush1.msra.mxu0 0.0
        %2002 = vmatprep.subr.mxu0 0.0
        %2003 = vmatpush1.msra.mxu0 0.0
        %2004 = vmatprep.subr.mxu0 0.0
        %2005 = vmatpush1.msra.mxu0 0.0
        %2006 = vmatprep.subr.mxu0 0.0
        %2007 = vmatpush1.msra.mxu0 0.0
        %2008 = vmatprep.subr.mxu0 0.0
        %2009 = vmatpush1.msra.mxu0 0.0
        %2010 = vmatprep.subr.mxu0 0.0
        %2011 = vmatpush1.msra.mxu0 0.0
        %2012 = vmatprep.subr.mxu0 0.0
        %2013 = vmatpush1.msra.mxu0 0.0
        %2014 = vmatprep.subr.mxu0 0.0
        %2015 = vmatpush1.msra.mxu0 0.0
        %2016 = vmatprep.subr.mxu0 0.0
        %2017 = vmatpush1.msra.mxu0 0.0
        %2018 = vmatprep.subr.mxu0 0.0
        %2019 = vmatpush1.msra.mxu0 0.0
        %2020 = vmatprep.mubr.f32.mxu0 0.0
        %2021 = vmatmul.mubr.f32.gmra.mrb[0].mxu0 %v1950
        %v2022 = vpop.f32.mrb[0].mxu0
        %v2023 = vadd.f32 %v1946, %v2022
        %v2024 = vpop.f32.mrb[0].mxu0
        %2025 = vdwg.mxu0
        %v2026 = vld [vmem:[%s15] sm:$0xff]
        %v2027 = vld [vmem:[%s15 + $0x8] sm:$0xff]
        %v2028 = vld [vmem:[%s15 + $0x10] sm:$0xff]
        %v2029 = vld [vmem:[%s15 + $0x18] sm:$0xff]
        %v2030 = vld [vmem:[#allocation16] sm:$0x1]
        %v2032 = vlaneseq
        %v2033 = vshrl.u32 %v2032, 7
        %v2034 = vsub.s32 0, %v2033
        %v2035 = vrot.slane %v2030, %v2034
        %vm2037 = vcmask 261120
        %v2039 = vsel %vm2037, %v2023, 0
        %2041 = vmatprep.subr.mxu0 0.0
        %2042 = vmatpush1.msra.mxu0 %v2026
        %2043 = vmatprep.subr.mxu0 0.0
        %2044 = vmatpush1.msra.mxu0 %v2027
        %2045 = vmatprep.subr.mxu0 0.0
        %2046 = vmatpush1.msra.mxu0 %v2028
        %2047 = vmatprep.subr.mxu0 0.0
        %2048 = vmatpush1.msra.mxu0 %v2029
        %2049 = vmatprep.subr.mxu0 0.0
        %2050 = vmatpush1.msra.mxu0 0.0
        %2051 = vmatprep.subr.mxu0 0.0
        %2052 = vmatpush1.msra.mxu0 0.0
        %2053 = vmatprep.subr.mxu0 0.0
        %2054 = vmatpush1.msra.mxu0 0.0
        %2055 = vmatprep.subr.mxu0 0.0
        %2056 = vmatpush1.msra.mxu0 0.0
        %2057 = vmatprep.subr.mxu0 0.0
        %2058 = vmatpush1.msra.mxu0 0.0
        %2059 = vmatprep.subr.mxu0 0.0
        %2060 = vmatpush1.msra.mxu0 0.0
        %2061 = vmatprep.subr.mxu0 0.0
        %2062 = vmatpush1.msra.mxu0 0.0
        %2063 = vmatprep.subr.mxu0 0.0
        %2064 = vmatpush1.msra.mxu0 0.0
        %2065 = vmatprep.subr.mxu0 0.0
        %2066 = vmatpush1.msra.mxu0 0.0
        %2067 = vmatprep.subr.mxu0 0.0
        %2068 = vmatpush1.msra.mxu0 0.0
        %2069 = vmatprep.subr.mxu0 0.0
        %2070 = vmatpush1.msra.mxu0 0.0
        %2071 = vmatprep.subr.mxu0 0.0
        %2072 = vmatpush1.msra.mxu0 0.0
        %2073 = vmatprep.subr.mxu0 0.0
        %2074 = vmatpush1.msra.mxu0 0.0
        %2075 = vmatprep.subr.mxu0 0.0
        %2076 = vmatpush1.msra.mxu0 0.0
        %2077 = vmatprep.subr.mxu0 0.0
        %2078 = vmatpush1.msra.mxu0 0.0
        %2079 = vmatprep.subr.mxu0 0.0
        %2080 = vmatpush1.msra.mxu0 0.0
        %2081 = vmatprep.subr.mxu0 0.0
        %2082 = vmatpush1.msra.mxu0 0.0
        %2083 = vmatprep.subr.mxu0 0.0
        %2084 = vmatpush1.msra.mxu0 0.0
        %2085 = vmatprep.subr.mxu0 0.0
        %2086 = vmatpush1.msra.mxu0 0.0
        %2087 = vmatprep.subr.mxu0 0.0
        %2088 = vmatpush1.msra.mxu0 0.0
        %2089 = vmatprep.subr.mxu0 0.0
        %2090 = vmatpush1.msra.mxu0 0.0
        %2091 = vmatprep.subr.mxu0 0.0
        %2092 = vmatpush1.msra.mxu0 0.0
        %2093 = vmatprep.subr.mxu0 0.0
        %2094 = vmatpush1.msra.mxu0 0.0
        %2095 = vmatprep.subr.mxu0 0.0
        %2096 = vmatpush1.msra.mxu0 0.0
        %2097 = vmatprep.subr.mxu0 0.0
        %2098 = vmatpush1.msra.mxu0 0.0
        %2099 = vmatprep.subr.mxu0 0.0
        %2100 = vmatpush1.msra.mxu0 0.0
        %2101 = vmatprep.subr.mxu0 0.0
        %2102 = vmatpush1.msra.mxu0 0.0
        %2103 = vmatprep.subr.mxu0 0.0
        %2104 = vmatpush1.msra.mxu0 0.0
        %2105 = vmatprep.mubr.f32.mxu0 0.0
        %2106 = vmatmul.mubr.f32.gmra.mrb[0].mxu0 %v2039
        %v2107 = vpop.f32.mrb[0].mxu0
        %v2108 = vadd.f32 %v2035, %v2107
        %v2109 = vpop.f32.mrb[0].mxu0
        %2110 = vdwg.mxu0
        %s2111 = scalar_lea.vmem %s15, 32
        %v2112 = vld [vmem:[%s2111] sm:$0xff]
        %v2113 = vld [vmem:[%s2111 + $0x8] sm:$0xff]
        %v2114 = vld [vmem:[%s2111 + $0x10] sm:$0xff]
        %v2115 = vld [vmem:[%s2111 + $0x18] sm:$0xff]
        %s2116 = scalar_lea.vmem [#allocation16], 1
        %v2117 = vld [vmem:[%s2116] sm:$0x1]
        %v2119 = vlaneseq
        %v2120 = vshrl.u32 %v2119, 7
        %v2121 = vsub.s32 0, %v2120
        %v2122 = vrot.slane %v2117, %v2121
        %2124 = vmatprep.subr.mxu0 0.0
        %2125 = vmatpush1.msra.mxu0 %v2112
        %2126 = vmatprep.subr.mxu0 0.0
        %2127 = vmatpush1.msra.mxu0 %v2113
        %2128 = vmatprep.subr.mxu0 0.0
        %2129 = vmatpush1.msra.mxu0 %v2114
        %2130 = vmatprep.subr.mxu0 0.0
        %2131 = vmatpush1.msra.mxu0 %v2115
        %2132 = vmatprep.subr.mxu0 0.0
        %2133 = vmatpush1.msra.mxu0 0.0
        %2134 = vmatprep.subr.mxu0 0.0
        %2135 = vmatpush1.msra.mxu0 0.0
        %2136 = vmatprep.subr.mxu0 0.0
        %2137 = vmatpush1.msra.mxu0 0.0
        %2138 = vmatprep.subr.mxu0 0.0
        %2139 = vmatpush1.msra.mxu0 0.0
        %2140 = vmatprep.subr.mxu0 0.0
        %2141 = vmatpush1.msra.mxu0 0.0
        %2142 = vmatprep.subr.mxu0 0.0
        %2143 = vmatpush1.msra.mxu0 0.0
        %2144 = vmatprep.subr.mxu0 0.0
        %2145 = vmatpush1.msra.mxu0 0.0
        %2146 = vmatprep.subr.mxu0 0.0
        %2147 = vmatpush1.msra.mxu0 0.0
        %2148 = vmatprep.subr.mxu0 0.0
        %2149 = vmatpush1.msra.mxu0 0.0
        %2150 = vmatprep.subr.mxu0 0.0
        %2151 = vmatpush1.msra.mxu0 0.0
        %2152 = vmatprep.subr.mxu0 0.0
        %2153 = vmatpush1.msra.mxu0 0.0
        %2154 = vmatprep.subr.mxu0 0.0
        %2155 = vmatpush1.msra.mxu0 0.0
        %2156 = vmatprep.subr.mxu0 0.0
        %2157 = vmatpush1.msra.mxu0 0.0
        %2158 = vmatprep.subr.mxu0 0.0
        %2159 = vmatpush1.msra.mxu0 0.0
        %2160 = vmatprep.subr.mxu0 0.0
        %2161 = vmatpush1.msra.mxu0 0.0
        %2162 = vmatprep.subr.mxu0 0.0
        %2163 = vmatpush1.msra.mxu0 0.0
        %2164 = vmatprep.subr.mxu0 0.0
        %2165 = vmatpush1.msra.mxu0 0.0
        %2166 = vmatprep.subr.mxu0 0.0
        %2167 = vmatpush1.msra.mxu0 0.0
        %2168 = vmatprep.subr.mxu0 0.0
        %2169 = vmatpush1.msra.mxu0 0.0
        %2170 = vmatprep.subr.mxu0 0.0
        %2171 = vmatpush1.msra.mxu0 0.0
        %2172 = vmatprep.subr.mxu0 0.0
        %2173 = vmatpush1.msra.mxu0 0.0
        %2174 = vmatprep.subr.mxu0 0.0
        %2175 = vmatpush1.msra.mxu0 0.0
        %2176 = vmatprep.subr.mxu0 0.0
        %2177 = vmatpush1.msra.mxu0 0.0
        %2178 = vmatprep.subr.mxu0 0.0
        %2179 = vmatpush1.msra.mxu0 0.0
        %2180 = vmatprep.subr.mxu0 0.0
        %2181 = vmatpush1.msra.mxu0 0.0
        %2182 = vmatprep.subr.mxu0 0.0
        %2183 = vmatpush1.msra.mxu0 0.0
        %2184 = vmatprep.subr.mxu0 0.0
        %2185 = vmatpush1.msra.mxu0 0.0
        %2186 = vmatprep.subr.mxu0 0.0
        %2187 = vmatpush1.msra.mxu0 0.0
        %2188 = vmatprep.mubr.f32.mxu0 0.0
        %2189 = vmatmul.mubr.f32.gmra.mrb[0].mxu0 %v2039
        %v2190 = vpop.f32.mrb[0].mxu0
        %v2191 = vadd.f32 %v2122, %v2190
        %v2192 = vpop.f32.mrb[0].mxu0
        %2193 = vdwg.mxu0
        %s2194 = scalar_lea.vmem %s15, 64
        %v2195 = vld [vmem:[%s2194] sm:$0xff]
        %v2196 = vld [vmem:[%s2194 + $0x8] sm:$0xff]
        %v2197 = vld [vmem:[%s2194 + $0x10] sm:$0xff]
        %v2198 = vld [vmem:[%s2194 + $0x18] sm:$0xff]
        %s2199 = scalar_lea.vmem [#allocation16], 2
        %v2200 = vld [vmem:[%s2199] sm:$0x1]
        %v2202 = vlaneseq
        %v2203 = vshrl.u32 %v2202, 7
        %v2204 = vsub.s32 0, %v2203
        %v2205 = vrot.slane %v2200, %v2204
        %2207 = vmatprep.subr.mxu0 0.0
        %2208 = vmatpush1.msra.mxu0 %v2195
        %2209 = vmatprep.subr.mxu0 0.0
        %2210 = vmatpush1.msra.mxu0 %v2196
        %2211 = vmatprep.subr.mxu0 0.0
        %2212 = vmatpush1.msra.mxu0 %v2197
        %2213 = vmatprep.subr.mxu0 0.0
        %2214 = vmatpush1.msra.mxu0 %v2198
        %2215 = vmatprep.subr.mxu0 0.0
        %2216 = vmatpush1.msra.mxu0 0.0
        %2217 = vmatprep.subr.mxu0 0.0
        %2218 = vmatpush1.msra.mxu0 0.0
        %2219 = vmatprep.subr.mxu0 0.0
        %2220 = vmatpush1.msra.mxu0 0.0
        %2221 = vmatprep.subr.mxu0 0.0
        %2222 = vmatpush1.msra.mxu0 0.0
        %2223 = vmatprep.subr.mxu0 0.0
        %2224 = vmatpush1.msra.mxu0 0.0
        %2225 = vmatprep.subr.mxu0 0.0
        %2226 = vmatpush1.msra.mxu0 0.0
        %2227 = vmatprep.subr.mxu0 0.0
        %2228 = vmatpush1.msra.mxu0 0.0
        %2229 = vmatprep.subr.mxu0 0.0
        %2230 = vmatpush1.msra.mxu0 0.0
        %2231 = vmatprep.subr.mxu0 0.0
        %2232 = vmatpush1.msra.mxu0 0.0
        %2233 = vmatprep.subr.mxu0 0.0
        %2234 = vmatpush1.msra.mxu0 0.0
        %2235 = vmatprep.subr.mxu0 0.0
        %2236 = vmatpush1.msra.mxu0 0.0
        %2237 = vmatprep.subr.mxu0 0.0
        %2238 = vmatpush1.msra.mxu0 0.0
        %2239 = vmatprep.subr.mxu0 0.0
        %2240 = vmatpush1.msra.mxu0 0.0
        %2241 = vmatprep.subr.mxu0 0.0
        %2242 = vmatpush1.msra.mxu0 0.0
        %2243 = vmatprep.subr.mxu0 0.0
        %2244 = vmatpush1.msra.mxu0 0.0
        %2245 = vmatprep.subr.mxu0 0.0
        %2246 = vmatpush1.msra.mxu0 0.0
        %2247 = vmatprep.subr.mxu0 0.0
        %2248 = vmatpush1.msra.mxu0 0.0
        %2249 = vmatprep.subr.mxu0 0.0
        %2250 = vmatpush1.msra.mxu0 0.0
        %2251 = vmatprep.subr.mxu0 0.0
        %2252 = vmatpush1.msra.mxu0 0.0
        %2253 = vmatprep.subr.mxu0 0.0
        %2254 = vmatpush1.msra.mxu0 0.0
        %2255 = vmatprep.subr.mxu0 0.0
        %2256 = vmatpush1.msra.mxu0 0.0
        %2257 = vmatprep.subr.mxu0 0.0
        %2258 = vmatpush1.msra.mxu0 0.0
        %2259 = vmatprep.subr.mxu0 0.0
        %2260 = vmatpush1.msra.mxu0 0.0
        %2261 = vmatprep.subr.mxu0 0.0
        %2262 = vmatpush1.msra.mxu0 0.0
        %2263 = vmatprep.subr.mxu0 0.0
        %2264 = vmatpush1.msra.mxu0 0.0
        %2265 = vmatprep.subr.mxu0 0.0
        %2266 = vmatpush1.msra.mxu0 0.0
        %2267 = vmatprep.subr.mxu0 0.0
        %2268 = vmatpush1.msra.mxu0 0.0
        %2269 = vmatprep.subr.mxu0 0.0
        %2270 = vmatpush1.msra.mxu0 0.0
        %2271 = vmatprep.mubr.f32.mxu0 0.0
        %2272 = vmatmul.mubr.f32.gmra.mrb[0].mxu0 %v2039
        %v2273 = vpop.f32.mrb[0].mxu0
        %v2274 = vadd.f32 %v2205, %v2273
        %v2275 = vpop.f32.mrb[0].mxu0
        %2276 = vdwg.mxu0
        %v2277 = vlaneseq
        %v2278 = vshrl.u32 %v2277, 7
        %v2279 = vadd.s32 %v2278, 8
        %v2280 = vstv %s1939
        %vm2281 = vcmp.eq.s32.totalorder %v2278, %v2280
        %vm2282 = vcmp.eq.s32.totalorder %v2279, %v2280
        %v2285 = vunpack.c.l.s4 1966171168
        %v2286 = vunpack.c.0.s8 %v2285
        %v2287 = vlaneseq
        %v2288 = vshrl.u32 %v2287, 7
        %v2289 = vsub.s32 %v2286, %v2288
        %v2290 = vrot.slane %v2191, %v2289
        %v2291 = vcombine.high %v2290, %v2290
        %v2293 = vunpack.c.l.s4 1966171168
        %v2294 = vunpack.c.0.s8 %v2293
        %v2295 = vlaneseq
        %v2296 = vshrl.u32 %v2295, 7
        %v2297 = vsub.s32 %v2294, %v2296
        %v2298 = vrot.slane %v2290, %v2297
        %v2300 = vunpack.c.l.s4 1966171168
        %v2301 = vunpack.c.0.s8 %v2300
        %v2302 = vlaneseq
        %v2303 = vshrl.u32 %v2302, 7
        %v2304 = vsub.s32 %v2301, %v2303
        %v2305 = vrot.slane %v2291, %v2304
        %v2306 = vld [vmem:[#allocation5] sm:$0xff]
        %v2307 = vld [vmem:[#allocation5 + $0x8] sm:$0x7]
        %v2308 = vld [vmem:[#allocation5 + $0x10] sm:$0xff]
        %v2309 = vld [vmem:[#allocation5 + $0x18] sm:$0x7]
        %v2310 = vlaneseq
        %v2311 = vshrl.u32 %v2310, 7
        %v2312 = vsub.s32 0, %v2311
        %v2313 = vrot.slane %v2298, %v2312
        %v2314 = vlaneseq
        %v2315 = vshrl.u32 %v2314, 7
        %v2316 = vsub.s32 0, %v2315
        %v2317 = vrot.slane %v2305, %v2316
        %v2320 = vsel %vm2281, %v2313, %v2306
        %v2321 = vsel %vm2282, %v2313, %v2307
        %v2322 = vsel %vm2281, %v2317, %v2308
        %v2323 = vsel %vm2282, %v2317, %v2309
        %v2326 = vunpack.c.l.s4 1966171168
        %v2327 = vunpack.c.0.s8 %v2326
        %v2328 = vlaneseq
        %v2329 = vshrl.u32 %v2328, 7
        %v2330 = vsub.s32 %v2327, %v2329
        %v2331 = vrot.slane %v2274, %v2330
        %v2332 = vcombine.high %v2331, %v2331
        %v2334 = vunpack.c.l.s4 1966171168
        %v2335 = vunpack.c.0.s8 %v2334
        %v2336 = vlaneseq
        %v2337 = vshrl.u32 %v2336, 7
        %v2338 = vsub.s32 %v2335, %v2337
        %v2339 = vrot.slane %v2331, %v2338
        %v2341 = vunpack.c.l.s4 1966171168
        %v2342 = vunpack.c.0.s8 %v2341
        %v2343 = vlaneseq
        %v2344 = vshrl.u32 %v2343, 7
        %v2345 = vsub.s32 %v2342, %v2344
        %v2346 = vrot.slane %v2332, %v2345
        %v2347 = vld [vmem:[#allocation6] sm:$0xff]
        %v2348 = vld [vmem:[#allocation6 + $0x8] sm:$0x7]
        %v2349 = vld [vmem:[#allocation6 + $0x10] sm:$0xff]
        %v2350 = vld [vmem:[#allocation6 + $0x18] sm:$0x7]
        %v2351 = vlaneseq
        %v2352 = vshrl.u32 %v2351, 7
        %v2353 = vsub.s32 0, %v2352
        %v2354 = vrot.slane %v2339, %v2353
        %v2355 = vlaneseq
        %v2356 = vshrl.u32 %v2355, 7
        %v2357 = vsub.s32 0, %v2356
        %v2358 = vrot.slane %v2346, %v2357
        %v2361 = vsel %vm2281, %v2354, %v2347
        %v2362 = vsel %vm2282, %v2354, %v2348
        %v2363 = vsel %vm2281, %v2358, %v2349
        %v2364 = vsel %vm2282, %v2358, %v2350
        %2365 = vst.msk [vmem:[#allocation5] sm:$0xff] %vm2037, %v2320
        %vm2366 = vcmask 256000
        %2367 = vst.msk [vmem:[#allocation5 + $0x8] sm:$0x7] %vm2366, %v2321
        %2368 = vst.msk [vmem:[#allocation5 + $0x10] sm:$0xff] %vm2037, %v2322
        %2369 = vst.msk [vmem:[#allocation5 + $0x18] sm:$0x7] %vm2366, %v2323
        %2370 = vst.msk [vmem:[#allocation6] sm:$0xff] %vm2037, %v2361
        %2371 = vst.msk [vmem:[#allocation6 + $0x8] sm:$0x7] %vm2366, %v2362
        %2372 = vst.msk [vmem:[#allocation6 + $0x10] sm:$0xff] %vm2037, %v2363
        %2373 = vst.msk [vmem:[#allocation6 + $0x18] sm:$0x7] %vm2366, %v2364
        %v2376 = vunpack.c.l.s4 1966171168
        %v2377 = vunpack.c.0.s8 %v2376
        %v2378 = vlaneseq
        %v2379 = vshrl.u32 %v2378, 7
        %v2380 = vsub.s32 %v2377, %v2379
        %v2381 = vrot.slane %v2108, %v2380
        %v2382 = vcombine.high %v2381, %v2381
        %v2384 = vunpack.c.l.s4 1966171168
        %v2385 = vunpack.c.0.s8 %v2384
        %v2386 = vlaneseq
        %v2387 = vshrl.u32 %v2386, 7
        %v2388 = vsub.s32 %v2385, %v2387
        %v2389 = vrot.slane %v2381, %v2388
        %v2391 = vunpack.c.l.s4 1966171168
        %v2392 = vunpack.c.0.s8 %v2391
        %v2393 = vlaneseq
        %v2394 = vshrl.u32 %v2393, 7
        %v2395 = vsub.s32 %v2392, %v2394
        %v2396 = vrot.slane %v2382, %v2395
        %v2397 = vlaneseq
        %v2398 = vshrl.u32 %v2397, 7
        %v2399 = vsub.s32 0, %v2398
        %v2400 = vrot.slane %v2389, %v2399
        %v2401 = vlaneseq
        %v2402 = vshrl.u32 %v2401, 7
        %v2403 = vsub.s32 0, %v2402
        %v2404 = vrot.slane %v2396, %v2403
        %v2407 = vmul.f32 %v2400, %v2320
        %v2408 = vmul.f32 %v2400, %v2321
        %v2409 = vmul.f32 %v2404, %v2322
        %v2410 = vmul.f32 %v2404, %v2323
        %v2415 = vcombine.high %v2407, %v2407
        %v2417 = vunpack.c.l.s4 1966171168
        %v2418 = vunpack.c.0.s8 %v2417
        %v2419 = vlaneseq
        %v2420 = vshrl.u32 %v2419, 7
        %v2421 = vsub.s32 %v2418, %v2420
        %v2422 = vrot.slane %v2407, %v2421
        %v2424 = vunpack.c.l.s4 1966171168
        %v2425 = vunpack.c.0.s8 %v2424
        %v2426 = vlaneseq
        %v2427 = vshrl.u32 %v2426, 7
        %v2428 = vsub.s32 %v2425, %v2427
        %v2429 = vrot.slane %v2415, %v2428
        %v2430 = vcombine.high %v2422, %v2422
        %v2431 = vcombine.high %v2429, %v2429
        %v2433 = vunpack.c.l.s4 1966171168
        %v2434 = vunpack.c.0.s8 %v2433
        %v2435 = vlaneseq
        %v2436 = vshrl.u32 %v2435, 7
        %v2437 = vsub.s32 %v2434, %v2436
        %v2438 = vrot.slane %v2422, %v2437
        %v2440 = vunpack.c.l.s4 1966171168
        %v2441 = vunpack.c.0.s8 %v2440
        %v2442 = vlaneseq
        %v2443 = vshrl.u32 %v2442, 7
        %v2444 = vsub.s32 %v2441, %v2443
        %v2445 = vrot.slane %v2429, %v2444
        %v2447 = vunpack.c.l.s4 1966171168
        %v2448 = vunpack.c.0.s8 %v2447
        %v2449 = vlaneseq
        %v2450 = vshrl.u32 %v2449, 7
        %v2451 = vsub.s32 %v2448, %v2450
        %v2452 = vrot.slane %v2430, %v2451
        %v2454 = vunpack.c.l.s4 1966171168
        %v2455 = vunpack.c.0.s8 %v2454
        %v2456 = vlaneseq
        %v2457 = vshrl.u32 %v2456, 7
        %v2458 = vsub.s32 %v2455, %v2457
        %v2459 = vrot.slane %v2431, %v2458
        %v2460 = vcombine.high %v2438, %v2438
        %v2461 = vcombine.high %v2445, %v2445
        %v2462 = vcombine.high %v2452, %v2452
        %v2463 = vcombine.high %v2459, %v2459
        %v2465 = vunpack.c.l.s4 1966171168
        %v2466 = vunpack.c.0.s8 %v2465
        %v2467 = vlaneseq
        %v2468 = vshrl.u32 %v2467, 7
        %v2469 = vsub.s32 %v2466, %v2468
        %v2470 = vrot.slane %v2408, %v2469
        %v2471 = vcombine.high %v2470, %v2470
        %v2473 = vunpack.c.l.s4 1966171168
        %v2474 = vunpack.c.0.s8 %v2473
        %v2475 = vlaneseq
        %v2476 = vshrl.u32 %v2475, 7
        %v2477 = vsub.s32 %v2474, %v2476
        %v2478 = vrot.slane %v2470, %v2477
        %v2480 = vunpack.c.l.s4 1966171168
        %v2481 = vunpack.c.0.s8 %v2480
        %v2482 = vlaneseq
        %v2483 = vshrl.u32 %v2482, 7
        %v2484 = vsub.s32 %v2481, %v2483
        %v2485 = vrot.slane %v2471, %v2484
        %v2486 = vcombine.high %v2478, %v2478
        %v2487 = vcombine.high %v2409, %v2409
        %v2489 = vunpack.c.l.s4 1966171168
        %v2490 = vunpack.c.0.s8 %v2489
        %v2491 = vlaneseq
        %v2492 = vshrl.u32 %v2491, 7
        %v2493 = vsub.s32 %v2490, %v2492
        %v2494 = vrot.slane %v2409, %v2493
        %v2496 = vunpack.c.l.s4 1966171168
        %v2497 = vunpack.c.0.s8 %v2496
        %v2498 = vlaneseq
        %v2499 = vshrl.u32 %v2498, 7
        %v2500 = vsub.s32 %v2497, %v2499
        %v2501 = vrot.slane %v2487, %v2500
        %v2502 = vcombine.high %v2494, %v2494
        %v2503 = vcombine.high %v2501, %v2501
        %v2505 = vunpack.c.l.s4 1966171168
        %v2506 = vunpack.c.0.s8 %v2505
        %v2507 = vlaneseq
        %v2508 = vshrl.u32 %v2507, 7
        %v2509 = vsub.s32 %v2506, %v2508
        %v2510 = vrot.slane %v2494, %v2509
        %v2512 = vunpack.c.l.s4 1966171168
        %v2513 = vunpack.c.0.s8 %v2512
        %v2514 = vlaneseq
        %v2515 = vshrl.u32 %v2514, 7
        %v2516 = vsub.s32 %v2513, %v2515
        %v2517 = vrot.slane %v2501, %v2516
        %v2519 = vunpack.c.l.s4 1966171168
        %v2520 = vunpack.c.0.s8 %v2519
        %v2521 = vlaneseq
        %v2522 = vshrl.u32 %v2521, 7
        %v2523 = vsub.s32 %v2520, %v2522
        %v2524 = vrot.slane %v2502, %v2523
        %v2526 = vunpack.c.l.s4 1966171168
        %v2527 = vunpack.c.0.s8 %v2526
        %v2528 = vlaneseq
        %v2529 = vshrl.u32 %v2528, 7
        %v2530 = vsub.s32 %v2527, %v2529
        %v2531 = vrot.slane %v2503, %v2530
        %v2532 = vcombine.high %v2510, %v2510
        %v2533 = vcombine.high %v2517, %v2517
        %v2534 = vcombine.high %v2524, %v2524
        %v2535 = vcombine.high %v2531, %v2531
        %v2537 = vunpack.c.l.s4 1966171168
        %v2538 = vunpack.c.0.s8 %v2537
        %v2539 = vlaneseq
        %v2540 = vshrl.u32 %v2539, 7
        %v2541 = vsub.s32 %v2538, %v2540
        %v2542 = vrot.slane %v2410, %v2541
        %v2543 = vcombine.high %v2542, %v2542
        %v2545 = vunpack.c.l.s4 1966171168
        %v2546 = vunpack.c.0.s8 %v2545
        %v2547 = vlaneseq
        %v2548 = vshrl.u32 %v2547, 7
        %v2549 = vsub.s32 %v2546, %v2548
        %v2550 = vrot.slane %v2542, %v2549
        %v2552 = vunpack.c.l.s4 1966171168
        %v2553 = vunpack.c.0.s8 %v2552
        %v2554 = vlaneseq
        %v2555 = vshrl.u32 %v2554, 7
        %v2556 = vsub.s32 %v2553, %v2555
        %v2557 = vrot.slane %v2543, %v2556
        %v2558 = vcombine.high %v2550, %v2550
        %v2559 = vld [vmem:[%s39] sm:$0xff]
        %v2560 = vld [vmem:[%s39 + $0x8] sm:$0xff]
        %v2561 = vld [vmem:[%s39 + $0x10] sm:$0xff]
        %v2562 = vld [vmem:[%s39 + $0x18] sm:$0xff]
        %v2563 = vcombine.low %v2438, %v2452
        %v2564 = vcombine.low %v2460, %v2462
        %v2565 = vcombine.low %v2445, %v2459
        %v2566 = vcombine.low %v2461, %v2463
        %v2568 = vunpack.c.l.s4 1966171168
        %v2569 = vunpack.c.0.s8 %v2568
        %v2570 = vlaneseq
        %v2571 = vshrl.u32 %v2570, 7
        %v2572 = vsub.s32 %v2569, %v2571
        %v2573 = vrot.slane %v2563, %v2572
        %v2575 = vunpack.c.l.s4 1966171168
        %v2576 = vunpack.c.0.s8 %v2575
        %v2577 = vlaneseq
        %v2578 = vshrl.u32 %v2577, 7
        %v2579 = vsub.s32 %v2576, %v2578
        %v2580 = vrot.slane %v2564, %v2579
        %v2582 = vunpack.c.l.s4 1966171168
        %v2583 = vunpack.c.0.s8 %v2582
        %v2584 = vlaneseq
        %v2585 = vshrl.u32 %v2584, 7
        %v2586 = vsub.s32 %v2583, %v2585
        %v2587 = vrot.slane %v2565, %v2586
        %v2589 = vunpack.c.l.s4 1966171168
        %v2590 = vunpack.c.0.s8 %v2589
        %v2591 = vlaneseq
        %v2592 = vshrl.u32 %v2591, 7
        %v2593 = vsub.s32 %v2590, %v2592
        %v2594 = vrot.slane %v2566, %v2593
        %v2595 = vcombine.low %v2573, %v2580
        %v2596 = vcombine.low %v2587, %v2594
        %v2598 = vunpack.c.l.s4 1966171168
        %v2599 = vunpack.c.0.s8 %v2598
        %v2600 = vlaneseq
        %v2601 = vshrl.u32 %v2600, 7
        %v2602 = vsub.s32 %v2599, %v2601
        %v2603 = vrot.slane %v2595, %v2602
        %v2605 = vunpack.c.l.s4 1966171168
        %v2606 = vunpack.c.0.s8 %v2605
        %v2607 = vlaneseq
        %v2608 = vshrl.u32 %v2607, 7
        %v2609 = vsub.s32 %v2606, %v2608
        %v2610 = vrot.slane %v2596, %v2609
        %v2611 = vcombine.low %v2603, %v2610
        %v2612 = vcombine.low %v2478, %v2485
        %v2613 = vcombine.low %v2486, %v2510
        %v2614 = vcombine.low %v2524, %v2532
        %v2615 = vcombine.low %v2534, %v2517
        %v2617 = vunpack.c.l.s4 1966171168
        %v2618 = vunpack.c.0.s8 %v2617
        %v2619 = vlaneseq
        %v2620 = vshrl.u32 %v2619, 7
        %v2621 = vsub.s32 %v2618, %v2620
        %v2622 = vrot.slane %v2612, %v2621
        %v2624 = vunpack.c.l.s4 1966171168
        %v2625 = vunpack.c.0.s8 %v2624
        %v2626 = vlaneseq
        %v2627 = vshrl.u32 %v2626, 7
        %v2628 = vsub.s32 %v2625, %v2627
        %v2629 = vrot.slane %v2613, %v2628
        %v2631 = vunpack.c.l.s4 1966171168
        %v2632 = vunpack.c.0.s8 %v2631
        %v2633 = vlaneseq
        %v2634 = vshrl.u32 %v2633, 7
        %v2635 = vsub.s32 %v2632, %v2634
        %v2636 = vrot.slane %v2614, %v2635
        %v2638 = vunpack.c.l.s4 1966171168
        %v2639 = vunpack.c.0.s8 %v2638
        %v2640 = vlaneseq
        %v2641 = vshrl.u32 %v2640, 7
        %v2642 = vsub.s32 %v2639, %v2641
        %v2643 = vrot.slane %v2615, %v2642
        %v2644 = vcombine.low %v2622, %v2629
        %v2645 = vcombine.low %v2636, %v2643
        %v2647 = vunpack.c.l.s4 1966171168
        %v2648 = vunpack.c.0.s8 %v2647
        %v2649 = vlaneseq
        %v2650 = vshrl.u32 %v2649, 7
        %v2651 = vsub.s32 %v2648, %v2650
        %v2652 = vrot.slane %v2644, %v2651
        %v2654 = vunpack.c.l.s4 1966171168
        %v2655 = vunpack.c.0.s8 %v2654
        %v2656 = vlaneseq
        %v2657 = vshrl.u32 %v2656, 7
        %v2658 = vsub.s32 %v2655, %v2657
        %v2659 = vrot.slane %v2645, %v2658
        %v2660 = vcombine.low %v2652, %v2659
        %v2661 = vcombine.low %v2531, %v2533
        %v2662 = vcombine.low %v2535, %v2550
        %v2663 = vcombine.low %v2557, %v2558
        %v2665 = vunpack.c.l.s4 1966171168
        %v2666 = vunpack.c.0.s8 %v2665
        %v2667 = vlaneseq
        %v2668 = vshrl.u32 %v2667, 7
        %v2669 = vsub.s32 %v2666, %v2668
        %v2670 = vrot.slane %v2661, %v2669
        %v2672 = vunpack.c.l.s4 1966171168
        %v2673 = vunpack.c.0.s8 %v2672
        %v2674 = vlaneseq
        %v2675 = vshrl.u32 %v2674, 7
        %v2676 = vsub.s32 %v2673, %v2675
        %v2677 = vrot.slane %v2662, %v2676
        %v2679 = vunpack.c.l.s4 1966171168
        %v2680 = vunpack.c.0.s8 %v2679
        %v2681 = vlaneseq
        %v2682 = vshrl.u32 %v2681, 7
        %v2683 = vsub.s32 %v2680, %v2682
        %v2684 = vrot.slane %v2663, %v2683
        %v2685 = vcombine.low %v2670, %v2677
        %v2687 = vunpack.c.l.s4 1966171168
        %v2688 = vunpack.c.0.s8 %v2687
        %v2689 = vlaneseq
        %v2690 = vshrl.u32 %v2689, 7
        %v2691 = vsub.s32 %v2688, %v2690
        %v2692 = vrot.slane %v2685, %v2691
        %v2694 = vunpack.c.l.s4 1966171168
        %v2695 = vunpack.c.0.s8 %v2694
        %v2696 = vlaneseq
        %v2697 = vshrl.u32 %v2696, 7
        %v2698 = vsub.s32 %v2695, %v2697
        %v2699 = vrot.slane %v2684, %v2698
        %v2700 = vcombine.low %v2692, %v2699
        %v2701 = vsel %vm2037, %v2611, 0
        %v2703 = vsel %vm2037, %v2660, 0
        %v2705 = vsel %vm2037, %v2700, 0
        %2707 = vmatprep.subr.mxu0 0.0
        %2708 = vmatpush1.msra.mxu0 %v2559
        %2709 = vmatprep.subr.mxu0 0.0
        %2710 = vmatpush1.msra.mxu0 %v2560
        %2711 = vmatprep.subr.mxu0 0.0
        %2712 = vmatpush1.msra.mxu0 %v2561
        %2713 = vmatprep.subr.mxu0 0.0
        %2714 = vmatpush1.msra.mxu0 %v2562
        %2715 = vmatprep.subr.mxu0 0.0
        %2716 = vmatpush1.msra.mxu0 0.0
        %2717 = vmatprep.subr.mxu0 0.0
        %2718 = vmatpush1.msra.mxu0 0.0
        %2719 = vmatprep.subr.mxu0 0.0
        %2720 = vmatpush1.msra.mxu0 0.0
        %2721 = vmatprep.subr.mxu0 0.0
        %2722 = vmatpush1.msra.mxu0 0.0
        %2723 = vmatprep.subr.mxu0 0.0
        %2724 = vmatpush1.msra.mxu0 0.0
        %2725 = vmatprep.subr.mxu0 0.0
        %2726 = vmatpush1.msra.mxu0 0.0
        %2727 = vmatprep.subr.mxu0 0.0
        %2728 = vmatpush1.msra.mxu0 0.0
        %2729 = vmatprep.subr.mxu0 0.0
        %2730 = vmatpush1.msra.mxu0 0.0
        %2731 = vmatprep.subr.mxu0 0.0
        %2732 = vmatpush1.msra.mxu0 0.0
        %2733 = vmatprep.subr.mxu0 0.0
        %2734 = vmatpush1.msra.mxu0 0.0
        %2735 = vmatprep.subr.mxu0 0.0
        %2736 = vmatpush1.msra.mxu0 0.0
        %2737 = vmatprep.subr.mxu0 0.0
        %2738 = vmatpush1.msra.mxu0 0.0
        %2739 = vmatprep.subr.mxu0 0.0
        %2740 = vmatpush1.msra.mxu0 0.0
        %2741 = vmatprep.subr.mxu0 0.0
        %2742 = vmatpush1.msra.mxu0 0.0
        %2743 = vmatprep.subr.mxu0 0.0
        %2744 = vmatpush1.msra.mxu0 0.0
        %2745 = vmatprep.subr.mxu0 0.0
        %2746 = vmatpush1.msra.mxu0 0.0
        %2747 = vmatprep.subr.mxu0 0.0
        %2748 = vmatpush1.msra.mxu0 0.0
        %2749 = vmatprep.subr.mxu0 0.0
        %2750 = vmatpush1.msra.mxu0 0.0
        %2751 = vmatprep.subr.mxu0 0.0
        %2752 = vmatpush1.msra.mxu0 0.0
        %2753 = vmatprep.subr.mxu0 0.0
        %2754 = vmatpush1.msra.mxu0 0.0
        %2755 = vmatprep.subr.mxu0 0.0
        %2756 = vmatpush1.msra.mxu0 0.0
        %2757 = vmatprep.subr.mxu0 0.0
        %2758 = vmatpush1.msra.mxu0 0.0
        %2759 = vmatprep.subr.mxu0 0.0
        %2760 = vmatpush1.msra.mxu0 0.0
        %2761 = vmatprep.subr.mxu0 0.0
        %2762 = vmatpush1.msra.mxu0 0.0
        %2763 = vmatprep.subr.mxu0 0.0
        %2764 = vmatpush1.msra.mxu0 0.0
        %2765 = vmatprep.subr.mxu0 0.0
        %2766 = vmatpush1.msra.mxu0 0.0
        %2767 = vmatprep.subr.mxu0 0.0
        %2768 = vmatpush1.msra.mxu0 0.0
        %2769 = vmatprep.subr.mxu0 0.0
        %2770 = vmatpush1.msra.mxu0 0.0
        %2771 = vmatprep.mubr.f32.mxu0 0.0
        %2772 = vmatmul.mubr.f32.gmra.mrb[0].mxu0 %v2701
        %v2773 = vpop.f32.mrb[0].mxu0
        %v2774 = vadd.f32 0.0, %v2773
        %v2775 = vpop.f32.mrb[0].mxu0
        %2776 = vmatprep.mubr.f32.mxu0 0.0
        %2777 = vmatmul.mubr.f32.gmra.mrb[0].mxu0 %v2703
        %v2778 = vpop.f32.mrb[0].mxu0
        %v2779 = vadd.f32 0.0, %v2778
        %v2780 = vpop.f32.mrb[0].mxu0
        %2781 = vmatprep.mubr.f32.mxu0 0.0
        %2782 = vmatmul.mubr.f32.gmra.mrb[0].mxu0 %v2705
        %v2783 = vpop.f32.mrb[0].mxu0
        %v2784 = vadd.f32 0.0, %v2783
        %v2785 = vpop.f32.mrb[0].mxu0
        %2786 = vdwg.mxu0
        %v2790 = vcombine.high %v2774, %v2774
        %v2792 = vunpack.c.l.s4 1966171168
        %v2793 = vunpack.c.0.s8 %v2792
        %v2794 = vlaneseq
        %v2795 = vshrl.u32 %v2794, 7
        %v2796 = vsub.s32 %v2793, %v2795
        %v2797 = vrot.slane %v2774, %v2796
        %v2799 = vunpack.c.l.s4 1966171168
        %v2800 = vunpack.c.0.s8 %v2799
        %v2801 = vlaneseq
        %v2802 = vshrl.u32 %v2801, 7
        %v2803 = vsub.s32 %v2800, %v2802
        %v2804 = vrot.slane %v2790, %v2803
        %v2805 = vcombine.high %v2797, %v2797
        %v2806 = vcombine.high %v2804, %v2804
        %v2808 = vunpack.c.l.s4 1966171168
        %v2809 = vunpack.c.0.s8 %v2808
        %v2810 = vlaneseq
        %v2811 = vshrl.u32 %v2810, 7
        %v2812 = vsub.s32 %v2809, %v2811
        %v2813 = vrot.slane %v2797, %v2812
        %v2815 = vunpack.c.l.s4 1966171168
        %v2816 = vunpack.c.0.s8 %v2815
        %v2817 = vlaneseq
        %v2818 = vshrl.u32 %v2817, 7
        %v2819 = vsub.s32 %v2816, %v2818
        %v2820 = vrot.slane %v2804, %v2819
        %v2822 = vunpack.c.l.s4 1966171168
        %v2823 = vunpack.c.0.s8 %v2822
        %v2824 = vlaneseq
        %v2825 = vshrl.u32 %v2824, 7
        %v2826 = vsub.s32 %v2823, %v2825
        %v2827 = vrot.slane %v2805, %v2826
        %v2829 = vunpack.c.l.s4 1966171168
        %v2830 = vunpack.c.0.s8 %v2829
        %v2831 = vlaneseq
        %v2832 = vshrl.u32 %v2831, 7
        %v2833 = vsub.s32 %v2830, %v2832
        %v2834 = vrot.slane %v2806, %v2833
        %v2835 = vcombine.high %v2813, %v2813
        %v2836 = vcombine.high %v2820, %v2820
        %v2837 = vcombine.high %v2827, %v2827
        %v2838 = vcombine.high %v2834, %v2834
        %v2839 = vcombine.high %v2779, %v2779
        %v2841 = vunpack.c.l.s4 1966171168
        %v2842 = vunpack.c.0.s8 %v2841
        %v2843 = vlaneseq
        %v2844 = vshrl.u32 %v2843, 7
        %v2845 = vsub.s32 %v2842, %v2844
        %v2846 = vrot.slane %v2779, %v2845
        %v2848 = vunpack.c.l.s4 1966171168
        %v2849 = vunpack.c.0.s8 %v2848
        %v2850 = vlaneseq
        %v2851 = vshrl.u32 %v2850, 7
        %v2852 = vsub.s32 %v2849, %v2851
        %v2853 = vrot.slane %v2839, %v2852
        %v2854 = vcombine.high %v2846, %v2846
        %v2855 = vcombine.high %v2853, %v2853
        %v2857 = vunpack.c.l.s4 1966171168
        %v2858 = vunpack.c.0.s8 %v2857
        %v2859 = vlaneseq
        %v2860 = vshrl.u32 %v2859, 7
        %v2861 = vsub.s32 %v2858, %v2860
        %v2862 = vrot.slane %v2846, %v2861
        %v2864 = vunpack.c.l.s4 1966171168
        %v2865 = vunpack.c.0.s8 %v2864
        %v2866 = vlaneseq
        %v2867 = vshrl.u32 %v2866, 7
        %v2868 = vsub.s32 %v2865, %v2867
        %v2869 = vrot.slane %v2853, %v2868
        %v2871 = vunpack.c.l.s4 1966171168
        %v2872 = vunpack.c.0.s8 %v2871
        %v2873 = vlaneseq
        %v2874 = vshrl.u32 %v2873, 7
        %v2875 = vsub.s32 %v2872, %v2874
        %v2876 = vrot.slane %v2854, %v2875
        %v2878 = vunpack.c.l.s4 1966171168
        %v2879 = vunpack.c.0.s8 %v2878
        %v2880 = vlaneseq
        %v2881 = vshrl.u32 %v2880, 7
        %v2882 = vsub.s32 %v2879, %v2881
        %v2883 = vrot.slane %v2855, %v2882
        %v2884 = vcombine.high %v2862, %v2862
        %v2885 = vcombine.high %v2869, %v2869
        %v2886 = vcombine.high %v2876, %v2876
        %v2887 = vcombine.high %v2883, %v2883
        %v2888 = vcombine.high %v2784, %v2784
        %v2890 = vunpack.c.l.s4 1966171168
        %v2891 = vunpack.c.0.s8 %v2890
        %v2892 = vlaneseq
        %v2893 = vshrl.u32 %v2892, 7
        %v2894 = vsub.s32 %v2891, %v2893
        %v2895 = vrot.slane %v2784, %v2894
        %v2897 = vunpack.c.l.s4 1966171168
        %v2898 = vunpack.c.0.s8 %v2897
        %v2899 = vlaneseq
        %v2900 = vshrl.u32 %v2899, 7
        %v2901 = vsub.s32 %v2898, %v2900
        %v2902 = vrot.slane %v2888, %v2901
        %v2903 = vcombine.high %v2895, %v2895
        %v2904 = vcombine.high %v2902, %v2902
        %v2906 = vunpack.c.l.s4 1966171168
        %v2907 = vunpack.c.0.s8 %v2906
        %v2908 = vlaneseq
        %v2909 = vshrl.u32 %v2908, 7
        %v2910 = vsub.s32 %v2907, %v2909
        %v2911 = vrot.slane %v2895, %v2910
        %v2913 = vunpack.c.l.s4 1966171168
        %v2914 = vunpack.c.0.s8 %v2913
        %v2915 = vlaneseq
        %v2916 = vshrl.u32 %v2915, 7
        %v2917 = vsub.s32 %v2914, %v2916
        %v2918 = vrot.slane %v2902, %v2917
        %v2920 = vunpack.c.l.s4 1966171168
        %v2921 = vunpack.c.0.s8 %v2920
        %v2922 = vlaneseq
        %v2923 = vshrl.u32 %v2922, 7
        %v2924 = vsub.s32 %v2921, %v2923
        %v2925 = vrot.slane %v2903, %v2924
        %v2927 = vunpack.c.l.s4 1966171168
        %v2928 = vunpack.c.0.s8 %v2927
        %v2929 = vlaneseq
        %v2930 = vshrl.u32 %v2929, 7
        %v2931 = vsub.s32 %v2928, %v2930
        %v2932 = vrot.slane %v2904, %v2931
        %v2933 = vcombine.high %v2911, %v2911
        %v2934 = vcombine.high %v2925, %v2925
        %v2957 = vmul.f32 %v2813, 0.35355338
        %v2958 = vmul.f32 %v2827, 0.35355338
        %v2959 = vmul.f32 %v2835, 0.35355338
        %v2960 = vmul.f32 %v2837, 0.35355338
        %v2961 = vmul.f32 %v2820, 0.35355338
        %v2962 = vmul.f32 %v2834, 0.35355338
        %v2963 = vmul.f32 %v2836, 0.35355338
        %v2964 = vmul.f32 %v2838, 0.35355338
        %v2965 = vmul.f32 %v2862, 0.35355338
        %v2966 = vmul.f32 %v2876, 0.35355338
        %v2967 = vmul.f32 %v2884, 0.35355338
        %v2968 = vmul.f32 %v2886, 0.35355338
        %v2969 = vmul.f32 %v2869, 0.35355338
        %v2970 = vmul.f32 %v2883, 0.35355338
        %v2971 = vmul.f32 %v2885, 0.35355338
        %v2972 = vmul.f32 %v2887, 0.35355338
        %v2973 = vmul.f32 %v2911, 0.35355338
        %v2974 = vmul.f32 %v2925, 0.35355338
        %v2975 = vmul.f32 %v2933, 0.35355338
        %v2976 = vmul.f32 %v2934, 0.35355338
        %v2977 = vmul.f32 %v2918, 0.35355338
        %v2978 = vmul.f32 %v2932, 0.35355338
        %vm2979 = vcmp.le.s32.totalorder %v2278, %v2280
        %vm2980 = vcmp.le.s32.totalorder %v2279, %v2280
        %v3003 = vcombine.low %v2957, %v2958
        %v3004 = vcombine.low %v2959, %v2960
        %v3005 = vcombine.low %v2961, %v2962
        %v3006 = vcombine.low %v2963, %v2964
        %v3008 = vunpack.c.l.s4 1966171168
        %v3009 = vunpack.c.0.s8 %v3008
        %v3010 = vlaneseq
        %v3011 = vshrl.u32 %v3010, 7
        %v3012 = vsub.s32 %v3009, %v3011
        %v3013 = vrot.slane %v3003, %v3012
        %v3015 = vunpack.c.l.s4 1966171168
        %v3016 = vunpack.c.0.s8 %v3015
        %v3017 = vlaneseq
        %v3018 = vshrl.u32 %v3017, 7
        %v3019 = vsub.s32 %v3016, %v3018
        %v3020 = vrot.slane %v3004, %v3019
        %v3022 = vunpack.c.l.s4 1966171168
        %v3023 = vunpack.c.0.s8 %v3022
        %v3024 = vlaneseq
        %v3025 = vshrl.u32 %v3024, 7
        %v3026 = vsub.s32 %v3023, %v3025
        %v3027 = vrot.slane %v3005, %v3026
        %v3029 = vunpack.c.l.s4 1966171168
        %v3030 = vunpack.c.0.s8 %v3029
        %v3031 = vlaneseq
        %v3032 = vshrl.u32 %v3031, 7
        %v3033 = vsub.s32 %v3030, %v3032
        %v3034 = vrot.slane %v3006, %v3033
        %v3035 = vcombine.low %v3013, %v3020
        %v3036 = vcombine.low %v3027, %v3034
        %v3038 = vunpack.c.l.s4 1966171168
        %v3039 = vunpack.c.0.s8 %v3038
        %v3040 = vlaneseq
        %v3041 = vshrl.u32 %v3040, 7
        %v3042 = vsub.s32 %v3039, %v3041
        %v3043 = vrot.slane %v3035, %v3042
        %v3045 = vunpack.c.l.s4 1966171168
        %v3046 = vunpack.c.0.s8 %v3045
        %v3047 = vlaneseq
        %v3048 = vshrl.u32 %v3047, 7
        %v3049 = vsub.s32 %v3046, %v3048
        %v3050 = vrot.slane %v3036, %v3049
        %v3051 = vcombine.low %v3043, %v3050
        %v3052 = vcombine.low %v2965, %v2966
        %v3054 = vunpack.c.l.s4 1966171168
        %v3055 = vunpack.c.0.s8 %v3054
        %v3056 = vlaneseq
        %v3057 = vshrl.u32 %v3056, 7
        %v3058 = vsub.s32 %v3055, %v3057
        %v3059 = vrot.slane %v3052, %v3058
        %v3061 = vunpack.c.l.s4 1966171168
        %v3062 = vunpack.c.0.s8 %v3061
        %v3063 = vlaneseq
        %v3064 = vshrl.u32 %v3063, 7
        %v3065 = vsub.s32 %v3062, %v3064
        %v3066 = vrot.slane %v2967, %v3065
        %v3067 = vcombine.low %v3059, %v3066
        %v3069 = vunpack.c.l.s4 1966171168
        %v3070 = vunpack.c.0.s8 %v3069
        %v3071 = vlaneseq
        %v3072 = vshrl.u32 %v3071, 7
        %v3073 = vsub.s32 %v3070, %v3072
        %v3074 = vrot.slane %v3067, %v3073
        %v3075 = vcombine.low %v2968, %v2969
        %v3076 = vcombine.low %v2970, %v2971
        %v3077 = vcombine.low %v2972, %v2973
        %v3078 = vcombine.low %v2974, %v2975
        %v3080 = vunpack.c.l.s4 1966171168
        %v3081 = vunpack.c.0.s8 %v3080
        %v3082 = vlaneseq
        %v3083 = vshrl.u32 %v3082, 7
        %v3084 = vsub.s32 %v3081, %v3083
        %v3085 = vrot.slane %v3075, %v3084
        %v3087 = vunpack.c.l.s4 1966171168
        %v3088 = vunpack.c.0.s8 %v3087
        %v3089 = vlaneseq
        %v3090 = vshrl.u32 %v3089, 7
        %v3091 = vsub.s32 %v3088, %v3090
        %v3092 = vrot.slane %v3076, %v3091
        %v3094 = vunpack.c.l.s4 1966171168
        %v3095 = vunpack.c.0.s8 %v3094
        %v3096 = vlaneseq
        %v3097 = vshrl.u32 %v3096, 7
        %v3098 = vsub.s32 %v3095, %v3097
        %v3099 = vrot.slane %v3077, %v3098
        %v3101 = vunpack.c.l.s4 1966171168
        %v3102 = vunpack.c.0.s8 %v3101
        %v3103 = vlaneseq
        %v3104 = vshrl.u32 %v3103, 7
        %v3105 = vsub.s32 %v3102, %v3104
        %v3106 = vrot.slane %v3078, %v3105
        %v3107 = vcombine.low %v3085, %v3092
        %v3108 = vcombine.low %v3099, %v3106
        %v3110 = vunpack.c.l.s4 1966171168
        %v3111 = vunpack.c.0.s8 %v3110
        %v3112 = vlaneseq
        %v3113 = vshrl.u32 %v3112, 7
        %v3114 = vsub.s32 %v3111, %v3113
        %v3115 = vrot.slane %v3107, %v3114
        %v3117 = vunpack.c.l.s4 1966171168
        %v3118 = vunpack.c.0.s8 %v3117
        %v3119 = vlaneseq
        %v3120 = vshrl.u32 %v3119, 7
        %v3121 = vsub.s32 %v3118, %v3120
        %v3122 = vrot.slane %v3108, %v3121
        %v3123 = vcombine.low %v3115, %v3122
        %v3124 = vcombine.low %v2976, %v2977
        %v3126 = vunpack.c.l.s4 1966171168
        %v3127 = vunpack.c.0.s8 %v3126
        %v3128 = vlaneseq
        %v3129 = vshrl.u32 %v3128, 7
        %v3130 = vsub.s32 %v3127, %v3129
        %v3131 = vrot.slane %v3124, %v3130
        %v3133 = vunpack.c.l.s4 1966171168
        %v3134 = vunpack.c.0.s8 %v3133
        %v3135 = vlaneseq
        %v3136 = vshrl.u32 %v3135, 7
        %v3137 = vsub.s32 %v3134, %v3136
        %v3138 = vrot.slane %v2978, %v3137
        %v3139 = vcombine.low %v3131, %v3138
        %v3141 = vunpack.c.l.s4 1966171168
        %v3142 = vunpack.c.0.s8 %v3141
        %v3143 = vlaneseq
        %v3144 = vshrl.u32 %v3143, 7
        %v3145 = vsub.s32 %v3142, %v3144
        %v3146 = vrot.slane %v3139, %v3145
        %v3151 = vsel %vm2979, %v3051, -1e+09
        %v3152 = vsel %vm2980, %v3074, -1e+09
        %v3153 = vsel %vm2979, %v3123, -1e+09
        %v3154 = vsel %vm2980, %v3146, -1e+09
        %v3155 = vsel %vm1948, %v3151, -inf
        %vm3156 = vcmask 26624
        %v3157 = vsel %vm3156, %v3152, -inf
        %v3158 = vmax.f32 %v3155, %v3157
        %v3159 = vrot.slane %v3158, 4
        %v3160 = vmax.f32 %v3158, %v3159
        %v3161 = vrot.slane %v3160, 2
        %v3162 = vmax.f32 %v3160, %v3161
        %v3163 = vrot.slane %v3162, 1
        %v3164 = vmax.f32 %v3162, %v3163
        %v3165 = vsel %vm1948, %v3153, -inf
        %v3166 = vsel %vm3156, %v3154, -inf
        %v3167 = vmax.f32 %v3165, %v3166
        %v3168 = vrot.slane %v3167, 4
        %v3169 = vmax.f32 %v3167, %v3168
        %v3170 = vrot.slane %v3169, 2
        %v3171 = vmax.f32 %v3169, %v3170
        %v3172 = vrot.slane %v3171, 1
        %v3173 = vmax.f32 %v3171, %v3172
        %v3174 = vsub.f32 %v3151, %v3164
        %v3175 = vsub.f32 %v3152, %v3164
        %v3176 = vsub.f32 %v3153, %v3173
        %v3177 = vsub.f32 %v3154, %v3173
        %v3178 = vmul.f32 %v3174, 1.442695
        %v3179 = vpow.pop %v3178
        %v3180 = vmul.f32 %v3175, 1.442695
        %v3181 = vpow.pop %v3180
        %v3182 = vmul.f32 %v3176, 1.442695
        %v3183 = vpow.pop %v3182
        %v3184 = vmul.f32 %v3177, 1.442695
        %v3185 = vpow.pop %v3184
        %v3186 = vsel %vm1948, %v3179, 0.0
        %v3187 = vsel %vm3156, %v3181, 0.0
        %v3188 = vadd.f32 %v3186, %v3187
        %v3189 = vrot.slane %v3188, 4
        %v3190 = vadd.f32 %v3188, %v3189
        %v3191 = vrot.slane %v3190, 2
        %v3192 = vadd.f32 %v3190, %v3191
        %v3193 = vrot.slane %v3192, 1
        %v3194 = vadd.f32 %v3192, %v3193
        %v3195 = vsel %vm1948, %v3183, 0.0
        %v3196 = vsel %vm3156, %v3185, 0.0
        %v3197 = vadd.f32 %v3195, %v3196
        %v3198 = vrot.slane %v3197, 4
        %v3199 = vadd.f32 %v3197, %v3198
        %v3200 = vrot.slane %v3199, 2
        %v3201 = vadd.f32 %v3199, %v3200
        %v3202 = vrot.slane %v3201, 1
        %v3203 = vadd.f32 %v3201, %v3202
        %v3204 = vrcp.pop %v3194
        %v3205 = vrcp.pop %v3203
        %v3206 = vmul.f32 %v3179, %v3204
        %v3207 = vmul.f32 %v3181, %v3204
        %v3208 = vmul.f32 %v3183, %v3205
        %v3209 = vmul.f32 %v3185, %v3205
        %v3214 = vcombine.high %v3206, %v3206
        %v3216 = vunpack.c.l.s4 1966171168
        %v3217 = vunpack.c.0.s8 %v3216
        %v3218 = vlaneseq
        %v3219 = vshrl.u32 %v3218, 7
        %v3220 = vsub.s32 %v3217, %v3219
        %v3221 = vrot.slane %v3206, %v3220
        %v3223 = vunpack.c.l.s4 1966171168
        %v3224 = vunpack.c.0.s8 %v3223
        %v3225 = vlaneseq
        %v3226 = vshrl.u32 %v3225, 7
        %v3227 = vsub.s32 %v3224, %v3226
        %v3228 = vrot.slane %v3214, %v3227
        %v3229 = vcombine.high %v3221, %v3221
        %v3230 = vcombine.high %v3228, %v3228
        %v3232 = vunpack.c.l.s4 1966171168
        %v3233 = vunpack.c.0.s8 %v3232
        %v3234 = vlaneseq
        %v3235 = vshrl.u32 %v3234, 7
        %v3236 = vsub.s32 %v3233, %v3235
        %v3237 = vrot.slane %v3221, %v3236
        %v3239 = vunpack.c.l.s4 1966171168
        %v3240 = vunpack.c.0.s8 %v3239
        %v3241 = vlaneseq
        %v3242 = vshrl.u32 %v3241, 7
        %v3243 = vsub.s32 %v3240, %v3242
        %v3244 = vrot.slane %v3228, %v3243
        %v3246 = vunpack.c.l.s4 1966171168
        %v3247 = vunpack.c.0.s8 %v3246
        %v3248 = vlaneseq
        %v3249 = vshrl.u32 %v3248, 7
        %v3250 = vsub.s32 %v3247, %v3249
        %v3251 = vrot.slane %v3229, %v3250
        %v3253 = vunpack.c.l.s4 1966171168
        %v3254 = vunpack.c.0.s8 %v3253
        %v3255 = vlaneseq
        %v3256 = vshrl.u32 %v3255, 7
        %v3257 = vsub.s32 %v3254, %v3256
        %v3258 = vrot.slane %v3230, %v3257
        %v3259 = vcombine.high %v3237, %v3237
        %v3260 = vcombine.high %v3244, %v3244
        %v3261 = vcombine.high %v3251, %v3251
        %v3262 = vcombine.high %v3258, %v3258
        %v3264 = vunpack.c.l.s4 1966171168
        %v3265 = vunpack.c.0.s8 %v3264
        %v3266 = vlaneseq
        %v3267 = vshrl.u32 %v3266, 7
        %v3268 = vsub.s32 %v3265, %v3267
        %v3269 = vrot.slane %v3207, %v3268
        %v3270 = vcombine.high %v3269, %v3269
        %v3272 = vunpack.c.l.s4 1966171168
        %v3273 = vunpack.c.0.s8 %v3272
        %v3274 = vlaneseq
        %v3275 = vshrl.u32 %v3274, 7
        %v3276 = vsub.s32 %v3273, %v3275
        %v3277 = vrot.slane %v3269, %v3276
        %v3279 = vunpack.c.l.s4 1966171168
        %v3280 = vunpack.c.0.s8 %v3279
        %v3281 = vlaneseq
        %v3282 = vshrl.u32 %v3281, 7
        %v3283 = vsub.s32 %v3280, %v3282
        %v3284 = vrot.slane %v3270, %v3283
        %v3285 = vcombine.high %v3277, %v3277
        %v3286 = vcombine.high %v3208, %v3208
        %v3288 = vunpack.c.l.s4 1966171168
        %v3289 = vunpack.c.0.s8 %v3288
        %v3290 = vlaneseq
        %v3291 = vshrl.u32 %v3290, 7
        %v3292 = vsub.s32 %v3289, %v3291
        %v3293 = vrot.slane %v3208, %v3292
        %v3295 = vunpack.c.l.s4 1966171168
        %v3296 = vunpack.c.0.s8 %v3295
        %v3297 = vlaneseq
        %v3298 = vshrl.u32 %v3297, 7
        %v3299 = vsub.s32 %v3296, %v3298
        %v3300 = vrot.slane %v3286, %v3299
        %v3301 = vcombine.high %v3293, %v3293
        %v3302 = vcombine.high %v3300, %v3300
        %v3304 = vunpack.c.l.s4 1966171168
        %v3305 = vunpack.c.0.s8 %v3304
        %v3306 = vlaneseq
        %v3307 = vshrl.u32 %v3306, 7
        %v3308 = vsub.s32 %v3305, %v3307
        %v3309 = vrot.slane %v3293, %v3308
        %v3311 = vunpack.c.l.s4 1966171168
        %v3312 = vunpack.c.0.s8 %v3311
        %v3313 = vlaneseq
        %v3314 = vshrl.u32 %v3313, 7
        %v3315 = vsub.s32 %v3312, %v3314
        %v3316 = vrot.slane %v3300, %v3315
        %v3318 = vunpack.c.l.s4 1966171168
        %v3319 = vunpack.c.0.s8 %v3318
        %v3320 = vlaneseq
        %v3321 = vshrl.u32 %v3320, 7
        %v3322 = vsub.s32 %v3319, %v3321
        %v3323 = vrot.slane %v3301, %v3322
        %v3325 = vunpack.c.l.s4 1966171168
        %v3326 = vunpack.c.0.s8 %v3325
        %v3327 = vlaneseq
        %v3328 = vshrl.u32 %v3327, 7
        %v3329 = vsub.s32 %v3326, %v3328
        %v3330 = vrot.slane %v3302, %v3329
        %v3331 = vcombine.high %v3309, %v3309
        %v3332 = vcombine.high %v3316, %v3316
        %v3333 = vcombine.high %v3323, %v3323
        %v3334 = vcombine.high %v3330, %v3330
        %v3336 = vunpack.c.l.s4 1966171168
        %v3337 = vunpack.c.0.s8 %v3336
        %v3338 = vlaneseq
        %v3339 = vshrl.u32 %v3338, 7
        %v3340 = vsub.s32 %v3337, %v3339
        %v3341 = vrot.slane %v3209, %v3340
        %v3342 = vcombine.high %v3341, %v3341
        %v3344 = vunpack.c.l.s4 1966171168
        %v3345 = vunpack.c.0.s8 %v3344
        %v3346 = vlaneseq
        %v3347 = vshrl.u32 %v3346, 7
        %v3348 = vsub.s32 %v3345, %v3347
        %v3349 = vrot.slane %v3341, %v3348
        %v3351 = vunpack.c.l.s4 1966171168
        %v3352 = vunpack.c.0.s8 %v3351
        %v3353 = vlaneseq
        %v3354 = vshrl.u32 %v3353, 7
        %v3355 = vsub.s32 %v3352, %v3354
        %v3356 = vrot.slane %v3342, %v3355
        %v3357 = vcombine.high %v3349, %v3349
        %v3358 = vld [vmem:[#allocation31] sm:$0xf]
        %v3359 = vcombine.low %v3237, %v3251
        %v3360 = vcombine.low %v3259, %v3261
        %v3361 = vcombine.low %v3244, %v3258
        %v3362 = vcombine.low %v3260, %v3262
        %v3364 = vunpack.c.l.s4 1966171168
        %v3365 = vunpack.c.0.s8 %v3364
        %v3366 = vlaneseq
        %v3367 = vshrl.u32 %v3366, 7
        %v3368 = vsub.s32 %v3365, %v3367
        %v3369 = vrot.slane %v3359, %v3368
        %v3371 = vunpack.c.l.s4 1966171168
        %v3372 = vunpack.c.0.s8 %v3371
        %v3373 = vlaneseq
        %v3374 = vshrl.u32 %v3373, 7
        %v3375 = vsub.s32 %v3372, %v3374
        %v3376 = vrot.slane %v3360, %v3375
        %v3378 = vunpack.c.l.s4 1966171168
        %v3379 = vunpack.c.0.s8 %v3378
        %v3380 = vlaneseq
        %v3381 = vshrl.u32 %v3380, 7
        %v3382 = vsub.s32 %v3379, %v3381
        %v3383 = vrot.slane %v3361, %v3382
        %v3385 = vunpack.c.l.s4 1966171168
        %v3386 = vunpack.c.0.s8 %v3385
        %v3387 = vlaneseq
        %v3388 = vshrl.u32 %v3387, 7
        %v3389 = vsub.s32 %v3386, %v3388
        %v3390 = vrot.slane %v3362, %v3389
        %v3391 = vcombine.low %v3369, %v3376
        %v3392 = vcombine.low %v3383, %v3390
        %v3394 = vunpack.c.l.s4 1966171168
        %v3395 = vunpack.c.0.s8 %v3394
        %v3396 = vlaneseq
        %v3397 = vshrl.u32 %v3396, 7
        %v3398 = vsub.s32 %v3395, %v3397
        %v3399 = vrot.slane %v3391, %v3398
        %v3401 = vunpack.c.l.s4 1966171168
        %v3402 = vunpack.c.0.s8 %v3401
        %v3403 = vlaneseq
        %v3404 = vshrl.u32 %v3403, 7
        %v3405 = vsub.s32 %v3402, %v3404
        %v3406 = vrot.slane %v3392, %v3405
        %v3407 = vcombine.low %v3399, %v3406
        %v3408 = vcombine.low %v3277, %v3284
        %v3409 = vcombine.low %v3285, %v3309
        %v3410 = vcombine.low %v3323, %v3331
        %v3411 = vcombine.low %v3333, %v3316
        %v3413 = vunpack.c.l.s4 1966171168
        %v3414 = vunpack.c.0.s8 %v3413
        %v3415 = vlaneseq
        %v3416 = vshrl.u32 %v3415, 7
        %v3417 = vsub.s32 %v3414, %v3416
        %v3418 = vrot.slane %v3408, %v3417
        %v3420 = vunpack.c.l.s4 1966171168
        %v3421 = vunpack.c.0.s8 %v3420
        %v3422 = vlaneseq
        %v3423 = vshrl.u32 %v3422, 7
        %v3424 = vsub.s32 %v3421, %v3423
        %v3425 = vrot.slane %v3409, %v3424
        %v3427 = vunpack.c.l.s4 1966171168
        %v3428 = vunpack.c.0.s8 %v3427
        %v3429 = vlaneseq
        %v3430 = vshrl.u32 %v3429, 7
        %v3431 = vsub.s32 %v3428, %v3430
        %v3432 = vrot.slane %v3410, %v3431
        %v3434 = vunpack.c.l.s4 1966171168
        %v3435 = vunpack.c.0.s8 %v3434
        %v3436 = vlaneseq
        %v3437 = vshrl.u32 %v3436, 7
        %v3438 = vsub.s32 %v3435, %v3437
        %v3439 = vrot.slane %v3411, %v3438
        %v3440 = vcombine.low %v3418, %v3425
        %v3441 = vcombine.low %v3432, %v3439
        %v3443 = vunpack.c.l.s4 1966171168
        %v3444 = vunpack.c.0.s8 %v3443
        %v3445 = vlaneseq
        %v3446 = vshrl.u32 %v3445, 7
        %v3447 = vsub.s32 %v3444, %v3446
        %v3448 = vrot.slane %v3440, %v3447
        %v3450 = vunpack.c.l.s4 1966171168
        %v3451 = vunpack.c.0.s8 %v3450
        %v3452 = vlaneseq
        %v3453 = vshrl.u32 %v3452, 7
        %v3454 = vsub.s32 %v3451, %v3453
        %v3455 = vrot.slane %v3441, %v3454
        %v3456 = vcombine.low %v3448, %v3455
        %v3457 = vcombine.low %v3330, %v3332
        %v3458 = vcombine.low %v3334, %v3349
        %v3459 = vcombine.low %v3356, %v3357
        %v3461 = vunpack.c.l.s4 1966171168
        %v3462 = vunpack.c.0.s8 %v3461
        %v3463 = vlaneseq
        %v3464 = vshrl.u32 %v3463, 7
        %v3465 = vsub.s32 %v3462, %v3464
        %v3466 = vrot.slane %v3457, %v3465
        %v3468 = vunpack.c.l.s4 1966171168
        %v3469 = vunpack.c.0.s8 %v3468
        %v3470 = vlaneseq
        %v3471 = vshrl.u32 %v3470, 7
        %v3472 = vsub.s32 %v3469, %v3471
        %v3473 = vrot.slane %v3458, %v3472
        %v3475 = vunpack.c.l.s4 1966171168
        %v3476 = vunpack.c.0.s8 %v3475
        %v3477 = vlaneseq
        %v3478 = vshrl.u32 %v3477, 7
        %v3479 = vsub.s32 %v3476, %v3478
        %v3480 = vrot.slane %v3459, %v3479
        %v3481 = vcombine.low %v3466, %v3473
        %v3483 = vunpack.c.l.s4 1966171168
        %v3484 = vunpack.c.0.s8 %v3483
        %v3485 = vlaneseq
        %v3486 = vshrl.u32 %v3485, 7
        %v3487 = vsub.s32 %v3484, %v3486
        %v3488 = vrot.slane %v3481, %v3487
        %v3490 = vunpack.c.l.s4 1966171168
        %v3491 = vunpack.c.0.s8 %v3490
        %v3492 = vlaneseq
        %v3493 = vshrl.u32 %v3492, 7
        %v3494 = vsub.s32 %v3491, %v3493
        %v3495 = vrot.slane %v3480, %v3494
        %v3496 = vcombine.low %v3488, %v3495
        %v3497 = vsel %vm1948, %v3407, 0
        %v3499 = vsel %vm1948, %v3456, 0
        %v3501 = vsel %vm1948, %v3496, 0
        %v3504 = vsel %vm1952, %v3358, 0
        %3506 = vmatprep.subr.mxu0 0.0
        %3507 = vmatpush1.msra.mxu0 %v3504
        %3508 = vmatprep.subr.mxu0 0.0
        %3509 = vmatpush1.msra.mxu0 0.0
        %3510 = vmatprep.subr.mxu0 0.0
        %3511 = vmatpush1.msra.mxu0 0.0
        %3512 = vmatprep.subr.mxu0 0.0
        %3513 = vmatpush1.msra.mxu0 0.0
        %3514 = vmatprep.subr.mxu0 0.0
        %3515 = vmatpush1.msra.mxu0 0.0
        %3516 = vmatprep.subr.mxu0 0.0
        %3517 = vmatpush1.msra.mxu0 0.0
        %3518 = vmatprep.subr.mxu0 0.0
        %3519 = vmatpush1.msra.mxu0 0.0
        %3520 = vmatprep.subr.mxu0 0.0
        %3521 = vmatpush1.msra.mxu0 0.0
        %3522 = vmatprep.subr.mxu0 0.0
        %3523 = vmatpush1.msra.mxu0 0.0
        %3524 = vmatprep.subr.mxu0 0.0
        %3525 = vmatpush1.msra.mxu0 0.0
        %3526 = vmatprep.subr.mxu0 0.0
        %3527 = vmatpush1.msra.mxu0 0.0
        %3528 = vmatprep.subr.mxu0 0.0
        %3529 = vmatpush1.msra.mxu0 0.0
        %3530 = vmatprep.subr.mxu0 0.0
        %3531 = vmatpush1.msra.mxu0 0.0
        %3532 = vmatprep.subr.mxu0 0.0
        %3533 = vmatpush1.msra.mxu0 0.0
        %3534 = vmatprep.subr.mxu0 0.0
        %3535 = vmatpush1.msra.mxu0 0.0
        %3536 = vmatprep.subr.mxu0 0.0
        %3537 = vmatpush1.msra.mxu0 0.0
        %3538 = vmatprep.subr.mxu0 0.0
        %3539 = vmatpush1.msra.mxu0 0.0
        %3540 = vmatprep.subr.mxu0 0.0
        %3541 = vmatpush1.msra.mxu0 0.0
        %3542 = vmatprep.subr.mxu0 0.0
        %3543 = vmatpush1.msra.mxu0 0.0
        %3544 = vmatprep.subr.mxu0 0.0
        %3545 = vmatpush1.msra.mxu0 0.0
        %3546 = vmatprep.subr.mxu0 0.0
        %3547 = vmatpush1.msra.mxu0 0.0
        %3548 = vmatprep.subr.mxu0 0.0
        %3549 = vmatpush1.msra.mxu0 0.0
        %3550 = vmatprep.subr.mxu0 0.0
        %3551 = vmatpush1.msra.mxu0 0.0
        %3552 = vmatprep.subr.mxu0 0.0
        %3553 = vmatpush1.msra.mxu0 0.0
        %3554 = vmatprep.subr.mxu0 0.0
        %3555 = vmatpush1.msra.mxu0 0.0
        %3556 = vmatprep.subr.mxu0 0.0
        %3557 = vmatpush1.msra.mxu0 0.0
        %3558 = vmatprep.subr.mxu0 0.0
        %3559 = vmatpush1.msra.mxu0 0.0
        %3560 = vmatprep.subr.mxu0 0.0
        %3561 = vmatpush1.msra.mxu0 0.0
        %3562 = vmatprep.subr.mxu0 0.0
        %3563 = vmatpush1.msra.mxu0 0.0
        %3564 = vmatprep.subr.mxu0 0.0
        %3565 = vmatpush1.msra.mxu0 0.0
        %3566 = vmatprep.subr.mxu0 0.0
        %3567 = vmatpush1.msra.mxu0 0.0
        %3568 = vmatprep.subr.mxu0 0.0
        %3569 = vmatpush1.msra.mxu0 0.0
        %3570 = vmatprep.mubr.f32.mxu0 0.0
        %3571 = vmatmul.mubr.f32.gmra.mrb[0].mxu0 %v3497
        %v3572 = vpop.f32.mrb[0].mxu0
        %v3573 = vadd.f32 0.0, %v3572
        %v3574 = vpop.f32.mrb[0].mxu0
        %3575 = vmatprep.mubr.f32.mxu0 0.0
        %3576 = vmatmul.mubr.f32.gmra.mrb[0].mxu0 %v3499
        %v3577 = vpop.f32.mrb[0].mxu0
        %v3578 = vadd.f32 0.0, %v3577
        %v3579 = vpop.f32.mrb[0].mxu0
        %3580 = vmatprep.mubr.f32.mxu0 0.0
        %3581 = vmatmul.mubr.f32.gmra.mrb[0].mxu0 %v3501
        %v3582 = vpop.f32.mrb[0].mxu0
        %v3583 = vadd.f32 0.0, %v3582
        %v3584 = vpop.f32.mrb[0].mxu0
        %3585 = vdwg.mxu0
        %v3589 = vcombine.high %v3573, %v3573
        %v3591 = vunpack.c.l.s4 1966171168
        %v3592 = vunpack.c.0.s8 %v3591
        %v3593 = vlaneseq
        %v3594 = vshrl.u32 %v3593, 7
        %v3595 = vsub.s32 %v3592, %v3594
        %v3596 = vrot.slane %v3573, %v3595
        %v3598 = vunpack.c.l.s4 1966171168
        %v3599 = vunpack.c.0.s8 %v3598
        %v3600 = vlaneseq
        %v3601 = vshrl.u32 %v3600, 7
        %v3602 = vsub.s32 %v3599, %v3601
        %v3603 = vrot.slane %v3589, %v3602
        %v3604 = vcombine.high %v3596, %v3596
        %v3605 = vcombine.high %v3603, %v3603
        %v3607 = vunpack.c.l.s4 1966171168
        %v3608 = vunpack.c.0.s8 %v3607
        %v3609 = vlaneseq
        %v3610 = vshrl.u32 %v3609, 7
        %v3611 = vsub.s32 %v3608, %v3610
        %v3612 = vrot.slane %v3596, %v3611
        %v3614 = vunpack.c.l.s4 1966171168
        %v3615 = vunpack.c.0.s8 %v3614
        %v3616 = vlaneseq
        %v3617 = vshrl.u32 %v3616, 7
        %v3618 = vsub.s32 %v3615, %v3617
        %v3619 = vrot.slane %v3603, %v3618
        %v3621 = vunpack.c.l.s4 1966171168
        %v3622 = vunpack.c.0.s8 %v3621
        %v3623 = vlaneseq
        %v3624 = vshrl.u32 %v3623, 7
        %v3625 = vsub.s32 %v3622, %v3624
        %v3626 = vrot.slane %v3604, %v3625
        %v3628 = vunpack.c.l.s4 1966171168
        %v3629 = vunpack.c.0.s8 %v3628
        %v3630 = vlaneseq
        %v3631 = vshrl.u32 %v3630, 7
        %v3632 = vsub.s32 %v3629, %v3631
        %v3633 = vrot.slane %v3605, %v3632
        %v3634 = vcombine.high %v3612, %v3612
        %v3635 = vcombine.high %v3619, %v3619
        %v3636 = vcombine.high %v3626, %v3626
        %v3637 = vcombine.high %v3633, %v3633
        %v3638 = vcombine.high %v3578, %v3578
        %v3640 = vunpack.c.l.s4 1966171168
        %v3641 = vunpack.c.0.s8 %v3640
        %v3642 = vlaneseq
        %v3643 = vshrl.u32 %v3642, 7
        %v3644 = vsub.s32 %v3641, %v3643
        %v3645 = vrot.slane %v3578, %v3644
        %v3647 = vunpack.c.l.s4 1966171168
        %v3648 = vunpack.c.0.s8 %v3647
        %v3649 = vlaneseq
        %v3650 = vshrl.u32 %v3649, 7
        %v3651 = vsub.s32 %v3648, %v3650
        %v3652 = vrot.slane %v3638, %v3651
        %v3653 = vcombine.high %v3645, %v3645
        %v3654 = vcombine.high %v3652, %v3652
        %v3656 = vunpack.c.l.s4 1966171168
        %v3657 = vunpack.c.0.s8 %v3656
        %v3658 = vlaneseq
        %v3659 = vshrl.u32 %v3658, 7
        %v3660 = vsub.s32 %v3657, %v3659
        %v3661 = vrot.slane %v3645, %v3660
        %v3663 = vunpack.c.l.s4 1966171168
        %v3664 = vunpack.c.0.s8 %v3663
        %v3665 = vlaneseq
        %v3666 = vshrl.u32 %v3665, 7
        %v3667 = vsub.s32 %v3664, %v3666
        %v3668 = vrot.slane %v3652, %v3667
        %v3670 = vunpack.c.l.s4 1966171168
        %v3671 = vunpack.c.0.s8 %v3670
        %v3672 = vlaneseq
        %v3673 = vshrl.u32 %v3672, 7
        %v3674 = vsub.s32 %v3671, %v3673
        %v3675 = vrot.slane %v3653, %v3674
        %v3677 = vunpack.c.l.s4 1966171168
        %v3678 = vunpack.c.0.s8 %v3677
        %v3679 = vlaneseq
        %v3680 = vshrl.u32 %v3679, 7
        %v3681 = vsub.s32 %v3678, %v3680
        %v3682 = vrot.slane %v3654, %v3681
        %v3683 = vcombine.high %v3661, %v3661
        %v3684 = vcombine.high %v3668, %v3668
        %v3685 = vcombine.high %v3675, %v3675
        %v3686 = vcombine.high %v3682, %v3682
        %v3687 = vcombine.high %v3583, %v3583
        %v3689 = vunpack.c.l.s4 1966171168
        %v3690 = vunpack.c.0.s8 %v3689
        %v3691 = vlaneseq
        %v3692 = vshrl.u32 %v3691, 7
        %v3693 = vsub.s32 %v3690, %v3692
        %v3694 = vrot.slane %v3583, %v3693
        %v3696 = vunpack.c.l.s4 1966171168
        %v3697 = vunpack.c.0.s8 %v3696
        %v3698 = vlaneseq
        %v3699 = vshrl.u32 %v3698, 7
        %v3700 = vsub.s32 %v3697, %v3699
        %v3701 = vrot.slane %v3687, %v3700
        %v3702 = vcombine.high %v3694, %v3694
        %v3703 = vcombine.high %v3701, %v3701
        %v3705 = vunpack.c.l.s4 1966171168
        %v3706 = vunpack.c.0.s8 %v3705
        %v3707 = vlaneseq
        %v3708 = vshrl.u32 %v3707, 7
        %v3709 = vsub.s32 %v3706, %v3708
        %v3710 = vrot.slane %v3694, %v3709
        %v3712 = vunpack.c.l.s4 1966171168
        %v3713 = vunpack.c.0.s8 %v3712
        %v3714 = vlaneseq
        %v3715 = vshrl.u32 %v3714, 7
        %v3716 = vsub.s32 %v3713, %v3715
        %v3717 = vrot.slane %v3701, %v3716
        %v3719 = vunpack.c.l.s4 1966171168
        %v3720 = vunpack.c.0.s8 %v3719
        %v3721 = vlaneseq
        %v3722 = vshrl.u32 %v3721, 7
        %v3723 = vsub.s32 %v3720, %v3722
        %v3724 = vrot.slane %v3702, %v3723
        %v3726 = vunpack.c.l.s4 1966171168
        %v3727 = vunpack.c.0.s8 %v3726
        %v3728 = vlaneseq
        %v3729 = vshrl.u32 %v3728, 7
        %v3730 = vsub.s32 %v3727, %v3729
        %v3731 = vrot.slane %v3703, %v3730
        %v3732 = vcombine.high %v3710, %v3710
        %v3733 = vcombine.high %v3724, %v3724
        %v3760 = vcombine.high %v2361, %v2361
        %v3762 = vunpack.c.l.s4 1966171168
        %v3763 = vunpack.c.0.s8 %v3762
        %v3764 = vlaneseq
        %v3765 = vshrl.u32 %v3764, 7
        %v3766 = vsub.s32 %v3763, %v3765
        %v3767 = vrot.slane %v2361, %v3766
        %v3769 = vunpack.c.l.s4 1966171168
        %v3770 = vunpack.c.0.s8 %v3769
        %v3771 = vlaneseq
        %v3772 = vshrl.u32 %v3771, 7
        %v3773 = vsub.s32 %v3770, %v3772
        %v3774 = vrot.slane %v3760, %v3773
        %v3775 = vcombine.high %v3767, %v3767
        %v3776 = vcombine.high %v3774, %v3774
        %v3778 = vunpack.c.l.s4 1966171168
        %v3779 = vunpack.c.0.s8 %v3778
        %v3780 = vlaneseq
        %v3781 = vshrl.u32 %v3780, 7
        %v3782 = vsub.s32 %v3779, %v3781
        %v3783 = vrot.slane %v3767, %v3782
        %v3785 = vunpack.c.l.s4 1966171168
        %v3786 = vunpack.c.0.s8 %v3785
        %v3787 = vlaneseq
        %v3788 = vshrl.u32 %v3787, 7
        %v3789 = vsub.s32 %v3786, %v3788
        %v3790 = vrot.slane %v3774, %v3789
        %v3792 = vunpack.c.l.s4 1966171168
        %v3793 = vunpack.c.0.s8 %v3792
        %v3794 = vlaneseq
        %v3795 = vshrl.u32 %v3794, 7
        %v3796 = vsub.s32 %v3793, %v3795
        %v3797 = vrot.slane %v3775, %v3796
        %v3799 = vunpack.c.l.s4 1966171168
        %v3800 = vunpack.c.0.s8 %v3799
        %v3801 = vlaneseq
        %v3802 = vshrl.u32 %v3801, 7
        %v3803 = vsub.s32 %v3800, %v3802
        %v3804 = vrot.slane %v3776, %v3803
        %v3805 = vcombine.high %v3783, %v3783
        %v3806 = vcombine.high %v3790, %v3790
        %v3807 = vcombine.high %v3797, %v3797
        %v3808 = vcombine.high %v3804, %v3804
        %v3810 = vunpack.c.l.s4 1966171168
        %v3811 = vunpack.c.0.s8 %v3810
        %v3812 = vlaneseq
        %v3813 = vshrl.u32 %v3812, 7
        %v3814 = vsub.s32 %v3811, %v3813
        %v3815 = vrot.slane %v2362, %v3814
        %v3816 = vcombine.high %v3815, %v3815
        %v3818 = vunpack.c.l.s4 1966171168
        %v3819 = vunpack.c.0.s8 %v3818
        %v3820 = vlaneseq
        %v3821 = vshrl.u32 %v3820, 7
        %v3822 = vsub.s32 %v3819, %v3821
        %v3823 = vrot.slane %v3815, %v3822
        %v3825 = vunpack.c.l.s4 1966171168
        %v3826 = vunpack.c.0.s8 %v3825
        %v3827 = vlaneseq
        %v3828 = vshrl.u32 %v3827, 7
        %v3829 = vsub.s32 %v3826, %v3828
        %v3830 = vrot.slane %v3816, %v3829
        %v3831 = vcombine.high %v3823, %v3823
        %v3832 = vcombine.high %v2363, %v2363
        %v3834 = vunpack.c.l.s4 1966171168
        %v3835 = vunpack.c.0.s8 %v3834
        %v3836 = vlaneseq
        %v3837 = vshrl.u32 %v3836, 7
        %v3838 = vsub.s32 %v3835, %v3837
        %v3839 = vrot.slane %v2363, %v3838
        %v3841 = vunpack.c.l.s4 1966171168
        %v3842 = vunpack.c.0.s8 %v3841
        %v3843 = vlaneseq
        %v3844 = vshrl.u32 %v3843, 7
        %v3845 = vsub.s32 %v3842, %v3844
        %v3846 = vrot.slane %v3832, %v3845
        %v3847 = vcombine.high %v3839, %v3839
        %v3848 = vcombine.high %v3846, %v3846
        %v3850 = vunpack.c.l.s4 1966171168
        %v3851 = vunpack.c.0.s8 %v3850
        %v3852 = vlaneseq
        %v3853 = vshrl.u32 %v3852, 7
        %v3854 = vsub.s32 %v3851, %v3853
        %v3855 = vrot.slane %v3839, %v3854
        %v3857 = vunpack.c.l.s4 1966171168
        %v3858 = vunpack.c.0.s8 %v3857
        %v3859 = vlaneseq
        %v3860 = vshrl.u32 %v3859, 7
        %v3861 = vsub.s32 %v3858, %v3860
        %v3862 = vrot.slane %v3846, %v3861
        %v3864 = vunpack.c.l.s4 1966171168
        %v3865 = vunpack.c.0.s8 %v3864
        %v3866 = vlaneseq
        %v3867 = vshrl.u32 %v3866, 7
        %v3868 = vsub.s32 %v3865, %v3867
        %v3869 = vrot.slane %v3847, %v3868
        %v3871 = vunpack.c.l.s4 1966171168
        %v3872 = vunpack.c.0.s8 %v3871
        %v3873 = vlaneseq
        %v3874 = vshrl.u32 %v3873, 7
        %v3875 = vsub.s32 %v3872, %v3874
        %v3876 = vrot.slane %v3848, %v3875
        %v3877 = vcombine.high %v3855, %v3855
        %v3878 = vcombine.high %v3862, %v3862
        %v3879 = vcombine.high %v3869, %v3869
        %v3880 = vcombine.high %v3876, %v3876
        %v3882 = vunpack.c.l.s4 1966171168
        %v3883 = vunpack.c.0.s8 %v3882
        %v3884 = vlaneseq
        %v3885 = vshrl.u32 %v3884, 7
        %v3886 = vsub.s32 %v3883, %v3885
        %v3887 = vrot.slane %v2364, %v3886
        %v3888 = vcombine.high %v3887, %v3887
        %v3890 = vunpack.c.l.s4 1966171168
        %v3891 = vunpack.c.0.s8 %v3890
        %v3892 = vlaneseq
        %v3893 = vshrl.u32 %v3892, 7
        %v3894 = vsub.s32 %v3891, %v3893
        %v3895 = vrot.slane %v3887, %v3894
        %v3897 = vunpack.c.l.s4 1966171168
        %v3898 = vunpack.c.0.s8 %v3897
        %v3899 = vlaneseq
        %v3900 = vshrl.u32 %v3899, 7
        %v3901 = vsub.s32 %v3898, %v3900
        %v3902 = vrot.slane %v3888, %v3901
        %v3903 = vcombine.high %v3895, %v3895
        %v3926 = vmul.f32 %v3612, %v3783
        %v3927 = vmul.f32 %v3626, %v3797
        %v3928 = vmul.f32 %v3634, %v3805
        %v3929 = vmul.f32 %v3636, %v3807
        %v3930 = vmul.f32 %v3619, %v3790
        %v3931 = vmul.f32 %v3633, %v3804
        %v3932 = vmul.f32 %v3635, %v3806
        %v3933 = vmul.f32 %v3637, %v3808
        %v3934 = vmul.f32 %v3661, %v3823
        %v3935 = vmul.f32 %v3675, %v3830
        %v3936 = vmul.f32 %v3683, %v3831
        %v3937 = vmul.f32 %v3685, %v3855
        %v3938 = vmul.f32 %v3668, %v3869
        %v3939 = vmul.f32 %v3682, %v3877
        %v3940 = vmul.f32 %v3684, %v3879
        %v3941 = vmul.f32 %v3686, %v3862
        %v3942 = vmul.f32 %v3710, %v3876
        %v3943 = vmul.f32 %v3724, %v3878
        %v3944 = vmul.f32 %v3732, %v3880
        %v3945 = vmul.f32 %v3733, %v3895
        %v3946 = vmul.f32 %v3717, %v3902
        %v3947 = vmul.f32 %v3731, %v3903
        %v3970 = vcombine.low %v3926, %v3927
        %v3971 = vcombine.low %v3928, %v3929
        %v3972 = vcombine.low %v3930, %v3931
        %v3973 = vcombine.low %v3932, %v3933
        %v3975 = vunpack.c.l.s4 1966171168
        %v3976 = vunpack.c.0.s8 %v3975
        %v3977 = vlaneseq
        %v3978 = vshrl.u32 %v3977, 7
        %v3979 = vsub.s32 %v3976, %v3978
        %v3980 = vrot.slane %v3970, %v3979
        %v3982 = vunpack.c.l.s4 1966171168
        %v3983 = vunpack.c.0.s8 %v3982
        %v3984 = vlaneseq
        %v3985 = vshrl.u32 %v3984, 7
        %v3986 = vsub.s32 %v3983, %v3985
        %v3987 = vrot.slane %v3971, %v3986
        %v3989 = vunpack.c.l.s4 1966171168
        %v3990 = vunpack.c.0.s8 %v3989
        %v3991 = vlaneseq
        %v3992 = vshrl.u32 %v3991, 7
        %v3993 = vsub.s32 %v3990, %v3992
        %v3994 = vrot.slane %v3972, %v3993
        %v3996 = vunpack.c.l.s4 1966171168
        %v3997 = vunpack.c.0.s8 %v3996
        %v3998 = vlaneseq
        %v3999 = vshrl.u32 %v3998, 7
        %v4000 = vsub.s32 %v3997, %v3999
        %v4001 = vrot.slane %v3973, %v4000
        %v4002 = vcombine.low %v3980, %v3987
        %v4003 = vcombine.low %v3994, %v4001
        %v4005 = vunpack.c.l.s4 1966171168
        %v4006 = vunpack.c.0.s8 %v4005
        %v4007 = vlaneseq
        %v4008 = vshrl.u32 %v4007, 7
        %v4009 = vsub.s32 %v4006, %v4008
        %v4010 = vrot.slane %v4002, %v4009
        %v4012 = vunpack.c.l.s4 1966171168
        %v4013 = vunpack.c.0.s8 %v4012
        %v4014 = vlaneseq
        %v4015 = vshrl.u32 %v4014, 7
        %v4016 = vsub.s32 %v4013, %v4015
        %v4017 = vrot.slane %v4003, %v4016
        %v4018 = vcombine.low %v4010, %v4017
        %v4019 = vcombine.low %v3934, %v3935
        %v4021 = vunpack.c.l.s4 1966171168
        %v4022 = vunpack.c.0.s8 %v4021
        %v4023 = vlaneseq
        %v4024 = vshrl.u32 %v4023, 7
        %v4025 = vsub.s32 %v4022, %v4024
        %v4026 = vrot.slane %v4019, %v4025
        %v4028 = vunpack.c.l.s4 1966171168
        %v4029 = vunpack.c.0.s8 %v4028
        %v4030 = vlaneseq
        %v4031 = vshrl.u32 %v4030, 7
        %v4032 = vsub.s32 %v4029, %v4031
        %v4033 = vrot.slane %v3936, %v4032
        %v4034 = vcombine.low %v4026, %v4033
        %v4036 = vunpack.c.l.s4 1966171168
        %v4037 = vunpack.c.0.s8 %v4036
        %v4038 = vlaneseq
        %v4039 = vshrl.u32 %v4038, 7
        %v4040 = vsub.s32 %v4037, %v4039
        %v4041 = vrot.slane %v4034, %v4040
        %v4042 = vcombine.low %v3937, %v3938
        %v4043 = vcombine.low %v3939, %v3940
        %v4044 = vcombine.low %v3941, %v3942
        %v4045 = vcombine.low %v3943, %v3944
        %v4047 = vunpack.c.l.s4 1966171168
        %v4048 = vunpack.c.0.s8 %v4047
        %v4049 = vlaneseq
        %v4050 = vshrl.u32 %v4049, 7
        %v4051 = vsub.s32 %v4048, %v4050
        %v4052 = vrot.slane %v4042, %v4051
        %v4054 = vunpack.c.l.s4 1966171168
        %v4055 = vunpack.c.0.s8 %v4054
        %v4056 = vlaneseq
        %v4057 = vshrl.u32 %v4056, 7
        %v4058 = vsub.s32 %v4055, %v4057
        %v4059 = vrot.slane %v4043, %v4058
        %v4061 = vunpack.c.l.s4 1966171168
        %v4062 = vunpack.c.0.s8 %v4061
        %v4063 = vlaneseq
        %v4064 = vshrl.u32 %v4063, 7
        %v4065 = vsub.s32 %v4062, %v4064
        %v4066 = vrot.slane %v4044, %v4065
        %v4068 = vunpack.c.l.s4 1966171168
        %v4069 = vunpack.c.0.s8 %v4068
        %v4070 = vlaneseq
        %v4071 = vshrl.u32 %v4070, 7
        %v4072 = vsub.s32 %v4069, %v4071
        %v4073 = vrot.slane %v4045, %v4072
        %v4074 = vcombine.low %v4052, %v4059
        %v4075 = vcombine.low %v4066, %v4073
        %v4077 = vunpack.c.l.s4 1966171168
        %v4078 = vunpack.c.0.s8 %v4077
        %v4079 = vlaneseq
        %v4080 = vshrl.u32 %v4079, 7
        %v4081 = vsub.s32 %v4078, %v4080
        %v4082 = vrot.slane %v4074, %v4081
        %v4084 = vunpack.c.l.s4 1966171168
        %v4085 = vunpack.c.0.s8 %v4084
        %v4086 = vlaneseq
        %v4087 = vshrl.u32 %v4086, 7
        %v4088 = vsub.s32 %v4085, %v4087
        %v4089 = vrot.slane %v4075, %v4088
        %v4090 = vcombine.low %v4082, %v4089
        %v4091 = vcombine.low %v3945, %v3946
        %v4093 = vunpack.c.l.s4 1966171168
        %v4094 = vunpack.c.0.s8 %v4093
        %v4095 = vlaneseq
        %v4096 = vshrl.u32 %v4095, 7
        %v4097 = vsub.s32 %v4094, %v4096
        %v4098 = vrot.slane %v4091, %v4097
        %v4100 = vunpack.c.l.s4 1966171168
        %v4101 = vunpack.c.0.s8 %v4100
        %v4102 = vlaneseq
        %v4103 = vshrl.u32 %v4102, 7
        %v4104 = vsub.s32 %v4101, %v4103
        %v4105 = vrot.slane %v3947, %v4104
        %v4106 = vcombine.low %v4098, %v4105
        %v4108 = vunpack.c.l.s4 1966171168
        %v4109 = vunpack.c.0.s8 %v4108
        %v4110 = vlaneseq
        %v4111 = vshrl.u32 %v4110, 7
        %v4112 = vsub.s32 %v4109, %v4111
        %v4113 = vrot.slane %v4106, %v4112
        %v4118 = vsel %vm2037, %v4018, 0.0
        %v4119 = vsel %vm2366, %v4041, 0.0
        %v4120 = vadd.f32 %v4118, %v4119
        %v4121 = vrot.slane %v4120, 4
        %v4122 = vadd.f32 %v4120, %v4121
        %v4123 = vrot.slane %v4122, 2
        %v4124 = vadd.f32 %v4122, %v4123
        %v4125 = vrot.slane %v4124, 1
        %v4126 = vadd.f32 %v4124, %v4125
        %v4127 = vsel %vm2037, %v4090, 0.0
        %v4128 = vsel %vm2366, %v4113, 0.0
        %v4129 = vadd.f32 %v4127, %v4128
        %v4130 = vrot.slane %v4129, 4
        %v4131 = vadd.f32 %v4129, %v4130
        %v4132 = vrot.slane %v4131, 2
        %v4133 = vadd.f32 %v4131, %v4132
        %v4134 = vrot.slane %v4133, 1
        %v4135 = vadd.f32 %v4133, %v4134
        %v4136 = vld [vmem:[#allocation18] sm:$0xff]
        %v4137 = vld [vmem:[#allocation18 + $0x8] sm:$0xff]
        %v4138 = vld [vmem:[#allocation18 + $0x10] sm:$0xff]
        %v4139 = vld [vmem:[#allocation18 + $0x18] sm:$0xff]
        %v4140 = vld [vmem:[#allocation19] sm:$0x1]
        %v4142 = vlaneseq
        %v4143 = vshrl.u32 %v4142, 7
        %v4144 = vsub.s32 0, %v4143
        %v4145 = vrot.slane %v4140, %v4144
        %vm4149 = vcmask 1041409
        %v4150 = vsel %vm4149, %v4135, %v4126
        %v4151 = vsel %vm2037, %v4150, 0
        %4153 = vmatprep.subr.mxu0 0.0
        %4154 = vmatpush1.msra.mxu0 %v4136
        %4155 = vmatprep.subr.mxu0 0.0
        %4156 = vmatpush1.msra.mxu0 %v4137
        %4157 = vmatprep.subr.mxu0 0.0
        %4158 = vmatpush1.msra.mxu0 %v4138
        %4159 = vmatprep.subr.mxu0 0.0
        %4160 = vmatpush1.msra.mxu0 %v4139
        %4161 = vmatprep.subr.mxu0 0.0
        %4162 = vmatpush1.msra.mxu0 0.0
        %4163 = vmatprep.subr.mxu0 0.0
        %4164 = vmatpush1.msra.mxu0 0.0
        %4165 = vmatprep.subr.mxu0 0.0
        %4166 = vmatpush1.msra.mxu0 0.0
        %4167 = vmatprep.subr.mxu0 0.0
        %4168 = vmatpush1.msra.mxu0 0.0
        %4169 = vmatprep.subr.mxu0 0.0
        %4170 = vmatpush1.msra.mxu0 0.0
        %4171 = vmatprep.subr.mxu0 0.0
        %4172 = vmatpush1.msra.mxu0 0.0
        %4173 = vmatprep.subr.mxu0 0.0
        %4174 = vmatpush1.msra.mxu0 0.0
        %4175 = vmatprep.subr.mxu0 0.0
        %4176 = vmatpush1.msra.mxu0 0.0
        %4177 = vmatprep.subr.mxu0 0.0
        %4178 = vmatpush1.msra.mxu0 0.0
        %4179 = vmatprep.subr.mxu0 0.0
        %4180 = vmatpush1.msra.mxu0 0.0
        %4181 = vmatprep.subr.mxu0 0.0
        %4182 = vmatpush1.msra.mxu0 0.0
        %4183 = vmatprep.subr.mxu0 0.0
        %4184 = vmatpush1.msra.mxu0 0.0
        %4185 = vmatprep.subr.mxu0 0.0
        %4186 = vmatpush1.msra.mxu0 0.0
        %4187 = vmatprep.subr.mxu0 0.0
        %4188 = vmatpush1.msra.mxu0 0.0
        %4189 = vmatprep.subr.mxu0 0.0
        %4190 = vmatpush1.msra.mxu0 0.0
        %4191 = vmatprep.subr.mxu0 0.0
        %4192 = vmatpush1.msra.mxu0 0.0
        %4193 = vmatprep.subr.mxu0 0.0
        %4194 = vmatpush1.msra.mxu0 0.0
        %4195 = vmatprep.subr.mxu0 0.0
        %4196 = vmatpush1.msra.mxu0 0.0
        %4197 = vmatprep.subr.mxu0 0.0
        %4198 = vmatpush1.msra.mxu0 0.0
        %4199 = vmatprep.subr.mxu0 0.0
        %4200 = vmatpush1.msra.mxu0 0.0
        %4201 = vmatprep.subr.mxu0 0.0
        %4202 = vmatpush1.msra.mxu0 0.0
        %4203 = vmatprep.subr.mxu0 0.0
        %4204 = vmatpush1.msra.mxu0 0.0
        %4205 = vmatprep.subr.mxu0 0.0
        %4206 = vmatpush1.msra.mxu0 0.0
        %4207 = vmatprep.subr.mxu0 0.0
        %4208 = vmatpush1.msra.mxu0 0.0
        %4209 = vmatprep.subr.mxu0 0.0
        %4210 = vmatpush1.msra.mxu0 0.0
        %4211 = vmatprep.subr.mxu0 0.0
        %4212 = vmatpush1.msra.mxu0 0.0
        %4213 = vmatprep.subr.mxu0 0.0
        %4214 = vmatpush1.msra.mxu0 0.0
        %4215 = vmatprep.subr.mxu0 0.0
        %4216 = vmatpush1.msra.mxu0 0.0
        %4217 = vmatprep.mubr.f32.mxu0 0.0
        %4218 = vmatmul.mubr.f32.gmra.mrb[0].mxu0 %v4151
        %v4219 = vpop.f32.mrb[0].mxu0
        %v4220 = vadd.f32 %v4145, %v4219
        %v4221 = vpop.f32.mrb[0].mxu0
        %4222 = vdwg.mxu0
        %v4223 = vadd.f32 %v2023, %v4220
        %v4224 = vld [vmem:[#allocation21] sm:$0x1]
        %v4225 = vld [vmem:[#allocation22] sm:$0x1]
        %vm4226 = vcmask 254976
        %v4227 = vsel %vm4226, %v4223, 0.0
        %4228 = vadd.xlane.f32.xlu0 %v4227
        %v4229 = vpop.xlane.xlu0 %4228
        %v4230 = vrcp.pop 32.0
        %v4231 = vmul.f32 %v4229, %v4230
        %v4232 = vsub.f32 %v4223, %v4231
        %v4233 = vmul.f32 %v4232, %v4232
        %v4234 = vsel %vm4226, %v4233, 0.0
        %4235 = vadd.xlane.f32.xlu0 %v4234
        %v4236 = vpop.xlane.xlu0 %4235
        %v4237 = vmul.f32 %v4236, %v4230
        %v4238 = vadd.f32 %v4237, 1e-05
        %v4239 = vrsqrt.pop %v4238
        %v4240 = vmul.f32 %v4232, %v4239
        %v4242 = vlaneseq
        %v4243 = vshrl.u32 %v4242, 7
        %v4244 = vsub.s32 0, %v4243
        %v4245 = vrot.slane %v4224, %v4244
        %v4247 = vmul.f32 %v4240, %v4245
        %v4249 = vlaneseq
        %v4250 = vshrl.u32 %v4249, 7
        %v4251 = vsub.s32 0, %v4250
        %v4252 = vrot.slane %v4225, %v4251
        %v4254 = vadd.f32 %v4247, %v4252
        %v4255 = vld [vmem:[#allocation24] sm:$0xff]
        %v4256 = vld [vmem:[#allocation24 + $0x8] sm:$0xff]
        %v4257 = vld [vmem:[#allocation24 + $0x10] sm:$0xff]
        %v4258 = vld [vmem:[#allocation24 + $0x18] sm:$0xff]
        %v4259 = vld [vmem:[#allocation25] sm:$0x1]
        %v4261 = vlaneseq
        %v4262 = vshrl.u32 %v4261, 7
        %v4263 = vsub.s32 0, %v4262
        %v4264 = vrot.slane %v4259, %v4263
        %v4267 = vsel %vm2037, %v4254, 0
        %4269 = vmatprep.subr.mxu0 0.0
        %4270 = vmatpush1.msra.mxu0 %v4255
        %4271 = vmatprep.subr.mxu0 0.0
        %4272 = vmatpush1.msra.mxu0 %v4256
        %4273 = vmatprep.subr.mxu0 0.0
        %4274 = vmatpush1.msra.mxu0 %v4257
        %4275 = vmatprep.subr.mxu0 0.0
        %4276 = vmatpush1.msra.mxu0 %v4258
        %4277 = vmatprep.subr.mxu0 0.0
        %4278 = vmatpush1.msra.mxu0 0.0
        %4279 = vmatprep.subr.mxu0 0.0
        %4280 = vmatpush1.msra.mxu0 0.0
        %4281 = vmatprep.subr.mxu0 0.0
        %4282 = vmatpush1.msra.mxu0 0.0
        %4283 = vmatprep.subr.mxu0 0.0
        %4284 = vmatpush1.msra.mxu0 0.0
        %4285 = vmatprep.subr.mxu0 0.0
        %4286 = vmatpush1.msra.mxu0 0.0
        %4287 = vmatprep.subr.mxu0 0.0
        %4288 = vmatpush1.msra.mxu0 0.0
        %4289 = vmatprep.subr.mxu0 0.0
        %4290 = vmatpush1.msra.mxu0 0.0
        %4291 = vmatprep.subr.mxu0 0.0
        %4292 = vmatpush1.msra.mxu0 0.0
        %4293 = vmatprep.subr.mxu0 0.0
        %4294 = vmatpush1.msra.mxu0 0.0
        %4295 = vmatprep.subr.mxu0 0.0
        %4296 = vmatpush1.msra.mxu0 0.0
        %4297 = vmatprep.subr.mxu0 0.0
        %4298 = vmatpush1.msra.mxu0 0.0
        %4299 = vmatprep.subr.mxu0 0.0
        %4300 = vmatpush1.msra.mxu0 0.0
        %4301 = vmatprep.subr.mxu0 0.0
        %4302 = vmatpush1.msra.mxu0 0.0
        %4303 = vmatprep.subr.mxu0 0.0
        %4304 = vmatpush1.msra.mxu0 0.0
        %4305 = vmatprep.subr.mxu0 0.0
        %4306 = vmatpush1.msra.mxu0 0.0
        %4307 = vmatprep.subr.mxu0 0.0
        %4308 = vmatpush1.msra.mxu0 0.0
        %4309 = vmatprep.subr.mxu0 0.0
        %4310 = vmatpush1.msra.mxu0 0.0
        %4311 = vmatprep.subr.mxu0 0.0
        %4312 = vmatpush1.msra.mxu0 0.0
        %4313 = vmatprep.subr.mxu0 0.0
        %4314 = vmatpush1.msra.mxu0 0.0
        %4315 = vmatprep.subr.mxu0 0.0
        %4316 = vmatpush1.msra.mxu0 0.0
        %4317 = vmatprep.subr.mxu0 0.0
        %4318 = vmatpush1.msra.mxu0 0.0
        %4319 = vmatprep.subr.mxu0 0.0
        %4320 = vmatpush1.msra.mxu0 0.0
        %4321 = vmatprep.subr.mxu0 0.0
        %4322 = vmatpush1.msra.mxu0 0.0
        %4323 = vmatprep.subr.mxu0 0.0
        %4324 = vmatpush1.msra.mxu0 0.0
        %4325 = vmatprep.subr.mxu0 0.0
        %4326 = vmatpush1.msra.mxu0 0.0
        %4327 = vmatprep.subr.mxu0 0.0
        %4328 = vmatpush1.msra.mxu0 0.0
        %4329 = vmatprep.subr.mxu0 0.0
        %4330 = vmatpush1.msra.mxu0 0.0
        %4331 = vmatprep.subr.mxu0 0.0
        %4332 = vmatpush1.msra.mxu0 0.0
        %4333 = vmatprep.mubr.f32.mxu0 0.0
        %4334 = vmatmul.mubr.f32.gmra.mrb[0].mxu0 %v4267
        %v4335 = vpop.f32.mrb[0].mxu0
        %v4336 = vadd.f32 %v4264, %v4335
        %v4337 = vpop.f32.mrb[0].mxu0
        %4338 = vdwg.mxu0
        %v4339 = vmax.f32 %v4336, 0.0
        %v4340 = vld [vmem:[%s31] sm:$0xff]
        %v4341 = vld [vmem:[%s31 + $0x8] sm:$0xff]
        %v4342 = vld [vmem:[%s31 + $0x10] sm:$0xff]
        %v4343 = vld [vmem:[%s31 + $0x18] sm:$0xff]
        %v4344 = vld [vmem:[%s31 + $0x20] sm:$0xff]
        %v4345 = vld [vmem:[%s31 + $0x28] sm:$0xff]
        %v4346 = vld [vmem:[%s31 + $0x30] sm:$0xff]
        %v4347 = vld [vmem:[%s31 + $0x38] sm:$0xff]
        %v4348 = vld [vmem:[#allocation27] sm:$0x1]
        %v4350 = vlaneseq
        %v4351 = vshrl.u32 %v4350, 7
        %v4352 = vsub.s32 0, %v4351
        %v4353 = vrot.slane %v4348, %v4352
        %vm4355 = vcmask 523264
        %v4357 = vsel %vm4355, %v4339, 0
        %4359 = vmatprep.subr.mxu0 0.0
        %4360 = vmatpush1.msra.mxu0 %v4340
        %4361 = vmatprep.subr.mxu0 0.0
        %4362 = vmatpush1.msra.mxu0 %v4341
        %4363 = vmatprep.subr.mxu0 0.0
        %4364 = vmatpush1.msra.mxu0 %v4342
        %4365 = vmatprep.subr.mxu0 0.0
        %4366 = vmatpush1.msra.mxu0 %v4343
        %4367 = vmatprep.subr.mxu0 0.0
        %4368 = vmatpush1.msra.mxu0 %v4344
        %4369 = vmatprep.subr.mxu0 0.0
        %4370 = vmatpush1.msra.mxu0 %v4345
        %4371 = vmatprep.subr.mxu0 0.0
        %4372 = vmatpush1.msra.mxu0 %v4346
        %4373 = vmatprep.subr.mxu0 0.0
        %4374 = vmatpush1.msra.mxu0 %v4347
        %4375 = vmatprep.subr.mxu0 0.0
        %4376 = vmatpush1.msra.mxu0 0.0
        %4377 = vmatprep.subr.mxu0 0.0
        %4378 = vmatpush1.msra.mxu0 0.0
        %4379 = vmatprep.subr.mxu0 0.0
        %4380 = vmatpush1.msra.mxu0 0.0
        %4381 = vmatprep.subr.mxu0 0.0
        %4382 = vmatpush1.msra.mxu0 0.0
        %4383 = vmatprep.subr.mxu0 0.0
        %4384 = vmatpush1.msra.mxu0 0.0
        %4385 = vmatprep.subr.mxu0 0.0
        %4386 = vmatpush1.msra.mxu0 0.0
        %4387 = vmatprep.subr.mxu0 0.0
        %4388 = vmatpush1.msra.mxu0 0.0
        %4389 = vmatprep.subr.mxu0 0.0
        %4390 = vmatpush1.msra.mxu0 0.0
        %4391 = vmatprep.subr.mxu0 0.0
        %4392 = vmatpush1.msra.mxu0 0.0
        %4393 = vmatprep.subr.mxu0 0.0
        %4394 = vmatpush1.msra.mxu0 0.0
        %4395 = vmatprep.subr.mxu0 0.0
        %4396 = vmatpush1.msra.mxu0 0.0
        %4397 = vmatprep.subr.mxu0 0.0
        %4398 = vmatpush1.msra.mxu0 0.0
        %4399 = vmatprep.subr.mxu0 0.0
        %4400 = vmatpush1.msra.mxu0 0.0
        %4401 = vmatprep.subr.mxu0 0.0
        %4402 = vmatpush1.msra.mxu0 0.0
        %4403 = vmatprep.subr.mxu0 0.0
        %4404 = vmatpush1.msra.mxu0 0.0
        %4405 = vmatprep.subr.mxu0 0.0
        %4406 = vmatpush1.msra.mxu0 0.0
        %4407 = vmatprep.subr.mxu0 0.0
        %4408 = vmatpush1.msra.mxu0 0.0
        %4409 = vmatprep.subr.mxu0 0.0
        %4410 = vmatpush1.msra.mxu0 0.0
        %4411 = vmatprep.subr.mxu0 0.0
        %4412 = vmatpush1.msra.mxu0 0.0
        %4413 = vmatprep.subr.mxu0 0.0
        %4414 = vmatpush1.msra.mxu0 0.0
        %4415 = vmatprep.subr.mxu0 0.0
        %4416 = vmatpush1.msra.mxu0 0.0
        %4417 = vmatprep.subr.mxu0 0.0
        %4418 = vmatpush1.msra.mxu0 0.0
        %4419 = vmatprep.subr.mxu0 0.0
        %4420 = vmatpush1.msra.mxu0 0.0
        %4421 = vmatprep.subr.mxu0 0.0
        %4422 = vmatpush1.msra.mxu0 0.0
        %4423 = vmatprep.mubr.f32.mxu0 0.0
        %4424 = vmatmul.mubr.f32.gmra.mrb[0].mxu0 %v4357
        %v4425 = vpop.f32.mrb[0].mxu0
        %v4426 = vadd.f32 %v4353, %v4425
        %v4427 = vpop.f32.mrb[0].mxu0
        %4428 = vdwg.mxu0
        %v4429 = vadd.f32 %v4254, %v4426
        %v4430 = vld [vmem:[#allocation28] sm:$0x1]
        %v4431 = vld [vmem:[#allocation30] sm:$0x1]
        %v4432 = vsel %vm4226, %v4429, 0.0
        %4433 = vadd.xlane.f32.xlu0 %v4432
        %v4434 = vpop.xlane.xlu0 %4433
        %v4435 = vmul.f32 %v4434, %v4230
        %v4436 = vsub.f32 %v4429, %v4435
        %v4437 = vmul.f32 %v4436, %v4436
        %v4438 = vsel %vm4226, %v4437, 0.0
        %4439 = vadd.xlane.f32.xlu0 %v4438
        %v4440 = vpop.xlane.xlu0 %4439
        %v4441 = vmul.f32 %v4440, %v4230
        %v4442 = vadd.f32 %v4441, 1e-05
        %v4443 = vrsqrt.pop %v4442
        %v4444 = vmul.f32 %v4436, %v4443
        %v4446 = vlaneseq
        %v4447 = vshrl.u32 %v4446, 7
        %v4448 = vsub.s32 0, %v4447
        %v4449 = vrot.slane %v4430, %v4448
        %v4451 = vmul.f32 %v4444, %v4449
        %v4453 = vlaneseq
        %v4454 = vshrl.u32 %v4453, 7
        %v4455 = vsub.s32 0, %v4454
        %v4456 = vrot.slane %v4431, %v4455
        %v4458 = vadd.f32 %v4451, %v4456
        %v4459 = vld [vmem:[%s43] sm:$0xff]
        %v4460 = vld [vmem:[%s43 + $0x8] sm:$0xff]
        %v4461 = vld [vmem:[%s43 + $0x10] sm:$0xff]
        %v4462 = vld [vmem:[%s43 + $0x18] sm:$0xff]
        %v4463 = vld [vmem:[#allocation33] sm:$0x1]
        %v4465 = vlaneseq
        %v4466 = vshrl.u32 %v4465, 7
        %v4467 = vsub.s32 0, %v4466
        %v4468 = vrot.slane %v4463, %v4467
        %v4471 = vsel %vm2037, %v4458, 0
        %4473 = vmatprep.subr.mxu0 0.0
        %4474 = vmatpush1.msra.mxu0 %v4459
        %4475 = vmatprep.subr.mxu0 0.0
        %4476 = vmatpush1.msra.mxu0 %v4460
        %4477 = vmatprep.subr.mxu0 0.0
        %4478 = vmatpush1.msra.mxu0 %v4461
        %4479 = vmatprep.subr.mxu0 0.0
        %4480 = vmatpush1.msra.mxu0 %v4462
        %4481 = vmatprep.subr.mxu0 0.0
        %4482 = vmatpush1.msra.mxu0 0.0
        %4483 = vmatprep.subr.mxu0 0.0
        %4484 = vmatpush1.msra.mxu0 0.0
        %4485 = vmatprep.subr.mxu0 0.0
        %4486 = vmatpush1.msra.mxu0 0.0
        %4487 = vmatprep.subr.mxu0 0.0
        %4488 = vmatpush1.msra.mxu0 0.0
        %4489 = vmatprep.subr.mxu0 0.0
        %4490 = vmatpush1.msra.mxu0 0.0
        %4491 = vmatprep.subr.mxu0 0.0
        %4492 = vmatpush1.msra.mxu0 0.0
        %4493 = vmatprep.subr.mxu0 0.0
        %4494 = vmatpush1.msra.mxu0 0.0
        %4495 = vmatprep.subr.mxu0 0.0
        %4496 = vmatpush1.msra.mxu0 0.0
        %4497 = vmatprep.subr.mxu0 0.0
        %4498 = vmatpush1.msra.mxu0 0.0
        %4499 = vmatprep.subr.mxu0 0.0
        %4500 = vmatpush1.msra.mxu0 0.0
        %4501 = vmatprep.subr.mxu0 0.0
        %4502 = vmatpush1.msra.mxu0 0.0
        %4503 = vmatprep.subr.mxu0 0.0
        %4504 = vmatpush1.msra.mxu0 0.0
        %4505 = vmatprep.subr.mxu0 0.0
        %4506 = vmatpush1.msra.mxu0 0.0
        %4507 = vmatprep.subr.mxu0 0.0
        %4508 = vmatpush1.msra.mxu0 0.0
        %4509 = vmatprep.subr.mxu0 0.0
        %4510 = vmatpush1.msra.mxu0 0.0
        %4511 = vmatprep.subr.mxu0 0.0
        %4512 = vmatpush1.msra.mxu0 0.0
        %4513 = vmatprep.subr.mxu0 0.0
        %4514 = vmatpush1.msra.mxu0 0.0
        %4515 = vmatprep.subr.mxu0 0.0
        %4516 = vmatpush1.msra.mxu0 0.0
        %4517 = vmatprep.subr.mxu0 0.0
        %4518 = vmatpush1.msra.mxu0 0.0
        %4519 = vmatprep.subr.mxu0 0.0
        %4520 = vmatpush1.msra.mxu0 0.0
        %4521 = vmatprep.subr.mxu0 0.0
        %4522 = vmatpush1.msra.mxu0 0.0
        %4523 = vmatprep.subr.mxu0 0.0
        %4524 = vmatpush1.msra.mxu0 0.0
        %4525 = vmatprep.subr.mxu0 0.0
        %4526 = vmatpush1.msra.mxu0 0.0
        %4527 = vmatprep.subr.mxu0 0.0
        %4528 = vmatpush1.msra.mxu0 0.0
        %4529 = vmatprep.subr.mxu0 0.0
        %4530 = vmatpush1.msra.mxu0 0.0
        %4531 = vmatprep.subr.mxu0 0.0
        %4532 = vmatpush1.msra.mxu0 0.0
        %4533 = vmatprep.subr.mxu0 0.0
        %4534 = vmatpush1.msra.mxu0 0.0
        %4535 = vmatprep.subr.mxu0 0.0
        %4536 = vmatpush1.msra.mxu0 0.0
        %4537 = vmatprep.mubr.f32.mxu0 0.0
        %4538 = vmatmul.mubr.f32.gmra.mrb[0].mxu0 %v4471
        %v4539 = vpop.f32.mrb[0].mxu0
        %v4540 = vadd.f32 %v4468, %v4539
        %v4541 = vpop.f32.mrb[0].mxu0
        %4542 = vdwg.mxu0
        %v4543 = vld [vmem:[#allocation34] sm:$0xf]
        %v4544 = vld [vmem:[#allocation36] sm:$0x1]
        %v4546 = vlaneseq
        %v4547 = vshrl.u32 %v4546, 7
        %v4548 = vsub.s32 0, %v4547
        %v4549 = vrot.slane %v4544, %v4548
        %v4552 = vsel %vm1952, %v4543, 0
        %4554 = vmatprep.subr.mxu0 0.0
        %4555 = vmatpush1.msra.mxu0 %v4552
        %4556 = vmatprep.subr.mxu0 0.0
        %4557 = vmatpush1.msra.mxu0 0.0
        %4558 = vmatprep.subr.mxu0 0.0
        %4559 = vmatpush1.msra.mxu0 0.0
        %4560 = vmatprep.subr.mxu0 0.0
        %4561 = vmatpush1.msra.mxu0 0.0
        %4562 = vmatprep.subr.mxu0 0.0
        %4563 = vmatpush1.msra.mxu0 0.0
        %4564 = vmatprep.subr.mxu0 0.0
        %4565 = vmatpush1.msra.mxu0 0.0
        %4566 = vmatprep.subr.mxu0 0.0
        %4567 = vmatpush1.msra.mxu0 0.0
        %4568 = vmatprep.subr.mxu0 0.0
        %4569 = vmatpush1.msra.mxu0 0.0
        %4570 = vmatprep.subr.mxu0 0.0
        %4571 = vmatpush1.msra.mxu0 0.0
        %4572 = vmatprep.subr.mxu0 0.0
        %4573 = vmatpush1.msra.mxu0 0.0
        %4574 = vmatprep.subr.mxu0 0.0
        %4575 = vmatpush1.msra.mxu0 0.0
        %4576 = vmatprep.subr.mxu0 0.0
        %4577 = vmatpush1.msra.mxu0 0.0
        %4578 = vmatprep.subr.mxu0 0.0
        %4579 = vmatpush1.msra.mxu0 0.0
        %4580 = vmatprep.subr.mxu0 0.0
        %4581 = vmatpush1.msra.mxu0 0.0
        %4582 = vmatprep.subr.mxu0 0.0
        %4583 = vmatpush1.msra.mxu0 0.0
        %4584 = vmatprep.subr.mxu0 0.0
        %4585 = vmatpush1.msra.mxu0 0.0
        %4586 = vmatprep.subr.mxu0 0.0
        %4587 = vmatpush1.msra.mxu0 0.0
        %4588 = vmatprep.subr.mxu0 0.0
        %4589 = vmatpush1.msra.mxu0 0.0
        %4590 = vmatprep.subr.mxu0 0.0
        %4591 = vmatpush1.msra.mxu0 0.0
        %4592 = vmatprep.subr.mxu0 0.0
        %4593 = vmatpush1.msra.mxu0 0.0
        %4594 = vmatprep.subr.mxu0 0.0
        %4595 = vmatpush1.msra.mxu0 0.0
        %4596 = vmatprep.subr.mxu0 0.0
        %4597 = vmatpush1.msra.mxu0 0.0
        %4598 = vmatprep.subr.mxu0 0.0
        %4599 = vmatpush1.msra.mxu0 0.0
        %4600 = vmatprep.subr.mxu0 0.0
        %4601 = vmatpush1.msra.mxu0 0.0
        %4602 = vmatprep.subr.mxu0 0.0
        %4603 = vmatpush1.msra.mxu0 0.0
        %4604 = vmatprep.subr.mxu0 0.0
        %4605 = vmatpush1.msra.mxu0 0.0
        %4606 = vmatprep.subr.mxu0 0.0
        %4607 = vmatpush1.msra.mxu0 0.0
        %4608 = vmatprep.subr.mxu0 0.0
        %4609 = vmatpush1.msra.mxu0 0.0
        %4610 = vmatprep.subr.mxu0 0.0
        %4611 = vmatpush1.msra.mxu0 0.0
        %4612 = vmatprep.subr.mxu0 0.0
        %4613 = vmatpush1.msra.mxu0 0.0
        %4614 = vmatprep.subr.mxu0 0.0
        %4615 = vmatpush1.msra.mxu0 0.0
        %4616 = vmatprep.subr.mxu0 0.0
        %4617 = vmatpush1.msra.mxu0 0.0
        %4618 = vmatprep.mubr.f32.mxu0 0.0
        %4619 = vmatmul.mubr.f32.gmra.mrb[0].mxu0 %v1950
        %v4620 = vpop.f32.mrb[0].mxu0
        %v4621 = vadd.f32 %v4549, %v4620
        %v4622 = vpop.f32.mrb[0].mxu0
        %4623 = vdwg.mxu0
        %v4624 = vadd.f32 %v4621, %v4540
        %v4625 = vld [vmem:[#allocation3] sm:$0x3]
        %v4626 = vld [vmem:[#allocation4] sm:$0x3]
        %v4627 = vld [vmem:[%s51] sm:$0xff]
        %v4628 = vld [vmem:[%s55] sm:$0x1]
        %v4630 = vlaneseq
        %v4631 = vshrl.u32 %v4630, 7
        %v4632 = vsub.s32 0, %v4631
        %v4633 = vrot.slane %v4628, %v4632
        %vm4635 = vcmask 64512
        %v4637 = vsel %vm4635, %v4624, 0
        %4639 = vmatprep.subr.mxu0 0.0
        %4640 = vmatpush1.msra.mxu0 %v4627
        %4641 = vmatprep.subr.mxu0 0.0
        %4642 = vmatpush1.msra.mxu0 0.0
        %4643 = vmatprep.subr.mxu0 0.0
        %4644 = vmatpush1.msra.mxu0 0.0
        %4645 = vmatprep.subr.mxu0 0.0
        %4646 = vmatpush1.msra.mxu0 0.0
        %4647 = vmatprep.subr.mxu0 0.0
        %4648 = vmatpush1.msra.mxu0 0.0
        %4649 = vmatprep.subr.mxu0 0.0
        %4650 = vmatpush1.msra.mxu0 0.0
        %4651 = vmatprep.subr.mxu0 0.0
        %4652 = vmatpush1.msra.mxu0 0.0
        %4653 = vmatprep.subr.mxu0 0.0
        %4654 = vmatpush1.msra.mxu0 0.0
        %4655 = vmatprep.subr.mxu0 0.0
        %4656 = vmatpush1.msra.mxu0 0.0
        %4657 = vmatprep.subr.mxu0 0.0
        %4658 = vmatpush1.msra.mxu0 0.0
        %4659 = vmatprep.subr.mxu0 0.0
        %4660 = vmatpush1.msra.mxu0 0.0
        %4661 = vmatprep.subr.mxu0 0.0
        %4662 = vmatpush1.msra.mxu0 0.0
        %4663 = vmatprep.subr.mxu0 0.0
        %4664 = vmatpush1.msra.mxu0 0.0
        %4665 = vmatprep.subr.mxu0 0.0
        %4666 = vmatpush1.msra.mxu0 0.0
        %4667 = vmatprep.subr.mxu0 0.0
        %4668 = vmatpush1.msra.mxu0 0.0
        %4669 = vmatprep.subr.mxu0 0.0
        %4670 = vmatpush1.msra.mxu0 0.0
        %4671 = vmatprep.subr.mxu0 0.0
        %4672 = vmatpush1.msra.mxu0 0.0
        %4673 = vmatprep.subr.mxu0 0.0
        %4674 = vmatpush1.msra.mxu0 0.0
        %4675 = vmatprep.subr.mxu0 0.0
        %4676 = vmatpush1.msra.mxu0 0.0
        %4677 = vmatprep.subr.mxu0 0.0
        %4678 = vmatpush1.msra.mxu0 0.0
        %4679 = vmatprep.subr.mxu0 0.0
        %4680 = vmatpush1.msra.mxu0 0.0
        %4681 = vmatprep.subr.mxu0 0.0
        %4682 = vmatpush1.msra.mxu0 0.0
        %4683 = vmatprep.subr.mxu0 0.0
        %4684 = vmatpush1.msra.mxu0 0.0
        %4685 = vmatprep.subr.mxu0 0.0
        %4686 = vmatpush1.msra.mxu0 0.0
        %4687 = vmatprep.subr.mxu0 0.0
        %4688 = vmatpush1.msra.mxu0 0.0
        %4689 = vmatprep.subr.mxu0 0.0
        %4690 = vmatpush1.msra.mxu0 0.0
        %4691 = vmatprep.subr.mxu0 0.0
        %4692 = vmatpush1.msra.mxu0 0.0
        %4693 = vmatprep.subr.mxu0 0.0
        %4694 = vmatpush1.msra.mxu0 0.0
        %4695 = vmatprep.subr.mxu0 0.0
        %4696 = vmatpush1.msra.mxu0 0.0
        %4697 = vmatprep.subr.mxu0 0.0
        %4698 = vmatpush1.msra.mxu0 0.0
        %4699 = vmatprep.subr.mxu0 0.0
        %4700 = vmatpush1.msra.mxu0 0.0
        %4701 = vmatprep.subr.mxu0 0.0
        %4702 = vmatpush1.msra.mxu0 0.0
        %4703 = vmatprep.mubr.f32.mxu0 0.0
        %4704 = vmatmul.mubr.f32.gmra.mrb[0].mxu0 %v4637
        %v4705 = vpop.f32.mrb[0].mxu0
        %v4706 = vadd.f32 %v4633, %v4705
        %v4707 = vpop.f32.mrb[0].mxu0
        %4708 = vdwg.mxu0
        %v4709 = vld [vmem:[%s53] sm:$0xff]
        %v4710 = vld [vmem:[%s53 + $0x8] sm:$0xff]
        %v4711 = vld [vmem:[%s53 + $0x10] sm:$0xff]
        %v4712 = vld [vmem:[%s53 + $0x18] sm:$0xff]
        %v4714 = vsel %vm2037, %v4625, 0
        %4716 = vmatprep.subr.mxu0 0.0
        %4717 = vmatpush1.msra.mxu0 %v4709
        %4718 = vmatprep.subr.mxu0 0.0
        %4719 = vmatpush1.msra.mxu0 %v4710
        %4720 = vmatprep.subr.mxu0 0.0
        %4721 = vmatpush1.msra.mxu0 %v4711
        %4722 = vmatprep.subr.mxu0 0.0
        %4723 = vmatpush1.msra.mxu0 %v4712
        %4724 = vmatprep.subr.mxu0 0.0
        %4725 = vmatpush1.msra.mxu0 0.0
        %4726 = vmatprep.subr.mxu0 0.0
        %4727 = vmatpush1.msra.mxu0 0.0
        %4728 = vmatprep.subr.mxu0 0.0
        %4729 = vmatpush1.msra.mxu0 0.0
        %4730 = vmatprep.subr.mxu0 0.0
        %4731 = vmatpush1.msra.mxu0 0.0
        %4732 = vmatprep.subr.mxu0 0.0
        %4733 = vmatpush1.msra.mxu0 0.0
        %4734 = vmatprep.subr.mxu0 0.0
        %4735 = vmatpush1.msra.mxu0 0.0
        %4736 = vmatprep.subr.mxu0 0.0
        %4737 = vmatpush1.msra.mxu0 0.0
        %4738 = vmatprep.subr.mxu0 0.0
        %4739 = vmatpush1.msra.mxu0 0.0
        %4740 = vmatprep.subr.mxu0 0.0
        %4741 = vmatpush1.msra.mxu0 0.0
        %4742 = vmatprep.subr.mxu0 0.0
        %4743 = vmatpush1.msra.mxu0 0.0
        %4744 = vmatprep.subr.mxu0 0.0
        %4745 = vmatpush1.msra.mxu0 0.0
        %4746 = vmatprep.subr.mxu0 0.0
        %4747 = vmatpush1.msra.mxu0 0.0
        %4748 = vmatprep.subr.mxu0 0.0
        %4749 = vmatpush1.msra.mxu0 0.0
        %4750 = vmatprep.subr.mxu0 0.0
        %4751 = vmatpush1.msra.mxu0 0.0
        %4752 = vmatprep.subr.mxu0 0.0
        %4753 = vmatpush1.msra.mxu0 0.0
        %4754 = vmatprep.subr.mxu0 0.0
        %4755 = vmatpush1.msra.mxu0 0.0
        %4756 = vmatprep.subr.mxu0 0.0
        %4757 = vmatpush1.msra.mxu0 0.0
        %4758 = vmatprep.subr.mxu0 0.0
        %4759 = vmatpush1.msra.mxu0 0.0
        %4760 = vmatprep.subr.mxu0 0.0
        %4761 = vmatpush1.msra.mxu0 0.0
        %4762 = vmatprep.subr.mxu0 0.0
        %4763 = vmatpush1.msra.mxu0 0.0
        %4764 = vmatprep.subr.mxu0 0.0
        %4765 = vmatpush1.msra.mxu0 0.0
        %4766 = vmatprep.subr.mxu0 0.0
        %4767 = vmatpush1.msra.mxu0 0.0
        %4768 = vmatprep.subr.mxu0 0.0
        %4769 = vmatpush1.msra.mxu0 0.0
        %4770 = vmatprep.subr.mxu0 0.0
        %4771 = vmatpush1.msra.mxu0 0.0
        %4772 = vmatprep.subr.mxu0 0.0
        %4773 = vmatpush1.msra.mxu0 0.0
        %4774 = vmatprep.subr.mxu0 0.0
        %4775 = vmatpush1.msra.mxu0 0.0
        %4776 = vmatprep.subr.mxu0 0.0
        %4777 = vmatpush1.msra.mxu0 0.0
        %4778 = vmatprep.subr.mxu0 0.0
        %4779 = vmatpush1.msra.mxu0 0.0
        %4780 = vmatprep.mubr.f32.mxu0 0.0
        %4781 = vmatmul.mubr.f32.gmra.mrb[0].mxu0 %v4714
        %v4782 = vpop.f32.mrb[0].mxu0
        %v4783 = vadd.f32 0.0, %v4782
        %v4784 = vpop.f32.mrb[0].mxu0
        %4785 = vdwg.mxu0
        %v4786 = vadd.f32 %v4706, %v4783
        %v4787 = vld [vmem:[%s57] sm:$0x1]
        %v4789 = vlaneseq
        %v4790 = vshrl.u32 %v4789, 7
        %v4791 = vsub.s32 0, %v4790
        %v4792 = vrot.slane %v4787, %v4791
        %v4794 = vadd.f32 %v4786, %v4792
        %v4795 = vxor.u32 %v4794, 2147483648
        %v4796 = vmul.f32 %v4795, 1.442695
        %v4797 = vpow.pop %v4796
        %v4798 = vadd.f32 %v4797, 1.0
        %v4799 = vrcp.pop %v4798
        %v4800 = vmul.f32 1.0, %v4799
        %s4801 = scalar_lea.vmem %s51, 8
        %v4802 = vld [vmem:[%s4801] sm:$0xff]
        %s4803 = scalar_lea.vmem %s55, 1
        %v4804 = vld [vmem:[%s4803] sm:$0x1]
        %v4806 = vlaneseq
        %v4807 = vshrl.u32 %v4806, 7
        %v4808 = vsub.s32 0, %v4807
        %v4809 = vrot.slane %v4804, %v4808
        %4811 = vmatprep.subr.mxu0 0.0
        %4812 = vmatpush1.msra.mxu0 %v4802
        %4813 = vmatprep.subr.mxu0 0.0
        %4814 = vmatpush1.msra.mxu0 0.0
        %4815 = vmatprep.subr.mxu0 0.0
        %4816 = vmatpush1.msra.mxu0 0.0
        %4817 = vmatprep.subr.mxu0 0.0
        %4818 = vmatpush1.msra.mxu0 0.0
        %4819 = vmatprep.subr.mxu0 0.0
        %4820 = vmatpush1.msra.mxu0 0.0
        %4821 = vmatprep.subr.mxu0 0.0
        %4822 = vmatpush1.msra.mxu0 0.0
        %4823 = vmatprep.subr.mxu0 0.0
        %4824 = vmatpush1.msra.mxu0 0.0
        %4825 = vmatprep.subr.mxu0 0.0
        %4826 = vmatpush1.msra.mxu0 0.0
        %4827 = vmatprep.subr.mxu0 0.0
        %4828 = vmatpush1.msra.mxu0 0.0
        %4829 = vmatprep.subr.mxu0 0.0
        %4830 = vmatpush1.msra.mxu0 0.0
        %4831 = vmatprep.subr.mxu0 0.0
        %4832 = vmatpush1.msra.mxu0 0.0
        %4833 = vmatprep.subr.mxu0 0.0
        %4834 = vmatpush1.msra.mxu0 0.0
        %4835 = vmatprep.subr.mxu0 0.0
        %4836 = vmatpush1.msra.mxu0 0.0
        %4837 = vmatprep.subr.mxu0 0.0
        %4838 = vmatpush1.msra.mxu0 0.0
        %4839 = vmatprep.subr.mxu0 0.0
        %4840 = vmatpush1.msra.mxu0 0.0
        %4841 = vmatprep.subr.mxu0 0.0
        %4842 = vmatpush1.msra.mxu0 0.0
        %4843 = vmatprep.subr.mxu0 0.0
        %4844 = vmatpush1.msra.mxu0 0.0
        %4845 = vmatprep.subr.mxu0 0.0
        %4846 = vmatpush1.msra.mxu0 0.0
        %4847 = vmatprep.subr.mxu0 0.0
        %4848 = vmatpush1.msra.mxu0 0.0
        %4849 = vmatprep.subr.mxu0 0.0
        %4850 = vmatpush1.msra.mxu0 0.0
        %4851 = vmatprep.subr.mxu0 0.0
        %4852 = vmatpush1.msra.mxu0 0.0
        %4853 = vmatprep.subr.mxu0 0.0
        %4854 = vmatpush1.msra.mxu0 0.0
        %4855 = vmatprep.subr.mxu0 0.0
        %4856 = vmatpush1.msra.mxu0 0.0
        %4857 = vmatprep.subr.mxu0 0.0
        %4858 = vmatpush1.msra.mxu0 0.0
        %4859 = vmatprep.subr.mxu0 0.0
        %4860 = vmatpush1.msra.mxu0 0.0
        %4861 = vmatprep.subr.mxu0 0.0
        %4862 = vmatpush1.msra.mxu0 0.0
        %4863 = vmatprep.subr.mxu0 0.0
        %4864 = vmatpush1.msra.mxu0 0.0
        %4865 = vmatprep.subr.mxu0 0.0
        %4866 = vmatpush1.msra.mxu0 0.0
        %4867 = vmatprep.subr.mxu0 0.0
        %4868 = vmatpush1.msra.mxu0 0.0
        %4869 = vmatprep.subr.mxu0 0.0
        %4870 = vmatpush1.msra.mxu0 0.0
        %4871 = vmatprep.subr.mxu0 0.0
        %4872 = vmatpush1.msra.mxu0 0.0
        %4873 = vmatprep.subr.mxu0 0.0
        %4874 = vmatpush1.msra.mxu0 0.0
        %4875 = vmatprep.mubr.f32.mxu0 0.0
        %4876 = vmatmul.mubr.f32.gmra.mrb[0].mxu0 %v4637
        %v4877 = vpop.f32.mrb[0].mxu0
        %v4878 = vadd.f32 %v4809, %v4877
        %v4879 = vpop.f32.mrb[0].mxu0
        %4880 = vdwg.mxu0
        %s4881 = scalar_lea.vmem %s53, 32
        %v4882 = vld [vmem:[%s4881] sm:$0xff]
        %v4883 = vld [vmem:[%s4881 + $0x8] sm:$0xff]
        %v4884 = vld [vmem:[%s4881 + $0x10] sm:$0xff]
        %v4885 = vld [vmem:[%s4881 + $0x18] sm:$0xff]
        %4886 = vmatprep.subr.mxu0 0.0
        %4887 = vmatpush1.msra.mxu0 %v4882
        %4888 = vmatprep.subr.mxu0 0.0
        %4889 = vmatpush1.msra.mxu0 %v4883
        %4890 = vmatprep.subr.mxu0 0.0
        %4891 = vmatpush1.msra.mxu0 %v4884
        %4892 = vmatprep.subr.mxu0 0.0
        %4893 = vmatpush1.msra.mxu0 %v4885
        %4894 = vmatprep.subr.mxu0 0.0
        %4895 = vmatpush1.msra.mxu0 0.0
        %4896 = vmatprep.subr.mxu0 0.0
        %4897 = vmatpush1.msra.mxu0 0.0
        %4898 = vmatprep.subr.mxu0 0.0
        %4899 = vmatpush1.msra.mxu0 0.0
        %4900 = vmatprep.subr.mxu0 0.0
        %4901 = vmatpush1.msra.mxu0 0.0
        %4902 = vmatprep.subr.mxu0 0.0
        %4903 = vmatpush1.msra.mxu0 0.0
        %4904 = vmatprep.subr.mxu0 0.0
        %4905 = vmatpush1.msra.mxu0 0.0
        %4906 = vmatprep.subr.mxu0 0.0
        %4907 = vmatpush1.msra.mxu0 0.0
        %4908 = vmatprep.subr.mxu0 0.0
        %4909 = vmatpush1.msra.mxu0 0.0
        %4910 = vmatprep.subr.mxu0 0.0
        %4911 = vmatpush1.msra.mxu0 0.0
        %4912 = vmatprep.subr.mxu0 0.0
        %4913 = vmatpush1.msra.mxu0 0.0
        %4914 = vmatprep.subr.mxu0 0.0
        %4915 = vmatpush1.msra.mxu0 0.0
        %4916 = vmatprep.subr.mxu0 0.0
        %4917 = vmatpush1.msra.mxu0 0.0
        %4918 = vmatprep.subr.mxu0 0.0
        %4919 = vmatpush1.msra.mxu0 0.0
        %4920 = vmatprep.subr.mxu0 0.0
        %4921 = vmatpush1.msra.mxu0 0.0
        %4922 = vmatprep.subr.mxu0 0.0
        %4923 = vmatpush1.msra.mxu0 0.0
        %4924 = vmatprep.subr.mxu0 0.0
        %4925 = vmatpush1.msra.mxu0 0.0
        %4926 = vmatprep.subr.mxu0 0.0
        %4927 = vmatpush1.msra.mxu0 0.0
        %4928 = vmatprep.subr.mxu0 0.0
        %4929 = vmatpush1.msra.mxu0 0.0
        %4930 = vmatprep.subr.mxu0 0.0
        %4931 = vmatpush1.msra.mxu0 0.0
        %4932 = vmatprep.subr.mxu0 0.0
        %4933 = vmatpush1.msra.mxu0 0.0
        %4934 = vmatprep.subr.mxu0 0.0
        %4935 = vmatpush1.msra.mxu0 0.0
        %4936 = vmatprep.subr.mxu0 0.0
        %4937 = vmatpush1.msra.mxu0 0.0
        %4938 = vmatprep.subr.mxu0 0.0
        %4939 = vmatpush1.msra.mxu0 0.0
        %4940 = vmatprep.subr.mxu0 0.0
        %4941 = vmatpush1.msra.mxu0 0.0
        %4942 = vmatprep.subr.mxu0 0.0
        %4943 = vmatpush1.msra.mxu0 0.0
        %4944 = vmatprep.subr.mxu0 0.0
        %4945 = vmatpush1.msra.mxu0 0.0
        %4946 = vmatprep.subr.mxu0 0.0
        %4947 = vmatpush1.msra.mxu0 0.0
        %4948 = vmatprep.subr.mxu0 0.0
        %4949 = vmatpush1.msra.mxu0 0.0
        %4950 = vmatprep.mubr.f32.mxu0 0.0
        %4951 = vmatmul.mubr.f32.gmra.mrb[0].mxu0 %v4714
        %v4952 = vpop.f32.mrb[0].mxu0
        %v4953 = vadd.f32 0.0, %v4952
        %v4954 = vpop.f32.mrb[0].mxu0
        %4955 = vdwg.mxu0
        %v4956 = vadd.f32 %v4878, %v4953
        %s4957 = scalar_lea.vmem %s57, 1
        %v4958 = vld [vmem:[%s4957] sm:$0x1]
        %v4960 = vlaneseq
        %v4961 = vshrl.u32 %v4960, 7
        %v4962 = vsub.s32 0, %v4961
        %v4963 = vrot.slane %v4958, %v4962
        %v4965 = vadd.f32 %v4956, %v4963
        %v4966 = vxor.u32 %v4965, 2147483648
        %v4967 = vmul.f32 %v4966, 1.442695
        %v4968 = vpow.pop %v4967
        %v4969 = vadd.f32 %v4968, 1.0
        %v4970 = vrcp.pop %v4969
        %v4971 = vmul.f32 1.0, %v4970
        %s4972 = scalar_lea.vmem %s51, 16
        %v4973 = vld [vmem:[%s4972] sm:$0xff]
        %s4974 = scalar_lea.vmem %s55, 2
        %v4975 = vld [vmem:[%s4974] sm:$0x1]
        %v4977 = vlaneseq
        %v4978 = vshrl.u32 %v4977, 7
        %v4979 = vsub.s32 0, %v4978
        %v4980 = vrot.slane %v4975, %v4979
        %4982 = vmatprep.subr.mxu0 0.0
        %4983 = vmatpush1.msra.mxu0 %v4973
        %4984 = vmatprep.subr.mxu0 0.0
        %4985 = vmatpush1.msra.mxu0 0.0
        %4986 = vmatprep.subr.mxu0 0.0
        %4987 = vmatpush1.msra.mxu0 0.0
        %4988 = vmatprep.subr.mxu0 0.0
        %4989 = vmatpush1.msra.mxu0 0.0
        %4990 = vmatprep.subr.mxu0 0.0
        %4991 = vmatpush1.msra.mxu0 0.0
        %4992 = vmatprep.subr.mxu0 0.0
        %4993 = vmatpush1.msra.mxu0 0.0
        %4994 = vmatprep.subr.mxu0 0.0
        %4995 = vmatpush1.msra.mxu0 0.0
        %4996 = vmatprep.subr.mxu0 0.0
        %4997 = vmatpush1.msra.mxu0 0.0
        %4998 = vmatprep.subr.mxu0 0.0
        %4999 = vmatpush1.msra.mxu0 0.0
        %5000 = vmatprep.subr.mxu0 0.0
        %5001 = vmatpush1.msra.mxu0 0.0
        %5002 = vmatprep.subr.mxu0 0.0
        %5003 = vmatpush1.msra.mxu0 0.0
        %5004 = vmatprep.subr.mxu0 0.0
        %5005 = vmatpush1.msra.mxu0 0.0
        %5006 = vmatprep.subr.mxu0 0.0
        %5007 = vmatpush1.msra.mxu0 0.0
        %5008 = vmatprep.subr.mxu0 0.0
        %5009 = vmatpush1.msra.mxu0 0.0
        %5010 = vmatprep.subr.mxu0 0.0
        %5011 = vmatpush1.msra.mxu0 0.0
        %5012 = vmatprep.subr.mxu0 0.0
        %5013 = vmatpush1.msra.mxu0 0.0
        %5014 = vmatprep.subr.mxu0 0.0
        %5015 = vmatpush1.msra.mxu0 0.0
        %5016 = vmatprep.subr.mxu0 0.0
        %5017 = vmatpush1.msra.mxu0 0.0
        %5018 = vmatprep.subr.mxu0 0.0
        %5019 = vmatpush1.msra.mxu0 0.0
        %5020 = vmatprep.subr.mxu0 0.0
        %5021 = vmatpush1.msra.mxu0 0.0
        %5022 = vmatprep.subr.mxu0 0.0
        %5023 = vmatpush1.msra.mxu0 0.0
        %5024 = vmatprep.subr.mxu0 0.0
        %5025 = vmatpush1.msra.mxu0 0.0
        %5026 = vmatprep.subr.mxu0 0.0
        %5027 = vmatpush1.msra.mxu0 0.0
        %5028 = vmatprep.subr.mxu0 0.0
        %5029 = vmatpush1.msra.mxu0 0.0
        %5030 = vmatprep.subr.mxu0 0.0
        %5031 = vmatpush1.msra.mxu0 0.0
        %5032 = vmatprep.subr.mxu0 0.0
        %5033 = vmatpush1.msra.mxu0 0.0
        %5034 = vmatprep.subr.mxu0 0.0
        %5035 = vmatpush1.msra.mxu0 0.0
        %5036 = vmatprep.subr.mxu0 0.0
        %5037 = vmatpush1.msra.mxu0 0.0
        %5038 = vmatprep.subr.mxu0 0.0
        %5039 = vmatpush1.msra.mxu0 0.0
        %5040 = vmatprep.subr.mxu0 0.0
        %5041 = vmatpush1.msra.mxu0 0.0
        %5042 = vmatprep.subr.mxu0 0.0
        %5043 = vmatpush1.msra.mxu0 0.0
        %5044 = vmatprep.subr.mxu0 0.0
        %5045 = vmatpush1.msra.mxu0 0.0
        %5046 = vmatprep.mubr.f32.mxu0 0.0
        %5047 = vmatmul.mubr.f32.gmra.mrb[0].mxu0 %v4637
        %v5048 = vpop.f32.mrb[0].mxu0
        %v5049 = vadd.f32 %v4980, %v5048
        %v5050 = vpop.f32.mrb[0].mxu0
        %5051 = vdwg.mxu0
        %s5052 = scalar_lea.vmem %s53, 64
        %v5053 = vld [vmem:[%s5052] sm:$0xff]
        %v5054 = vld [vmem:[%s5052 + $0x8] sm:$0xff]
        %v5055 = vld [vmem:[%s5052 + $0x10] sm:$0xff]
        %v5056 = vld [vmem:[%s5052 + $0x18] sm:$0xff]
        %s5057 = scalar_lea.vmem %s57, 2
        %v5058 = vld [vmem:[%s5057] sm:$0x1]
        %v5060 = vlaneseq
        %v5061 = vshrl.u32 %v5060, 7
        %v5062 = vsub.s32 0, %v5061
        %v5063 = vrot.slane %v5058, %v5062
        %5065 = vmatprep.subr.mxu0 0.0
        %5066 = vmatpush1.msra.mxu0 %v5053
        %5067 = vmatprep.subr.mxu0 0.0
        %5068 = vmatpush1.msra.mxu0 %v5054
        %5069 = vmatprep.subr.mxu0 0.0
        %5070 = vmatpush1.msra.mxu0 %v5055
        %5071 = vmatprep.subr.mxu0 0.0
        %5072 = vmatpush1.msra.mxu0 %v5056
        %5073 = vmatprep.subr.mxu0 0.0
        %5074 = vmatpush1.msra.mxu0 0.0
        %5075 = vmatprep.subr.mxu0 0.0
        %5076 = vmatpush1.msra.mxu0 0.0
        %5077 = vmatprep.subr.mxu0 0.0
        %5078 = vmatpush1.msra.mxu0 0.0
        %5079 = vmatprep.subr.mxu0 0.0
        %5080 = vmatpush1.msra.mxu0 0.0
        %5081 = vmatprep.subr.mxu0 0.0
        %5082 = vmatpush1.msra.mxu0 0.0
        %5083 = vmatprep.subr.mxu0 0.0
        %5084 = vmatpush1.msra.mxu0 0.0
        %5085 = vmatprep.subr.mxu0 0.0
        %5086 = vmatpush1.msra.mxu0 0.0
        %5087 = vmatprep.subr.mxu0 0.0
        %5088 = vmatpush1.msra.mxu0 0.0
        %5089 = vmatprep.subr.mxu0 0.0
        %5090 = vmatpush1.msra.mxu0 0.0
        %5091 = vmatprep.subr.mxu0 0.0
        %5092 = vmatpush1.msra.mxu0 0.0
        %5093 = vmatprep.subr.mxu0 0.0
        %5094 = vmatpush1.msra.mxu0 0.0
        %5095 = vmatprep.subr.mxu0 0.0
        %5096 = vmatpush1.msra.mxu0 0.0
        %5097 = vmatprep.subr.mxu0 0.0
        %5098 = vmatpush1.msra.mxu0 0.0
        %5099 = vmatprep.subr.mxu0 0.0
        %5100 = vmatpush1.msra.mxu0 0.0
        %5101 = vmatprep.subr.mxu0 0.0
        %5102 = vmatpush1.msra.mxu0 0.0
        %5103 = vmatprep.subr.mxu0 0.0
        %5104 = vmatpush1.msra.mxu0 0.0
        %5105 = vmatprep.subr.mxu0 0.0
        %5106 = vmatpush1.msra.mxu0 0.0
        %5107 = vmatprep.subr.mxu0 0.0
        %5108 = vmatpush1.msra.mxu0 0.0
        %5109 = vmatprep.subr.mxu0 0.0
        %5110 = vmatpush1.msra.mxu0 0.0
        %5111 = vmatprep.subr.mxu0 0.0
        %5112 = vmatpush1.msra.mxu0 0.0
        %5113 = vmatprep.subr.mxu0 0.0
        %5114 = vmatpush1.msra.mxu0 0.0
        %5115 = vmatprep.subr.mxu0 0.0
        %5116 = vmatpush1.msra.mxu0 0.0
        %5117 = vmatprep.subr.mxu0 0.0
        %5118 = vmatpush1.msra.mxu0 0.0
        %5119 = vmatprep.subr.mxu0 0.0
        %5120 = vmatpush1.msra.mxu0 0.0
        %5121 = vmatprep.subr.mxu0 0.0
        %5122 = vmatpush1.msra.mxu0 0.0
        %5123 = vmatprep.subr.mxu0 0.0
        %5124 = vmatpush1.msra.mxu0 0.0
        %5125 = vmatprep.subr.mxu0 0.0
        %5126 = vmatpush1.msra.mxu0 0.0
        %5127 = vmatprep.subr.mxu0 0.0
        %5128 = vmatpush1.msra.mxu0 0.0
        %5129 = vmatprep.mubr.f32.mxu0 0.0
        %5130 = vmatmul.mubr.f32.gmra.mrb[0].mxu0 %v4714
        %v5131 = vpop.f32.mrb[0].mxu0
        %v5132 = vadd.f32 %v5063, %v5131
        %v5133 = vpop.f32.mrb[0].mxu0
        %5134 = vdwg.mxu0
        %v5135 = vmul.f32 %v4800, %v5132
        %v5136 = vadd.f32 %v5049, %v5135
        %v5137 = vtanh.pop %v5136
        %v5138 = vsub.f32 1.0, %v4971
        %v5139 = vmul.f32 %v5138, %v5137
        %v5140 = vmul.f32 %v4971, %v4625
        %v5141 = vadd.f32 %v5139, %v5140
        %v5142 = vld [vmem:[%s59] sm:$0xff]
        %v5143 = vld [vmem:[%s59 + $0x8] sm:$0xff]
        %v5144 = vld [vmem:[%s59 + $0x10] sm:$0xff]
        %v5145 = vld [vmem:[%s59 + $0x18] sm:$0xff]
        %v5146 = vld [vmem:[%s63] sm:$0x1]
        %v5148 = vlaneseq
        %v5149 = vshrl.u32 %v5148, 7
        %v5150 = vsub.s32 0, %v5149
        %v5151 = vrot.slane %v5146, %v5150
        %v5154 = vsel %vm2037, %v5141, 0
        %5156 = vmatprep.subr.mxu0 0.0
        %5157 = vmatpush1.msra.mxu0 %v5142
        %5158 = vmatprep.subr.mxu0 0.0
        %5159 = vmatpush1.msra.mxu0 %v5143
        %5160 = vmatprep.subr.mxu0 0.0
        %5161 = vmatpush1.msra.mxu0 %v5144
        %5162 = vmatprep.subr.mxu0 0.0
        %5163 = vmatpush1.msra.mxu0 %v5145
        %5164 = vmatprep.subr.mxu0 0.0
        %5165 = vmatpush1.msra.mxu0 0.0
        %5166 = vmatprep.subr.mxu0 0.0
        %5167 = vmatpush1.msra.mxu0 0.0
        %5168 = vmatprep.subr.mxu0 0.0
        %5169 = vmatpush1.msra.mxu0 0.0
        %5170 = vmatprep.subr.mxu0 0.0
        %5171 = vmatpush1.msra.mxu0 0.0
        %5172 = vmatprep.subr.mxu0 0.0
        %5173 = vmatpush1.msra.mxu0 0.0
        %5174 = vmatprep.subr.mxu0 0.0
        %5175 = vmatpush1.msra.mxu0 0.0
        %5176 = vmatprep.subr.mxu0 0.0
        %5177 = vmatpush1.msra.mxu0 0.0
        %5178 = vmatprep.subr.mxu0 0.0
        %5179 = vmatpush1.msra.mxu0 0.0
        %5180 = vmatprep.subr.mxu0 0.0
        %5181 = vmatpush1.msra.mxu0 0.0
        %5182 = vmatprep.subr.mxu0 0.0
        %5183 = vmatpush1.msra.mxu0 0.0
        %5184 = vmatprep.subr.mxu0 0.0
        %5185 = vmatpush1.msra.mxu0 0.0
        %5186 = vmatprep.subr.mxu0 0.0
        %5187 = vmatpush1.msra.mxu0 0.0
        %5188 = vmatprep.subr.mxu0 0.0
        %5189 = vmatpush1.msra.mxu0 0.0
        %5190 = vmatprep.subr.mxu0 0.0
        %5191 = vmatpush1.msra.mxu0 0.0
        %5192 = vmatprep.subr.mxu0 0.0
        %5193 = vmatpush1.msra.mxu0 0.0
        %5194 = vmatprep.subr.mxu0 0.0
        %5195 = vmatpush1.msra.mxu0 0.0
        %5196 = vmatprep.subr.mxu0 0.0
        %5197 = vmatpush1.msra.mxu0 0.0
        %5198 = vmatprep.subr.mxu0 0.0
        %5199 = vmatpush1.msra.mxu0 0.0
        %5200 = vmatprep.subr.mxu0 0.0
        %5201 = vmatpush1.msra.mxu0 0.0
        %5202 = vmatprep.subr.mxu0 0.0
        %5203 = vmatpush1.msra.mxu0 0.0
        %5204 = vmatprep.subr.mxu0 0.0
        %5205 = vmatpush1.msra.mxu0 0.0
        %5206 = vmatprep.subr.mxu0 0.0
        %5207 = vmatpush1.msra.mxu0 0.0
        %5208 = vmatprep.subr.mxu0 0.0
        %5209 = vmatpush1.msra.mxu0 0.0
        %5210 = vmatprep.subr.mxu0 0.0
        %5211 = vmatpush1.msra.mxu0 0.0
        %5212 = vmatprep.subr.mxu0 0.0
        %5213 = vmatpush1.msra.mxu0 0.0
        %5214 = vmatprep.subr.mxu0 0.0
        %5215 = vmatpush1.msra.mxu0 0.0
        %5216 = vmatprep.subr.mxu0 0.0
        %5217 = vmatpush1.msra.mxu0 0.0
        %5218 = vmatprep.subr.mxu0 0.0
        %5219 = vmatpush1.msra.mxu0 0.0
        %5220 = vmatprep.mubr.f32.mxu0 0.0
        %5221 = vmatmul.mubr.f32.gmra.mrb[0].mxu0 %v5154
        %v5222 = vpop.f32.mrb[0].mxu0
        %v5223 = vadd.f32 %v5151, %v5222
        %v5224 = vpop.f32.mrb[0].mxu0
        %5225 = vdwg.mxu0
        %v5226 = vld [vmem:[#allocation37] sm:$0xff]
        %v5227 = vld [vmem:[#allocation37 + $0x8] sm:$0xff]
        %v5228 = vld [vmem:[#allocation37 + $0x10] sm:$0xff]
        %v5229 = vld [vmem:[#allocation37 + $0x18] sm:$0xff]
        %v5231 = vsel %vm2037, %v4626, 0
        %5233 = vmatprep.subr.mxu0 0.0
        %5234 = vmatpush1.msra.mxu0 %v5226
        %5235 = vmatprep.subr.mxu0 0.0
        %5236 = vmatpush1.msra.mxu0 %v5227
        %5237 = vmatprep.subr.mxu0 0.0
        %5238 = vmatpush1.msra.mxu0 %v5228
        %5239 = vmatprep.subr.mxu0 0.0
        %5240 = vmatpush1.msra.mxu0 %v5229
        %5241 = vmatprep.subr.mxu0 0.0
        %5242 = vmatpush1.msra.mxu0 0.0
        %5243 = vmatprep.subr.mxu0 0.0
        %5244 = vmatpush1.msra.mxu0 0.0
        %5245 = vmatprep.subr.mxu0 0.0
        %5246 = vmatpush1.msra.mxu0 0.0
        %5247 = vmatprep.subr.mxu0 0.0
        %5248 = vmatpush1.msra.mxu0 0.0
        %5249 = vmatprep.subr.mxu0 0.0
        %5250 = vmatpush1.msra.mxu0 0.0
        %5251 = vmatprep.subr.mxu0 0.0
        %5252 = vmatpush1.msra.mxu0 0.0
        %5253 = vmatprep.subr.mxu0 0.0
        %5254 = vmatpush1.msra.mxu0 0.0
        %5255 = vmatprep.subr.mxu0 0.0
        %5256 = vmatpush1.msra.mxu0 0.0
        %5257 = vmatprep.subr.mxu0 0.0
        %5258 = vmatpush1.msra.mxu0 0.0
        %5259 = vmatprep.subr.mxu0 0.0
        %5260 = vmatpush1.msra.mxu0 0.0
        %5261 = vmatprep.subr.mxu0 0.0
        %5262 = vmatpush1.msra.mxu0 0.0
        %5263 = vmatprep.subr.mxu0 0.0
        %5264 = vmatpush1.msra.mxu0 0.0
        %5265 = vmatprep.subr.mxu0 0.0
        %5266 = vmatpush1.msra.mxu0 0.0
        %5267 = vmatprep.subr.mxu0 0.0
        %5268 = vmatpush1.msra.mxu0 0.0
        %5269 = vmatprep.subr.mxu0 0.0
        %5270 = vmatpush1.msra.mxu0 0.0
        %5271 = vmatprep.subr.mxu0 0.0
        %5272 = vmatpush1.msra.mxu0 0.0
        %5273 = vmatprep.subr.mxu0 0.0
        %5274 = vmatpush1.msra.mxu0 0.0
        %5275 = vmatprep.subr.mxu0 0.0
        %5276 = vmatpush1.msra.mxu0 0.0
        %5277 = vmatprep.subr.mxu0 0.0
        %5278 = vmatpush1.msra.mxu0 0.0
        %5279 = vmatprep.subr.mxu0 0.0
        %5280 = vmatpush1.msra.mxu0 0.0
        %5281 = vmatprep.subr.mxu0 0.0
        %5282 = vmatpush1.msra.mxu0 0.0
        %5283 = vmatprep.subr.mxu0 0.0
        %5284 = vmatpush1.msra.mxu0 0.0
        %5285 = vmatprep.subr.mxu0 0.0
        %5286 = vmatpush1.msra.mxu0 0.0
        %5287 = vmatprep.subr.mxu0 0.0
        %5288 = vmatpush1.msra.mxu0 0.0
        %5289 = vmatprep.subr.mxu0 0.0
        %5290 = vmatpush1.msra.mxu0 0.0
        %5291 = vmatprep.subr.mxu0 0.0
        %5292 = vmatpush1.msra.mxu0 0.0
        %5293 = vmatprep.subr.mxu0 0.0
        %5294 = vmatpush1.msra.mxu0 0.0
        %5295 = vmatprep.subr.mxu0 0.0
        %5296 = vmatpush1.msra.mxu0 0.0
        %5297 = vmatprep.mubr.f32.mxu0 0.0
        %5298 = vmatmul.mubr.f32.gmra.mrb[0].mxu0 %v5231
        %v5299 = vpop.f32.mrb[0].mxu0
        %v5300 = vadd.f32 0.0, %v5299
        %v5301 = vpop.f32.mrb[0].mxu0
        %5302 = vdwg.mxu0
        %v5303 = vadd.f32 %v5223, %v5300
        %v5304 = vld [vmem:[%s65] sm:$0x1]
        %v5306 = vlaneseq
        %v5307 = vshrl.u32 %v5306, 7
        %v5308 = vsub.s32 0, %v5307
        %v5309 = vrot.slane %v5304, %v5308
        %v5311 = vadd.f32 %v5303, %v5309
        %v5312 = vxor.u32 %v5311, 2147483648
        %v5313 = vmul.f32 %v5312, 1.442695
        %v5314 = vpow.pop %v5313
        %v5315 = vadd.f32 %v5314, 1.0
        %v5316 = vrcp.pop %v5315
        %v5317 = vmul.f32 1.0, %v5316
        %s5318 = scalar_lea.vmem %s59, 32
        %v5319 = vld [vmem:[%s5318] sm:$0xff]
        %v5320 = vld [vmem:[%s5318 + $0x8] sm:$0xff]
        %v5321 = vld [vmem:[%s5318 + $0x10] sm:$0xff]
        %v5322 = vld [vmem:[%s5318 + $0x18] sm:$0xff]
        %s5323 = scalar_lea.vmem %s63, 1
        %v5324 = vld [vmem:[%s5323] sm:$0x1]
        %v5326 = vlaneseq
        %v5327 = vshrl.u32 %v5326, 7
        %v5328 = vsub.s32 0, %v5327
        %v5329 = vrot.slane %v5324, %v5328
        %5331 = vmatprep.subr.mxu0 0.0
        %5332 = vmatpush1.msra.mxu0 %v5319
        %5333 = vmatprep.subr.mxu0 0.0
        %5334 = vmatpush1.msra.mxu0 %v5320
        %5335 = vmatprep.subr.mxu0 0.0
        %5336 = vmatpush1.msra.mxu0 %v5321
        %5337 = vmatprep.subr.mxu0 0.0
        %5338 = vmatpush1.msra.mxu0 %v5322
        %5339 = vmatprep.subr.mxu0 0.0
        %5340 = vmatpush1.msra.mxu0 0.0
        %5341 = vmatprep.subr.mxu0 0.0
        %5342 = vmatpush1.msra.mxu0 0.0
        %5343 = vmatprep.subr.mxu0 0.0
        %5344 = vmatpush1.msra.mxu0 0.0
        %5345 = vmatprep.subr.mxu0 0.0
        %5346 = vmatpush1.msra.mxu0 0.0
        %5347 = vmatprep.subr.mxu0 0.0
        %5348 = vmatpush1.msra.mxu0 0.0
        %5349 = vmatprep.subr.mxu0 0.0
        %5350 = vmatpush1.msra.mxu0 0.0
        %5351 = vmatprep.subr.mxu0 0.0
        %5352 = vmatpush1.msra.mxu0 0.0
        %5353 = vmatprep.subr.mxu0 0.0
        %5354 = vmatpush1.msra.mxu0 0.0
        %5355 = vmatprep.subr.mxu0 0.0
        %5356 = vmatpush1.msra.mxu0 0.0
        %5357 = vmatprep.subr.mxu0 0.0
        %5358 = vmatpush1.msra.mxu0 0.0
        %5359 = vmatprep.subr.mxu0 0.0
        %5360 = vmatpush1.msra.mxu0 0.0
        %5361 = vmatprep.subr.mxu0 0.0
        %5362 = vmatpush1.msra.mxu0 0.0
        %5363 = vmatprep.subr.mxu0 0.0
        %5364 = vmatpush1.msra.mxu0 0.0
        %5365 = vmatprep.subr.mxu0 0.0
        %5366 = vmatpush1.msra.mxu0 0.0
        %5367 = vmatprep.subr.mxu0 0.0
        %5368 = vmatpush1.msra.mxu0 0.0
        %5369 = vmatprep.subr.mxu0 0.0
        %5370 = vmatpush1.msra.mxu0 0.0
        %5371 = vmatprep.subr.mxu0 0.0
        %5372 = vmatpush1.msra.mxu0 0.0
        %5373 = vmatprep.subr.mxu0 0.0
        %5374 = vmatpush1.msra.mxu0 0.0
        %5375 = vmatprep.subr.mxu0 0.0
        %5376 = vmatpush1.msra.mxu0 0.0
        %5377 = vmatprep.subr.mxu0 0.0
        %5378 = vmatpush1.msra.mxu0 0.0
        %5379 = vmatprep.subr.mxu0 0.0
        %5380 = vmatpush1.msra.mxu0 0.0
        %5381 = vmatprep.subr.mxu0 0.0
        %5382 = vmatpush1.msra.mxu0 0.0
        %5383 = vmatprep.subr.mxu0 0.0
        %5384 = vmatpush1.msra.mxu0 0.0
        %5385 = vmatprep.subr.mxu0 0.0
        %5386 = vmatpush1.msra.mxu0 0.0
        %5387 = vmatprep.subr.mxu0 0.0
        %5388 = vmatpush1.msra.mxu0 0.0
        %5389 = vmatprep.subr.mxu0 0.0
        %5390 = vmatpush1.msra.mxu0 0.0
        %5391 = vmatprep.subr.mxu0 0.0
        %5392 = vmatpush1.msra.mxu0 0.0
        %5393 = vmatprep.subr.mxu0 0.0
        %5394 = vmatpush1.msra.mxu0 0.0
        %5395 = vmatprep.mubr.f32.mxu0 0.0
        %5396 = vmatmul.mubr.f32.gmra.mrb[0].mxu0 %v5154
        %v5397 = vpop.f32.mrb[0].mxu0
        %v5398 = vadd.f32 %v5329, %v5397
        %v5399 = vpop.f32.mrb[0].mxu0
        %5400 = vdwg.mxu0
        %s5401 = scalar_lea.vmem [#allocation37], 32
        %v5402 = vld [vmem:[%s5401] sm:$0xff]
        %v5403 = vld [vmem:[%s5401 + $0x8] sm:$0xff]
        %v5404 = vld [vmem:[%s5401 + $0x10] sm:$0xff]
        %v5405 = vld [vmem:[%s5401 + $0x18] sm:$0xff]
        %5406 = vmatprep.subr.mxu0 0.0
        %5407 = vmatpush1.msra.mxu0 %v5402
        %5408 = vmatprep.subr.mxu0 0.0
        %5409 = vmatpush1.msra.mxu0 %v5403
        %5410 = vmatprep.subr.mxu0 0.0
        %5411 = vmatpush1.msra.mxu0 %v5404
        %5412 = vmatprep.subr.mxu0 0.0
        %5413 = vmatpush1.msra.mxu0 %v5405
        %5414 = vmatprep.subr.mxu0 0.0
        %5415 = vmatpush1.msra.mxu0 0.0
        %5416 = vmatprep.subr.mxu0 0.0
        %5417 = vmatpush1.msra.mxu0 0.0
        %5418 = vmatprep.subr.mxu0 0.0
        %5419 = vmatpush1.msra.mxu0 0.0
        %5420 = vmatprep.subr.mxu0 0.0
        %5421 = vmatpush1.msra.mxu0 0.0
        %5422 = vmatprep.subr.mxu0 0.0
        %5423 = vmatpush1.msra.mxu0 0.0
        %5424 = vmatprep.subr.mxu0 0.0
        %5425 = vmatpush1.msra.mxu0 0.0
        %5426 = vmatprep.subr.mxu0 0.0
        %5427 = vmatpush1.msra.mxu0 0.0
        %5428 = vmatprep.subr.mxu0 0.0
        %5429 = vmatpush1.msra.mxu0 0.0
        %5430 = vmatprep.subr.mxu0 0.0
        %5431 = vmatpush1.msra.mxu0 0.0
        %5432 = vmatprep.subr.mxu0 0.0
        %5433 = vmatpush1.msra.mxu0 0.0
        %5434 = vmatprep.subr.mxu0 0.0
        %5435 = vmatpush1.msra.mxu0 0.0
        %5436 = vmatprep.subr.mxu0 0.0
        %5437 = vmatpush1.msra.mxu0 0.0
        %5438 = vmatprep.subr.mxu0 0.0
        %5439 = vmatpush1.msra.mxu0 0.0
        %5440 = vmatprep.subr.mxu0 0.0
        %5441 = vmatpush1.msra.mxu0 0.0
        %5442 = vmatprep.subr.mxu0 0.0
        %5443 = vmatpush1.msra.mxu0 0.0
        %5444 = vmatprep.subr.mxu0 0.0
        %5445 = vmatpush1.msra.mxu0 0.0
        %5446 = vmatprep.subr.mxu0 0.0
        %5447 = vmatpush1.msra.mxu0 0.0
        %5448 = vmatprep.subr.mxu0 0.0
        %5449 = vmatpush1.msra.mxu0 0.0
        %5450 = vmatprep.subr.mxu0 0.0
        %5451 = vmatpush1.msra.mxu0 0.0
        %5452 = vmatprep.subr.mxu0 0.0
        %5453 = vmatpush1.msra.mxu0 0.0
        %5454 = vmatprep.subr.mxu0 0.0
        %5455 = vmatpush1.msra.mxu0 0.0
        %5456 = vmatprep.subr.mxu0 0.0
        %5457 = vmatpush1.msra.mxu0 0.0
        %5458 = vmatprep.subr.mxu0 0.0
        %5459 = vmatpush1.msra.mxu0 0.0
        %5460 = vmatprep.subr.mxu0 0.0
        %5461 = vmatpush1.msra.mxu0 0.0
        %5462 = vmatprep.subr.mxu0 0.0
        %5463 = vmatpush1.msra.mxu0 0.0
        %5464 = vmatprep.subr.mxu0 0.0
        %5465 = vmatpush1.msra.mxu0 0.0
        %5466 = vmatprep.subr.mxu0 0.0
        %5467 = vmatpush1.msra.mxu0 0.0
        %5468 = vmatprep.subr.mxu0 0.0
        %5469 = vmatpush1.msra.mxu0 0.0
        %5470 = vmatprep.mubr.f32.mxu0 0.0
        %5471 = vmatmul.mubr.f32.gmra.mrb[0].mxu0 %v5231
        %v5472 = vpop.f32.mrb[0].mxu0
        %v5473 = vadd.f32 0.0, %v5472
        %v5474 = vpop.f32.mrb[0].mxu0
        %5475 = vdwg.mxu0
        %v5476 = vadd.f32 %v5398, %v5473
        %s5477 = scalar_lea.vmem %s65, 1
        %v5478 = vld [vmem:[%s5477] sm:$0x1]
        %v5480 = vlaneseq
        %v5481 = vshrl.u32 %v5480, 7
        %v5482 = vsub.s32 0, %v5481
        %v5483 = vrot.slane %v5478, %v5482
        %v5485 = vadd.f32 %v5476, %v5483
        %v5486 = vxor.u32 %v5485, 2147483648
        %v5487 = vmul.f32 %v5486, 1.442695
        %v5488 = vpow.pop %v5487
        %v5489 = vadd.f32 %v5488, 1.0
        %v5490 = vrcp.pop %v5489
        %v5491 = vmul.f32 1.0, %v5490
        %s5492 = scalar_lea.vmem %s59, 64
        %v5493 = vld [vmem:[%s5492] sm:$0xff]
        %v5494 = vld [vmem:[%s5492 + $0x8] sm:$0xff]
        %v5495 = vld [vmem:[%s5492 + $0x10] sm:$0xff]
        %v5496 = vld [vmem:[%s5492 + $0x18] sm:$0xff]
        %s5497 = scalar_lea.vmem %s63, 2
        %v5498 = vld [vmem:[%s5497] sm:$0x1]
        %v5500 = vlaneseq
        %v5501 = vshrl.u32 %v5500, 7
        %v5502 = vsub.s32 0, %v5501
        %v5503 = vrot.slane %v5498, %v5502
        %5505 = vmatprep.subr.mxu0 0.0
        %5506 = vmatpush1.msra.mxu0 %v5493
        %5507 = vmatprep.subr.mxu0 0.0
        %5508 = vmatpush1.msra.mxu0 %v5494
        %5509 = vmatprep.subr.mxu0 0.0
        %5510 = vmatpush1.msra.mxu0 %v5495
        %5511 = vmatprep.subr.mxu0 0.0
        %5512 = vmatpush1.msra.mxu0 %v5496
        %5513 = vmatprep.subr.mxu0 0.0
        %5514 = vmatpush1.msra.mxu0 0.0
        %5515 = vmatprep.subr.mxu0 0.0
        %5516 = vmatpush1.msra.mxu0 0.0
        %5517 = vmatprep.subr.mxu0 0.0
        %5518 = vmatpush1.msra.mxu0 0.0
        %5519 = vmatprep.subr.mxu0 0.0
        %5520 = vmatpush1.msra.mxu0 0.0
        %5521 = vmatprep.subr.mxu0 0.0
        %5522 = vmatpush1.msra.mxu0 0.0
        %5523 = vmatprep.subr.mxu0 0.0
        %5524 = vmatpush1.msra.mxu0 0.0
        %5525 = vmatprep.subr.mxu0 0.0
        %5526 = vmatpush1.msra.mxu0 0.0
        %5527 = vmatprep.subr.mxu0 0.0
        %5528 = vmatpush1.msra.mxu0 0.0
        %5529 = vmatprep.subr.mxu0 0.0
        %5530 = vmatpush1.msra.mxu0 0.0
        %5531 = vmatprep.subr.mxu0 0.0
        %5532 = vmatpush1.msra.mxu0 0.0
        %5533 = vmatprep.subr.mxu0 0.0
        %5534 = vmatpush1.msra.mxu0 0.0
        %5535 = vmatprep.subr.mxu0 0.0
        %5536 = vmatpush1.msra.mxu0 0.0
        %5537 = vmatprep.subr.mxu0 0.0
        %5538 = vmatpush1.msra.mxu0 0.0
        %5539 = vmatprep.subr.mxu0 0.0
        %5540 = vmatpush1.msra.mxu0 0.0
        %5541 = vmatprep.subr.mxu0 0.0
        %5542 = vmatpush1.msra.mxu0 0.0
        %5543 = vmatprep.subr.mxu0 0.0
        %5544 = vmatpush1.msra.mxu0 0.0
        %5545 = vmatprep.subr.mxu0 0.0
        %5546 = vmatpush1.msra.mxu0 0.0
        %5547 = vmatprep.subr.mxu0 0.0
        %5548 = vmatpush1.msra.mxu0 0.0
        %5549 = vmatprep.subr.mxu0 0.0
        %5550 = vmatpush1.msra.mxu0 0.0
        %5551 = vmatprep.subr.mxu0 0.0
        %5552 = vmatpush1.msra.mxu0 0.0
        %5553 = vmatprep.subr.mxu0 0.0
        %5554 = vmatpush1.msra.mxu0 0.0
        %5555 = vmatprep.subr.mxu0 0.0
        %5556 = vmatpush1.msra.mxu0 0.0
        %5557 = vmatprep.subr.mxu0 0.0
        %5558 = vmatpush1.msra.mxu0 0.0
        %5559 = vmatprep.subr.mxu0 0.0
        %5560 = vmatpush1.msra.mxu0 0.0
        %5561 = vmatprep.subr.mxu0 0.0
        %5562 = vmatpush1.msra.mxu0 0.0
        %5563 = vmatprep.subr.mxu0 0.0
        %5564 = vmatpush1.msra.mxu0 0.0
        %5565 = vmatprep.subr.mxu0 0.0
        %5566 = vmatpush1.msra.mxu0 0.0
        %5567 = vmatprep.subr.mxu0 0.0
        %5568 = vmatpush1.msra.mxu0 0.0
        %5569 = vmatprep.mubr.f32.mxu0 0.0
        %5570 = vmatmul.mubr.f32.gmra.mrb[0].mxu0 %v5154
        %v5571 = vpop.f32.mrb[0].mxu0
        %v5572 = vadd.f32 %v5503, %v5571
        %v5573 = vpop.f32.mrb[0].mxu0
        %5574 = vdwg.mxu0
        %s5575 = scalar_lea.vmem [#allocation37], 64
        %v5576 = vld [vmem:[%s5575] sm:$0xff]
        %v5577 = vld [vmem:[%s5575 + $0x8] sm:$0xff]
        %v5578 = vld [vmem:[%s5575 + $0x10] sm:$0xff]
        %v5579 = vld [vmem:[%s5575 + $0x18] sm:$0xff]
        %s5580 = scalar_lea.vmem %s65, 2
        %v5581 = vld [vmem:[%s5580] sm:$0x1]
        %v5583 = vlaneseq
        %v5584 = vshrl.u32 %v5583, 7
        %v5585 = vsub.s32 0, %v5584
        %v5586 = vrot.slane %v5581, %v5585
        %5588 = vmatprep.subr.mxu0 0.0
        %5589 = vmatpush1.msra.mxu0 %v5576
        %5590 = vmatprep.subr.mxu0 0.0
        %5591 = vmatpush1.msra.mxu0 %v5577
        %5592 = vmatprep.subr.mxu0 0.0
        %5593 = vmatpush1.msra.mxu0 %v5578
        %5594 = vmatprep.subr.mxu0 0.0
        %5595 = vmatpush1.msra.mxu0 %v5579
        %5596 = vmatprep.subr.mxu0 0.0
        %5597 = vmatpush1.msra.mxu0 0.0
        %5598 = vmatprep.subr.mxu0 0.0
        %5599 = vmatpush1.msra.mxu0 0.0
        %5600 = vmatprep.subr.mxu0 0.0
        %5601 = vmatpush1.msra.mxu0 0.0
        %5602 = vmatprep.subr.mxu0 0.0
        %5603 = vmatpush1.msra.mxu0 0.0
        %5604 = vmatprep.subr.mxu0 0.0
        %5605 = vmatpush1.msra.mxu0 0.0
        %5606 = vmatprep.subr.mxu0 0.0
        %5607 = vmatpush1.msra.mxu0 0.0
        %5608 = vmatprep.subr.mxu0 0.0
        %5609 = vmatpush1.msra.mxu0 0.0
        %5610 = vmatprep.subr.mxu0 0.0
        %5611 = vmatpush1.msra.mxu0 0.0
        %5612 = vmatprep.subr.mxu0 0.0
        %5613 = vmatpush1.msra.mxu0 0.0
        %5614 = vmatprep.subr.mxu0 0.0
        %5615 = vmatpush1.msra.mxu0 0.0
        %5616 = vmatprep.subr.mxu0 0.0
        %5617 = vmatpush1.msra.mxu0 0.0
        %5618 = vmatprep.subr.mxu0 0.0
        %5619 = vmatpush1.msra.mxu0 0.0
        %5620 = vmatprep.subr.mxu0 0.0
        %5621 = vmatpush1.msra.mxu0 0.0
        %5622 = vmatprep.subr.mxu0 0.0
        %5623 = vmatpush1.msra.mxu0 0.0
        %5624 = vmatprep.subr.mxu0 0.0
        %5625 = vmatpush1.msra.mxu0 0.0
        %5626 = vmatprep.subr.mxu0 0.0
        %5627 = vmatpush1.msra.mxu0 0.0
        %5628 = vmatprep.subr.mxu0 0.0
        %5629 = vmatpush1.msra.mxu0 0.0
        %5630 = vmatprep.subr.mxu0 0.0
        %5631 = vmatpush1.msra.mxu0 0.0
        %5632 = vmatprep.subr.mxu0 0.0
        %5633 = vmatpush1.msra.mxu0 0.0
        %5634 = vmatprep.subr.mxu0 0.0
        %5635 = vmatpush1.msra.mxu0 0.0
        %5636 = vmatprep.subr.mxu0 0.0
        %5637 = vmatpush1.msra.mxu0 0.0
        %5638 = vmatprep.subr.mxu0 0.0
        %5639 = vmatpush1.msra.mxu0 0.0
        %5640 = vmatprep.subr.mxu0 0.0
        %5641 = vmatpush1.msra.mxu0 0.0
        %5642 = vmatprep.subr.mxu0 0.0
        %5643 = vmatpush1.msra.mxu0 0.0
        %5644 = vmatprep.subr.mxu0 0.0
        %5645 = vmatpush1.msra.mxu0 0.0
        %5646 = vmatprep.subr.mxu0 0.0
        %5647 = vmatpush1.msra.mxu0 0.0
        %5648 = vmatprep.subr.mxu0 0.0
        %5649 = vmatpush1.msra.mxu0 0.0
        %5650 = vmatprep.subr.mxu0 0.0
        %5651 = vmatpush1.msra.mxu0 0.0
        %5652 = vmatprep.mubr.f32.mxu0 0.0
        %5653 = vmatmul.mubr.f32.gmra.mrb[0].mxu0 %v5231
        %v5654 = vpop.f32.mrb[0].mxu0
        %v5655 = vadd.f32 %v5586, %v5654
        %v5656 = vpop.f32.mrb[0].mxu0
        %5657 = vdwg.mxu0
        %v5658 = vmul.f32 %v5317, %v5655
        %v5659 = vadd.f32 %v5572, %v5658
        %v5660 = vtanh.pop %v5659
        %v5661 = vsub.f32 1.0, %v5491
        %v5662 = vmul.f32 %v5661, %v5660
        %v5663 = vmul.f32 %v5491, %v4626
        %v5664 = vadd.f32 %v5662, %v5663
        %5665 = vst.msk [vmem:[#allocation3] sm:$0x3] %vm4226, %v5141
        %5666 = vst.msk [vmem:[#allocation4] sm:$0x3] %vm4226, %v5664
        %v5667 = vld [vmem:[%s67] sm:$0xff]
        %v5668 = vld [vmem:[%s67 + $0x8] sm:$0xff]
        %v5669 = vld [vmem:[%s67 + $0x10] sm:$0xff]
        %v5670 = vld [vmem:[%s67 + $0x18] sm:$0xff]
        %v5671 = vld [vmem:[%s69] sm:$0x1]
        %v5673 = vlaneseq
        %v5674 = vshrl.u32 %v5673, 7
        %v5675 = vsub.s32 0, %v5674
        %v5676 = vrot.slane %v5671, %v5675
        %v5679 = vsel %vm2037, %v5664, 0
        %5681 = vmatprep.subr.mxu0 0.0
        %5682 = vmatpush1.msra.mxu0 %v5667
        %5683 = vmatprep.subr.mxu0 0.0
        %5684 = vmatpush1.msra.mxu0 %v5668
        %5685 = vmatprep.subr.mxu0 0.0
        %5686 = vmatpush1.msra.mxu0 %v5669
        %5687 = vmatprep.subr.mxu0 0.0
        %5688 = vmatpush1.msra.mxu0 %v5670
        %5689 = vmatprep.subr.mxu0 0.0
        %5690 = vmatpush1.msra.mxu0 0.0
        %5691 = vmatprep.subr.mxu0 0.0
        %5692 = vmatpush1.msra.mxu0 0.0
        %5693 = vmatprep.subr.mxu0 0.0
        %5694 = vmatpush1.msra.mxu0 0.0
        %5695 = vmatprep.subr.mxu0 0.0
        %5696 = vmatpush1.msra.mxu0 0.0
        %5697 = vmatprep.subr.mxu0 0.0
        %5698 = vmatpush1.msra.mxu0 0.0
        %5699 = vmatprep.subr.mxu0 0.0
        %5700 = vmatpush1.msra.mxu0 0.0
        %5701 = vmatprep.subr.mxu0 0.0
        %5702 = vmatpush1.msra.mxu0 0.0
        %5703 = vmatprep.subr.mxu0 0.0
        %5704 = vmatpush1.msra.mxu0 0.0
        %5705 = vmatprep.subr.mxu0 0.0
        %5706 = vmatpush1.msra.mxu0 0.0
        %5707 = vmatprep.subr.mxu0 0.0
        %5708 = vmatpush1.msra.mxu0 0.0
        %5709 = vmatprep.subr.mxu0 0.0
        %5710 = vmatpush1.msra.mxu0 0.0
        %5711 = vmatprep.subr.mxu0 0.0
        %5712 = vmatpush1.msra.mxu0 0.0
        %5713 = vmatprep.subr.mxu0 0.0
        %5714 = vmatpush1.msra.mxu0 0.0
        %5715 = vmatprep.subr.mxu0 0.0
        %5716 = vmatpush1.msra.mxu0 0.0
        %5717 = vmatprep.subr.mxu0 0.0
        %5718 = vmatpush1.msra.mxu0 0.0
        %5719 = vmatprep.subr.mxu0 0.0
        %5720 = vmatpush1.msra.mxu0 0.0
        %5721 = vmatprep.subr.mxu0 0.0
        %5722 = vmatpush1.msra.mxu0 0.0
        %5723 = vmatprep.subr.mxu0 0.0
        %5724 = vmatpush1.msra.mxu0 0.0
        %5725 = vmatprep.subr.mxu0 0.0
        %5726 = vmatpush1.msra.mxu0 0.0
        %5727 = vmatprep.subr.mxu0 0.0
        %5728 = vmatpush1.msra.mxu0 0.0
        %5729 = vmatprep.subr.mxu0 0.0
        %5730 = vmatpush1.msra.mxu0 0.0
        %5731 = vmatprep.subr.mxu0 0.0
        %5732 = vmatpush1.msra.mxu0 0.0
        %5733 = vmatprep.subr.mxu0 0.0
        %5734 = vmatpush1.msra.mxu0 0.0
        %5735 = vmatprep.subr.mxu0 0.0
        %5736 = vmatpush1.msra.mxu0 0.0
        %5737 = vmatprep.subr.mxu0 0.0
        %5738 = vmatpush1.msra.mxu0 0.0
        %5739 = vmatprep.subr.mxu0 0.0
        %5740 = vmatpush1.msra.mxu0 0.0
        %5741 = vmatprep.subr.mxu0 0.0
        %5742 = vmatpush1.msra.mxu0 0.0
        %5743 = vmatprep.subr.mxu0 0.0
        %5744 = vmatpush1.msra.mxu0 0.0
        %5745 = vmatprep.mubr.f32.mxu0 0.0
        %5746 = vmatmul.mubr.f32.gmra.mrb[0].mxu0 %v5679
        %v5747 = vpop.f32.mrb[0].mxu0
        %v5748 = vadd.f32 %v5676, %v5747
        %v5749 = vpop.f32.mrb[0].mxu0
        %5750 = vdwg.mxu0
        %v5751 = vadd.f32 %v5748, %v4624
        %v5752 = vld [vmem:[%s71] sm:$0xff]
        %v5753 = vld [vmem:[%s73] sm:$0x1]
        %v5755 = vlaneseq
        %v5756 = vshrl.u32 %v5755, 7
        %v5757 = vsub.s32 0, %v5756
        %v5758 = vrot.slane %v5753, %v5757
        %v5761 = vsel %vm4635, %v5751, 0
        %5763 = vmatprep.subr.mxu0 0.0
        %5764 = vmatpush1.msra.mxu0 %v5752
        %5765 = vmatprep.subr.mxu0 0.0
        %5766 = vmatpush1.msra.mxu0 0.0
        %5767 = vmatprep.subr.mxu0 0.0
        %5768 = vmatpush1.msra.mxu0 0.0
        %5769 = vmatprep.subr.mxu0 0.0
        %5770 = vmatpush1.msra.mxu0 0.0
        %5771 = vmatprep.subr.mxu0 0.0
        %5772 = vmatpush1.msra.mxu0 0.0
        %5773 = vmatprep.subr.mxu0 0.0
        %5774 = vmatpush1.msra.mxu0 0.0
        %5775 = vmatprep.subr.mxu0 0.0
        %5776 = vmatpush1.msra.mxu0 0.0
        %5777 = vmatprep.subr.mxu0 0.0
        %5778 = vmatpush1.msra.mxu0 0.0
        %5779 = vmatprep.subr.mxu0 0.0
        %5780 = vmatpush1.msra.mxu0 0.0
        %5781 = vmatprep.subr.mxu0 0.0
        %5782 = vmatpush1.msra.mxu0 0.0
        %5783 = vmatprep.subr.mxu0 0.0
        %5784 = vmatpush1.msra.mxu0 0.0
        %5785 = vmatprep.subr.mxu0 0.0
        %5786 = vmatpush1.msra.mxu0 0.0
        %5787 = vmatprep.subr.mxu0 0.0
        %5788 = vmatpush1.msra.mxu0 0.0
        %5789 = vmatprep.subr.mxu0 0.0
        %5790 = vmatpush1.msra.mxu0 0.0
        %5791 = vmatprep.subr.mxu0 0.0
        %5792 = vmatpush1.msra.mxu0 0.0
        %5793 = vmatprep.subr.mxu0 0.0
        %5794 = vmatpush1.msra.mxu0 0.0
        %5795 = vmatprep.subr.mxu0 0.0
        %5796 = vmatpush1.msra.mxu0 0.0
        %5797 = vmatprep.subr.mxu0 0.0
        %5798 = vmatpush1.msra.mxu0 0.0
        %5799 = vmatprep.subr.mxu0 0.0
        %5800 = vmatpush1.msra.mxu0 0.0
        %5801 = vmatprep.subr.mxu0 0.0
        %5802 = vmatpush1.msra.mxu0 0.0
        %5803 = vmatprep.subr.mxu0 0.0
        %5804 = vmatpush1.msra.mxu0 0.0
        %5805 = vmatprep.subr.mxu0 0.0
        %5806 = vmatpush1.msra.mxu0 0.0
        %5807 = vmatprep.subr.mxu0 0.0
        %5808 = vmatpush1.msra.mxu0 0.0
        %5809 = vmatprep.subr.mxu0 0.0
        %5810 = vmatpush1.msra.mxu0 0.0
        %5811 = vmatprep.subr.mxu0 0.0
        %5812 = vmatpush1.msra.mxu0 0.0
        %5813 = vmatprep.subr.mxu0 0.0
        %5814 = vmatpush1.msra.mxu0 0.0
        %5815 = vmatprep.subr.mxu0 0.0
        %5816 = vmatpush1.msra.mxu0 0.0
        %5817 = vmatprep.subr.mxu0 0.0
        %5818 = vmatpush1.msra.mxu0 0.0
        %5819 = vmatprep.subr.mxu0 0.0
        %5820 = vmatpush1.msra.mxu0 0.0
        %5821 = vmatprep.subr.mxu0 0.0
        %5822 = vmatpush1.msra.mxu0 0.0
        %5823 = vmatprep.subr.mxu0 0.0
        %5824 = vmatpush1.msra.mxu0 0.0
        %5825 = vmatprep.subr.mxu0 0.0
        %5826 = vmatpush1.msra.mxu0 0.0
        %5827 = vmatprep.mubr.f32.mxu0 0.0
        %5828 = vmatmul.mubr.f32.gmra.mrb[0].mxu0 %v5761
        %v5829 = vpop.f32.mrb[0].mxu0
        %v5830 = vadd.f32 %v5758, %v5829
        %v5831 = vpop.f32.mrb[0].mxu0
        %5832 = vdwg.mxu0
        %5833 = vmatprep.subr.mxu0 0.0
        %5834 = vmatpush1.msra.mxu0 %v5752
        %5835 = vmatprep.subr.mxu0 0.0
        %5836 = vmatpush1.msra.mxu0 0.0
        %5837 = vmatprep.subr.mxu0 0.0
        %5838 = vmatpush1.msra.mxu0 0.0
        %5839 = vmatprep.subr.mxu0 0.0
        %5840 = vmatpush1.msra.mxu0 0.0
        %5841 = vmatprep.subr.mxu0 0.0
        %5842 = vmatpush1.msra.mxu0 0.0
        %5843 = vmatprep.subr.mxu0 0.0
        %5844 = vmatpush1.msra.mxu0 0.0
        %5845 = vmatprep.subr.mxu0 0.0
        %5846 = vmatpush1.msra.mxu0 0.0
        %5847 = vmatprep.subr.mxu0 0.0
        %5848 = vmatpush1.msra.mxu0 0.0
        %5849 = vmatprep.subr.mxu0 0.0
        %5850 = vmatpush1.msra.mxu0 0.0
        %5851 = vmatprep.subr.mxu0 0.0
        %5852 = vmatpush1.msra.mxu0 0.0
        %5853 = vmatprep.subr.mxu0 0.0
        %5854 = vmatpush1.msra.mxu0 0.0
        %5855 = vmatprep.subr.mxu0 0.0
        %5856 = vmatpush1.msra.mxu0 0.0
        %5857 = vmatprep.subr.mxu0 0.0
        %5858 = vmatpush1.msra.mxu0 0.0
        %5859 = vmatprep.subr.mxu0 0.0
        %5860 = vmatpush1.msra.mxu0 0.0
        %5861 = vmatprep.subr.mxu0 0.0
        %5862 = vmatpush1.msra.mxu0 0.0
        %5863 = vmatprep.subr.mxu0 0.0
        %5864 = vmatpush1.msra.mxu0 0.0
        %5865 = vmatprep.subr.mxu0 0.0
        %5866 = vmatpush1.msra.mxu0 0.0
        %5867 = vmatprep.subr.mxu0 0.0
        %5868 = vmatpush1.msra.mxu0 0.0
        %5869 = vmatprep.subr.mxu0 0.0
        %5870 = vmatpush1.msra.mxu0 0.0
        %5871 = vmatprep.subr.mxu0 0.0
        %5872 = vmatpush1.msra.mxu0 0.0
        %5873 = vmatprep.subr.mxu0 0.0
        %5874 = vmatpush1.msra.mxu0 0.0
        %5875 = vmatprep.subr.mxu0 0.0
        %5876 = vmatpush1.msra.mxu0 0.0
        %5877 = vmatprep.subr.mxu0 0.0
        %5878 = vmatpush1.msra.mxu0 0.0
        %5879 = vmatprep.subr.mxu0 0.0
        %5880 = vmatpush1.msra.mxu0 0.0
        %5881 = vmatprep.subr.mxu0 0.0
        %5882 = vmatpush1.msra.mxu0 0.0
        %5883 = vmatprep.subr.mxu0 0.0
        %5884 = vmatpush1.msra.mxu0 0.0
        %5885 = vmatprep.subr.mxu0 0.0
        %5886 = vmatpush1.msra.mxu0 0.0
        %5887 = vmatprep.subr.mxu0 0.0
        %5888 = vmatpush1.msra.mxu0 0.0
        %5889 = vmatprep.subr.mxu0 0.0
        %5890 = vmatpush1.msra.mxu0 0.0
        %5891 = vmatprep.subr.mxu0 0.0
        %5892 = vmatpush1.msra.mxu0 0.0
        %5893 = vmatprep.subr.mxu0 0.0
        %5894 = vmatpush1.msra.mxu0 0.0
        %5895 = vmatprep.subr.mxu0 0.0
        %5896 = vmatpush1.msra.mxu0 0.0
        %5897 = vmatprep.mubr.f32.mxu0 0.0
        %5898 = vmatmul.mubr.f32.gmra.mrb[0].mxu0 %v4637
        %v5899 = vpop.f32.mrb[0].mxu0
        %v5900 = vadd.f32 %v5758, %v5899
        %v5901 = vpop.f32.mrb[0].mxu0
        %5902 = vdwg.mxu0
        %vm5903 = vcmask 25600
        %5904 = vst.msk [vmem:[%s1447] sm:$0x3] %vm5903, %v5900
        %5905 = vst.msk [vmem:[%s1451] sm:$0x3] %vm5903, %v5830
        %5906 = vst.msk [vmem:[%s1455] sm:$0x3] %vm5903, %v1938
        %s5907 = sld [smem:[#allocation7 + %s103]]
        %v5908 = vld [vmem:[%s1443] sm:$0x3]
        %v5909 = vstv %s5907
        %v5910 = vmul.f32 %v5909, %v5908
        %v5911 = vadd.f32 %v5830, %v5910
        %s5912 = sld [smem:[#allocation10 + %s103]]
        %v5913 = vstv %s5912
        %v5914 = vadd.f32 %v5911, %v5913
        %5915 = vst.msk [vmem:[#allocation2] sm:$0x3] %vm5903, %v5914
        %p5916 = scmp.lt.s32.totalorder %s103, 4
        %s5917 = scalar_select %p5916, %s103, 4
        %s5918 = smul.addr %s5917, 2
        %s5919 = scalar_lea.vmem %s75, %s5918
        %p5920 = scmp.lt.s32.totalorder %s103, 4
        %s5921 = scalar_select %p5920, %s103, 4
        %s5922 = smul.addr %s5921, 2
        %s5923 = scalar_lea.vmem %s77, %s5922
        %p5924 = scmp.lt.s32.totalorder %s103, 4
        %s5925 = scalar_select %p5924, %s103, 4
        %s5926 = smul.addr %s5925, 2
        %s5927 = scalar_lea.vmem %s79, %s5926
        // Predicated region
        $region253: #{tpu_custom_call.1} parent=167 // pred_check
          %p5928 = pneg %p903
        $region254: #{tpu_custom_call.1} parent=167 // pred_check_branch
          %5930 = sbr.rel (%p5928) target = $region256
        $region255: #{tpu_custom_call.1} parent=167 // pred_region
          _
        $region256: #{tpu_custom_call.1} parent=167 // pred_fallthru
          _
        // Predicated region
        $region257: #{tpu_custom_call.1} parent=167 // pred_check
          %p5931 = pneg %p929
        $region258: #{tpu_custom_call.1} parent=167 // pred_check_branch
          %5933 = sbr.rel (%p5931) target = $region260
        $region259: #{tpu_custom_call.1} parent=167 // pred_region
          _
        $region260: #{tpu_custom_call.1} parent=167 // pred_fallthru
          _
        // Predicated region
        $region261: #{tpu_custom_call.1} parent=167 // pred_check
          %p5934 = pneg %p955
        $region262: #{tpu_custom_call.1} parent=167 // pred_check_branch
          %5936 = sbr.rel (%p5934) target = $region264
        $region263: #{tpu_custom_call.1} parent=167 // pred_region
          _
        $region264: #{tpu_custom_call.1} parent=167 // pred_fallthru
          _
      $region168: #{tpu_custom_call.1} parent=5 // pred_fallthru
        _
      %p5937 = scmp.le.s32.totalorder 2, %s98
      // Predicated region
      $region265: #{tpu_custom_call.1} parent=5 // pred_check
        %p5938 = pneg %p5937
      $region266: #{tpu_custom_call.1} parent=5 // pred_check_branch
        %5940 = sbr.rel (%p5938) target = $region268
      $region267: #{tpu_custom_call.1} parent=5 // pred_region
        %s5941 = ssub.s32 %s98, 2
        // Predicated region
        $region269: #{tpu_custom_call.1} parent=267 // pred_check
          %p5942 = pneg %p909
        $region270: #{tpu_custom_call.1} parent=267 // pred_check_branch
          %5944 = sbr.rel (%p5942) target = $region272
        $region271: #{tpu_custom_call.1} parent=267 // pred_region
          %p5945 = scmp.lt.s32.totalorder %s104, 4
          %s5946 = scalar_select %p5945, %s104, 4
          %s5947 = smul.addr %s5946, 2
          %s5948 = scalar_lea.vmem %s75, %s5947
        $region272: #{tpu_custom_call.1} parent=267 // pred_fallthru
          _
        // Predicated region
        $region273: #{tpu_custom_call.1} parent=267 // pred_check
          %p5949 = pneg %p935
        $region274: #{tpu_custom_call.1} parent=267 // pred_check_branch
          %5951 = sbr.rel (%p5949) target = $region276
        $region275: #{tpu_custom_call.1} parent=267 // pred_region
          %p5952 = scmp.lt.s32.totalorder %s104, 4
          %s5953 = scalar_select %p5952, %s104, 4
          %s5954 = smul.addr %s5953, 2
          %s5955 = scalar_lea.vmem %s77, %s5954
        $region276: #{tpu_custom_call.1} parent=267 // pred_fallthru
          _
        // Predicated region
        $region277: #{tpu_custom_call.1} parent=267 // pred_check
          %p5956 = pneg %p961
        $region278: #{tpu_custom_call.1} parent=267 // pred_check_branch
          %5958 = sbr.rel (%p5956) target = $region280
        $region279: #{tpu_custom_call.1} parent=267 // pred_region
          %p5959 = scmp.lt.s32.totalorder %s104, 4
          %s5960 = scalar_select %p5959, %s104, 4
          %s5961 = smul.addr %s5960, 2
          %s5962 = scalar_lea.vmem %s79, %s5961
        $region280: #{tpu_custom_call.1} parent=267 // pred_fallthru
          _
      $region268: #{tpu_custom_call.1} parent=5 // pred_fallthru
        _
    $region6: #{tpu_custom_call.1} parent=1 // loop_footer
      %s102 = sadd.s32 1, %s98
    $region7: #{tpu_custom_call.1} parent=1 // loop_footer_branch
      %97 = sbr.rel target = $region3
    $region8: #{tpu_custom_call.1} parent=1 // loop_exit
      _
    %5963 = vsyncpa [#allocation8], 1
    %s5964 = scalar_lea.sflag [#allocation8], 1
    %5965 = vsyncpa %s5964, 1
    %5966 = vsyncpa [#allocation14], 1
    %5967 = vsyncpa [#allocation17], 1
    %5968 = vsyncpa [#allocation20], 1
    %5969 = vsyncpa [#allocation23], 1
    %5970 = vsyncpa [#allocation26], 1
    %5971 = vsyncpa [#allocation29], 1
    %5972 = vsyncpa [#allocation32], 1
    %5973 = vsyncpa [#allocation35], 1
    %5974 = vsyncpa [#allocation38], 1
    %5975 = vsyncpa [#allocation9], 1
    %s5976 = scalar_lea.sflag [#allocation9], 1
    %5977 = vsyncpa %s5976, 1
    %5978 = vsyncpa [#allocation11], 1

</llo_original>
